<compile_context>
chip_gen: v7x
topology: tpu7x:2x2x1
jax: 0.10.0
libtpu: 0.0.40
codegen_flags: <defaults>
</compile_context>

<pallas_src>
from functools import partial

import jax
import jax.numpy as jnp
from jax import lax
from jax.experimental import pallas as pl
from jax.experimental.pallas import tpu as pltpu


def _round_up(x, m):
    return (x + m - 1) // m * m


def _conv_block_kernel(x_ref, w1_ref, b1_ref, w2_ref, b2_ref, o_ref, yflat_ref,
                       *, H, W, Cp, base):
    """Fused conv3x3->BN->ReLU->conv3x3->BN->ReLU for one image.

    x_ref:     (P0, Cp)    flattened spatially-padded, lane-padded input
    w*_ref:    (9, Cp, Cp) per-tap folded conv weights (k = kh*3+kw)
    b*_ref:    (1, Cp)     folded BN biases
    o_ref:     (M, Cp)     flattened output, M = H*(W+2) (2 junk cols per row)
    yflat_ref: (P0, Cp)    VMEM scratch: layer-1 activation with zero halo
    """
    Wp = W + 2
    M = H * Wp                  # flattened conv output rows (incl. junk cols)
    S = base + Wp + 1           # flat row of real pixel (0,0) in layer-2 input
    P0 = yflat_ref.shape[0]

    def conv3x3(tap, w_ref, b_ref):
        """3x3 conv = 9 accumulating (M,Cp)x(Cp,Cp) MXU dots + bias + ReLU."""
        acc = None
        for kh in range(3):
            for kw in range(3):
                t = tap(kh * Wp + kw)                     # (M, Cp) shifted window
                c = jnp.dot(t, w_ref[kh * 3 + kw],
                            preferred_element_type=jnp.float32)
                acc = c if acc is None else acc + c
        return jnp.maximum(acc + b_ref[...], 0.0)

    # ---- layer 1: conv3x3 + folded-BN + ReLU, result kept in VMEM ----
    y1 = conv3x3(lambda off: x_ref[pl.ds(off, M), :], w1_ref, b1_ref)

    # The 2 wrap-around columns per flattened row are junk; they land exactly
    # on the layer-2 halo columns, so force them to zero before storing.
    col = lax.broadcasted_iota(jnp.int32, (M, Cp), 0) % Wp
    y1 = jnp.where(col < W, y1, 0.0)

    # Zero only the halo end-caps; the interior (halo columns included, thanks
    # to the mask above) is completely rewritten every grid step.
    yflat_ref[0:S, :] = jnp.zeros((S, Cp), jnp.float32)
    yflat_ref[S + M:P0, :] = jnp.zeros((P0 - S - M, Cp), jnp.float32)
    yflat_ref[S:S + M, :] = y1            # 8-aligned sublane offset (by `base`)

    # ---- layer 2: conv3x3 + folded-BN + ReLU, straight to the output ----
    y2 = conv3x3(lambda off: yflat_ref[pl.ds(base + off, M), :], w2_ref, b2_ref)
    o_ref[...] = y2.astype(o_ref.dtype)


def conv_block_pallas(x_flat, w1, b1, w2, b2, *, H, W, Cp, base, P0):
    """x_flat: (N, P0, Cp) flattened padded NHWC input (lane-padded to Cp)."""
    N = x_flat.shape[0]
    M = H * (W + 2)
    kernel = partial(_conv_block_kernel, H=H, W=W, Cp=Cp, base=base)
    return pl.pallas_call(
        kernel,
        out_shape=jax.ShapeDtypeStruct((N, M, Cp), jnp.float32),
        grid_spec=pltpu.PrefetchScalarGridSpec(
            num_scalar_prefetch=0,
            grid=(N,),
            in_specs=[
                pl.BlockSpec((None, P0, Cp), lambda n: (n, 0, 0)),
                pl.BlockSpec((9, Cp, Cp), lambda n: (0, 0, 0)),
                pl.BlockSpec((1, Cp), lambda n: (0, 0)),
                pl.BlockSpec((9, Cp, Cp), lambda n: (0, 0, 0)),
                pl.BlockSpec((1, Cp), lambda n: (0, 0)),
            ],
            out_specs=pl.BlockSpec((None, M, Cp), lambda n: (n, 0, 0)),
            scratch_shapes=[
                pltpu.VMEM((P0, Cp), jnp.float32),   # layer-1 activation + halo
            ],
        ),
        compiler_params=pltpu.CompilerParams(
            dimension_semantics=("parallel",),
            vmem_limit_bytes=32 * 1024 * 1024,
        ),
    )(x_flat, w1, b1, w2, b2)


def init_conv_block_params(key, ch_in, ch_out, dtype=jnp.float32):
    """Deterministic init mirroring the PyTorch module.

    Conv weights: PyTorch (Cout, Cin, 3, 3), no bias; BatchNorm default init
    (gamma=1, beta=0, mean=0, var=1, eps=1e-5) folded into the conv weights
    (scale) plus a per-output-channel bias.  Kernel-side params are
    channel-padded to Cp and laid out per-tap as (9, Cp, Cp).
    """
    k1, k2 = jax.random.split(key)
    eps = 1e-5
    Cp = _round_up(max(ch_in, ch_out, 1), 128)

    def conv_w(k, cin, cout):
        fan_in = cin * 3 * 3
        bound = (1.0 / fan_in) ** 0.5
        return jax.random.uniform(k, (cout, cin, 3, 3), dtype,
                                  minval=-bound, maxval=bound)

    def fold_and_pack(w_oihw, cin, cout):
        gamma = jnp.ones((cout,), jnp.float32)
        beta = jnp.zeros((cout,), jnp.float32)
        mean = jnp.zeros((cout,), jnp.float32)
        var = jnp.ones((cout,), jnp.float32)
        scale = gamma / jnp.sqrt(var + eps)          # fold in f32
        bias = beta - mean * scale
        w_hwio = jnp.transpose(w_oihw, (2, 3, 1, 0)).astype(jnp.float32)
        w_folded = w_hwio * scale[None, None, None, :]           # (3,3,cin,cout)
        w_taps = jnp.zeros((9, Cp, Cp), jnp.float32)
        w_taps = w_taps.at[:, :cin, :cout].set(w_folded.reshape(9, cin, cout))
        b_pad = jnp.zeros((1, Cp), jnp.float32).at[0, :cout].set(bias)
        return w_taps, b_pad, w_hwio, scale, bias

    w1_oihw = conv_w(k1, ch_in, ch_out)
    w2_oihw = conv_w(k2, ch_out, ch_out)
    w1_taps, b1_pad, w1_hwio, s1, bb1 = fold_and_pack(w1_oihw, ch_in, ch_out)
    w2_taps, b2_pad, w2_hwio, s2, bb2 = fold_and_pack(w2_oihw, ch_out, ch_out)

    return {
        "Cp": Cp, "ch_in": ch_in, "ch_out": ch_out,
        # kernel-side (folded, padded, per-tap)
        "w1_taps": w1_taps, "b1_pad": b1_pad,
        "w2_taps": w2_taps, "b2_pad": b2_pad,
        # reference-side (unfolded)
        "w1_hwio": w1_hwio, "scale1": s1, "bias1": bb1,
        "w2_hwio": w2_hwio, "scale2": s2, "bias2": bb2,
    }


def conv_block_forward(x_nchw, params):
    """PyTorch-facing forward: NCHW in, NCHW out."""
    N, Cin, H, W = x_nchw.shape
    Cp, Cout = params["Cp"], params["ch_out"]
    Wp = W + 2
    base = (-(W + 3)) % 8                         # makes the in-kernel
    P0 = _round_up((H + 2) * Wp + 2 + base, 8)    # activation store 8-aligned

    x = jnp.transpose(x_nchw, (0, 2, 3, 1))                       # NCHW -> NHWC
    # 1-px spatial halo + lane pad to Cp in one pad (lane-dense input DMA).
    x = jnp.pad(x, ((0, 0), (1, 1), (1, 1), (0, Cp - Cin)))
    x_flat = x.reshape(N, (H + 2) * Wp, Cp)
    x_flat = jnp.pad(x_flat, ((0, 0), (0, P0 - (H + 2) * Wp), (0, 0)))

    y = conv_block_pallas(x_flat, params["w1_taps"], params["b1_pad"],
                          params["w2_taps"], params["b2_pad"],
                          H=H, W=W, Cp=Cp, base=base, P0=P0)
    y = y.reshape(N, H, Wp, Cp)[:, :, :W, :Cout]  # drop junk cols + lane pad
    return jnp.transpose(y, (0, 3, 1, 2))         # NHWC -> NCHW


def _reference_forward(x_nchw, params):
    """Pure-JAX reference (lax conv, unfolded BN) for correctness checking."""
    def one(x, w_hwio, scale, bias):
        y = lax.conv_general_dilated(
            x, w_hwio, window_strides=(1, 1), padding=((1, 1), (1, 1)),
            dimension_numbers=("NCHW", "HWIO", "NCHW"))
        y = y * scale.reshape(1, -1, 1, 1) + bias.reshape(1, -1, 1, 1)
        return jnp.maximum(y, 0.0)

    x = one(x_nchw, params["w1_hwio"], params["scale1"], params["bias1"])
    x = one(x, params["w2_hwio"], params["scale2"], params["bias2"])
    return x


if __name__ == "__main__":
    key = jax.random.PRNGKey(0)
    kx, kp = jax.random.split(key)

    N, C_IN, C_OUT, H, W = 2, 4, 8, 16, 16
    x = jax.random.normal(kx, (N, C_IN, H, W), dtype=jnp.float32)
    params = init_conv_block_params(kp, C_IN, C_OUT)

    out = jax.block_until_ready(conv_block_forward(x, params))
    ref = jax.block_until_ready(_reference_forward(x, params))

    assert out.shape == (N, C_OUT, H, W)
    assert jnp.allclose(out, ref, atol=1e-4, rtol=1e-4)

    print("KERNEL_OK")
</pallas_src>

<mosaic_0001>
module attributes {stable_mosaic.version = 11 : i64} {
  func.func @_conv_block_kernel(%arg0: i32, %arg1: memref<1x336x128xf32, #tpu.memory_space<vmem>>, %arg2: memref<9x128x128xf32, #tpu.memory_space<vmem>>, %arg3: memref<1x128xf32, #tpu.memory_space<vmem>>, %arg4: memref<9x128x128xf32, #tpu.memory_space<vmem>>, %arg5: memref<1x128xf32, #tpu.memory_space<vmem>>, %arg6: memref<1x288x128xf32, #tpu.memory_space<vmem>>, %arg7: memref<336x128xf32, #tpu.memory_space<vmem>>) attributes {dimension_semantics = [#tpu.dimension_semantics<parallel>], iteration_bounds = array<i64: 2>, scalar_prefetch = 0 : i64, scratch_operands = 1 : i64, tpu.core_type = #tpu.core_type<tc>, window_params = [{transform_indices = @transform_0, window_bounds = array<i64: 1, 336, 128>}, {pipeline_mode = #tpu.pipeline_mode<synchronous>, transform_indices = @transform_1, window_bounds = array<i64: 9, 128, 128>}, {pipeline_mode = #tpu.pipeline_mode<synchronous>, transform_indices = @transform_2, window_bounds = array<i64: 1, 128>}, {pipeline_mode = #tpu.pipeline_mode<synchronous>, transform_indices = @transform_3, window_bounds = array<i64: 9, 128, 128>}, {pipeline_mode = #tpu.pipeline_mode<synchronous>, transform_indices = @transform_4, window_bounds = array<i64: 1, 128>}, {transform_indices = @transform_5, window_bounds = array<i64: 1, 288, 128>}]} {
    %c0 = arith.constant 0 : index
    %c0_0 = arith.constant 0 : index
    %c0_1 = arith.constant 0 : index
    %0 = vector.load %arg1[%c0, %c0_0, %c0_1] : memref<1x336x128xf32, #tpu.memory_space<vmem>>, vector<1x288x128xf32>
    %1 = vector.shape_cast %0 : vector<1x288x128xf32> to vector<288x128xf32>
    %c0_2 = arith.constant 0 : index
    %c0_3 = arith.constant 0 : index
    %c0_4 = arith.constant 0 : index
    %2 = vector.load %arg2[%c0_2, %c0_3, %c0_4] : memref<9x128x128xf32, #tpu.memory_space<vmem>>, vector<1x128x128xf32>
    %3 = vector.shape_cast %2 : vector<1x128x128xf32> to vector<128x128xf32>
    %cst = arith.constant dense<0.000000e+00> : vector<288x128xf32>
    %4 = tpu.matmul %1, %3, %cst {dimension_numbers = #tpu.dot_dimension_numbers<[1], [0], [0], [1], [0, 0, 1, 1], [], []>} : vector<288x128xf32>, vector<128x128xf32>, vector<288x128xf32> -> vector<288x128xf32>
    %c0_5 = arith.constant 0 : index
    %c1 = arith.constant 1 : index
    %c0_6 = arith.constant 0 : index
    %5 = vector.load %arg1[%c0_5, %c1, %c0_6] : memref<1x336x128xf32, #tpu.memory_space<vmem>>, vector<1x288x128xf32>
    %6 = vector.shape_cast %5 : vector<1x288x128xf32> to vector<288x128xf32>
    %c1_7 = arith.constant 1 : index
    %c0_8 = arith.constant 0 : index
    %c0_9 = arith.constant 0 : index
    %7 = vector.load %arg2[%c1_7, %c0_8, %c0_9] : memref<9x128x128xf32, #tpu.memory_space<vmem>>, vector<1x128x128xf32>
    %8 = vector.shape_cast %7 : vector<1x128x128xf32> to vector<128x128xf32>
    %cst_10 = arith.constant dense<0.000000e+00> : vector<288x128xf32>
    %9 = tpu.matmul %6, %8, %cst_10 {dimension_numbers = #tpu.dot_dimension_numbers<[1], [0], [0], [1], [0, 0, 1, 1], [], []>} : vector<288x128xf32>, vector<128x128xf32>, vector<288x128xf32> -> vector<288x128xf32>
    %10 = arith.addf %4, %9 : vector<288x128xf32>
    %c0_11 = arith.constant 0 : index
    %c2 = arith.constant 2 : index
    %c0_12 = arith.constant 0 : index
    %11 = vector.load %arg1[%c0_11, %c2, %c0_12] : memref<1x336x128xf32, #tpu.memory_space<vmem>>, vector<1x288x128xf32>
    %12 = vector.shape_cast %11 : vector<1x288x128xf32> to vector<288x128xf32>
    %c2_13 = arith.constant 2 : index
    %c0_14 = arith.constant 0 : index
    %c0_15 = arith.constant 0 : index
    %13 = vector.load %arg2[%c2_13, %c0_14, %c0_15] : memref<9x128x128xf32, #tpu.memory_space<vmem>>, vector<1x128x128xf32>
    %14 = vector.shape_cast %13 : vector<1x128x128xf32> to vector<128x128xf32>
    %cst_16 = arith.constant dense<0.000000e+00> : vector<288x128xf32>
    %15 = tpu.matmul %12, %14, %cst_16 {dimension_numbers = #tpu.dot_dimension_numbers<[1], [0], [0], [1], [0, 0, 1, 1], [], []>} : vector<288x128xf32>, vector<128x128xf32>, vector<288x128xf32> -> vector<288x128xf32>
    %16 = arith.addf %10, %15 : vector<288x128xf32>
    %c0_17 = arith.constant 0 : index
    %c18 = arith.constant 18 : index
    %c0_18 = arith.constant 0 : index
    %17 = vector.load %arg1[%c0_17, %c18, %c0_18] : memref<1x336x128xf32, #tpu.memory_space<vmem>>, vector<1x288x128xf32>
    %18 = vector.shape_cast %17 : vector<1x288x128xf32> to vector<288x128xf32>
    %c3 = arith.constant 3 : index
    %c0_19 = arith.constant 0 : index
    %c0_20 = arith.constant 0 : index
    %19 = vector.load %arg2[%c3, %c0_19, %c0_20] : memref<9x128x128xf32, #tpu.memory_space<vmem>>, vector<1x128x128xf32>
    %20 = vector.shape_cast %19 : vector<1x128x128xf32> to vector<128x128xf32>
    %cst_21 = arith.constant dense<0.000000e+00> : vector<288x128xf32>
    %21 = tpu.matmul %18, %20, %cst_21 {dimension_numbers = #tpu.dot_dimension_numbers<[1], [0], [0], [1], [0, 0, 1, 1], [], []>} : vector<288x128xf32>, vector<128x128xf32>, vector<288x128xf32> -> vector<288x128xf32>
    %22 = arith.addf %16, %21 : vector<288x128xf32>
    %c0_22 = arith.constant 0 : index
    %c19 = arith.constant 19 : index
    %c0_23 = arith.constant 0 : index
    %23 = vector.load %arg1[%c0_22, %c19, %c0_23] : memref<1x336x128xf32, #tpu.memory_space<vmem>>, vector<1x288x128xf32>
    %24 = vector.shape_cast %23 : vector<1x288x128xf32> to vector<288x128xf32>
    %c4 = arith.constant 4 : index
    %c0_24 = arith.constant 0 : index
    %c0_25 = arith.constant 0 : index
    %25 = vector.load %arg2[%c4, %c0_24, %c0_25] : memref<9x128x128xf32, #tpu.memory_space<vmem>>, vector<1x128x128xf32>
    %26 = vector.shape_cast %25 : vector<1x128x128xf32> to vector<128x128xf32>
    %cst_26 = arith.constant dense<0.000000e+00> : vector<288x128xf32>
    %27 = tpu.matmul %24, %26, %cst_26 {dimension_numbers = #tpu.dot_dimension_numbers<[1], [0], [0], [1], [0, 0, 1, 1], [], []>} : vector<288x128xf32>, vector<128x128xf32>, vector<288x128xf32> -> vector<288x128xf32>
    %28 = arith.addf %22, %27 : vector<288x128xf32>
    %c0_27 = arith.constant 0 : index
    %c20 = arith.constant 20 : index
    %c0_28 = arith.constant 0 : index
    %29 = vector.load %arg1[%c0_27, %c20, %c0_28] : memref<1x336x128xf32, #tpu.memory_space<vmem>>, vector<1x288x128xf32>
    %30 = vector.shape_cast %29 : vector<1x288x128xf32> to vector<288x128xf32>
    %c5 = arith.constant 5 : index
    %c0_29 = arith.constant 0 : index
    %c0_30 = arith.constant 0 : index
    %31 = vector.load %arg2[%c5, %c0_29, %c0_30] : memref<9x128x128xf32, #tpu.memory_space<vmem>>, vector<1x128x128xf32>
    %32 = vector.shape_cast %31 : vector<1x128x128xf32> to vector<128x128xf32>
    %cst_31 = arith.constant dense<0.000000e+00> : vector<288x128xf32>
    %33 = tpu.matmul %30, %32, %cst_31 {dimension_numbers = #tpu.dot_dimension_numbers<[1], [0], [0], [1], [0, 0, 1, 1], [], []>} : vector<288x128xf32>, vector<128x128xf32>, vector<288x128xf32> -> vector<288x128xf32>
    %34 = arith.addf %28, %33 : vector<288x128xf32>
    %c0_32 = arith.constant 0 : index
    %c36 = arith.constant 36 : index
    %c0_33 = arith.constant 0 : index
    %35 = vector.load %arg1[%c0_32, %c36, %c0_33] : memref<1x336x128xf32, #tpu.memory_space<vmem>>, vector<1x288x128xf32>
    %36 = vector.shape_cast %35 : vector<1x288x128xf32> to vector<288x128xf32>
    %c6 = arith.constant 6 : index
    %c0_34 = arith.constant 0 : index
    %c0_35 = arith.constant 0 : index
    %37 = vector.load %arg2[%c6, %c0_34, %c0_35] : memref<9x128x128xf32, #tpu.memory_space<vmem>>, vector<1x128x128xf32>
    %38 = vector.shape_cast %37 : vector<1x128x128xf32> to vector<128x128xf32>
    %cst_36 = arith.constant dense<0.000000e+00> : vector<288x128xf32>
    %39 = tpu.matmul %36, %38, %cst_36 {dimension_numbers = #tpu.dot_dimension_numbers<[1], [0], [0], [1], [0, 0, 1, 1], [], []>} : vector<288x128xf32>, vector<128x128xf32>, vector<288x128xf32> -> vector<288x128xf32>
    %40 = arith.addf %34, %39 : vector<288x128xf32>
    %c0_37 = arith.constant 0 : index
    %c37 = arith.constant 37 : index
    %c0_38 = arith.constant 0 : index
    %41 = vector.load %arg1[%c0_37, %c37, %c0_38] : memref<1x336x128xf32, #tpu.memory_space<vmem>>, vector<1x288x128xf32>
    %42 = vector.shape_cast %41 : vector<1x288x128xf32> to vector<288x128xf32>
    %c7 = arith.constant 7 : index
    %c0_39 = arith.constant 0 : index
    %c0_40 = arith.constant 0 : index
    %43 = vector.load %arg2[%c7, %c0_39, %c0_40] : memref<9x128x128xf32, #tpu.memory_space<vmem>>, vector<1x128x128xf32>
    %44 = vector.shape_cast %43 : vector<1x128x128xf32> to vector<128x128xf32>
    %cst_41 = arith.constant dense<0.000000e+00> : vector<288x128xf32>
    %45 = tpu.matmul %42, %44, %cst_41 {dimension_numbers = #tpu.dot_dimension_numbers<[1], [0], [0], [1], [0, 0, 1, 1], [], []>} : vector<288x128xf32>, vector<128x128xf32>, vector<288x128xf32> -> vector<288x128xf32>
    %46 = arith.addf %40, %45 : vector<288x128xf32>
    %c0_42 = arith.constant 0 : index
    %c38 = arith.constant 38 : index
    %c0_43 = arith.constant 0 : index
    %47 = vector.load %arg1[%c0_42, %c38, %c0_43] : memref<1x336x128xf32, #tpu.memory_space<vmem>>, vector<1x288x128xf32>
    %48 = vector.shape_cast %47 : vector<1x288x128xf32> to vector<288x128xf32>
    %c8 = arith.constant 8 : index
    %c0_44 = arith.constant 0 : index
    %c0_45 = arith.constant 0 : index
    %49 = vector.load %arg2[%c8, %c0_44, %c0_45] : memref<9x128x128xf32, #tpu.memory_space<vmem>>, vector<1x128x128xf32>
    %50 = vector.shape_cast %49 : vector<1x128x128xf32> to vector<128x128xf32>
    %cst_46 = arith.constant dense<0.000000e+00> : vector<288x128xf32>
    %51 = tpu.matmul %48, %50, %cst_46 {dimension_numbers = #tpu.dot_dimension_numbers<[1], [0], [0], [1], [0, 0, 1, 1], [], []>} : vector<288x128xf32>, vector<128x128xf32>, vector<288x128xf32> -> vector<288x128xf32>
    %52 = arith.addf %46, %51 : vector<288x128xf32>
    %c0_47 = arith.constant 0 : index
    %c0_48 = arith.constant 0 : index
    %53 = vector.load %arg3[%c0_47, %c0_48] : memref<1x128xf32, #tpu.memory_space<vmem>>, vector<1x128xf32>
    %54 = vector.broadcast %53 : vector<1x128xf32> to vector<288x128xf32>
    %55 = arith.addf %52, %54 : vector<288x128xf32>
    %cst_49 = arith.constant 0.000000e+00 : f32
    %56 = vector.broadcast %cst_49 : f32 to vector<288x128xf32>
    %57 = arith.maximumf %55, %56 : vector<288x128xf32>
    %58 = tpu.iota {dimensions = array<i32: 0>} : vector<288x128xi32>
    %c18_i32 = arith.constant 18 : i32
    %c0_i32 = arith.constant 0 : i32
    %59 = arith.cmpi eq, %c18_i32, %c0_i32 : i32
    %c1_i32 = arith.constant 1 : i32
    %60 = arith.select %59, %c1_i32, %c18_i32 : i32
    %61 = vector.broadcast %60 : i32 to vector<288x128xi32>
    %62 = arith.remsi %58, %61 : vector<288x128xi32>
    %c0_i32_50 = arith.constant 0 : i32
    %63 = vector.broadcast %c0_i32_50 : i32 to vector<288x128xi32>
    %64 = arith.cmpi ne, %62, %63 : vector<288x128xi32>
    %c0_i32_51 = arith.constant 0 : i32
    %65 = vector.broadcast %c0_i32_51 : i32 to vector<288x128xi32>
    %66 = arith.cmpi slt, %62, %65 : vector<288x128xi32>
    %c0_i32_52 = arith.constant 0 : i32
    %67 = arith.cmpi slt, %60, %c0_i32_52 : i32
    %68 = vector.broadcast %67 : i1 to vector<288x128xi1>
    %69 = vector.broadcast %68 : vector<288x128xi1> to vector<288x128xi1>
    %70 = arith.xori %66, %69 : vector<288x128xi1>
    %71 = arith.andi %70, %64 : vector<288x128xi1>
    %72 = vector.broadcast %60 : i32 to vector<288x128xi32>
    %73 = arith.addi %62, %72 : vector<288x128xi32>
    %74 = arith.select %71, %73, %62 : vector<288x128xi1>, vector<288x128xi32>
    %c16_i32 = arith.constant 16 : i32
    %75 = vector.broadcast %c16_i32 : i32 to vector<288x128xi32>
    %76 = arith.cmpi slt, %74, %75 : vector<288x128xi32>
    %cst_53 = arith.constant 0.000000e+00 : f32
    %77 = vector.broadcast %cst_53 : f32 to vector<288x128xf32>
    %78 = arith.select %76, %57, %77 : vector<288x128xi1>, vector<288x128xf32>
    %cst_54 = arith.constant 0.000000e+00 : f32
    %79 = vector.broadcast %cst_54 : f32 to vector<24x128xf32>
    %c0_55 = arith.constant 0 : index
    %c0_56 = arith.constant 0 : index
    %80 = vector.load %arg7[%c0_55, %c0_56] : memref<336x128xf32, #tpu.memory_space<vmem>>, vector<24x128xf32>
    tpu.vector_store %arg7[%c0_55, %c0_56], %79 {strides = array<i32>} : memref<336x128xf32, #tpu.memory_space<vmem>>, vector<24x128xf32>,
    %cst_57 = arith.constant 0.000000e+00 : f32
    %81 = vector.broadcast %cst_57 : f32 to vector<24x128xf32>
    %c312 = arith.constant 312 : index
    %c0_58 = arith.constant 0 : index
    %82 = vector.load %arg7[%c312, %c0_58] : memref<336x128xf32, #tpu.memory_space<vmem>>, vector<24x128xf32>
    tpu.vector_store %arg7[%c312, %c0_58], %81 {strides = array<i32>} : memref<336x128xf32, #tpu.memory_space<vmem>>, vector<24x128xf32>,
    %c24 = arith.constant 24 : index
    %c0_59 = arith.constant 0 : index
    %83 = vector.load %arg7[%c24, %c0_59] : memref<336x128xf32, #tpu.memory_space<vmem>>, vector<288x128xf32>
    tpu.vector_store %arg7[%c24, %c0_59], %78 {strides = array<i32>} : memref<336x128xf32, #tpu.memory_space<vmem>>, vector<288x128xf32>,
    %c5_60 = arith.constant 5 : index
    %c0_61 = arith.constant 0 : index
    %84 = vector.load %arg7[%c5_60, %c0_61] : memref<336x128xf32, #tpu.memory_space<vmem>>, vector<288x128xf32>
    %c0_62 = arith.constant 0 : index
    %c0_63 = arith.constant 0 : index
    %c0_64 = arith.constant 0 : index
    %85 = vector.load %arg4[%c0_62, %c0_63, %c0_64] : memref<9x128x128xf32, #tpu.memory_space<vmem>>, vector<1x128x128xf32>
    %86 = vector.shape_cast %85 : vector<1x128x128xf32> to vector<128x128xf32>
    %cst_65 = arith.constant dense<0.000000e+00> : vector<288x128xf32>
    %87 = tpu.matmul %84, %86, %cst_65 {dimension_numbers = #tpu.dot_dimension_numbers<[1], [0], [0], [1], [0, 0, 1, 1], [], []>} : vector<288x128xf32>, vector<128x128xf32>, vector<288x128xf32> -> vector<288x128xf32>
    %c6_66 = arith.constant 6 : index
    %c0_67 = arith.constant 0 : index
    %88 = vector.load %arg7[%c6_66, %c0_67] : memref<336x128xf32, #tpu.memory_space<vmem>>, vector<288x128xf32>
    %c1_68 = arith.constant 1 : index
    %c0_69 = arith.constant 0 : index
    %c0_70 = arith.constant 0 : index
    %89 = vector.load %arg4[%c1_68, %c0_69, %c0_70] : memref<9x128x128xf32, #tpu.memory_space<vmem>>, vector<1x128x128xf32>
    %90 = vector.shape_cast %89 : vector<1x128x128xf32> to vector<128x128xf32>
    %cst_71 = arith.constant dense<0.000000e+00> : vector<288x128xf32>
    %91 = tpu.matmul %88, %90, %cst_71 {dimension_numbers = #tpu.dot_dimension_numbers<[1], [0], [0], [1], [0, 0, 1, 1], [], []>} : vector<288x128xf32>, vector<128x128xf32>, vector<288x128xf32> -> vector<288x128xf32>
    %92 = arith.addf %87, %91 : vector<288x128xf32>
    %c7_72 = arith.constant 7 : index
    %c0_73 = arith.constant 0 : index
    %93 = vector.load %arg7[%c7_72, %c0_73] : memref<336x128xf32, #tpu.memory_space<vmem>>, vector<288x128xf32>
    %c2_74 = arith.constant 2 : index
    %c0_75 = arith.constant 0 : index
    %c0_76 = arith.constant 0 : index
    %94 = vector.load %arg4[%c2_74, %c0_75, %c0_76] : memref<9x128x128xf32, #tpu.memory_space<vmem>>, vector<1x128x128xf32>
    %95 = vector.shape_cast %94 : vector<1x128x128xf32> to vector<128x128xf32>
    %cst_77 = arith.constant dense<0.000000e+00> : vector<288x128xf32>
    %96 = tpu.matmul %93, %95, %cst_77 {dimension_numbers = #tpu.dot_dimension_numbers<[1], [0], [0], [1], [0, 0, 1, 1], [], []>} : vector<288x128xf32>, vector<128x128xf32>, vector<288x128xf32> -> vector<288x128xf32>
    %97 = arith.addf %92, %96 : vector<288x128xf32>
    %c23 = arith.constant 23 : index
    %c0_78 = arith.constant 0 : index
    %98 = vector.load %arg7[%c23, %c0_78] : memref<336x128xf32, #tpu.memory_space<vmem>>, vector<288x128xf32>
    %c3_79 = arith.constant 3 : index
    %c0_80 = arith.constant 0 : index
    %c0_81 = arith.constant 0 : index
    %99 = vector.load %arg4[%c3_79, %c0_80, %c0_81] : memref<9x128x128xf32, #tpu.memory_space<vmem>>, vector<1x128x128xf32>
    %100 = vector.shape_cast %99 : vector<1x128x128xf32> to vector<128x128xf32>
    %cst_82 = arith.constant dense<0.000000e+00> : vector<288x128xf32>
    %101 = tpu.matmul %98, %100, %cst_82 {dimension_numbers = #tpu.dot_dimension_numbers<[1], [0], [0], [1], [0, 0, 1, 1], [], []>} : vector<288x128xf32>, vector<128x128xf32>, vector<288x128xf32> -> vector<288x128xf32>
    %102 = arith.addf %97, %101 : vector<288x128xf32>
    %c24_83 = arith.constant 24 : index
    %c0_84 = arith.constant 0 : index
    %103 = vector.load %arg7[%c24_83, %c0_84] : memref<336x128xf32, #tpu.memory_space<vmem>>, vector<288x128xf32>
    %c4_85 = arith.constant 4 : index
    %c0_86 = arith.constant 0 : index
    %c0_87 = arith.constant 0 : index
    %104 = vector.load %arg4[%c4_85, %c0_86, %c0_87] : memref<9x128x128xf32, #tpu.memory_space<vmem>>, vector<1x128x128xf32>
    %105 = vector.shape_cast %104 : vector<1x128x128xf32> to vector<128x128xf32>
    %cst_88 = arith.constant dense<0.000000e+00> : vector<288x128xf32>
    %106 = tpu.matmul %103, %105, %cst_88 {dimension_numbers = #tpu.dot_dimension_numbers<[1], [0], [0], [1], [0, 0, 1, 1], [], []>} : vector<288x128xf32>, vector<128x128xf32>, vector<288x128xf32> -> vector<288x128xf32>
    %107 = arith.addf %102, %106 : vector<288x128xf32>
    %c25 = arith.constant 25 : index
    %c0_89 = arith.constant 0 : index
    %108 = vector.load %arg7[%c25, %c0_89] : memref<336x128xf32, #tpu.memory_space<vmem>>, vector<288x128xf32>
    %c5_90 = arith.constant 5 : index
    %c0_91 = arith.constant 0 : index
    %c0_92 = arith.constant 0 : index
    %109 = vector.load %arg4[%c5_90, %c0_91, %c0_92] : memref<9x128x128xf32, #tpu.memory_space<vmem>>, vector<1x128x128xf32>
    %110 = vector.shape_cast %109 : vector<1x128x128xf32> to vector<128x128xf32>
    %cst_93 = arith.constant dense<0.000000e+00> : vector<288x128xf32>
    %111 = tpu.matmul %108, %110, %cst_93 {dimension_numbers = #tpu.dot_dimension_numbers<[1], [0], [0], [1], [0, 0, 1, 1], [], []>} : vector<288x128xf32>, vector<128x128xf32>, vector<288x128xf32> -> vector<288x128xf32>
    %112 = arith.addf %107, %111 : vector<288x128xf32>
    %c41 = arith.constant 41 : index
    %c0_94 = arith.constant 0 : index
    %113 = vector.load %arg7[%c41, %c0_94] : memref<336x128xf32, #tpu.memory_space<vmem>>, vector<288x128xf32>
    %c6_95 = arith.constant 6 : index
    %c0_96 = arith.constant 0 : index
    %c0_97 = arith.constant 0 : index
    %114 = vector.load %arg4[%c6_95, %c0_96, %c0_97] : memref<9x128x128xf32, #tpu.memory_space<vmem>>, vector<1x128x128xf32>
    %115 = vector.shape_cast %114 : vector<1x128x128xf32> to vector<128x128xf32>
    %cst_98 = arith.constant dense<0.000000e+00> : vector<288x128xf32>
    %116 = tpu.matmul %113, %115, %cst_98 {dimension_numbers = #tpu.dot_dimension_numbers<[1], [0], [0], [1], [0, 0, 1, 1], [], []>} : vector<288x128xf32>, vector<128x128xf32>, vector<288x128xf32> -> vector<288x128xf32>
    %117 = arith.addf %112, %116 : vector<288x128xf32>
    %c42 = arith.constant 42 : index
    %c0_99 = arith.constant 0 : index
    %118 = vector.load %arg7[%c42, %c0_99] : memref<336x128xf32, #tpu.memory_space<vmem>>, vector<288x128xf32>
    %c7_100 = arith.constant 7 : index
    %c0_101 = arith.constant 0 : index
    %c0_102 = arith.constant 0 : index
    %119 = vector.load %arg4[%c7_100, %c0_101, %c0_102] : memref<9x128x128xf32, #tpu.memory_space<vmem>>, vector<1x128x128xf32>
    %120 = vector.shape_cast %119 : vector<1x128x128xf32> to vector<128x128xf32>
    %cst_103 = arith.constant dense<0.000000e+00> : vector<288x128xf32>
    %121 = tpu.matmul %118, %120, %cst_103 {dimension_numbers = #tpu.dot_dimension_numbers<[1], [0], [0], [1], [0, 0, 1, 1], [], []>} : vector<288x128xf32>, vector<128x128xf32>, vector<288x128xf32> -> vector<288x128xf32>
    %122 = arith.addf %117, %121 : vector<288x128xf32>
    %c43 = arith.constant 43 : index
    %c0_104 = arith.constant 0 : index
    %123 = vector.load %arg7[%c43, %c0_104] : memref<336x128xf32, #tpu.memory_space<vmem>>, vector<288x128xf32>
    %c8_105 = arith.constant 8 : index
    %c0_106 = arith.constant 0 : index
    %c0_107 = arith.constant 0 : index
    %124 = vector.load %arg4[%c8_105, %c0_106, %c0_107] : memref<9x128x128xf32, #tpu.memory_space<vmem>>, vector<1x128x128xf32>
    %125 = vector.shape_cast %124 : vector<1x128x128xf32> to vector<128x128xf32>
    %cst_108 = arith.constant dense<0.000000e+00> : vector<288x128xf32>
    %126 = tpu.matmul %123, %125, %cst_108 {dimension_numbers = #tpu.dot_dimension_numbers<[1], [0], [0], [1], [0, 0, 1, 1], [], []>} : vector<288x128xf32>, vector<128x128xf32>, vector<288x128xf32> -> vector<288x128xf32>
    %127 = arith.addf %122, %126 : vector<288x128xf32>
    %c0_109 = arith.constant 0 : index
    %c0_110 = arith.constant 0 : index
    %128 = vector.load %arg5[%c0_109, %c0_110] : memref<1x128xf32, #tpu.memory_space<vmem>>, vector<1x128xf32>
    %129 = vector.broadcast %128 : vector<1x128xf32> to vector<288x128xf32>
    %130 = arith.addf %127, %129 : vector<288x128xf32>
    %cst_111 = arith.constant 0.000000e+00 : f32
    %131 = vector.broadcast %cst_111 : f32 to vector<288x128xf32>
    %132 = arith.maximumf %130, %131 : vector<288x128xf32>
    %c0_112 = arith.constant 0 : index
    %c0_113 = arith.constant 0 : index
    %c0_114 = arith.constant 0 : index
    %133 = vector.load %arg6[%c0_112, %c0_113, %c0_114] : memref<1x288x128xf32, #tpu.memory_space<vmem>>, vector<1x288x128xf32>
    %134 = vector.shape_cast %133 : vector<1x288x128xf32> to vector<288x128xf32>
    %135 = vector.shape_cast %132 : vector<288x128xf32> to vector<1x288x128xf32>
    tpu.vector_store %arg6[%c0_112, %c0_113, %c0_114], %135 {strides = array<i32>} : memref<1x288x128xf32, #tpu.memory_space<vmem>>, vector<1x288x128xf32>,
    return
  }
  func.func @transform_0(%arg0: i32) -> (i32, i32, i32) {
    %c0_i32 = arith.constant 0 : i32
    %c0_i32_0 = arith.constant 0 : i32
    %c0_i32_1 = arith.constant 0 : i32
    return %arg0, %c0_i32, %c0_i32_0 : i32, i32, i32
  }
  func.func @transform_1(%arg0: i32) -> (i32, i32, i32) {
    %c0_i32 = arith.constant 0 : i32
    %c0_i32_0 = arith.constant 0 : i32
    %c0_i32_1 = arith.constant 0 : i32
    %c0_i32_2 = arith.constant 0 : i32
    return %c0_i32, %c0_i32_0, %c0_i32_1 : i32, i32, i32
  }
  func.func @transform_2(%arg0: i32) -> (i32, i32) {
    %c0_i32 = arith.constant 0 : i32
    %c0_i32_0 = arith.constant 0 : i32
    %c0_i32_1 = arith.constant 0 : i32
    return %c0_i32, %c0_i32_0 : i32, i32
  }
  func.func @transform_3(%arg0: i32) -> (i32, i32, i32) {
    %c0_i32 = arith.constant 0 : i32
    %c0_i32_0 = arith.constant 0 : i32
    %c0_i32_1 = arith.constant 0 : i32
    %c0_i32_2 = arith.constant 0 : i32
    return %c0_i32, %c0_i32_0, %c0_i32_1 : i32, i32, i32
  }
  func.func @transform_4(%arg0: i32) -> (i32, i32) {
    %c0_i32 = arith.constant 0 : i32
    %c0_i32_0 = arith.constant 0 : i32
    %c0_i32_1 = arith.constant 0 : i32
    return %c0_i32, %c0_i32_0 : i32, i32
  }
  func.func @transform_5(%arg0: i32) -> (i32, i32, i32) {
    %c0_i32 = arith.constant 0 : i32
    %c0_i32_0 = arith.constant 0 : i32
    %c0_i32_1 = arith.constant 0 : i32
    return %arg0, %c0_i32, %c0_i32_0 : i32, i32, i32
  }
}

</mosaic_0001>

<llo_original>
// kernel: tpu_custom_call.1
$region0: #{tpu_custom_call.1}
  #allocation0 [shape = 'u32[]', space=smem, size = 0x4, offset = 0x4, fixed_abs, tag = 'smem constant byte address 0x4 - core index']
  #allocation1 [shape = 'u32[144,128]{1,0:T(1,128)}', space=vmem, size = 0x12000, scoped, tag = 'internal scratch']
  #allocation2 [shape = 'f32[336,128]{1,0:T(8,128)}', space=vmem, size = 0x2a000, scoped, tag = 'scratch operand']
  %s0 = inlined_call_operand.hbm [shape: f32[2,336,128], index: 0, kind: input, shape index: {}]
  %s1 = inlined_call_operand.hbm [shape: f32[9,128,128], index: 1, kind: input, shape index: {}]
  %s2 = inlined_call_operand.vmem [shape: f32[1,128], index: 2, kind: input, shape index: {}]
  %s3 = inlined_call_operand.hbm [shape: f32[9,128,128], index: 3, kind: input, shape index: {}]
  %s4 = inlined_call_operand.vmem [shape: f32[1,128], index: 4, kind: input, shape index: {}]
  %s5 = inlined_call_operand.hbm [shape: f32[2,288,128], index: 5, kind: output, shape index: {}]
  %s6 = sld [smem:[#allocation0]]
  $region65: #{tpu_custom_call.1} parent=0
    _
  %s8 = ssub.s32 1, %s6
  %s9 = scalar_select 0, %s8, %s6
  $region1: #{tpu_custom_call.1} parent=0
    #allocation3 [shape = 'u8[344064]{0}', space=vmem, size = 0x54000, scoped, tag = 'input window, operand 0']
    #allocation4 [shape = 's32[2]{0}', space=sflag, size = 0x8, scoped, tag = 'scoped memory for tpu_custom_call.1']
    #allocation5 [shape = 's32[2]{0}', space=sflag, size = 0x8, scoped, tag = 'scoped memory for tpu_custom_call.1']
    #allocation6 [shape = 'u8[589824]{0}', space=vmem, size = 0x90000, scoped, tag = 'input window, operand 1, single buffered']
    #allocation7 [shape = 's32[1]{0}', space=sflag, size = 0x4, scoped, tag = 'scoped memory for tpu_custom_call.1']
    #allocation8 [shape = 'u8[589824]{0}', space=vmem, size = 0x90000, scoped, tag = 'input window, operand 3, single buffered']
    #allocation9 [shape = 'u8[294912]{0}', space=vmem, size = 0x48000, scoped, tag = 'output window, operand 0']
    %10 = vsyncpa [#allocation4], 0
    %s11 = scalar_lea.sflag [#allocation4], 1
    %12 = vsyncpa %s11, 0
    %13 = vsyncpa [#allocation7], 0
    %14 = vsyncpa [#allocation5], 0
    %s15 = scalar_lea.sflag [#allocation5], 1
    %16 = vsyncpa %s15, 0
    loop: start=0, step=1, limit=4
    $region2: #{tpu_custom_call.1} parent=1 // loop_pre_header
      _
    $region3: #{tpu_custom_call.1} parent=1 // loop_header
      %s18 = sphi 0, %s22
      %p19 = scmp.ge.s32.totalorder %s18, 4
      %s28 = sphi 0, %s30
      %s31 = sphi 0, %s28
      %s32 = sphi 0, %s31
      %s48 = sphi 0, %s32
      %s52 = sphi 0, %s52
      %s54 = sphi 0, %s52
      %s55 = sphi 0, %s54
      %s69 = sphi 0, %s55
      %s73 = sphi 0, %s73
      %s75 = sphi 0, %s73
      %s76 = sphi 0, %s75
      %s90 = sphi 0, %s76
      %s94 = sphi 0, %s94
      %s96 = sphi 0, %s94
      %s97 = sphi 0, %s96
      %s111 = sphi 0, %s97
      %s115 = sphi 0, %s115
      %s117 = sphi 0, %s115
      %s118 = sphi 0, %s117
      %s132 = sphi 0, %s118
      %s138 = sphi 0, %s140
      %s141 = sphi 0, %s138
      %s142 = sphi 0, %s141
      %s158 = sphi 0, %s142
    $region4: #{tpu_custom_call.1} parent=1 // loop_header_branch
      %21 = sbr.rel (%p19) target = $region8
    $region5: #{tpu_custom_call.1} parent=1 // loop_body
      %s23 = ssub.s32 %s18, 1
      %s24 = ssub.s32 %s18, 2
      %s25 = sadd.s32 %s18, 1
      %s26 = ssub.s32 %s18, %s25
      %p27 = scmp.eq.s32.totalorder %s26, 0
      %s29 = sadd.s32 %s28, 1
      %s30 = scalar_select %p27, %s28, %s29
      %p33 = pneg %p27
      %p34 = scmp.eq.s32.totalorder %s18, 1
      %p35 = por %p33, %p34
      %p36 = scmp.ne.s32.totalorder %s28, %s31
      %p37 = scmp.eq.s32.totalorder %s18, 0
      %p38 = por %p36, %p37
      %p39 = scmp.ne.s32.totalorder %s28, %s31
      %p40 = scmp.eq.s32.totalorder %s23, 1
      %p41 = por %p39, %p40
      %p42 = scmp.ne.s32.totalorder %s31, %s32
      %p43 = scmp.eq.s32.totalorder %s23, 0
      %p44 = por %p42, %p43
      %p45 = scmp.ne.s32.totalorder %s31, %s32
      %p46 = scmp.eq.s32.totalorder %s24, 1
      %p47 = por %p45, %p46
      %p49 = scmp.ne.s32.totalorder %s32, %s48
      %p50 = scmp.eq.s32.totalorder %s24, 0
      %p51 = por %p49, %p50
      %s53 = sadd.s32 %s52, 1
      %p56 = scmp.eq.s32.totalorder %s18, 1
      %p57 = scmp.ne.s32.totalorder %s52, %s54
      %p58 = scmp.eq.s32.totalorder %s18, 0
      %p59 = por %p57, %p58
      %p60 = scmp.ne.s32.totalorder %s52, %s54
      %p61 = scmp.eq.s32.totalorder %s23, 1
      %p62 = por %p60, %p61
      %p63 = scmp.ne.s32.totalorder %s54, %s55
      %p64 = scmp.eq.s32.totalorder %s23, 0
      %p65 = por %p63, %p64
      %p66 = scmp.ne.s32.totalorder %s54, %s55
      %p67 = scmp.eq.s32.totalorder %s24, 1
      %p68 = por %p66, %p67
      %p70 = scmp.ne.s32.totalorder %s55, %s69
      %p71 = scmp.eq.s32.totalorder %s24, 0
      %p72 = por %p70, %p71
      %s74 = sadd.s32 %s73, 1
      %p77 = scmp.eq.s32.totalorder %s18, 1
      %p78 = scmp.ne.s32.totalorder %s73, %s75
      %p79 = scmp.eq.s32.totalorder %s18, 0
      %p80 = por %p78, %p79
      %p81 = scmp.ne.s32.totalorder %s73, %s75
      %p82 = scmp.eq.s32.totalorder %s23, 1
      %p83 = por %p81, %p82
      %p84 = scmp.ne.s32.totalorder %s75, %s76
      %p85 = scmp.eq.s32.totalorder %s23, 0
      %p86 = por %p84, %p85
      %p87 = scmp.ne.s32.totalorder %s75, %s76
      %p88 = scmp.eq.s32.totalorder %s24, 1
      %p89 = por %p87, %p88
      %p91 = scmp.ne.s32.totalorder %s76, %s90
      %p92 = scmp.eq.s32.totalorder %s24, 0
      %p93 = por %p91, %p92
      %s95 = sadd.s32 %s94, 1
      %p98 = scmp.eq.s32.totalorder %s18, 1
      %p99 = scmp.ne.s32.totalorder %s94, %s96
      %p100 = scmp.eq.s32.totalorder %s18, 0
      %p101 = por %p99, %p100
      %p102 = scmp.ne.s32.totalorder %s94, %s96
      %p103 = scmp.eq.s32.totalorder %s23, 1
      %p104 = por %p102, %p103
      %p105 = scmp.ne.s32.totalorder %s96, %s97
      %p106 = scmp.eq.s32.totalorder %s23, 0
      %p107 = por %p105, %p106
      %p108 = scmp.ne.s32.totalorder %s96, %s97
      %p109 = scmp.eq.s32.totalorder %s24, 1
      %p110 = por %p108, %p109
      %p112 = scmp.ne.s32.totalorder %s97, %s111
      %p113 = scmp.eq.s32.totalorder %s24, 0
      %p114 = por %p112, %p113
      %s116 = sadd.s32 %s115, 1
      %p119 = scmp.eq.s32.totalorder %s18, 1
      %p120 = scmp.ne.s32.totalorder %s115, %s117
      %p121 = scmp.eq.s32.totalorder %s18, 0
      %p122 = por %p120, %p121
      %p123 = scmp.ne.s32.totalorder %s115, %s117
      %p124 = scmp.eq.s32.totalorder %s23, 1
      %p125 = por %p123, %p124
      %p126 = scmp.ne.s32.totalorder %s117, %s118
      %p127 = scmp.eq.s32.totalorder %s23, 0
      %p128 = por %p126, %p127
      %p129 = scmp.ne.s32.totalorder %s117, %s118
      %p130 = scmp.eq.s32.totalorder %s24, 1
      %p131 = por %p129, %p130
      %p133 = scmp.ne.s32.totalorder %s118, %s132
      %p134 = scmp.eq.s32.totalorder %s24, 0
      %p135 = por %p133, %p134
      %s136 = ssub.s32 %s18, %s25
      %p137 = scmp.eq.s32.totalorder %s136, 0
      %s139 = sadd.s32 %s138, 1
      %s140 = scalar_select %p137, %s138, %s139
      %p143 = pneg %p137
      %p144 = scmp.eq.s32.totalorder %s18, 1
      %p145 = por %p143, %p144
      %p146 = scmp.ne.s32.totalorder %s138, %s141
      %p147 = scmp.eq.s32.totalorder %s18, 0
      %p148 = por %p146, %p147
      %p149 = scmp.ne.s32.totalorder %s138, %s141
      %p150 = scmp.eq.s32.totalorder %s23, 1
      %p151 = por %p149, %p150
      %p152 = scmp.ne.s32.totalorder %s141, %s142
      %p153 = scmp.eq.s32.totalorder %s23, 0
      %p154 = por %p152, %p153
      %p155 = scmp.ne.s32.totalorder %s141, %s142
      %p156 = scmp.eq.s32.totalorder %s24, 1
      %p157 = por %p155, %p156
      %p159 = scmp.ne.s32.totalorder %s142, %s158
      %p160 = scmp.eq.s32.totalorder %s24, 0
      %p161 = por %p159, %p160
      %p162 = scmp.le.s32.totalorder 1, %s18
      %p163 = scmp.lt.s32.totalorder %s18, 3
      %p164 = pnand %p162, %p163
      %p165 = pneg %p164
      // Predicated region
      $region9: #{tpu_custom_call.1} parent=5 // pred_check
        _
      $region10: #{tpu_custom_call.1} parent=5 // pred_check_branch
        %167 = sbr.rel (%p164) target = $region12
      $region11: #{tpu_custom_call.1} parent=5 // pred_region
        %s168 = ssub.s32 %s18, 1
        // Predicated region
        $region13: #{tpu_custom_call.1} parent=11 // pred_check
          %p169 = pneg %p65
        $region14: #{tpu_custom_call.1} parent=11 // pred_check_branch
          %171 = sbr.rel (%p169) target = $region16
        $region15: #{tpu_custom_call.1} parent=11 // pred_region
          %s173 = ssub.s32 18432, 18432
          %174 = vsyncadd [#allocation7], %s173
          %s175 = sshll.u32 [#allocation6], 4
          %s176 = int_to_ptr.vmem [resolvable:$true] %s175
          %181 = dma.hbm_to_vmem [thread:$0]  %s1, 18432, %s176, [#allocation7], 128, 128, 8
        $region16: #{tpu_custom_call.1} parent=11 // pred_fallthru
          _
        // Predicated region
        $region17: #{tpu_custom_call.1} parent=11 // pred_check
          %p182 = pneg %p86
        $region18: #{tpu_custom_call.1} parent=11 // pred_check_branch
          %184 = sbr.rel (%p182) target = $region20
        $region19: #{tpu_custom_call.1} parent=11 // pred_region
          _
        $region20: #{tpu_custom_call.1} parent=11 // pred_fallthru
          _
        // Predicated region
        $region21: #{tpu_custom_call.1} parent=11 // pred_check
          %p185 = pneg %p107
        $region22: #{tpu_custom_call.1} parent=11 // pred_check_branch
          %187 = sbr.rel (%p185) target = $region24
        $region23: #{tpu_custom_call.1} parent=11 // pred_region
          %s189 = ssub.s32 18432, 18432
          %190 = vsyncadd [#allocation7], %s189
          %s191 = sshll.u32 [#allocation8], 4
          %s192 = int_to_ptr.vmem [resolvable:$true] %s191
          %197 = dma.hbm_to_vmem [thread:$0]  %s3, 18432, %s192, [#allocation7], 128, 128, 8
        $region24: #{tpu_custom_call.1} parent=11 // pred_fallthru
          _
        // Predicated region
        $region25: #{tpu_custom_call.1} parent=11 // pred_check
          %p198 = pneg %p128
        $region26: #{tpu_custom_call.1} parent=11 // pred_check_branch
          %200 = sbr.rel (%p198) target = $region28
        $region27: #{tpu_custom_call.1} parent=11 // pred_region
          _
        $region28: #{tpu_custom_call.1} parent=11 // pred_fallthru
          _
      $region12: #{tpu_custom_call.1} parent=5 // pred_fallthru
        _
      %p201 = scmp.lt.s32.totalorder %s18, 2
      // Predicated region
      $region29: #{tpu_custom_call.1} parent=5 // pred_check
        %p202 = pneg %p201
      $region30: #{tpu_custom_call.1} parent=5 // pred_check_branch
        %204 = sbr.rel (%p202) target = $region32
      $region31: #{tpu_custom_call.1} parent=5 // pred_region
        // Predicated region
        $region33: #{tpu_custom_call.1} parent=31 // pred_check
          %p205 = pneg %p38
        $region34: #{tpu_custom_call.1} parent=31 // pred_check_branch
          %207 = sbr.rel (%p205) target = $region36
        $region35: #{tpu_custom_call.1} parent=31 // pred_region
          %s208 = sand.u32 %s28, 1
          %s209 = scalar_lea.sflag [#allocation4], %s208
          %s210 = sand.u32 %s28, 1
          %s211 = smul.addr %s210, 336
          %s212 = scalar_lea.vmem [#allocation3], %s211
          %s214 = ssub.s32 5376, 5376
          %215 = vsyncadd %s209, %s214
          %s216 = smul.addr %s18, 42
          %s217 = smul.addr %s216, 128
          %s218 = scalar_lea.hbm %s0, %s217
          %s219 = sshll.u32 %s212, 4
          %s220 = int_to_ptr.vmem [resolvable:$true] %s219
          %225 = dma.hbm_to_vmem [thread:$0]  %s218, 5376, %s220, %s209, 128, 128, 8
        $region36: #{tpu_custom_call.1} parent=31 // pred_fallthru
          _
      $region32: #{tpu_custom_call.1} parent=5 // pred_fallthru
        _
      %p226 = scmp.le.s32.totalorder 1, %s18
      %p227 = scmp.lt.s32.totalorder %s18, 3
      %p228 = pnand %p226, %p227
      %p229 = pneg %p228
      // Predicated region
      $region37: #{tpu_custom_call.1} parent=5 // pred_check
        _
      $region38: #{tpu_custom_call.1} parent=5 // pred_check_branch
        %231 = sbr.rel (%p228) target = $region40
      $region39: #{tpu_custom_call.1} parent=5 // pred_region
        %s232 = ssub.s32 %s18, 1
        %s233 = sand.u32 %s31, 1
        %s234 = scalar_lea.sflag [#allocation4], %s233
        %s235 = sand.u32 %s31, 1
        %s236 = smul.addr %s235, 336
        %s237 = scalar_lea.vmem [#allocation3], %s236
        // Predicated region
        $region41: #{tpu_custom_call.1} parent=39 // pred_check
          %p238 = pneg %p44
        $region42: #{tpu_custom_call.1} parent=39 // pred_check_branch
          %240 = sbr.rel (%p238) target = $region44
        $region43: #{tpu_custom_call.1} parent=39 // pred_region
          %241 = dma.done %s234, 5376
        $region44: #{tpu_custom_call.1} parent=39 // pred_fallthru
          _
        // Predicated region
        $region45: #{tpu_custom_call.1} parent=39 // pred_check
          %p242 = pneg %p65
        $region46: #{tpu_custom_call.1} parent=39 // pred_check_branch
          %244 = sbr.rel (%p242) target = $region48
        $region47: #{tpu_custom_call.1} parent=39 // pred_region
          %245 = dma.done [#allocation7], 18432
        $region48: #{tpu_custom_call.1} parent=39 // pred_fallthru
          _
        // Predicated region
        $region49: #{tpu_custom_call.1} parent=39 // pred_check
          %p246 = pneg %p107
        $region50: #{tpu_custom_call.1} parent=39 // pred_check_branch
          %248 = sbr.rel (%p246) target = $region52
        $region51: #{tpu_custom_call.1} parent=39 // pred_region
          %249 = dma.done [#allocation7], 18432
        $region52: #{tpu_custom_call.1} parent=39 // pred_fallthru
          _
        %s250 = sand.u32 %s31, 1
        %s251 = scalar_lea.sflag [#allocation4], %s250
        %s252 = sand.u32 %s31, 1
        %s253 = smul.addr %s252, 336
        %s254 = scalar_lea.vmem [#allocation3], %s253
        %p255 = pneg %p44
        %p256 = pneg %p41
        %p257 = pneg %p65
        %p258 = pneg %p62
        %p259 = pneg %p86
        %p260 = pneg %p83
        %p261 = pneg %p107
        %p262 = pneg %p104
        %p263 = pneg %p128
        %p264 = pneg %p125
        %p265 = pneg %p154
        %p266 = pneg %p151
        %s267 = sand.u32 %s141, 1
        %s268 = scalar_lea.sflag [#allocation5], %s267
        %s269 = sand.u32 %s141, 1
        %s270 = smul.addr %s269, 288
        %s271 = scalar_lea.vmem [#allocation9], %s270
        %v272 = vld [vmem:[%s237] sm:$0xff]
        %v273 = vld [vmem:[%s237 + $0x8] sm:$0xff]
        %v274 = vld [vmem:[%s237 + $0x10] sm:$0xff]
        %v275 = vld [vmem:[%s237 + $0x18] sm:$0xff]
        %v276 = vld [vmem:[%s237 + $0x20] sm:$0xff]
        %v277 = vld [vmem:[%s237 + $0x28] sm:$0xff]
        %v278 = vld [vmem:[%s237 + $0x30] sm:$0xff]
        %v279 = vld [vmem:[%s237 + $0x38] sm:$0xff]
        %v280 = vld [vmem:[%s237 + $0x40] sm:$0xff]
        %v281 = vld [vmem:[%s237 + $0x48] sm:$0xff]
        %v282 = vld [vmem:[%s237 + $0x50] sm:$0xff]
        %v283 = vld [vmem:[%s237 + $0x58] sm:$0xff]
        %v284 = vld [vmem:[%s237 + $0x60] sm:$0xff]
        %v285 = vld [vmem:[%s237 + $0x68] sm:$0xff]
        %v286 = vld [vmem:[%s237 + $0x70] sm:$0xff]
        %v287 = vld [vmem:[%s237 + $0x78] sm:$0xff]
        %v288 = vld [vmem:[%s237 + $0x80] sm:$0xff]
        %v289 = vld [vmem:[%s237 + $0x88] sm:$0xff]
        %v290 = vld [vmem:[%s237 + $0x90] sm:$0xff]
        %v291 = vld [vmem:[%s237 + $0x98] sm:$0xff]
        %v292 = vld [vmem:[%s237 + $0xa0] sm:$0xff]
        %v293 = vld [vmem:[%s237 + $0xa8] sm:$0xff]
        %v294 = vld [vmem:[%s237 + $0xb0] sm:$0xff]
        %v295 = vld [vmem:[%s237 + $0xb8] sm:$0xff]
        %v296 = vld [vmem:[%s237 + $0xc0] sm:$0xff]
        %v297 = vld [vmem:[%s237 + $0xc8] sm:$0xff]
        %v298 = vld [vmem:[%s237 + $0xd0] sm:$0xff]
        %v299 = vld [vmem:[%s237 + $0xd8] sm:$0xff]
        %v300 = vld [vmem:[%s237 + $0xe0] sm:$0xff]
        %v301 = vld [vmem:[%s237 + $0xe8] sm:$0xff]
        %v302 = vld [vmem:[%s237 + $0xf0] sm:$0xff]
        %v303 = vld [vmem:[%s237 + $0xf8] sm:$0xff]
        %v304 = vld [vmem:[%s237 + $0x100] sm:$0xff]
        %v305 = vld [vmem:[%s237 + $0x108] sm:$0xff]
        %v306 = vld [vmem:[%s237 + $0x110] sm:$0xff]
        %v307 = vld [vmem:[%s237 + $0x118] sm:$0xff]
        %v308 = vld [vmem:[#allocation6] sm:$0xff]
        %v309 = vld [vmem:[#allocation6 + $0x8] sm:$0xff]
        %v310 = vld [vmem:[#allocation6 + $0x10] sm:$0xff]
        %v311 = vld [vmem:[#allocation6 + $0x18] sm:$0xff]
        %v312 = vld [vmem:[#allocation6 + $0x20] sm:$0xff]
        %v313 = vld [vmem:[#allocation6 + $0x28] sm:$0xff]
        %v314 = vld [vmem:[#allocation6 + $0x30] sm:$0xff]
        %v315 = vld [vmem:[#allocation6 + $0x38] sm:$0xff]
        %v316 = vld [vmem:[#allocation6 + $0x40] sm:$0xff]
        %v317 = vld [vmem:[#allocation6 + $0x48] sm:$0xff]
        %v318 = vld [vmem:[#allocation6 + $0x50] sm:$0xff]
        %v319 = vld [vmem:[#allocation6 + $0x58] sm:$0xff]
        %v320 = vld [vmem:[#allocation6 + $0x60] sm:$0xff]
        %v321 = vld [vmem:[#allocation6 + $0x68] sm:$0xff]
        %v322 = vld [vmem:[#allocation6 + $0x70] sm:$0xff]
        %v323 = vld [vmem:[#allocation6 + $0x78] sm:$0xff]
        %v324 = vld [vmem:[%s237 + $0x1] sm:$0xff]
        %v325 = vld [vmem:[%s237 + $0x9] sm:$0xff]
        %v326 = vld [vmem:[%s237 + $0x11] sm:$0xff]
        %v327 = vld [vmem:[%s237 + $0x19] sm:$0xff]
        %v328 = vld [vmem:[%s237 + $0x21] sm:$0xff]
        %v329 = vld [vmem:[%s237 + $0x29] sm:$0xff]
        %v330 = vld [vmem:[%s237 + $0x31] sm:$0xff]
        %v331 = vld [vmem:[%s237 + $0x39] sm:$0xff]
        %v332 = vld [vmem:[%s237 + $0x41] sm:$0xff]
        %v333 = vld [vmem:[%s237 + $0x49] sm:$0xff]
        %v334 = vld [vmem:[%s237 + $0x51] sm:$0xff]
        %v335 = vld [vmem:[%s237 + $0x59] sm:$0xff]
        %v336 = vld [vmem:[%s237 + $0x61] sm:$0xff]
        %v337 = vld [vmem:[%s237 + $0x69] sm:$0xff]
        %v338 = vld [vmem:[%s237 + $0x71] sm:$0xff]
        %v339 = vld [vmem:[%s237 + $0x79] sm:$0xff]
        %v340 = vld [vmem:[%s237 + $0x81] sm:$0xff]
        %v341 = vld [vmem:[%s237 + $0x89] sm:$0xff]
        %v342 = vld [vmem:[%s237 + $0x91] sm:$0xff]
        %v343 = vld [vmem:[%s237 + $0x99] sm:$0xff]
        %v344 = vld [vmem:[%s237 + $0xa1] sm:$0xff]
        %v345 = vld [vmem:[%s237 + $0xa9] sm:$0xff]
        %v346 = vld [vmem:[%s237 + $0xb1] sm:$0xff]
        %v347 = vld [vmem:[%s237 + $0xb9] sm:$0xff]
        %v348 = vld [vmem:[%s237 + $0xc1] sm:$0xff]
        %v349 = vld [vmem:[%s237 + $0xc9] sm:$0xff]
        %v350 = vld [vmem:[%s237 + $0xd1] sm:$0xff]
        %v351 = vld [vmem:[%s237 + $0xd9] sm:$0xff]
        %v352 = vld [vmem:[%s237 + $0xe1] sm:$0xff]
        %v353 = vld [vmem:[%s237 + $0xe9] sm:$0xff]
        %v354 = vld [vmem:[%s237 + $0xf1] sm:$0xff]
        %v355 = vld [vmem:[%s237 + $0xf9] sm:$0xff]
        %v356 = vld [vmem:[%s237 + $0x101] sm:$0xff]
        %v357 = vld [vmem:[%s237 + $0x109] sm:$0xff]
        %v358 = vld [vmem:[%s237 + $0x111] sm:$0xff]
        %v359 = vld [vmem:[%s237 + $0x119] sm:$0xff]
        %s360 = scalar_lea.vmem [#allocation6], 128
        %v361 = vld [vmem:[%s360] sm:$0xff]
        %v362 = vld [vmem:[%s360 + $0x8] sm:$0xff]
        %v363 = vld [vmem:[%s360 + $0x10] sm:$0xff]
        %v364 = vld [vmem:[%s360 + $0x18] sm:$0xff]
        %v365 = vld [vmem:[%s360 + $0x20] sm:$0xff]
        %v366 = vld [vmem:[%s360 + $0x28] sm:$0xff]
        %v367 = vld [vmem:[%s360 + $0x30] sm:$0xff]
        %v368 = vld [vmem:[%s360 + $0x38] sm:$0xff]
        %v369 = vld [vmem:[%s360 + $0x40] sm:$0xff]
        %v370 = vld [vmem:[%s360 + $0x48] sm:$0xff]
        %v371 = vld [vmem:[%s360 + $0x50] sm:$0xff]
        %v372 = vld [vmem:[%s360 + $0x58] sm:$0xff]
        %v373 = vld [vmem:[%s360 + $0x60] sm:$0xff]
        %v374 = vld [vmem:[%s360 + $0x68] sm:$0xff]
        %v375 = vld [vmem:[%s360 + $0x70] sm:$0xff]
        %v376 = vld [vmem:[%s360 + $0x78] sm:$0xff]
        %377 = vmatprep.subr.mxu0 0.0
        %378 = vmatpush1.msra.mxu0 %v361
        %379 = vmatprep.subr.mxu0 0.0
        %380 = vmatpush1.msra.mxu0 %v362
        %381 = vmatprep.subr.mxu0 0.0
        %382 = vmatpush1.msra.mxu0 %v363
        %383 = vmatprep.subr.mxu0 0.0
        %384 = vmatpush1.msra.mxu0 %v364
        %385 = vmatprep.subr.mxu0 0.0
        %386 = vmatpush1.msra.mxu0 %v365
        %387 = vmatprep.subr.mxu0 0.0
        %388 = vmatpush1.msra.mxu0 %v366
        %389 = vmatprep.subr.mxu0 0.0
        %390 = vmatpush1.msra.mxu0 %v367
        %391 = vmatprep.subr.mxu0 0.0
        %392 = vmatpush1.msra.mxu0 %v368
        %393 = vmatprep.subr.mxu0 0.0
        %394 = vmatpush1.msra.mxu0 %v369
        %395 = vmatprep.subr.mxu0 0.0
        %396 = vmatpush1.msra.mxu0 %v370
        %397 = vmatprep.subr.mxu0 0.0
        %398 = vmatpush1.msra.mxu0 %v371
        %399 = vmatprep.subr.mxu0 0.0
        %400 = vmatpush1.msra.mxu0 %v372
        %401 = vmatprep.subr.mxu0 0.0
        %402 = vmatpush1.msra.mxu0 %v373
        %403 = vmatprep.subr.mxu0 0.0
        %404 = vmatpush1.msra.mxu0 %v374
        %405 = vmatprep.subr.mxu0 0.0
        %406 = vmatpush1.msra.mxu0 %v375
        %407 = vmatprep.subr.mxu0 0.0
        %408 = vmatpush1.msra.mxu0 %v376
        %409 = vmatprep.subr.mxu0 0.0
        %410 = vmatpush1.msra.mxu0 0.0
        %411 = vmatprep.subr.mxu0 0.0
        %412 = vmatpush1.msra.mxu0 0.0
        %413 = vmatprep.subr.mxu0 0.0
        %414 = vmatpush1.msra.mxu0 0.0
        %415 = vmatprep.subr.mxu0 0.0
        %416 = vmatpush1.msra.mxu0 0.0
        %417 = vmatprep.subr.mxu0 0.0
        %418 = vmatpush1.msra.mxu0 0.0
        %419 = vmatprep.subr.mxu0 0.0
        %420 = vmatpush1.msra.mxu0 0.0
        %421 = vmatprep.subr.mxu0 0.0
        %422 = vmatpush1.msra.mxu0 0.0
        %423 = vmatprep.subr.mxu0 0.0
        %424 = vmatpush1.msra.mxu0 0.0
        %425 = vmatprep.subr.mxu0 0.0
        %426 = vmatpush1.msra.mxu0 0.0
        %427 = vmatprep.subr.mxu0 0.0
        %428 = vmatpush1.msra.mxu0 0.0
        %429 = vmatprep.subr.mxu0 0.0
        %430 = vmatpush1.msra.mxu0 0.0
        %431 = vmatprep.subr.mxu0 0.0
        %432 = vmatpush1.msra.mxu0 0.0
        %433 = vmatprep.subr.mxu0 0.0
        %434 = vmatpush1.msra.mxu0 0.0
        %435 = vmatprep.subr.mxu0 0.0
        %436 = vmatpush1.msra.mxu0 0.0
        %437 = vmatprep.subr.mxu0 0.0
        %438 = vmatpush1.msra.mxu0 0.0
        %439 = vmatprep.subr.mxu0 0.0
        %440 = vmatpush1.msra.mxu0 0.0
        %441 = vmatprep.mubr.f32.mxu0 0.0
        %442 = vmatmul.mubr.f32.gmra.mrb[0].mxu0 %v324
        %v443 = vpop.f32.mrb[0].mxu0
        %v444 = vadd.f32 0.0, %v443
        %v445 = vpop.f32.mrb[0].mxu0
        %446 = vmatprep.mubr.f32.mxu0 0.0
        %447 = vmatmul.mubr.f32.gmra.mrb[0].mxu0 %v325
        %v448 = vpop.f32.mrb[0].mxu0
        %v449 = vadd.f32 0.0, %v448
        %v450 = vpop.f32.mrb[0].mxu0
        %451 = vmatprep.mubr.f32.mxu0 0.0
        %452 = vmatmul.mubr.f32.gmra.mrb[0].mxu0 %v326
        %v453 = vpop.f32.mrb[0].mxu0
        %v454 = vadd.f32 0.0, %v453
        %v455 = vpop.f32.mrb[0].mxu0
        %456 = vmatprep.mubr.f32.mxu0 0.0
        %457 = vmatmul.mubr.f32.gmra.mrb[0].mxu0 %v327
        %v458 = vpop.f32.mrb[0].mxu0
        %v459 = vadd.f32 0.0, %v458
        %v460 = vpop.f32.mrb[0].mxu0
        %461 = vmatprep.mubr.f32.mxu0 0.0
        %462 = vmatmul.mubr.f32.gmra.mrb[0].mxu0 %v328
        %v463 = vpop.f32.mrb[0].mxu0
        %v464 = vadd.f32 0.0, %v463
        %v465 = vpop.f32.mrb[0].mxu0
        %466 = vmatprep.mubr.f32.mxu0 0.0
        %467 = vmatmul.mubr.f32.gmra.mrb[0].mxu0 %v329
        %v468 = vpop.f32.mrb[0].mxu0
        %v469 = vadd.f32 0.0, %v468
        %v470 = vpop.f32.mrb[0].mxu0
        %471 = vmatprep.mubr.f32.mxu0 0.0
        %472 = vmatmul.mubr.f32.gmra.mrb[0].mxu0 %v330
        %v473 = vpop.f32.mrb[0].mxu0
        %v474 = vadd.f32 0.0, %v473
        %v475 = vpop.f32.mrb[0].mxu0
        %476 = vmatprep.mubr.f32.mxu0 0.0
        %477 = vmatmul.mubr.f32.gmra.mrb[0].mxu0 %v331
        %v478 = vpop.f32.mrb[0].mxu0
        %v479 = vadd.f32 0.0, %v478
        %v480 = vpop.f32.mrb[0].mxu0
        %481 = vmatprep.mubr.f32.mxu0 0.0
        %482 = vmatmul.mubr.f32.gmra.mrb[0].mxu0 %v332
        %v483 = vpop.f32.mrb[0].mxu0
        %v484 = vadd.f32 0.0, %v483
        %v485 = vpop.f32.mrb[0].mxu0
        %486 = vmatprep.mubr.f32.mxu0 0.0
        %487 = vmatmul.mubr.f32.gmra.mrb[0].mxu0 %v333
        %v488 = vpop.f32.mrb[0].mxu0
        %v489 = vadd.f32 0.0, %v488
        %v490 = vpop.f32.mrb[0].mxu0
        %491 = vmatprep.mubr.f32.mxu0 0.0
        %492 = vmatmul.mubr.f32.gmra.mrb[0].mxu0 %v334
        %v493 = vpop.f32.mrb[0].mxu0
        %v494 = vadd.f32 0.0, %v493
        %v495 = vpop.f32.mrb[0].mxu0
        %496 = vmatprep.mubr.f32.mxu0 0.0
        %497 = vmatmul.mubr.f32.gmra.mrb[0].mxu0 %v335
        %v498 = vpop.f32.mrb[0].mxu0
        %v499 = vadd.f32 0.0, %v498
        %v500 = vpop.f32.mrb[0].mxu0
        %501 = vmatprep.mubr.f32.mxu0 0.0
        %502 = vmatmul.mubr.f32.gmra.mrb[0].mxu0 %v336
        %v503 = vpop.f32.mrb[0].mxu0
        %v504 = vadd.f32 0.0, %v503
        %v505 = vpop.f32.mrb[0].mxu0
        %506 = vmatprep.mubr.f32.mxu0 0.0
        %507 = vmatmul.mubr.f32.gmra.mrb[0].mxu0 %v337
        %v508 = vpop.f32.mrb[0].mxu0
        %v509 = vadd.f32 0.0, %v508
        %v510 = vpop.f32.mrb[0].mxu0
        %511 = vmatprep.mubr.f32.mxu0 0.0
        %512 = vmatmul.mubr.f32.gmra.mrb[0].mxu0 %v338
        %v513 = vpop.f32.mrb[0].mxu0
        %v514 = vadd.f32 0.0, %v513
        %v515 = vpop.f32.mrb[0].mxu0
        %516 = vmatprep.mubr.f32.mxu0 0.0
        %517 = vmatmul.mubr.f32.gmra.mrb[0].mxu0 %v339
        %v518 = vpop.f32.mrb[0].mxu0
        %v519 = vadd.f32 0.0, %v518
        %v520 = vpop.f32.mrb[0].mxu0
        %521 = vmatprep.mubr.f32.mxu0 0.0
        %522 = vmatmul.mubr.f32.gmra.mrb[0].mxu0 %v340
        %v523 = vpop.f32.mrb[0].mxu0
        %v524 = vadd.f32 0.0, %v523
        %v525 = vpop.f32.mrb[0].mxu0
        %526 = vmatprep.mubr.f32.mxu0 0.0
        %527 = vmatmul.mubr.f32.gmra.mrb[0].mxu0 %v341
        %v528 = vpop.f32.mrb[0].mxu0
        %v529 = vadd.f32 0.0, %v528
        %v530 = vpop.f32.mrb[0].mxu0
        %531 = vmatprep.mubr.f32.mxu0 0.0
        %532 = vmatmul.mubr.f32.gmra.mrb[0].mxu0 %v342
        %v533 = vpop.f32.mrb[0].mxu0
        %v534 = vadd.f32 0.0, %v533
        %v535 = vpop.f32.mrb[0].mxu0
        %536 = vmatprep.mubr.f32.mxu0 0.0
        %537 = vmatmul.mubr.f32.gmra.mrb[0].mxu0 %v343
        %v538 = vpop.f32.mrb[0].mxu0
        %v539 = vadd.f32 0.0, %v538
        %v540 = vpop.f32.mrb[0].mxu0
        %541 = vmatprep.mubr.f32.mxu0 0.0
        %542 = vmatmul.mubr.f32.gmra.mrb[0].mxu0 %v344
        %v543 = vpop.f32.mrb[0].mxu0
        %v544 = vadd.f32 0.0, %v543
        %v545 = vpop.f32.mrb[0].mxu0
        %546 = vmatprep.mubr.f32.mxu0 0.0
        %547 = vmatmul.mubr.f32.gmra.mrb[0].mxu0 %v345
        %v548 = vpop.f32.mrb[0].mxu0
        %v549 = vadd.f32 0.0, %v548
        %v550 = vpop.f32.mrb[0].mxu0
        %551 = vmatprep.mubr.f32.mxu0 0.0
        %552 = vmatmul.mubr.f32.gmra.mrb[0].mxu0 %v346
        %v553 = vpop.f32.mrb[0].mxu0
        %v554 = vadd.f32 0.0, %v553
        %v555 = vpop.f32.mrb[0].mxu0
        %556 = vmatprep.mubr.f32.mxu0 0.0
        %557 = vmatmul.mubr.f32.gmra.mrb[0].mxu0 %v347
        %v558 = vpop.f32.mrb[0].mxu0
        %v559 = vadd.f32 0.0, %v558
        %v560 = vpop.f32.mrb[0].mxu0
        %561 = vmatprep.mubr.f32.mxu0 0.0
        %562 = vmatmul.mubr.f32.gmra.mrb[0].mxu0 %v348
        %v563 = vpop.f32.mrb[0].mxu0
        %v564 = vadd.f32 0.0, %v563
        %v565 = vpop.f32.mrb[0].mxu0
        %566 = vmatprep.mubr.f32.mxu0 0.0
        %567 = vmatmul.mubr.f32.gmra.mrb[0].mxu0 %v349
        %v568 = vpop.f32.mrb[0].mxu0
        %v569 = vadd.f32 0.0, %v568
        %v570 = vpop.f32.mrb[0].mxu0
        %571 = vmatprep.mubr.f32.mxu0 0.0
        %572 = vmatmul.mubr.f32.gmra.mrb[0].mxu0 %v350
        %v573 = vpop.f32.mrb[0].mxu0
        %v574 = vadd.f32 0.0, %v573
        %v575 = vpop.f32.mrb[0].mxu0
        %576 = vmatprep.mubr.f32.mxu0 0.0
        %577 = vmatmul.mubr.f32.gmra.mrb[0].mxu0 %v351
        %v578 = vpop.f32.mrb[0].mxu0
        %v579 = vadd.f32 0.0, %v578
        %v580 = vpop.f32.mrb[0].mxu0
        %581 = vmatprep.mubr.f32.mxu0 0.0
        %582 = vmatmul.mubr.f32.gmra.mrb[0].mxu0 %v352
        %v583 = vpop.f32.mrb[0].mxu0
        %v584 = vadd.f32 0.0, %v583
        %v585 = vpop.f32.mrb[0].mxu0
        %586 = vmatprep.mubr.f32.mxu0 0.0
        %587 = vmatmul.mubr.f32.gmra.mrb[0].mxu0 %v353
        %v588 = vpop.f32.mrb[0].mxu0
        %v589 = vadd.f32 0.0, %v588
        %v590 = vpop.f32.mrb[0].mxu0
        %591 = vmatprep.mubr.f32.mxu0 0.0
        %592 = vmatmul.mubr.f32.gmra.mrb[0].mxu0 %v354
        %v593 = vpop.f32.mrb[0].mxu0
        %v594 = vadd.f32 0.0, %v593
        %v595 = vpop.f32.mrb[0].mxu0
        %596 = vmatprep.mubr.f32.mxu0 0.0
        %597 = vmatmul.mubr.f32.gmra.mrb[0].mxu0 %v355
        %v598 = vpop.f32.mrb[0].mxu0
        %v599 = vadd.f32 0.0, %v598
        %v600 = vpop.f32.mrb[0].mxu0
        %601 = vmatprep.mubr.f32.mxu0 0.0
        %602 = vmatmul.mubr.f32.gmra.mrb[0].mxu0 %v356
        %v603 = vpop.f32.mrb[0].mxu0
        %v604 = vadd.f32 0.0, %v603
        %v605 = vpop.f32.mrb[0].mxu0
        %606 = vmatprep.mubr.f32.mxu0 0.0
        %607 = vmatmul.mubr.f32.gmra.mrb[0].mxu0 %v357
        %v608 = vpop.f32.mrb[0].mxu0
        %v609 = vadd.f32 0.0, %v608
        %v610 = vpop.f32.mrb[0].mxu0
        %611 = vmatprep.mubr.f32.mxu0 0.0
        %612 = vmatmul.mubr.f32.gmra.mrb[0].mxu0 %v358
        %v613 = vpop.f32.mrb[0].mxu0
        %v614 = vadd.f32 0.0, %v613
        %v615 = vpop.f32.mrb[0].mxu0
        %616 = vmatprep.mubr.f32.mxu0 0.0
        %617 = vmatmul.mubr.f32.gmra.mrb[0].mxu0 %v359
        %v618 = vpop.f32.mrb[0].mxu0
        %v619 = vadd.f32 0.0, %v618
        %v620 = vpop.f32.mrb[0].mxu0
        %621 = vdwg.mxu0
        %622 = vmatprep.subr.mxu0 0.0
        %623 = vmatpush1.msra.mxu0 %v308
        %624 = vmatprep.subr.mxu0 0.0
        %625 = vmatpush1.msra.mxu0 %v309
        %626 = vmatprep.subr.mxu0 0.0
        %627 = vmatpush1.msra.mxu0 %v310
        %628 = vmatprep.subr.mxu0 0.0
        %629 = vmatpush1.msra.mxu0 %v311
        %630 = vmatprep.subr.mxu0 0.0
        %631 = vmatpush1.msra.mxu0 %v312
        %632 = vmatprep.subr.mxu0 0.0
        %633 = vmatpush1.msra.mxu0 %v313
        %634 = vmatprep.subr.mxu0 0.0
        %635 = vmatpush1.msra.mxu0 %v314
        %636 = vmatprep.subr.mxu0 0.0
        %637 = vmatpush1.msra.mxu0 %v315
        %638 = vmatprep.subr.mxu0 0.0
        %639 = vmatpush1.msra.mxu0 %v316
        %640 = vmatprep.subr.mxu0 0.0
        %641 = vmatpush1.msra.mxu0 %v317
        %642 = vmatprep.subr.mxu0 0.0
        %643 = vmatpush1.msra.mxu0 %v318
        %644 = vmatprep.subr.mxu0 0.0
        %645 = vmatpush1.msra.mxu0 %v319
        %646 = vmatprep.subr.mxu0 0.0
        %647 = vmatpush1.msra.mxu0 %v320
        %648 = vmatprep.subr.mxu0 0.0
        %649 = vmatpush1.msra.mxu0 %v321
        %650 = vmatprep.subr.mxu0 0.0
        %651 = vmatpush1.msra.mxu0 %v322
        %652 = vmatprep.subr.mxu0 0.0
        %653 = vmatpush1.msra.mxu0 %v323
        %654 = vmatprep.subr.mxu0 0.0
        %655 = vmatpush1.msra.mxu0 0.0
        %656 = vmatprep.subr.mxu0 0.0
        %657 = vmatpush1.msra.mxu0 0.0
        %658 = vmatprep.subr.mxu0 0.0
        %659 = vmatpush1.msra.mxu0 0.0
        %660 = vmatprep.subr.mxu0 0.0
        %661 = vmatpush1.msra.mxu0 0.0
        %662 = vmatprep.subr.mxu0 0.0
        %663 = vmatpush1.msra.mxu0 0.0
        %664 = vmatprep.subr.mxu0 0.0
        %665 = vmatpush1.msra.mxu0 0.0
        %666 = vmatprep.subr.mxu0 0.0
        %667 = vmatpush1.msra.mxu0 0.0
        %668 = vmatprep.subr.mxu0 0.0
        %669 = vmatpush1.msra.mxu0 0.0
        %670 = vmatprep.subr.mxu0 0.0
        %671 = vmatpush1.msra.mxu0 0.0
        %672 = vmatprep.subr.mxu0 0.0
        %673 = vmatpush1.msra.mxu0 0.0
        %674 = vmatprep.subr.mxu0 0.0
        %675 = vmatpush1.msra.mxu0 0.0
        %676 = vmatprep.subr.mxu0 0.0
        %677 = vmatpush1.msra.mxu0 0.0
        %678 = vmatprep.subr.mxu0 0.0
        %679 = vmatpush1.msra.mxu0 0.0
        %680 = vmatprep.subr.mxu0 0.0
        %681 = vmatpush1.msra.mxu0 0.0
        %682 = vmatprep.subr.mxu0 0.0
        %683 = vmatpush1.msra.mxu0 0.0
        %684 = vmatprep.subr.mxu0 0.0
        %685 = vmatpush1.msra.mxu0 0.0
        %686 = vmatprep.mubr.f32.mxu0 0.0
        %687 = vmatmul.mubr.f32.gmra.mrb[0].mxu0 %v272
        %v688 = vpop.f32.mrb[0].mxu0
        %v689 = vadd.f32 %v444, %v688
        %v690 = vpop.f32.mrb[0].mxu0
        %691 = vmatprep.mubr.f32.mxu0 0.0
        %692 = vmatmul.mubr.f32.gmra.mrb[0].mxu0 %v273
        %v693 = vpop.f32.mrb[0].mxu0
        %v694 = vadd.f32 %v449, %v693
        %v695 = vpop.f32.mrb[0].mxu0
        %696 = vmatprep.mubr.f32.mxu0 0.0
        %697 = vmatmul.mubr.f32.gmra.mrb[0].mxu0 %v274
        %v698 = vpop.f32.mrb[0].mxu0
        %v699 = vadd.f32 %v454, %v698
        %v700 = vpop.f32.mrb[0].mxu0
        %701 = vmatprep.mubr.f32.mxu0 0.0
        %702 = vmatmul.mubr.f32.gmra.mrb[0].mxu0 %v275
        %v703 = vpop.f32.mrb[0].mxu0
        %v704 = vadd.f32 %v459, %v703
        %v705 = vpop.f32.mrb[0].mxu0
        %706 = vmatprep.mubr.f32.mxu0 0.0
        %707 = vmatmul.mubr.f32.gmra.mrb[0].mxu0 %v276
        %v708 = vpop.f32.mrb[0].mxu0
        %v709 = vadd.f32 %v464, %v708
        %v710 = vpop.f32.mrb[0].mxu0
        %711 = vmatprep.mubr.f32.mxu0 0.0
        %712 = vmatmul.mubr.f32.gmra.mrb[0].mxu0 %v277
        %v713 = vpop.f32.mrb[0].mxu0
        %v714 = vadd.f32 %v469, %v713
        %v715 = vpop.f32.mrb[0].mxu0
        %716 = vmatprep.mubr.f32.mxu0 0.0
        %717 = vmatmul.mubr.f32.gmra.mrb[0].mxu0 %v278
        %v718 = vpop.f32.mrb[0].mxu0
        %v719 = vadd.f32 %v474, %v718
        %v720 = vpop.f32.mrb[0].mxu0
        %721 = vmatprep.mubr.f32.mxu0 0.0
        %722 = vmatmul.mubr.f32.gmra.mrb[0].mxu0 %v279
        %v723 = vpop.f32.mrb[0].mxu0
        %v724 = vadd.f32 %v479, %v723
        %v725 = vpop.f32.mrb[0].mxu0
        %726 = vmatprep.mubr.f32.mxu0 0.0
        %727 = vmatmul.mubr.f32.gmra.mrb[0].mxu0 %v280
        %v728 = vpop.f32.mrb[0].mxu0
        %v729 = vadd.f32 %v484, %v728
        %v730 = vpop.f32.mrb[0].mxu0
        %731 = vmatprep.mubr.f32.mxu0 0.0
        %732 = vmatmul.mubr.f32.gmra.mrb[0].mxu0 %v281
        %v733 = vpop.f32.mrb[0].mxu0
        %v734 = vadd.f32 %v489, %v733
        %v735 = vpop.f32.mrb[0].mxu0
        %736 = vmatprep.mubr.f32.mxu0 0.0
        %737 = vmatmul.mubr.f32.gmra.mrb[0].mxu0 %v282
        %v738 = vpop.f32.mrb[0].mxu0
        %v739 = vadd.f32 %v494, %v738
        %v740 = vpop.f32.mrb[0].mxu0
        %741 = vmatprep.mubr.f32.mxu0 0.0
        %742 = vmatmul.mubr.f32.gmra.mrb[0].mxu0 %v283
        %v743 = vpop.f32.mrb[0].mxu0
        %v744 = vadd.f32 %v499, %v743
        %v745 = vpop.f32.mrb[0].mxu0
        %746 = vmatprep.mubr.f32.mxu0 0.0
        %747 = vmatmul.mubr.f32.gmra.mrb[0].mxu0 %v284
        %v748 = vpop.f32.mrb[0].mxu0
        %v749 = vadd.f32 %v504, %v748
        %v750 = vpop.f32.mrb[0].mxu0
        %751 = vmatprep.mubr.f32.mxu0 0.0
        %752 = vmatmul.mubr.f32.gmra.mrb[0].mxu0 %v285
        %v753 = vpop.f32.mrb[0].mxu0
        %v754 = vadd.f32 %v509, %v753
        %v755 = vpop.f32.mrb[0].mxu0
        %756 = vmatprep.mubr.f32.mxu0 0.0
        %757 = vmatmul.mubr.f32.gmra.mrb[0].mxu0 %v286
        %v758 = vpop.f32.mrb[0].mxu0
        %v759 = vadd.f32 %v514, %v758
        %v760 = vpop.f32.mrb[0].mxu0
        %761 = vmatprep.mubr.f32.mxu0 0.0
        %762 = vmatmul.mubr.f32.gmra.mrb[0].mxu0 %v287
        %v763 = vpop.f32.mrb[0].mxu0
        %v764 = vadd.f32 %v519, %v763
        %v765 = vpop.f32.mrb[0].mxu0
        %766 = vmatprep.mubr.f32.mxu0 0.0
        %767 = vmatmul.mubr.f32.gmra.mrb[0].mxu0 %v288
        %v768 = vpop.f32.mrb[0].mxu0
        %v769 = vadd.f32 %v524, %v768
        %v770 = vpop.f32.mrb[0].mxu0
        %771 = vmatprep.mubr.f32.mxu0 0.0
        %772 = vmatmul.mubr.f32.gmra.mrb[0].mxu0 %v289
        %v773 = vpop.f32.mrb[0].mxu0
        %v774 = vadd.f32 %v529, %v773
        %v775 = vpop.f32.mrb[0].mxu0
        %776 = vmatprep.mubr.f32.mxu0 0.0
        %777 = vmatmul.mubr.f32.gmra.mrb[0].mxu0 %v290
        %v778 = vpop.f32.mrb[0].mxu0
        %v779 = vadd.f32 %v534, %v778
        %v780 = vpop.f32.mrb[0].mxu0
        %781 = vmatprep.mubr.f32.mxu0 0.0
        %782 = vmatmul.mubr.f32.gmra.mrb[0].mxu0 %v291
        %v783 = vpop.f32.mrb[0].mxu0
        %v784 = vadd.f32 %v539, %v783
        %v785 = vpop.f32.mrb[0].mxu0
        %786 = vmatprep.mubr.f32.mxu0 0.0
        %787 = vmatmul.mubr.f32.gmra.mrb[0].mxu0 %v292
        %v788 = vpop.f32.mrb[0].mxu0
        %v789 = vadd.f32 %v544, %v788
        %v790 = vpop.f32.mrb[0].mxu0
        %791 = vmatprep.mubr.f32.mxu0 0.0
        %792 = vmatmul.mubr.f32.gmra.mrb[0].mxu0 %v293
        %v793 = vpop.f32.mrb[0].mxu0
        %v794 = vadd.f32 %v549, %v793
        %v795 = vpop.f32.mrb[0].mxu0
        %796 = vmatprep.mubr.f32.mxu0 0.0
        %797 = vmatmul.mubr.f32.gmra.mrb[0].mxu0 %v294
        %v798 = vpop.f32.mrb[0].mxu0
        %v799 = vadd.f32 %v554, %v798
        %v800 = vpop.f32.mrb[0].mxu0
        %801 = vmatprep.mubr.f32.mxu0 0.0
        %802 = vmatmul.mubr.f32.gmra.mrb[0].mxu0 %v295
        %v803 = vpop.f32.mrb[0].mxu0
        %v804 = vadd.f32 %v559, %v803
        %v805 = vpop.f32.mrb[0].mxu0
        %806 = vmatprep.mubr.f32.mxu0 0.0
        %807 = vmatmul.mubr.f32.gmra.mrb[0].mxu0 %v296
        %v808 = vpop.f32.mrb[0].mxu0
        %v809 = vadd.f32 %v564, %v808
        %v810 = vpop.f32.mrb[0].mxu0
        %811 = vmatprep.mubr.f32.mxu0 0.0
        %812 = vmatmul.mubr.f32.gmra.mrb[0].mxu0 %v297
        %v813 = vpop.f32.mrb[0].mxu0
        %v814 = vadd.f32 %v569, %v813
        %v815 = vpop.f32.mrb[0].mxu0
        %816 = vmatprep.mubr.f32.mxu0 0.0
        %817 = vmatmul.mubr.f32.gmra.mrb[0].mxu0 %v298
        %v818 = vpop.f32.mrb[0].mxu0
        %v819 = vadd.f32 %v574, %v818
        %v820 = vpop.f32.mrb[0].mxu0
        %821 = vmatprep.mubr.f32.mxu0 0.0
        %822 = vmatmul.mubr.f32.gmra.mrb[0].mxu0 %v299
        %v823 = vpop.f32.mrb[0].mxu0
        %v824 = vadd.f32 %v579, %v823
        %v825 = vpop.f32.mrb[0].mxu0
        %826 = vmatprep.mubr.f32.mxu0 0.0
        %827 = vmatmul.mubr.f32.gmra.mrb[0].mxu0 %v300
        %v828 = vpop.f32.mrb[0].mxu0
        %v829 = vadd.f32 %v584, %v828
        %v830 = vpop.f32.mrb[0].mxu0
        %831 = vmatprep.mubr.f32.mxu0 0.0
        %832 = vmatmul.mubr.f32.gmra.mrb[0].mxu0 %v301
        %v833 = vpop.f32.mrb[0].mxu0
        %v834 = vadd.f32 %v589, %v833
        %v835 = vpop.f32.mrb[0].mxu0
        %836 = vmatprep.mubr.f32.mxu0 0.0
        %837 = vmatmul.mubr.f32.gmra.mrb[0].mxu0 %v302
        %v838 = vpop.f32.mrb[0].mxu0
        %v839 = vadd.f32 %v594, %v838
        %v840 = vpop.f32.mrb[0].mxu0
        %841 = vmatprep.mubr.f32.mxu0 0.0
        %842 = vmatmul.mubr.f32.gmra.mrb[0].mxu0 %v303
        %v843 = vpop.f32.mrb[0].mxu0
        %v844 = vadd.f32 %v599, %v843
        %v845 = vpop.f32.mrb[0].mxu0
        %846 = vmatprep.mubr.f32.mxu0 0.0
        %847 = vmatmul.mubr.f32.gmra.mrb[0].mxu0 %v304
        %v848 = vpop.f32.mrb[0].mxu0
        %v849 = vadd.f32 %v604, %v848
        %v850 = vpop.f32.mrb[0].mxu0
        %851 = vmatprep.mubr.f32.mxu0 0.0
        %852 = vmatmul.mubr.f32.gmra.mrb[0].mxu0 %v305
        %v853 = vpop.f32.mrb[0].mxu0
        %v854 = vadd.f32 %v609, %v853
        %v855 = vpop.f32.mrb[0].mxu0
        %856 = vmatprep.mubr.f32.mxu0 0.0
        %857 = vmatmul.mubr.f32.gmra.mrb[0].mxu0 %v306
        %v858 = vpop.f32.mrb[0].mxu0
        %v859 = vadd.f32 %v614, %v858
        %v860 = vpop.f32.mrb[0].mxu0
        %861 = vmatprep.mubr.f32.mxu0 0.0
        %862 = vmatmul.mubr.f32.gmra.mrb[0].mxu0 %v307
        %v863 = vpop.f32.mrb[0].mxu0
        %v864 = vadd.f32 %v619, %v863
        %v865 = vpop.f32.mrb[0].mxu0
        %866 = vdwg.mxu0
        %v867 = vld [vmem:[%s237 + $0x2] sm:$0xff]
        %v868 = vld [vmem:[%s237 + $0xa] sm:$0xff]
        %v869 = vld [vmem:[%s237 + $0x12] sm:$0xff]
        %v870 = vld [vmem:[%s237 + $0x1a] sm:$0xff]
        %v871 = vld [vmem:[%s237 + $0x22] sm:$0xff]
        %v872 = vld [vmem:[%s237 + $0x2a] sm:$0xff]
        %v873 = vld [vmem:[%s237 + $0x32] sm:$0xff]
        %v874 = vld [vmem:[%s237 + $0x3a] sm:$0xff]
        %v875 = vld [vmem:[%s237 + $0x42] sm:$0xff]
        %v876 = vld [vmem:[%s237 + $0x4a] sm:$0xff]
        %v877 = vld [vmem:[%s237 + $0x52] sm:$0xff]
        %v878 = vld [vmem:[%s237 + $0x5a] sm:$0xff]
        %v879 = vld [vmem:[%s237 + $0x62] sm:$0xff]
        %v880 = vld [vmem:[%s237 + $0x6a] sm:$0xff]
        %v881 = vld [vmem:[%s237 + $0x72] sm:$0xff]
        %v882 = vld [vmem:[%s237 + $0x7a] sm:$0xff]
        %v883 = vld [vmem:[%s237 + $0x82] sm:$0xff]
        %v884 = vld [vmem:[%s237 + $0x8a] sm:$0xff]
        %v885 = vld [vmem:[%s237 + $0x92] sm:$0xff]
        %v886 = vld [vmem:[%s237 + $0x9a] sm:$0xff]
        %v887 = vld [vmem:[%s237 + $0xa2] sm:$0xff]
        %v888 = vld [vmem:[%s237 + $0xaa] sm:$0xff]
        %v889 = vld [vmem:[%s237 + $0xb2] sm:$0xff]
        %v890 = vld [vmem:[%s237 + $0xba] sm:$0xff]
        %v891 = vld [vmem:[%s237 + $0xc2] sm:$0xff]
        %v892 = vld [vmem:[%s237 + $0xca] sm:$0xff]
        %v893 = vld [vmem:[%s237 + $0xd2] sm:$0xff]
        %v894 = vld [vmem:[%s237 + $0xda] sm:$0xff]
        %v895 = vld [vmem:[%s237 + $0xe2] sm:$0xff]
        %v896 = vld [vmem:[%s237 + $0xea] sm:$0xff]
        %v897 = vld [vmem:[%s237 + $0xf2] sm:$0xff]
        %v898 = vld [vmem:[%s237 + $0xfa] sm:$0xff]
        %v899 = vld [vmem:[%s237 + $0x102] sm:$0xff]
        %v900 = vld [vmem:[%s237 + $0x10a] sm:$0xff]
        %v901 = vld [vmem:[%s237 + $0x112] sm:$0xff]
        %v902 = vld [vmem:[%s237 + $0x11a] sm:$0xff]
        %s903 = scalar_lea.vmem [#allocation6], 256
        %v904 = vld [vmem:[%s903] sm:$0xff]
        %v905 = vld [vmem:[%s903 + $0x8] sm:$0xff]
        %v906 = vld [vmem:[%s903 + $0x10] sm:$0xff]
        %v907 = vld [vmem:[%s903 + $0x18] sm:$0xff]
        %v908 = vld [vmem:[%s903 + $0x20] sm:$0xff]
        %v909 = vld [vmem:[%s903 + $0x28] sm:$0xff]
        %v910 = vld [vmem:[%s903 + $0x30] sm:$0xff]
        %v911 = vld [vmem:[%s903 + $0x38] sm:$0xff]
        %v912 = vld [vmem:[%s903 + $0x40] sm:$0xff]
        %v913 = vld [vmem:[%s903 + $0x48] sm:$0xff]
        %v914 = vld [vmem:[%s903 + $0x50] sm:$0xff]
        %v915 = vld [vmem:[%s903 + $0x58] sm:$0xff]
        %v916 = vld [vmem:[%s903 + $0x60] sm:$0xff]
        %v917 = vld [vmem:[%s903 + $0x68] sm:$0xff]
        %v918 = vld [vmem:[%s903 + $0x70] sm:$0xff]
        %v919 = vld [vmem:[%s903 + $0x78] sm:$0xff]
        %920 = vmatprep.subr.mxu0 0.0
        %921 = vmatpush1.msra.mxu0 %v904
        %922 = vmatprep.subr.mxu0 0.0
        %923 = vmatpush1.msra.mxu0 %v905
        %924 = vmatprep.subr.mxu0 0.0
        %925 = vmatpush1.msra.mxu0 %v906
        %926 = vmatprep.subr.mxu0 0.0
        %927 = vmatpush1.msra.mxu0 %v907
        %928 = vmatprep.subr.mxu0 0.0
        %929 = vmatpush1.msra.mxu0 %v908
        %930 = vmatprep.subr.mxu0 0.0
        %931 = vmatpush1.msra.mxu0 %v909
        %932 = vmatprep.subr.mxu0 0.0
        %933 = vmatpush1.msra.mxu0 %v910
        %934 = vmatprep.subr.mxu0 0.0
        %935 = vmatpush1.msra.mxu0 %v911
        %936 = vmatprep.subr.mxu0 0.0
        %937 = vmatpush1.msra.mxu0 %v912
        %938 = vmatprep.subr.mxu0 0.0
        %939 = vmatpush1.msra.mxu0 %v913
        %940 = vmatprep.subr.mxu0 0.0
        %941 = vmatpush1.msra.mxu0 %v914
        %942 = vmatprep.subr.mxu0 0.0
        %943 = vmatpush1.msra.mxu0 %v915
        %944 = vmatprep.subr.mxu0 0.0
        %945 = vmatpush1.msra.mxu0 %v916
        %946 = vmatprep.subr.mxu0 0.0
        %947 = vmatpush1.msra.mxu0 %v917
        %948 = vmatprep.subr.mxu0 0.0
        %949 = vmatpush1.msra.mxu0 %v918
        %950 = vmatprep.subr.mxu0 0.0
        %951 = vmatpush1.msra.mxu0 %v919
        %952 = vmatprep.subr.mxu0 0.0
        %953 = vmatpush1.msra.mxu0 0.0
        %954 = vmatprep.subr.mxu0 0.0
        %955 = vmatpush1.msra.mxu0 0.0
        %956 = vmatprep.subr.mxu0 0.0
        %957 = vmatpush1.msra.mxu0 0.0
        %958 = vmatprep.subr.mxu0 0.0
        %959 = vmatpush1.msra.mxu0 0.0
        %960 = vmatprep.subr.mxu0 0.0
        %961 = vmatpush1.msra.mxu0 0.0
        %962 = vmatprep.subr.mxu0 0.0
        %963 = vmatpush1.msra.mxu0 0.0
        %964 = vmatprep.subr.mxu0 0.0
        %965 = vmatpush1.msra.mxu0 0.0
        %966 = vmatprep.subr.mxu0 0.0
        %967 = vmatpush1.msra.mxu0 0.0
        %968 = vmatprep.subr.mxu0 0.0
        %969 = vmatpush1.msra.mxu0 0.0
        %970 = vmatprep.subr.mxu0 0.0
        %971 = vmatpush1.msra.mxu0 0.0
        %972 = vmatprep.subr.mxu0 0.0
        %973 = vmatpush1.msra.mxu0 0.0
        %974 = vmatprep.subr.mxu0 0.0
        %975 = vmatpush1.msra.mxu0 0.0
        %976 = vmatprep.subr.mxu0 0.0
        %977 = vmatpush1.msra.mxu0 0.0
        %978 = vmatprep.subr.mxu0 0.0
        %979 = vmatpush1.msra.mxu0 0.0
        %980 = vmatprep.subr.mxu0 0.0
        %981 = vmatpush1.msra.mxu0 0.0
        %982 = vmatprep.subr.mxu0 0.0
        %983 = vmatpush1.msra.mxu0 0.0
        %984 = vmatprep.mubr.f32.mxu0 0.0
        %985 = vmatmul.mubr.f32.gmra.mrb[0].mxu0 %v867
        %v986 = vpop.f32.mrb[0].mxu0
        %v987 = vadd.f32 0.0, %v986
        %v988 = vpop.f32.mrb[0].mxu0
        %989 = vmatprep.mubr.f32.mxu0 0.0
        %990 = vmatmul.mubr.f32.gmra.mrb[0].mxu0 %v868
        %v991 = vpop.f32.mrb[0].mxu0
        %v992 = vadd.f32 0.0, %v991
        %v993 = vpop.f32.mrb[0].mxu0
        %994 = vmatprep.mubr.f32.mxu0 0.0
        %995 = vmatmul.mubr.f32.gmra.mrb[0].mxu0 %v869
        %v996 = vpop.f32.mrb[0].mxu0
        %v997 = vadd.f32 0.0, %v996
        %v998 = vpop.f32.mrb[0].mxu0
        %999 = vmatprep.mubr.f32.mxu0 0.0
        %1000 = vmatmul.mubr.f32.gmra.mrb[0].mxu0 %v870
        %v1001 = vpop.f32.mrb[0].mxu0
        %v1002 = vadd.f32 0.0, %v1001
        %v1003 = vpop.f32.mrb[0].mxu0
        %1004 = vmatprep.mubr.f32.mxu0 0.0
        %1005 = vmatmul.mubr.f32.gmra.mrb[0].mxu0 %v871
        %v1006 = vpop.f32.mrb[0].mxu0
        %v1007 = vadd.f32 0.0, %v1006
        %v1008 = vpop.f32.mrb[0].mxu0
        %1009 = vmatprep.mubr.f32.mxu0 0.0
        %1010 = vmatmul.mubr.f32.gmra.mrb[0].mxu0 %v872
        %v1011 = vpop.f32.mrb[0].mxu0
        %v1012 = vadd.f32 0.0, %v1011
        %v1013 = vpop.f32.mrb[0].mxu0
        %1014 = vmatprep.mubr.f32.mxu0 0.0
        %1015 = vmatmul.mubr.f32.gmra.mrb[0].mxu0 %v873
        %v1016 = vpop.f32.mrb[0].mxu0
        %v1017 = vadd.f32 0.0, %v1016
        %v1018 = vpop.f32.mrb[0].mxu0
        %1019 = vmatprep.mubr.f32.mxu0 0.0
        %1020 = vmatmul.mubr.f32.gmra.mrb[0].mxu0 %v874
        %v1021 = vpop.f32.mrb[0].mxu0
        %v1022 = vadd.f32 0.0, %v1021
        %v1023 = vpop.f32.mrb[0].mxu0
        %1024 = vmatprep.mubr.f32.mxu0 0.0
        %1025 = vmatmul.mubr.f32.gmra.mrb[0].mxu0 %v875
        %v1026 = vpop.f32.mrb[0].mxu0
        %v1027 = vadd.f32 0.0, %v1026
        %v1028 = vpop.f32.mrb[0].mxu0
        %1029 = vmatprep.mubr.f32.mxu0 0.0
        %1030 = vmatmul.mubr.f32.gmra.mrb[0].mxu0 %v876
        %v1031 = vpop.f32.mrb[0].mxu0
        %v1032 = vadd.f32 0.0, %v1031
        %v1033 = vpop.f32.mrb[0].mxu0
        %1034 = vmatprep.mubr.f32.mxu0 0.0
        %1035 = vmatmul.mubr.f32.gmra.mrb[0].mxu0 %v877
        %v1036 = vpop.f32.mrb[0].mxu0
        %v1037 = vadd.f32 0.0, %v1036
        %v1038 = vpop.f32.mrb[0].mxu0
        %1039 = vmatprep.mubr.f32.mxu0 0.0
        %1040 = vmatmul.mubr.f32.gmra.mrb[0].mxu0 %v878
        %v1041 = vpop.f32.mrb[0].mxu0
        %v1042 = vadd.f32 0.0, %v1041
        %v1043 = vpop.f32.mrb[0].mxu0
        %1044 = vmatprep.mubr.f32.mxu0 0.0
        %1045 = vmatmul.mubr.f32.gmra.mrb[0].mxu0 %v879
        %v1046 = vpop.f32.mrb[0].mxu0
        %v1047 = vadd.f32 0.0, %v1046
        %v1048 = vpop.f32.mrb[0].mxu0
        %1049 = vmatprep.mubr.f32.mxu0 0.0
        %1050 = vmatmul.mubr.f32.gmra.mrb[0].mxu0 %v880
        %v1051 = vpop.f32.mrb[0].mxu0
        %v1052 = vadd.f32 0.0, %v1051
        %v1053 = vpop.f32.mrb[0].mxu0
        %1054 = vmatprep.mubr.f32.mxu0 0.0
        %1055 = vmatmul.mubr.f32.gmra.mrb[0].mxu0 %v881
        %v1056 = vpop.f32.mrb[0].mxu0
        %v1057 = vadd.f32 0.0, %v1056
        %v1058 = vpop.f32.mrb[0].mxu0
        %1059 = vmatprep.mubr.f32.mxu0 0.0
        %1060 = vmatmul.mubr.f32.gmra.mrb[0].mxu0 %v882
        %v1061 = vpop.f32.mrb[0].mxu0
        %v1062 = vadd.f32 0.0, %v1061
        %v1063 = vpop.f32.mrb[0].mxu0
        %1064 = vmatprep.mubr.f32.mxu0 0.0
        %1065 = vmatmul.mubr.f32.gmra.mrb[0].mxu0 %v883
        %v1066 = vpop.f32.mrb[0].mxu0
        %v1067 = vadd.f32 0.0, %v1066
        %v1068 = vpop.f32.mrb[0].mxu0
        %1069 = vmatprep.mubr.f32.mxu0 0.0
        %1070 = vmatmul.mubr.f32.gmra.mrb[0].mxu0 %v884
        %v1071 = vpop.f32.mrb[0].mxu0
        %v1072 = vadd.f32 0.0, %v1071
        %v1073 = vpop.f32.mrb[0].mxu0
        %1074 = vmatprep.mubr.f32.mxu0 0.0
        %1075 = vmatmul.mubr.f32.gmra.mrb[0].mxu0 %v885
        %v1076 = vpop.f32.mrb[0].mxu0
        %v1077 = vadd.f32 0.0, %v1076
        %v1078 = vpop.f32.mrb[0].mxu0
        %1079 = vmatprep.mubr.f32.mxu0 0.0
        %1080 = vmatmul.mubr.f32.gmra.mrb[0].mxu0 %v886
        %v1081 = vpop.f32.mrb[0].mxu0
        %v1082 = vadd.f32 0.0, %v1081
        %v1083 = vpop.f32.mrb[0].mxu0
        %1084 = vmatprep.mubr.f32.mxu0 0.0
        %1085 = vmatmul.mubr.f32.gmra.mrb[0].mxu0 %v887
        %v1086 = vpop.f32.mrb[0].mxu0
        %v1087 = vadd.f32 0.0, %v1086
        %v1088 = vpop.f32.mrb[0].mxu0
        %1089 = vmatprep.mubr.f32.mxu0 0.0
        %1090 = vmatmul.mubr.f32.gmra.mrb[0].mxu0 %v888
        %v1091 = vpop.f32.mrb[0].mxu0
        %v1092 = vadd.f32 0.0, %v1091
        %v1093 = vpop.f32.mrb[0].mxu0
        %1094 = vmatprep.mubr.f32.mxu0 0.0
        %1095 = vmatmul.mubr.f32.gmra.mrb[0].mxu0 %v889
        %v1096 = vpop.f32.mrb[0].mxu0
        %v1097 = vadd.f32 0.0, %v1096
        %v1098 = vpop.f32.mrb[0].mxu0
        %1099 = vmatprep.mubr.f32.mxu0 0.0
        %1100 = vmatmul.mubr.f32.gmra.mrb[0].mxu0 %v890
        %v1101 = vpop.f32.mrb[0].mxu0
        %v1102 = vadd.f32 0.0, %v1101
        %v1103 = vpop.f32.mrb[0].mxu0
        %1104 = vmatprep.mubr.f32.mxu0 0.0
        %1105 = vmatmul.mubr.f32.gmra.mrb[0].mxu0 %v891
        %v1106 = vpop.f32.mrb[0].mxu0
        %v1107 = vadd.f32 0.0, %v1106
        %v1108 = vpop.f32.mrb[0].mxu0
        %1109 = vmatprep.mubr.f32.mxu0 0.0
        %1110 = vmatmul.mubr.f32.gmra.mrb[0].mxu0 %v892
        %v1111 = vpop.f32.mrb[0].mxu0
        %v1112 = vadd.f32 0.0, %v1111
        %v1113 = vpop.f32.mrb[0].mxu0
        %1114 = vmatprep.mubr.f32.mxu0 0.0
        %1115 = vmatmul.mubr.f32.gmra.mrb[0].mxu0 %v893
        %v1116 = vpop.f32.mrb[0].mxu0
        %v1117 = vadd.f32 0.0, %v1116
        %v1118 = vpop.f32.mrb[0].mxu0
        %1119 = vmatprep.mubr.f32.mxu0 0.0
        %1120 = vmatmul.mubr.f32.gmra.mrb[0].mxu0 %v894
        %v1121 = vpop.f32.mrb[0].mxu0
        %v1122 = vadd.f32 0.0, %v1121
        %v1123 = vpop.f32.mrb[0].mxu0
        %1124 = vmatprep.mubr.f32.mxu0 0.0
        %1125 = vmatmul.mubr.f32.gmra.mrb[0].mxu0 %v895
        %v1126 = vpop.f32.mrb[0].mxu0
        %v1127 = vadd.f32 0.0, %v1126
        %v1128 = vpop.f32.mrb[0].mxu0
        %1129 = vmatprep.mubr.f32.mxu0 0.0
        %1130 = vmatmul.mubr.f32.gmra.mrb[0].mxu0 %v896
        %v1131 = vpop.f32.mrb[0].mxu0
        %v1132 = vadd.f32 0.0, %v1131
        %v1133 = vpop.f32.mrb[0].mxu0
        %1134 = vmatprep.mubr.f32.mxu0 0.0
        %1135 = vmatmul.mubr.f32.gmra.mrb[0].mxu0 %v897
        %v1136 = vpop.f32.mrb[0].mxu0
        %v1137 = vadd.f32 0.0, %v1136
        %v1138 = vpop.f32.mrb[0].mxu0
        %1139 = vmatprep.mubr.f32.mxu0 0.0
        %1140 = vmatmul.mubr.f32.gmra.mrb[0].mxu0 %v898
        %v1141 = vpop.f32.mrb[0].mxu0
        %v1142 = vadd.f32 0.0, %v1141
        %v1143 = vpop.f32.mrb[0].mxu0
        %1144 = vmatprep.mubr.f32.mxu0 0.0
        %1145 = vmatmul.mubr.f32.gmra.mrb[0].mxu0 %v899
        %v1146 = vpop.f32.mrb[0].mxu0
        %v1147 = vadd.f32 0.0, %v1146
        %v1148 = vpop.f32.mrb[0].mxu0
        %1149 = vmatprep.mubr.f32.mxu0 0.0
        %1150 = vmatmul.mubr.f32.gmra.mrb[0].mxu0 %v900
        %v1151 = vpop.f32.mrb[0].mxu0
        %v1152 = vadd.f32 0.0, %v1151
        %v1153 = vpop.f32.mrb[0].mxu0
        %1154 = vmatprep.mubr.f32.mxu0 0.0
        %1155 = vmatmul.mubr.f32.gmra.mrb[0].mxu0 %v901
        %v1156 = vpop.f32.mrb[0].mxu0
        %v1157 = vadd.f32 0.0, %v1156
        %v1158 = vpop.f32.mrb[0].mxu0
        %1159 = vmatprep.mubr.f32.mxu0 0.0
        %1160 = vmatmul.mubr.f32.gmra.mrb[0].mxu0 %v902
        %v1161 = vpop.f32.mrb[0].mxu0
        %v1162 = vadd.f32 0.0, %v1161
        %v1163 = vpop.f32.mrb[0].mxu0
        %1164 = vdwg.mxu0
        %v1165 = vadd.f32 %v689, %v987
        %v1166 = vadd.f32 %v694, %v992
        %v1167 = vadd.f32 %v699, %v997
        %v1168 = vadd.f32 %v704, %v1002
        %v1169 = vadd.f32 %v709, %v1007
        %v1170 = vadd.f32 %v714, %v1012
        %v1171 = vadd.f32 %v719, %v1017
        %v1172 = vadd.f32 %v724, %v1022
        %v1173 = vadd.f32 %v729, %v1027
        %v1174 = vadd.f32 %v734, %v1032
        %v1175 = vadd.f32 %v739, %v1037
        %v1176 = vadd.f32 %v744, %v1042
        %v1177 = vadd.f32 %v749, %v1047
        %v1178 = vadd.f32 %v754, %v1052
        %v1179 = vadd.f32 %v759, %v1057
        %v1180 = vadd.f32 %v764, %v1062
        %v1181 = vadd.f32 %v769, %v1067
        %v1182 = vadd.f32 %v774, %v1072
        %v1183 = vadd.f32 %v779, %v1077
        %v1184 = vadd.f32 %v784, %v1082
        %v1185 = vadd.f32 %v789, %v1087
        %v1186 = vadd.f32 %v794, %v1092
        %v1187 = vadd.f32 %v799, %v1097
        %v1188 = vadd.f32 %v804, %v1102
        %v1189 = vadd.f32 %v809, %v1107
        %v1190 = vadd.f32 %v814, %v1112
        %v1191 = vadd.f32 %v819, %v1117
        %v1192 = vadd.f32 %v824, %v1122
        %v1193 = vadd.f32 %v829, %v1127
        %v1194 = vadd.f32 %v834, %v1132
        %v1195 = vadd.f32 %v839, %v1137
        %v1196 = vadd.f32 %v844, %v1142
        %v1197 = vadd.f32 %v849, %v1147
        %v1198 = vadd.f32 %v854, %v1152
        %v1199 = vadd.f32 %v859, %v1157
        %v1200 = vadd.f32 %v864, %v1162
        %v1201 = vld [vmem:[%s237 + $0x12] sm:$0xff]
        %v1202 = vld [vmem:[%s237 + $0x1a] sm:$0xff]
        %v1203 = vld [vmem:[%s237 + $0x22] sm:$0xff]
        %v1204 = vld [vmem:[%s237 + $0x2a] sm:$0xff]
        %v1205 = vld [vmem:[%s237 + $0x32] sm:$0xff]
        %v1206 = vld [vmem:[%s237 + $0x3a] sm:$0xff]
        %v1207 = vld [vmem:[%s237 + $0x42] sm:$0xff]
        %v1208 = vld [vmem:[%s237 + $0x4a] sm:$0xff]
        %v1209 = vld [vmem:[%s237 + $0x52] sm:$0xff]
        %v1210 = vld [vmem:[%s237 + $0x5a] sm:$0xff]
        %v1211 = vld [vmem:[%s237 + $0x62] sm:$0xff]
        %v1212 = vld [vmem:[%s237 + $0x6a] sm:$0xff]
        %v1213 = vld [vmem:[%s237 + $0x72] sm:$0xff]
        %v1214 = vld [vmem:[%s237 + $0x7a] sm:$0xff]
        %v1215 = vld [vmem:[%s237 + $0x82] sm:$0xff]
        %v1216 = vld [vmem:[%s237 + $0x8a] sm:$0xff]
        %v1217 = vld [vmem:[%s237 + $0x92] sm:$0xff]
        %v1218 = vld [vmem:[%s237 + $0x9a] sm:$0xff]
        %v1219 = vld [vmem:[%s237 + $0xa2] sm:$0xff]
        %v1220 = vld [vmem:[%s237 + $0xaa] sm:$0xff]
        %v1221 = vld [vmem:[%s237 + $0xb2] sm:$0xff]
        %v1222 = vld [vmem:[%s237 + $0xba] sm:$0xff]
        %v1223 = vld [vmem:[%s237 + $0xc2] sm:$0xff]
        %v1224 = vld [vmem:[%s237 + $0xca] sm:$0xff]
        %v1225 = vld [vmem:[%s237 + $0xd2] sm:$0xff]
        %v1226 = vld [vmem:[%s237 + $0xda] sm:$0xff]
        %v1227 = vld [vmem:[%s237 + $0xe2] sm:$0xff]
        %v1228 = vld [vmem:[%s237 + $0xea] sm:$0xff]
        %v1229 = vld [vmem:[%s237 + $0xf2] sm:$0xff]
        %v1230 = vld [vmem:[%s237 + $0xfa] sm:$0xff]
        %v1231 = vld [vmem:[%s237 + $0x102] sm:$0xff]
        %v1232 = vld [vmem:[%s237 + $0x10a] sm:$0xff]
        %v1233 = vld [vmem:[%s237 + $0x112] sm:$0xff]
        %v1234 = vld [vmem:[%s237 + $0x11a] sm:$0xff]
        %v1235 = vld [vmem:[%s237 + $0x122] sm:$0xff]
        %v1236 = vld [vmem:[%s237 + $0x12a] sm:$0xff]
        %s1237 = scalar_lea.vmem [#allocation6], 384
        %v1238 = vld [vmem:[%s1237] sm:$0xff]
        %v1239 = vld [vmem:[%s1237 + $0x8] sm:$0xff]
        %v1240 = vld [vmem:[%s1237 + $0x10] sm:$0xff]
        %v1241 = vld [vmem:[%s1237 + $0x18] sm:$0xff]
        %v1242 = vld [vmem:[%s1237 + $0x20] sm:$0xff]
        %v1243 = vld [vmem:[%s1237 + $0x28] sm:$0xff]
        %v1244 = vld [vmem:[%s1237 + $0x30] sm:$0xff]
        %v1245 = vld [vmem:[%s1237 + $0x38] sm:$0xff]
        %v1246 = vld [vmem:[%s1237 + $0x40] sm:$0xff]
        %v1247 = vld [vmem:[%s1237 + $0x48] sm:$0xff]
        %v1248 = vld [vmem:[%s1237 + $0x50] sm:$0xff]
        %v1249 = vld [vmem:[%s1237 + $0x58] sm:$0xff]
        %v1250 = vld [vmem:[%s1237 + $0x60] sm:$0xff]
        %v1251 = vld [vmem:[%s1237 + $0x68] sm:$0xff]
        %v1252 = vld [vmem:[%s1237 + $0x70] sm:$0xff]
        %v1253 = vld [vmem:[%s1237 + $0x78] sm:$0xff]
        %1254 = vmatprep.subr.mxu0 0.0
        %1255 = vmatpush1.msra.mxu0 %v1238
        %1256 = vmatprep.subr.mxu0 0.0
        %1257 = vmatpush1.msra.mxu0 %v1239
        %1258 = vmatprep.subr.mxu0 0.0
        %1259 = vmatpush1.msra.mxu0 %v1240
        %1260 = vmatprep.subr.mxu0 0.0
        %1261 = vmatpush1.msra.mxu0 %v1241
        %1262 = vmatprep.subr.mxu0 0.0
        %1263 = vmatpush1.msra.mxu0 %v1242
        %1264 = vmatprep.subr.mxu0 0.0
        %1265 = vmatpush1.msra.mxu0 %v1243
        %1266 = vmatprep.subr.mxu0 0.0
        %1267 = vmatpush1.msra.mxu0 %v1244
        %1268 = vmatprep.subr.mxu0 0.0
        %1269 = vmatpush1.msra.mxu0 %v1245
        %1270 = vmatprep.subr.mxu0 0.0
        %1271 = vmatpush1.msra.mxu0 %v1246
        %1272 = vmatprep.subr.mxu0 0.0
        %1273 = vmatpush1.msra.mxu0 %v1247
        %1274 = vmatprep.subr.mxu0 0.0
        %1275 = vmatpush1.msra.mxu0 %v1248
        %1276 = vmatprep.subr.mxu0 0.0
        %1277 = vmatpush1.msra.mxu0 %v1249
        %1278 = vmatprep.subr.mxu0 0.0
        %1279 = vmatpush1.msra.mxu0 %v1250
        %1280 = vmatprep.subr.mxu0 0.0
        %1281 = vmatpush1.msra.mxu0 %v1251
        %1282 = vmatprep.subr.mxu0 0.0
        %1283 = vmatpush1.msra.mxu0 %v1252
        %1284 = vmatprep.subr.mxu0 0.0
        %1285 = vmatpush1.msra.mxu0 %v1253
        %1286 = vmatprep.subr.mxu0 0.0
        %1287 = vmatpush1.msra.mxu0 0.0
        %1288 = vmatprep.subr.mxu0 0.0
        %1289 = vmatpush1.msra.mxu0 0.0
        %1290 = vmatprep.subr.mxu0 0.0
        %1291 = vmatpush1.msra.mxu0 0.0
        %1292 = vmatprep.subr.mxu0 0.0
        %1293 = vmatpush1.msra.mxu0 0.0
        %1294 = vmatprep.subr.mxu0 0.0
        %1295 = vmatpush1.msra.mxu0 0.0
        %1296 = vmatprep.subr.mxu0 0.0
        %1297 = vmatpush1.msra.mxu0 0.0
        %1298 = vmatprep.subr.mxu0 0.0
        %1299 = vmatpush1.msra.mxu0 0.0
        %1300 = vmatprep.subr.mxu0 0.0
        %1301 = vmatpush1.msra.mxu0 0.0
        %1302 = vmatprep.subr.mxu0 0.0
        %1303 = vmatpush1.msra.mxu0 0.0
        %1304 = vmatprep.subr.mxu0 0.0
        %1305 = vmatpush1.msra.mxu0 0.0
        %1306 = vmatprep.subr.mxu0 0.0
        %1307 = vmatpush1.msra.mxu0 0.0
        %1308 = vmatprep.subr.mxu0 0.0
        %1309 = vmatpush1.msra.mxu0 0.0
        %1310 = vmatprep.subr.mxu0 0.0
        %1311 = vmatpush1.msra.mxu0 0.0
        %1312 = vmatprep.subr.mxu0 0.0
        %1313 = vmatpush1.msra.mxu0 0.0
        %1314 = vmatprep.subr.mxu0 0.0
        %1315 = vmatpush1.msra.mxu0 0.0
        %1316 = vmatprep.subr.mxu0 0.0
        %1317 = vmatpush1.msra.mxu0 0.0
        %1318 = vmatprep.mubr.f32.mxu0 0.0
        %1319 = vmatmul.mubr.f32.gmra.mrb[0].mxu0 %v1201
        %v1320 = vpop.f32.mrb[0].mxu0
        %v1321 = vadd.f32 0.0, %v1320
        %v1322 = vpop.f32.mrb[0].mxu0
        %1323 = vmatprep.mubr.f32.mxu0 0.0
        %1324 = vmatmul.mubr.f32.gmra.mrb[0].mxu0 %v1202
        %v1325 = vpop.f32.mrb[0].mxu0
        %v1326 = vadd.f32 0.0, %v1325
        %v1327 = vpop.f32.mrb[0].mxu0
        %1328 = vmatprep.mubr.f32.mxu0 0.0
        %1329 = vmatmul.mubr.f32.gmra.mrb[0].mxu0 %v1203
        %v1330 = vpop.f32.mrb[0].mxu0
        %v1331 = vadd.f32 0.0, %v1330
        %v1332 = vpop.f32.mrb[0].mxu0
        %1333 = vmatprep.mubr.f32.mxu0 0.0
        %1334 = vmatmul.mubr.f32.gmra.mrb[0].mxu0 %v1204
        %v1335 = vpop.f32.mrb[0].mxu0
        %v1336 = vadd.f32 0.0, %v1335
        %v1337 = vpop.f32.mrb[0].mxu0
        %1338 = vmatprep.mubr.f32.mxu0 0.0
        %1339 = vmatmul.mubr.f32.gmra.mrb[0].mxu0 %v1205
        %v1340 = vpop.f32.mrb[0].mxu0
        %v1341 = vadd.f32 0.0, %v1340
        %v1342 = vpop.f32.mrb[0].mxu0
        %1343 = vmatprep.mubr.f32.mxu0 0.0
        %1344 = vmatmul.mubr.f32.gmra.mrb[0].mxu0 %v1206
        %v1345 = vpop.f32.mrb[0].mxu0
        %v1346 = vadd.f32 0.0, %v1345
        %v1347 = vpop.f32.mrb[0].mxu0
        %1348 = vmatprep.mubr.f32.mxu0 0.0
        %1349 = vmatmul.mubr.f32.gmra.mrb[0].mxu0 %v1207
        %v1350 = vpop.f32.mrb[0].mxu0
        %v1351 = vadd.f32 0.0, %v1350
        %v1352 = vpop.f32.mrb[0].mxu0
        %1353 = vmatprep.mubr.f32.mxu0 0.0
        %1354 = vmatmul.mubr.f32.gmra.mrb[0].mxu0 %v1208
        %v1355 = vpop.f32.mrb[0].mxu0
        %v1356 = vadd.f32 0.0, %v1355
        %v1357 = vpop.f32.mrb[0].mxu0
        %1358 = vmatprep.mubr.f32.mxu0 0.0
        %1359 = vmatmul.mubr.f32.gmra.mrb[0].mxu0 %v1209
        %v1360 = vpop.f32.mrb[0].mxu0
        %v1361 = vadd.f32 0.0, %v1360
        %v1362 = vpop.f32.mrb[0].mxu0
        %1363 = vmatprep.mubr.f32.mxu0 0.0
        %1364 = vmatmul.mubr.f32.gmra.mrb[0].mxu0 %v1210
        %v1365 = vpop.f32.mrb[0].mxu0
        %v1366 = vadd.f32 0.0, %v1365
        %v1367 = vpop.f32.mrb[0].mxu0
        %1368 = vmatprep.mubr.f32.mxu0 0.0
        %1369 = vmatmul.mubr.f32.gmra.mrb[0].mxu0 %v1211
        %v1370 = vpop.f32.mrb[0].mxu0
        %v1371 = vadd.f32 0.0, %v1370
        %v1372 = vpop.f32.mrb[0].mxu0
        %1373 = vmatprep.mubr.f32.mxu0 0.0
        %1374 = vmatmul.mubr.f32.gmra.mrb[0].mxu0 %v1212
        %v1375 = vpop.f32.mrb[0].mxu0
        %v1376 = vadd.f32 0.0, %v1375
        %v1377 = vpop.f32.mrb[0].mxu0
        %1378 = vmatprep.mubr.f32.mxu0 0.0
        %1379 = vmatmul.mubr.f32.gmra.mrb[0].mxu0 %v1213
        %v1380 = vpop.f32.mrb[0].mxu0
        %v1381 = vadd.f32 0.0, %v1380
        %v1382 = vpop.f32.mrb[0].mxu0
        %1383 = vmatprep.mubr.f32.mxu0 0.0
        %1384 = vmatmul.mubr.f32.gmra.mrb[0].mxu0 %v1214
        %v1385 = vpop.f32.mrb[0].mxu0
        %v1386 = vadd.f32 0.0, %v1385
        %v1387 = vpop.f32.mrb[0].mxu0
        %1388 = vmatprep.mubr.f32.mxu0 0.0
        %1389 = vmatmul.mubr.f32.gmra.mrb[0].mxu0 %v1215
        %v1390 = vpop.f32.mrb[0].mxu0
        %v1391 = vadd.f32 0.0, %v1390
        %v1392 = vpop.f32.mrb[0].mxu0
        %1393 = vmatprep.mubr.f32.mxu0 0.0
        %1394 = vmatmul.mubr.f32.gmra.mrb[0].mxu0 %v1216
        %v1395 = vpop.f32.mrb[0].mxu0
        %v1396 = vadd.f32 0.0, %v1395
        %v1397 = vpop.f32.mrb[0].mxu0
        %1398 = vmatprep.mubr.f32.mxu0 0.0
        %1399 = vmatmul.mubr.f32.gmra.mrb[0].mxu0 %v1217
        %v1400 = vpop.f32.mrb[0].mxu0
        %v1401 = vadd.f32 0.0, %v1400
        %v1402 = vpop.f32.mrb[0].mxu0
        %1403 = vmatprep.mubr.f32.mxu0 0.0
        %1404 = vmatmul.mubr.f32.gmra.mrb[0].mxu0 %v1218
        %v1405 = vpop.f32.mrb[0].mxu0
        %v1406 = vadd.f32 0.0, %v1405
        %v1407 = vpop.f32.mrb[0].mxu0
        %1408 = vmatprep.mubr.f32.mxu0 0.0
        %1409 = vmatmul.mubr.f32.gmra.mrb[0].mxu0 %v1219
        %v1410 = vpop.f32.mrb[0].mxu0
        %v1411 = vadd.f32 0.0, %v1410
        %v1412 = vpop.f32.mrb[0].mxu0
        %1413 = vmatprep.mubr.f32.mxu0 0.0
        %1414 = vmatmul.mubr.f32.gmra.mrb[0].mxu0 %v1220
        %v1415 = vpop.f32.mrb[0].mxu0
        %v1416 = vadd.f32 0.0, %v1415
        %v1417 = vpop.f32.mrb[0].mxu0
        %1418 = vmatprep.mubr.f32.mxu0 0.0
        %1419 = vmatmul.mubr.f32.gmra.mrb[0].mxu0 %v1221
        %v1420 = vpop.f32.mrb[0].mxu0
        %v1421 = vadd.f32 0.0, %v1420
        %v1422 = vpop.f32.mrb[0].mxu0
        %1423 = vmatprep.mubr.f32.mxu0 0.0
        %1424 = vmatmul.mubr.f32.gmra.mrb[0].mxu0 %v1222
        %v1425 = vpop.f32.mrb[0].mxu0
        %v1426 = vadd.f32 0.0, %v1425
        %v1427 = vpop.f32.mrb[0].mxu0
        %1428 = vmatprep.mubr.f32.mxu0 0.0
        %1429 = vmatmul.mubr.f32.gmra.mrb[0].mxu0 %v1223
        %v1430 = vpop.f32.mrb[0].mxu0
        %v1431 = vadd.f32 0.0, %v1430
        %v1432 = vpop.f32.mrb[0].mxu0
        %1433 = vmatprep.mubr.f32.mxu0 0.0
        %1434 = vmatmul.mubr.f32.gmra.mrb[0].mxu0 %v1224
        %v1435 = vpop.f32.mrb[0].mxu0
        %v1436 = vadd.f32 0.0, %v1435
        %v1437 = vpop.f32.mrb[0].mxu0
        %1438 = vmatprep.mubr.f32.mxu0 0.0
        %1439 = vmatmul.mubr.f32.gmra.mrb[0].mxu0 %v1225
        %v1440 = vpop.f32.mrb[0].mxu0
        %v1441 = vadd.f32 0.0, %v1440
        %v1442 = vpop.f32.mrb[0].mxu0
        %1443 = vmatprep.mubr.f32.mxu0 0.0
        %1444 = vmatmul.mubr.f32.gmra.mrb[0].mxu0 %v1226
        %v1445 = vpop.f32.mrb[0].mxu0
        %v1446 = vadd.f32 0.0, %v1445
        %v1447 = vpop.f32.mrb[0].mxu0
        %1448 = vmatprep.mubr.f32.mxu0 0.0
        %1449 = vmatmul.mubr.f32.gmra.mrb[0].mxu0 %v1227
        %v1450 = vpop.f32.mrb[0].mxu0
        %v1451 = vadd.f32 0.0, %v1450
        %v1452 = vpop.f32.mrb[0].mxu0
        %1453 = vmatprep.mubr.f32.mxu0 0.0
        %1454 = vmatmul.mubr.f32.gmra.mrb[0].mxu0 %v1228
        %v1455 = vpop.f32.mrb[0].mxu0
        %v1456 = vadd.f32 0.0, %v1455
        %v1457 = vpop.f32.mrb[0].mxu0
        %1458 = vmatprep.mubr.f32.mxu0 0.0
        %1459 = vmatmul.mubr.f32.gmra.mrb[0].mxu0 %v1229
        %v1460 = vpop.f32.mrb[0].mxu0
        %v1461 = vadd.f32 0.0, %v1460
        %v1462 = vpop.f32.mrb[0].mxu0
        %1463 = vmatprep.mubr.f32.mxu0 0.0
        %1464 = vmatmul.mubr.f32.gmra.mrb[0].mxu0 %v1230
        %v1465 = vpop.f32.mrb[0].mxu0
        %v1466 = vadd.f32 0.0, %v1465
        %v1467 = vpop.f32.mrb[0].mxu0
        %1468 = vmatprep.mubr.f32.mxu0 0.0
        %1469 = vmatmul.mubr.f32.gmra.mrb[0].mxu0 %v1231
        %v1470 = vpop.f32.mrb[0].mxu0
        %v1471 = vadd.f32 0.0, %v1470
        %v1472 = vpop.f32.mrb[0].mxu0
        %1473 = vmatprep.mubr.f32.mxu0 0.0
        %1474 = vmatmul.mubr.f32.gmra.mrb[0].mxu0 %v1232
        %v1475 = vpop.f32.mrb[0].mxu0
        %v1476 = vadd.f32 0.0, %v1475
        %v1477 = vpop.f32.mrb[0].mxu0
        %1478 = vmatprep.mubr.f32.mxu0 0.0
        %1479 = vmatmul.mubr.f32.gmra.mrb[0].mxu0 %v1233
        %v1480 = vpop.f32.mrb[0].mxu0
        %v1481 = vadd.f32 0.0, %v1480
        %v1482 = vpop.f32.mrb[0].mxu0
        %1483 = vmatprep.mubr.f32.mxu0 0.0
        %1484 = vmatmul.mubr.f32.gmra.mrb[0].mxu0 %v1234
        %v1485 = vpop.f32.mrb[0].mxu0
        %v1486 = vadd.f32 0.0, %v1485
        %v1487 = vpop.f32.mrb[0].mxu0
        %1488 = vmatprep.mubr.f32.mxu0 0.0
        %1489 = vmatmul.mubr.f32.gmra.mrb[0].mxu0 %v1235
        %v1490 = vpop.f32.mrb[0].mxu0
        %v1491 = vadd.f32 0.0, %v1490
        %v1492 = vpop.f32.mrb[0].mxu0
        %1493 = vmatprep.mubr.f32.mxu0 0.0
        %1494 = vmatmul.mubr.f32.gmra.mrb[0].mxu0 %v1236
        %v1495 = vpop.f32.mrb[0].mxu0
        %v1496 = vadd.f32 0.0, %v1495
        %v1497 = vpop.f32.mrb[0].mxu0
        %1498 = vdwg.mxu0
        %v1499 = vadd.f32 %v1165, %v1321
        %v1500 = vadd.f32 %v1166, %v1326
        %v1501 = vadd.f32 %v1167, %v1331
        %v1502 = vadd.f32 %v1168, %v1336
        %v1503 = vadd.f32 %v1169, %v1341
        %v1504 = vadd.f32 %v1170, %v1346
        %v1505 = vadd.f32 %v1171, %v1351
        %v1506 = vadd.f32 %v1172, %v1356
        %v1507 = vadd.f32 %v1173, %v1361
        %v1508 = vadd.f32 %v1174, %v1366
        %v1509 = vadd.f32 %v1175, %v1371
        %v1510 = vadd.f32 %v1176, %v1376
        %v1511 = vadd.f32 %v1177, %v1381
        %v1512 = vadd.f32 %v1178, %v1386
        %v1513 = vadd.f32 %v1179, %v1391
        %v1514 = vadd.f32 %v1180, %v1396
        %v1515 = vadd.f32 %v1181, %v1401
        %v1516 = vadd.f32 %v1182, %v1406
        %v1517 = vadd.f32 %v1183, %v1411
        %v1518 = vadd.f32 %v1184, %v1416
        %v1519 = vadd.f32 %v1185, %v1421
        %v1520 = vadd.f32 %v1186, %v1426
        %v1521 = vadd.f32 %v1187, %v1431
        %v1522 = vadd.f32 %v1188, %v1436
        %v1523 = vadd.f32 %v1189, %v1441
        %v1524 = vadd.f32 %v1190, %v1446
        %v1525 = vadd.f32 %v1191, %v1451
        %v1526 = vadd.f32 %v1192, %v1456
        %v1527 = vadd.f32 %v1193, %v1461
        %v1528 = vadd.f32 %v1194, %v1466
        %v1529 = vadd.f32 %v1195, %v1471
        %v1530 = vadd.f32 %v1196, %v1476
        %v1531 = vadd.f32 %v1197, %v1481
        %v1532 = vadd.f32 %v1198, %v1486
        %v1533 = vadd.f32 %v1199, %v1491
        %v1534 = vadd.f32 %v1200, %v1496
        %v1535 = vld [vmem:[%s237 + $0x13] sm:$0xff]
        %v1536 = vld [vmem:[%s237 + $0x1b] sm:$0xff]
        %v1537 = vld [vmem:[%s237 + $0x23] sm:$0xff]
        %v1538 = vld [vmem:[%s237 + $0x2b] sm:$0xff]
        %v1539 = vld [vmem:[%s237 + $0x33] sm:$0xff]
        %v1540 = vld [vmem:[%s237 + $0x3b] sm:$0xff]
        %v1541 = vld [vmem:[%s237 + $0x43] sm:$0xff]
        %v1542 = vld [vmem:[%s237 + $0x4b] sm:$0xff]
        %v1543 = vld [vmem:[%s237 + $0x53] sm:$0xff]
        %v1544 = vld [vmem:[%s237 + $0x5b] sm:$0xff]
        %v1545 = vld [vmem:[%s237 + $0x63] sm:$0xff]
        %v1546 = vld [vmem:[%s237 + $0x6b] sm:$0xff]
        %v1547 = vld [vmem:[%s237 + $0x73] sm:$0xff]
        %v1548 = vld [vmem:[%s237 + $0x7b] sm:$0xff]
        %v1549 = vld [vmem:[%s237 + $0x83] sm:$0xff]
        %v1550 = vld [vmem:[%s237 + $0x8b] sm:$0xff]
        %v1551 = vld [vmem:[%s237 + $0x93] sm:$0xff]
        %v1552 = vld [vmem:[%s237 + $0x9b] sm:$0xff]
        %v1553 = vld [vmem:[%s237 + $0xa3] sm:$0xff]
        %v1554 = vld [vmem:[%s237 + $0xab] sm:$0xff]
        %v1555 = vld [vmem:[%s237 + $0xb3] sm:$0xff]
        %v1556 = vld [vmem:[%s237 + $0xbb] sm:$0xff]
        %v1557 = vld [vmem:[%s237 + $0xc3] sm:$0xff]
        %v1558 = vld [vmem:[%s237 + $0xcb] sm:$0xff]
        %v1559 = vld [vmem:[%s237 + $0xd3] sm:$0xff]
        %v1560 = vld [vmem:[%s237 + $0xdb] sm:$0xff]
        %v1561 = vld [vmem:[%s237 + $0xe3] sm:$0xff]
        %v1562 = vld [vmem:[%s237 + $0xeb] sm:$0xff]
        %v1563 = vld [vmem:[%s237 + $0xf3] sm:$0xff]
        %v1564 = vld [vmem:[%s237 + $0xfb] sm:$0xff]
        %v1565 = vld [vmem:[%s237 + $0x103] sm:$0xff]
        %v1566 = vld [vmem:[%s237 + $0x10b] sm:$0xff]
        %v1567 = vld [vmem:[%s237 + $0x113] sm:$0xff]
        %v1568 = vld [vmem:[%s237 + $0x11b] sm:$0xff]
        %v1569 = vld [vmem:[%s237 + $0x123] sm:$0xff]
        %v1570 = vld [vmem:[%s237 + $0x12b] sm:$0xff]
        %s1571 = scalar_lea.vmem [#allocation6], 512
        %v1572 = vld [vmem:[%s1571] sm:$0xff]
        %v1573 = vld [vmem:[%s1571 + $0x8] sm:$0xff]
        %v1574 = vld [vmem:[%s1571 + $0x10] sm:$0xff]
        %v1575 = vld [vmem:[%s1571 + $0x18] sm:$0xff]
        %v1576 = vld [vmem:[%s1571 + $0x20] sm:$0xff]
        %v1577 = vld [vmem:[%s1571 + $0x28] sm:$0xff]
        %v1578 = vld [vmem:[%s1571 + $0x30] sm:$0xff]
        %v1579 = vld [vmem:[%s1571 + $0x38] sm:$0xff]
        %v1580 = vld [vmem:[%s1571 + $0x40] sm:$0xff]
        %v1581 = vld [vmem:[%s1571 + $0x48] sm:$0xff]
        %v1582 = vld [vmem:[%s1571 + $0x50] sm:$0xff]
        %v1583 = vld [vmem:[%s1571 + $0x58] sm:$0xff]
        %v1584 = vld [vmem:[%s1571 + $0x60] sm:$0xff]
        %v1585 = vld [vmem:[%s1571 + $0x68] sm:$0xff]
        %v1586 = vld [vmem:[%s1571 + $0x70] sm:$0xff]
        %v1587 = vld [vmem:[%s1571 + $0x78] sm:$0xff]
        %1588 = vmatprep.subr.mxu0 0.0
        %1589 = vmatpush1.msra.mxu0 %v1572
        %1590 = vmatprep.subr.mxu0 0.0
        %1591 = vmatpush1.msra.mxu0 %v1573
        %1592 = vmatprep.subr.mxu0 0.0
        %1593 = vmatpush1.msra.mxu0 %v1574
        %1594 = vmatprep.subr.mxu0 0.0
        %1595 = vmatpush1.msra.mxu0 %v1575
        %1596 = vmatprep.subr.mxu0 0.0
        %1597 = vmatpush1.msra.mxu0 %v1576
        %1598 = vmatprep.subr.mxu0 0.0
        %1599 = vmatpush1.msra.mxu0 %v1577
        %1600 = vmatprep.subr.mxu0 0.0
        %1601 = vmatpush1.msra.mxu0 %v1578
        %1602 = vmatprep.subr.mxu0 0.0
        %1603 = vmatpush1.msra.mxu0 %v1579
        %1604 = vmatprep.subr.mxu0 0.0
        %1605 = vmatpush1.msra.mxu0 %v1580
        %1606 = vmatprep.subr.mxu0 0.0
        %1607 = vmatpush1.msra.mxu0 %v1581
        %1608 = vmatprep.subr.mxu0 0.0
        %1609 = vmatpush1.msra.mxu0 %v1582
        %1610 = vmatprep.subr.mxu0 0.0
        %1611 = vmatpush1.msra.mxu0 %v1583
        %1612 = vmatprep.subr.mxu0 0.0
        %1613 = vmatpush1.msra.mxu0 %v1584
        %1614 = vmatprep.subr.mxu0 0.0
        %1615 = vmatpush1.msra.mxu0 %v1585
        %1616 = vmatprep.subr.mxu0 0.0
        %1617 = vmatpush1.msra.mxu0 %v1586
        %1618 = vmatprep.subr.mxu0 0.0
        %1619 = vmatpush1.msra.mxu0 %v1587
        %1620 = vmatprep.subr.mxu0 0.0
        %1621 = vmatpush1.msra.mxu0 0.0
        %1622 = vmatprep.subr.mxu0 0.0
        %1623 = vmatpush1.msra.mxu0 0.0
        %1624 = vmatprep.subr.mxu0 0.0
        %1625 = vmatpush1.msra.mxu0 0.0
        %1626 = vmatprep.subr.mxu0 0.0
        %1627 = vmatpush1.msra.mxu0 0.0
        %1628 = vmatprep.subr.mxu0 0.0
        %1629 = vmatpush1.msra.mxu0 0.0
        %1630 = vmatprep.subr.mxu0 0.0
        %1631 = vmatpush1.msra.mxu0 0.0
        %1632 = vmatprep.subr.mxu0 0.0
        %1633 = vmatpush1.msra.mxu0 0.0
        %1634 = vmatprep.subr.mxu0 0.0
        %1635 = vmatpush1.msra.mxu0 0.0
        %1636 = vmatprep.subr.mxu0 0.0
        %1637 = vmatpush1.msra.mxu0 0.0
        %1638 = vmatprep.subr.mxu0 0.0
        %1639 = vmatpush1.msra.mxu0 0.0
        %1640 = vmatprep.subr.mxu0 0.0
        %1641 = vmatpush1.msra.mxu0 0.0
        %1642 = vmatprep.subr.mxu0 0.0
        %1643 = vmatpush1.msra.mxu0 0.0
        %1644 = vmatprep.subr.mxu0 0.0
        %1645 = vmatpush1.msra.mxu0 0.0
        %1646 = vmatprep.subr.mxu0 0.0
        %1647 = vmatpush1.msra.mxu0 0.0
        %1648 = vmatprep.subr.mxu0 0.0
        %1649 = vmatpush1.msra.mxu0 0.0
        %1650 = vmatprep.subr.mxu0 0.0
        %1651 = vmatpush1.msra.mxu0 0.0
        %1652 = vmatprep.mubr.f32.mxu0 0.0
        %1653 = vmatmul.mubr.f32.gmra.mrb[0].mxu0 %v1535
        %v1654 = vpop.f32.mrb[0].mxu0
        %v1655 = vadd.f32 0.0, %v1654
        %v1656 = vpop.f32.mrb[0].mxu0
        %1657 = vmatprep.mubr.f32.mxu0 0.0
        %1658 = vmatmul.mubr.f32.gmra.mrb[0].mxu0 %v1536
        %v1659 = vpop.f32.mrb[0].mxu0
        %v1660 = vadd.f32 0.0, %v1659
        %v1661 = vpop.f32.mrb[0].mxu0
        %1662 = vmatprep.mubr.f32.mxu0 0.0
        %1663 = vmatmul.mubr.f32.gmra.mrb[0].mxu0 %v1537
        %v1664 = vpop.f32.mrb[0].mxu0
        %v1665 = vadd.f32 0.0, %v1664
        %v1666 = vpop.f32.mrb[0].mxu0
        %1667 = vmatprep.mubr.f32.mxu0 0.0
        %1668 = vmatmul.mubr.f32.gmra.mrb[0].mxu0 %v1538
        %v1669 = vpop.f32.mrb[0].mxu0
        %v1670 = vadd.f32 0.0, %v1669
        %v1671 = vpop.f32.mrb[0].mxu0
        %1672 = vmatprep.mubr.f32.mxu0 0.0
        %1673 = vmatmul.mubr.f32.gmra.mrb[0].mxu0 %v1539
        %v1674 = vpop.f32.mrb[0].mxu0
        %v1675 = vadd.f32 0.0, %v1674
        %v1676 = vpop.f32.mrb[0].mxu0
        %1677 = vmatprep.mubr.f32.mxu0 0.0
        %1678 = vmatmul.mubr.f32.gmra.mrb[0].mxu0 %v1540
        %v1679 = vpop.f32.mrb[0].mxu0
        %v1680 = vadd.f32 0.0, %v1679
        %v1681 = vpop.f32.mrb[0].mxu0
        %1682 = vmatprep.mubr.f32.mxu0 0.0
        %1683 = vmatmul.mubr.f32.gmra.mrb[0].mxu0 %v1541
        %v1684 = vpop.f32.mrb[0].mxu0
        %v1685 = vadd.f32 0.0, %v1684
        %v1686 = vpop.f32.mrb[0].mxu0
        %1687 = vmatprep.mubr.f32.mxu0 0.0
        %1688 = vmatmul.mubr.f32.gmra.mrb[0].mxu0 %v1542
        %v1689 = vpop.f32.mrb[0].mxu0
        %v1690 = vadd.f32 0.0, %v1689
        %v1691 = vpop.f32.mrb[0].mxu0
        %1692 = vmatprep.mubr.f32.mxu0 0.0
        %1693 = vmatmul.mubr.f32.gmra.mrb[0].mxu0 %v1543
        %v1694 = vpop.f32.mrb[0].mxu0
        %v1695 = vadd.f32 0.0, %v1694
        %v1696 = vpop.f32.mrb[0].mxu0
        %1697 = vmatprep.mubr.f32.mxu0 0.0
        %1698 = vmatmul.mubr.f32.gmra.mrb[0].mxu0 %v1544
        %v1699 = vpop.f32.mrb[0].mxu0
        %v1700 = vadd.f32 0.0, %v1699
        %v1701 = vpop.f32.mrb[0].mxu0
        %1702 = vmatprep.mubr.f32.mxu0 0.0
        %1703 = vmatmul.mubr.f32.gmra.mrb[0].mxu0 %v1545
        %v1704 = vpop.f32.mrb[0].mxu0
        %v1705 = vadd.f32 0.0, %v1704
        %v1706 = vpop.f32.mrb[0].mxu0
        %1707 = vmatprep.mubr.f32.mxu0 0.0
        %1708 = vmatmul.mubr.f32.gmra.mrb[0].mxu0 %v1546
        %v1709 = vpop.f32.mrb[0].mxu0
        %v1710 = vadd.f32 0.0, %v1709
        %v1711 = vpop.f32.mrb[0].mxu0
        %1712 = vmatprep.mubr.f32.mxu0 0.0
        %1713 = vmatmul.mubr.f32.gmra.mrb[0].mxu0 %v1547
        %v1714 = vpop.f32.mrb[0].mxu0
        %v1715 = vadd.f32 0.0, %v1714
        %v1716 = vpop.f32.mrb[0].mxu0
        %1717 = vmatprep.mubr.f32.mxu0 0.0
        %1718 = vmatmul.mubr.f32.gmra.mrb[0].mxu0 %v1548
        %v1719 = vpop.f32.mrb[0].mxu0
        %v1720 = vadd.f32 0.0, %v1719
        %v1721 = vpop.f32.mrb[0].mxu0
        %1722 = vmatprep.mubr.f32.mxu0 0.0
        %1723 = vmatmul.mubr.f32.gmra.mrb[0].mxu0 %v1549
        %v1724 = vpop.f32.mrb[0].mxu0
        %v1725 = vadd.f32 0.0, %v1724
        %v1726 = vpop.f32.mrb[0].mxu0
        %1727 = vmatprep.mubr.f32.mxu0 0.0
        %1728 = vmatmul.mubr.f32.gmra.mrb[0].mxu0 %v1550
        %v1729 = vpop.f32.mrb[0].mxu0
        %v1730 = vadd.f32 0.0, %v1729
        %v1731 = vpop.f32.mrb[0].mxu0
        %1732 = vmatprep.mubr.f32.mxu0 0.0
        %1733 = vmatmul.mubr.f32.gmra.mrb[0].mxu0 %v1551
        %v1734 = vpop.f32.mrb[0].mxu0
        %v1735 = vadd.f32 0.0, %v1734
        %v1736 = vpop.f32.mrb[0].mxu0
        %1737 = vmatprep.mubr.f32.mxu0 0.0
        %1738 = vmatmul.mubr.f32.gmra.mrb[0].mxu0 %v1552
        %v1739 = vpop.f32.mrb[0].mxu0
        %v1740 = vadd.f32 0.0, %v1739
        %v1741 = vpop.f32.mrb[0].mxu0
        %1742 = vmatprep.mubr.f32.mxu0 0.0
        %1743 = vmatmul.mubr.f32.gmra.mrb[0].mxu0 %v1553
        %v1744 = vpop.f32.mrb[0].mxu0
        %v1745 = vadd.f32 0.0, %v1744
        %v1746 = vpop.f32.mrb[0].mxu0
        %1747 = vmatprep.mubr.f32.mxu0 0.0
        %1748 = vmatmul.mubr.f32.gmra.mrb[0].mxu0 %v1554
        %v1749 = vpop.f32.mrb[0].mxu0
        %v1750 = vadd.f32 0.0, %v1749
        %v1751 = vpop.f32.mrb[0].mxu0
        %1752 = vmatprep.mubr.f32.mxu0 0.0
        %1753 = vmatmul.mubr.f32.gmra.mrb[0].mxu0 %v1555
        %v1754 = vpop.f32.mrb[0].mxu0
        %v1755 = vadd.f32 0.0, %v1754
        %v1756 = vpop.f32.mrb[0].mxu0
        %1757 = vmatprep.mubr.f32.mxu0 0.0
        %1758 = vmatmul.mubr.f32.gmra.mrb[0].mxu0 %v1556
        %v1759 = vpop.f32.mrb[0].mxu0
        %v1760 = vadd.f32 0.0, %v1759
        %v1761 = vpop.f32.mrb[0].mxu0
        %1762 = vmatprep.mubr.f32.mxu0 0.0
        %1763 = vmatmul.mubr.f32.gmra.mrb[0].mxu0 %v1557
        %v1764 = vpop.f32.mrb[0].mxu0
        %v1765 = vadd.f32 0.0, %v1764
        %v1766 = vpop.f32.mrb[0].mxu0
        %1767 = vmatprep.mubr.f32.mxu0 0.0
        %1768 = vmatmul.mubr.f32.gmra.mrb[0].mxu0 %v1558
        %v1769 = vpop.f32.mrb[0].mxu0
        %v1770 = vadd.f32 0.0, %v1769
        %v1771 = vpop.f32.mrb[0].mxu0
        %1772 = vmatprep.mubr.f32.mxu0 0.0
        %1773 = vmatmul.mubr.f32.gmra.mrb[0].mxu0 %v1559
        %v1774 = vpop.f32.mrb[0].mxu0
        %v1775 = vadd.f32 0.0, %v1774
        %v1776 = vpop.f32.mrb[0].mxu0
        %1777 = vmatprep.mubr.f32.mxu0 0.0
        %1778 = vmatmul.mubr.f32.gmra.mrb[0].mxu0 %v1560
        %v1779 = vpop.f32.mrb[0].mxu0
        %v1780 = vadd.f32 0.0, %v1779
        %v1781 = vpop.f32.mrb[0].mxu0
        %1782 = vmatprep.mubr.f32.mxu0 0.0
        %1783 = vmatmul.mubr.f32.gmra.mrb[0].mxu0 %v1561
        %v1784 = vpop.f32.mrb[0].mxu0
        %v1785 = vadd.f32 0.0, %v1784
        %v1786 = vpop.f32.mrb[0].mxu0
        %1787 = vmatprep.mubr.f32.mxu0 0.0
        %1788 = vmatmul.mubr.f32.gmra.mrb[0].mxu0 %v1562
        %v1789 = vpop.f32.mrb[0].mxu0
        %v1790 = vadd.f32 0.0, %v1789
        %v1791 = vpop.f32.mrb[0].mxu0
        %1792 = vmatprep.mubr.f32.mxu0 0.0
        %1793 = vmatmul.mubr.f32.gmra.mrb[0].mxu0 %v1563
        %v1794 = vpop.f32.mrb[0].mxu0
        %v1795 = vadd.f32 0.0, %v1794
        %v1796 = vpop.f32.mrb[0].mxu0
        %1797 = vmatprep.mubr.f32.mxu0 0.0
        %1798 = vmatmul.mubr.f32.gmra.mrb[0].mxu0 %v1564
        %v1799 = vpop.f32.mrb[0].mxu0
        %v1800 = vadd.f32 0.0, %v1799
        %v1801 = vpop.f32.mrb[0].mxu0
        %1802 = vmatprep.mubr.f32.mxu0 0.0
        %1803 = vmatmul.mubr.f32.gmra.mrb[0].mxu0 %v1565
        %v1804 = vpop.f32.mrb[0].mxu0
        %v1805 = vadd.f32 0.0, %v1804
        %v1806 = vpop.f32.mrb[0].mxu0
        %1807 = vmatprep.mubr.f32.mxu0 0.0
        %1808 = vmatmul.mubr.f32.gmra.mrb[0].mxu0 %v1566
        %v1809 = vpop.f32.mrb[0].mxu0
        %v1810 = vadd.f32 0.0, %v1809
        %v1811 = vpop.f32.mrb[0].mxu0
        %1812 = vmatprep.mubr.f32.mxu0 0.0
        %1813 = vmatmul.mubr.f32.gmra.mrb[0].mxu0 %v1567
        %v1814 = vpop.f32.mrb[0].mxu0
        %v1815 = vadd.f32 0.0, %v1814
        %v1816 = vpop.f32.mrb[0].mxu0
        %1817 = vmatprep.mubr.f32.mxu0 0.0
        %1818 = vmatmul.mubr.f32.gmra.mrb[0].mxu0 %v1568
        %v1819 = vpop.f32.mrb[0].mxu0
        %v1820 = vadd.f32 0.0, %v1819
        %v1821 = vpop.f32.mrb[0].mxu0
        %1822 = vmatprep.mubr.f32.mxu0 0.0
        %1823 = vmatmul.mubr.f32.gmra.mrb[0].mxu0 %v1569
        %v1824 = vpop.f32.mrb[0].mxu0
        %v1825 = vadd.f32 0.0, %v1824
        %v1826 = vpop.f32.mrb[0].mxu0
        %1827 = vmatprep.mubr.f32.mxu0 0.0
        %1828 = vmatmul.mubr.f32.gmra.mrb[0].mxu0 %v1570
        %v1829 = vpop.f32.mrb[0].mxu0
        %v1830 = vadd.f32 0.0, %v1829
        %v1831 = vpop.f32.mrb[0].mxu0
        %1832 = vdwg.mxu0
        %v1833 = vadd.f32 %v1499, %v1655
        %v1834 = vadd.f32 %v1500, %v1660
        %v1835 = vadd.f32 %v1501, %v1665
        %v1836 = vadd.f32 %v1502, %v1670
        %v1837 = vadd.f32 %v1503, %v1675
        %v1838 = vadd.f32 %v1504, %v1680
        %v1839 = vadd.f32 %v1505, %v1685
        %v1840 = vadd.f32 %v1506, %v1690
        %v1841 = vadd.f32 %v1507, %v1695
        %v1842 = vadd.f32 %v1508, %v1700
        %v1843 = vadd.f32 %v1509, %v1705
        %v1844 = vadd.f32 %v1510, %v1710
        %v1845 = vadd.f32 %v1511, %v1715
        %v1846 = vadd.f32 %v1512, %v1720
        %v1847 = vadd.f32 %v1513, %v1725
        %v1848 = vadd.f32 %v1514, %v1730
        %v1849 = vadd.f32 %v1515, %v1735
        %v1850 = vadd.f32 %v1516, %v1740
        %v1851 = vadd.f32 %v1517, %v1745
        %v1852 = vadd.f32 %v1518, %v1750
        %v1853 = vadd.f32 %v1519, %v1755
        %v1854 = vadd.f32 %v1520, %v1760
        %v1855 = vadd.f32 %v1521, %v1765
        %v1856 = vadd.f32 %v1522, %v1770
        %v1857 = vadd.f32 %v1523, %v1775
        %v1858 = vadd.f32 %v1524, %v1780
        %v1859 = vadd.f32 %v1525, %v1785
        %v1860 = vadd.f32 %v1526, %v1790
        %v1861 = vadd.f32 %v1527, %v1795
        %v1862 = vadd.f32 %v1528, %v1800
        %v1863 = vadd.f32 %v1529, %v1805
        %v1864 = vadd.f32 %v1530, %v1810
        %v1865 = vadd.f32 %v1531, %v1815
        %v1866 = vadd.f32 %v1532, %v1820
        %v1867 = vadd.f32 %v1533, %v1825
        %v1868 = vadd.f32 %v1534, %v1830
        %v1869 = vld [vmem:[%s237 + $0x14] sm:$0xff]
        %v1870 = vld [vmem:[%s237 + $0x1c] sm:$0xff]
        %v1871 = vld [vmem:[%s237 + $0x24] sm:$0xff]
        %v1872 = vld [vmem:[%s237 + $0x2c] sm:$0xff]
        %v1873 = vld [vmem:[%s237 + $0x34] sm:$0xff]
        %v1874 = vld [vmem:[%s237 + $0x3c] sm:$0xff]
        %v1875 = vld [vmem:[%s237 + $0x44] sm:$0xff]
        %v1876 = vld [vmem:[%s237 + $0x4c] sm:$0xff]
        %v1877 = vld [vmem:[%s237 + $0x54] sm:$0xff]
        %v1878 = vld [vmem:[%s237 + $0x5c] sm:$0xff]
        %v1879 = vld [vmem:[%s237 + $0x64] sm:$0xff]
        %v1880 = vld [vmem:[%s237 + $0x6c] sm:$0xff]
        %v1881 = vld [vmem:[%s237 + $0x74] sm:$0xff]
        %v1882 = vld [vmem:[%s237 + $0x7c] sm:$0xff]
        %v1883 = vld [vmem:[%s237 + $0x84] sm:$0xff]
        %v1884 = vld [vmem:[%s237 + $0x8c] sm:$0xff]
        %v1885 = vld [vmem:[%s237 + $0x94] sm:$0xff]
        %v1886 = vld [vmem:[%s237 + $0x9c] sm:$0xff]
        %v1887 = vld [vmem:[%s237 + $0xa4] sm:$0xff]
        %v1888 = vld [vmem:[%s237 + $0xac] sm:$0xff]
        %v1889 = vld [vmem:[%s237 + $0xb4] sm:$0xff]
        %v1890 = vld [vmem:[%s237 + $0xbc] sm:$0xff]
        %v1891 = vld [vmem:[%s237 + $0xc4] sm:$0xff]
        %v1892 = vld [vmem:[%s237 + $0xcc] sm:$0xff]
        %v1893 = vld [vmem:[%s237 + $0xd4] sm:$0xff]
        %v1894 = vld [vmem:[%s237 + $0xdc] sm:$0xff]
        %v1895 = vld [vmem:[%s237 + $0xe4] sm:$0xff]
        %v1896 = vld [vmem:[%s237 + $0xec] sm:$0xff]
        %v1897 = vld [vmem:[%s237 + $0xf4] sm:$0xff]
        %v1898 = vld [vmem:[%s237 + $0xfc] sm:$0xff]
        %v1899 = vld [vmem:[%s237 + $0x104] sm:$0xff]
        %v1900 = vld [vmem:[%s237 + $0x10c] sm:$0xff]
        %v1901 = vld [vmem:[%s237 + $0x114] sm:$0xff]
        %v1902 = vld [vmem:[%s237 + $0x11c] sm:$0xff]
        %v1903 = vld [vmem:[%s237 + $0x124] sm:$0xff]
        %v1904 = vld [vmem:[%s237 + $0x12c] sm:$0xff]
        %s1905 = scalar_lea.vmem [#allocation6], 640
        %v1906 = vld [vmem:[%s1905] sm:$0xff]
        %v1907 = vld [vmem:[%s1905 + $0x8] sm:$0xff]
        %v1908 = vld [vmem:[%s1905 + $0x10] sm:$0xff]
        %v1909 = vld [vmem:[%s1905 + $0x18] sm:$0xff]
        %v1910 = vld [vmem:[%s1905 + $0x20] sm:$0xff]
        %v1911 = vld [vmem:[%s1905 + $0x28] sm:$0xff]
        %v1912 = vld [vmem:[%s1905 + $0x30] sm:$0xff]
        %v1913 = vld [vmem:[%s1905 + $0x38] sm:$0xff]
        %v1914 = vld [vmem:[%s1905 + $0x40] sm:$0xff]
        %v1915 = vld [vmem:[%s1905 + $0x48] sm:$0xff]
        %v1916 = vld [vmem:[%s1905 + $0x50] sm:$0xff]
        %v1917 = vld [vmem:[%s1905 + $0x58] sm:$0xff]
        %v1918 = vld [vmem:[%s1905 + $0x60] sm:$0xff]
        %v1919 = vld [vmem:[%s1905 + $0x68] sm:$0xff]
        %v1920 = vld [vmem:[%s1905 + $0x70] sm:$0xff]
        %v1921 = vld [vmem:[%s1905 + $0x78] sm:$0xff]
        %1922 = vmatprep.subr.mxu0 0.0
        %1923 = vmatpush1.msra.mxu0 %v1906
        %1924 = vmatprep.subr.mxu0 0.0
        %1925 = vmatpush1.msra.mxu0 %v1907
        %1926 = vmatprep.subr.mxu0 0.0
        %1927 = vmatpush1.msra.mxu0 %v1908
        %1928 = vmatprep.subr.mxu0 0.0
        %1929 = vmatpush1.msra.mxu0 %v1909
        %1930 = vmatprep.subr.mxu0 0.0
        %1931 = vmatpush1.msra.mxu0 %v1910
        %1932 = vmatprep.subr.mxu0 0.0
        %1933 = vmatpush1.msra.mxu0 %v1911
        %1934 = vmatprep.subr.mxu0 0.0
        %1935 = vmatpush1.msra.mxu0 %v1912
        %1936 = vmatprep.subr.mxu0 0.0
        %1937 = vmatpush1.msra.mxu0 %v1913
        %1938 = vmatprep.subr.mxu0 0.0
        %1939 = vmatpush1.msra.mxu0 %v1914
        %1940 = vmatprep.subr.mxu0 0.0
        %1941 = vmatpush1.msra.mxu0 %v1915
        %1942 = vmatprep.subr.mxu0 0.0
        %1943 = vmatpush1.msra.mxu0 %v1916
        %1944 = vmatprep.subr.mxu0 0.0
        %1945 = vmatpush1.msra.mxu0 %v1917
        %1946 = vmatprep.subr.mxu0 0.0
        %1947 = vmatpush1.msra.mxu0 %v1918
        %1948 = vmatprep.subr.mxu0 0.0
        %1949 = vmatpush1.msra.mxu0 %v1919
        %1950 = vmatprep.subr.mxu0 0.0
        %1951 = vmatpush1.msra.mxu0 %v1920
        %1952 = vmatprep.subr.mxu0 0.0
        %1953 = vmatpush1.msra.mxu0 %v1921
        %1954 = vmatprep.subr.mxu0 0.0
        %1955 = vmatpush1.msra.mxu0 0.0
        %1956 = vmatprep.subr.mxu0 0.0
        %1957 = vmatpush1.msra.mxu0 0.0
        %1958 = vmatprep.subr.mxu0 0.0
        %1959 = vmatpush1.msra.mxu0 0.0
        %1960 = vmatprep.subr.mxu0 0.0
        %1961 = vmatpush1.msra.mxu0 0.0
        %1962 = vmatprep.subr.mxu0 0.0
        %1963 = vmatpush1.msra.mxu0 0.0
        %1964 = vmatprep.subr.mxu0 0.0
        %1965 = vmatpush1.msra.mxu0 0.0
        %1966 = vmatprep.subr.mxu0 0.0
        %1967 = vmatpush1.msra.mxu0 0.0
        %1968 = vmatprep.subr.mxu0 0.0
        %1969 = vmatpush1.msra.mxu0 0.0
        %1970 = vmatprep.subr.mxu0 0.0
        %1971 = vmatpush1.msra.mxu0 0.0
        %1972 = vmatprep.subr.mxu0 0.0
        %1973 = vmatpush1.msra.mxu0 0.0
        %1974 = vmatprep.subr.mxu0 0.0
        %1975 = vmatpush1.msra.mxu0 0.0
        %1976 = vmatprep.subr.mxu0 0.0
        %1977 = vmatpush1.msra.mxu0 0.0
        %1978 = vmatprep.subr.mxu0 0.0
        %1979 = vmatpush1.msra.mxu0 0.0
        %1980 = vmatprep.subr.mxu0 0.0
        %1981 = vmatpush1.msra.mxu0 0.0
        %1982 = vmatprep.subr.mxu0 0.0
        %1983 = vmatpush1.msra.mxu0 0.0
        %1984 = vmatprep.subr.mxu0 0.0
        %1985 = vmatpush1.msra.mxu0 0.0
        %1986 = vmatprep.mubr.f32.mxu0 0.0
        %1987 = vmatmul.mubr.f32.gmra.mrb[0].mxu0 %v1869
        %v1988 = vpop.f32.mrb[0].mxu0
        %v1989 = vadd.f32 0.0, %v1988
        %v1990 = vpop.f32.mrb[0].mxu0
        %1991 = vmatprep.mubr.f32.mxu0 0.0
        %1992 = vmatmul.mubr.f32.gmra.mrb[0].mxu0 %v1870
        %v1993 = vpop.f32.mrb[0].mxu0
        %v1994 = vadd.f32 0.0, %v1993
        %v1995 = vpop.f32.mrb[0].mxu0
        %1996 = vmatprep.mubr.f32.mxu0 0.0
        %1997 = vmatmul.mubr.f32.gmra.mrb[0].mxu0 %v1871
        %v1998 = vpop.f32.mrb[0].mxu0
        %v1999 = vadd.f32 0.0, %v1998
        %v2000 = vpop.f32.mrb[0].mxu0
        %2001 = vmatprep.mubr.f32.mxu0 0.0
        %2002 = vmatmul.mubr.f32.gmra.mrb[0].mxu0 %v1872
        %v2003 = vpop.f32.mrb[0].mxu0
        %v2004 = vadd.f32 0.0, %v2003
        %v2005 = vpop.f32.mrb[0].mxu0
        %2006 = vmatprep.mubr.f32.mxu0 0.0
        %2007 = vmatmul.mubr.f32.gmra.mrb[0].mxu0 %v1873
        %v2008 = vpop.f32.mrb[0].mxu0
        %v2009 = vadd.f32 0.0, %v2008
        %v2010 = vpop.f32.mrb[0].mxu0
        %2011 = vmatprep.mubr.f32.mxu0 0.0
        %2012 = vmatmul.mubr.f32.gmra.mrb[0].mxu0 %v1874
        %v2013 = vpop.f32.mrb[0].mxu0
        %v2014 = vadd.f32 0.0, %v2013
        %v2015 = vpop.f32.mrb[0].mxu0
        %2016 = vmatprep.mubr.f32.mxu0 0.0
        %2017 = vmatmul.mubr.f32.gmra.mrb[0].mxu0 %v1875
        %v2018 = vpop.f32.mrb[0].mxu0
        %v2019 = vadd.f32 0.0, %v2018
        %v2020 = vpop.f32.mrb[0].mxu0
        %2021 = vmatprep.mubr.f32.mxu0 0.0
        %2022 = vmatmul.mubr.f32.gmra.mrb[0].mxu0 %v1876
        %v2023 = vpop.f32.mrb[0].mxu0
        %v2024 = vadd.f32 0.0, %v2023
        %v2025 = vpop.f32.mrb[0].mxu0
        %2026 = vmatprep.mubr.f32.mxu0 0.0
        %2027 = vmatmul.mubr.f32.gmra.mrb[0].mxu0 %v1877
        %v2028 = vpop.f32.mrb[0].mxu0
        %v2029 = vadd.f32 0.0, %v2028
        %v2030 = vpop.f32.mrb[0].mxu0
        %2031 = vmatprep.mubr.f32.mxu0 0.0
        %2032 = vmatmul.mubr.f32.gmra.mrb[0].mxu0 %v1878
        %v2033 = vpop.f32.mrb[0].mxu0
        %v2034 = vadd.f32 0.0, %v2033
        %v2035 = vpop.f32.mrb[0].mxu0
        %2036 = vmatprep.mubr.f32.mxu0 0.0
        %2037 = vmatmul.mubr.f32.gmra.mrb[0].mxu0 %v1879
        %v2038 = vpop.f32.mrb[0].mxu0
        %v2039 = vadd.f32 0.0, %v2038
        %v2040 = vpop.f32.mrb[0].mxu0
        %2041 = vmatprep.mubr.f32.mxu0 0.0
        %2042 = vmatmul.mubr.f32.gmra.mrb[0].mxu0 %v1880
        %v2043 = vpop.f32.mrb[0].mxu0
        %v2044 = vadd.f32 0.0, %v2043
        %v2045 = vpop.f32.mrb[0].mxu0
        %2046 = vmatprep.mubr.f32.mxu0 0.0
        %2047 = vmatmul.mubr.f32.gmra.mrb[0].mxu0 %v1881
        %v2048 = vpop.f32.mrb[0].mxu0
        %v2049 = vadd.f32 0.0, %v2048
        %v2050 = vpop.f32.mrb[0].mxu0
        %2051 = vmatprep.mubr.f32.mxu0 0.0
        %2052 = vmatmul.mubr.f32.gmra.mrb[0].mxu0 %v1882
        %v2053 = vpop.f32.mrb[0].mxu0
        %v2054 = vadd.f32 0.0, %v2053
        %v2055 = vpop.f32.mrb[0].mxu0
        %2056 = vmatprep.mubr.f32.mxu0 0.0
        %2057 = vmatmul.mubr.f32.gmra.mrb[0].mxu0 %v1883
        %v2058 = vpop.f32.mrb[0].mxu0
        %v2059 = vadd.f32 0.0, %v2058
        %v2060 = vpop.f32.mrb[0].mxu0
        %2061 = vmatprep.mubr.f32.mxu0 0.0
        %2062 = vmatmul.mubr.f32.gmra.mrb[0].mxu0 %v1884
        %v2063 = vpop.f32.mrb[0].mxu0
        %v2064 = vadd.f32 0.0, %v2063
        %v2065 = vpop.f32.mrb[0].mxu0
        %2066 = vmatprep.mubr.f32.mxu0 0.0
        %2067 = vmatmul.mubr.f32.gmra.mrb[0].mxu0 %v1885
        %v2068 = vpop.f32.mrb[0].mxu0
        %v2069 = vadd.f32 0.0, %v2068
        %v2070 = vpop.f32.mrb[0].mxu0
        %2071 = vmatprep.mubr.f32.mxu0 0.0
        %2072 = vmatmul.mubr.f32.gmra.mrb[0].mxu0 %v1886
        %v2073 = vpop.f32.mrb[0].mxu0
        %v2074 = vadd.f32 0.0, %v2073
        %v2075 = vpop.f32.mrb[0].mxu0
        %2076 = vmatprep.mubr.f32.mxu0 0.0
        %2077 = vmatmul.mubr.f32.gmra.mrb[0].mxu0 %v1887
        %v2078 = vpop.f32.mrb[0].mxu0
        %v2079 = vadd.f32 0.0, %v2078
        %v2080 = vpop.f32.mrb[0].mxu0
        %2081 = vmatprep.mubr.f32.mxu0 0.0
        %2082 = vmatmul.mubr.f32.gmra.mrb[0].mxu0 %v1888
        %v2083 = vpop.f32.mrb[0].mxu0
        %v2084 = vadd.f32 0.0, %v2083
        %v2085 = vpop.f32.mrb[0].mxu0
        %2086 = vmatprep.mubr.f32.mxu0 0.0
        %2087 = vmatmul.mubr.f32.gmra.mrb[0].mxu0 %v1889
        %v2088 = vpop.f32.mrb[0].mxu0
        %v2089 = vadd.f32 0.0, %v2088
        %v2090 = vpop.f32.mrb[0].mxu0
        %2091 = vmatprep.mubr.f32.mxu0 0.0
        %2092 = vmatmul.mubr.f32.gmra.mrb[0].mxu0 %v1890
        %v2093 = vpop.f32.mrb[0].mxu0
        %v2094 = vadd.f32 0.0, %v2093
        %v2095 = vpop.f32.mrb[0].mxu0
        %2096 = vmatprep.mubr.f32.mxu0 0.0
        %2097 = vmatmul.mubr.f32.gmra.mrb[0].mxu0 %v1891
        %v2098 = vpop.f32.mrb[0].mxu0
        %v2099 = vadd.f32 0.0, %v2098
        %v2100 = vpop.f32.mrb[0].mxu0
        %2101 = vmatprep.mubr.f32.mxu0 0.0
        %2102 = vmatmul.mubr.f32.gmra.mrb[0].mxu0 %v1892
        %v2103 = vpop.f32.mrb[0].mxu0
        %v2104 = vadd.f32 0.0, %v2103
        %v2105 = vpop.f32.mrb[0].mxu0
        %2106 = vmatprep.mubr.f32.mxu0 0.0
        %2107 = vmatmul.mubr.f32.gmra.mrb[0].mxu0 %v1893
        %v2108 = vpop.f32.mrb[0].mxu0
        %v2109 = vadd.f32 0.0, %v2108
        %v2110 = vpop.f32.mrb[0].mxu0
        %2111 = vmatprep.mubr.f32.mxu0 0.0
        %2112 = vmatmul.mubr.f32.gmra.mrb[0].mxu0 %v1894
        %v2113 = vpop.f32.mrb[0].mxu0
        %v2114 = vadd.f32 0.0, %v2113
        %v2115 = vpop.f32.mrb[0].mxu0
        %2116 = vmatprep.mubr.f32.mxu0 0.0
        %2117 = vmatmul.mubr.f32.gmra.mrb[0].mxu0 %v1895
        %v2118 = vpop.f32.mrb[0].mxu0
        %v2119 = vadd.f32 0.0, %v2118
        %v2120 = vpop.f32.mrb[0].mxu0
        %2121 = vmatprep.mubr.f32.mxu0 0.0
        %2122 = vmatmul.mubr.f32.gmra.mrb[0].mxu0 %v1896
        %v2123 = vpop.f32.mrb[0].mxu0
        %v2124 = vadd.f32 0.0, %v2123
        %v2125 = vpop.f32.mrb[0].mxu0
        %2126 = vmatprep.mubr.f32.mxu0 0.0
        %2127 = vmatmul.mubr.f32.gmra.mrb[0].mxu0 %v1897
        %v2128 = vpop.f32.mrb[0].mxu0
        %v2129 = vadd.f32 0.0, %v2128
        %v2130 = vpop.f32.mrb[0].mxu0
        %2131 = vmatprep.mubr.f32.mxu0 0.0
        %2132 = vmatmul.mubr.f32.gmra.mrb[0].mxu0 %v1898
        %v2133 = vpop.f32.mrb[0].mxu0
        %v2134 = vadd.f32 0.0, %v2133
        %v2135 = vpop.f32.mrb[0].mxu0
        %2136 = vmatprep.mubr.f32.mxu0 0.0
        %2137 = vmatmul.mubr.f32.gmra.mrb[0].mxu0 %v1899
        %v2138 = vpop.f32.mrb[0].mxu0
        %v2139 = vadd.f32 0.0, %v2138
        %v2140 = vpop.f32.mrb[0].mxu0
        %2141 = vmatprep.mubr.f32.mxu0 0.0
        %2142 = vmatmul.mubr.f32.gmra.mrb[0].mxu0 %v1900
        %v2143 = vpop.f32.mrb[0].mxu0
        %v2144 = vadd.f32 0.0, %v2143
        %v2145 = vpop.f32.mrb[0].mxu0
        %2146 = vmatprep.mubr.f32.mxu0 0.0
        %2147 = vmatmul.mubr.f32.gmra.mrb[0].mxu0 %v1901
        %v2148 = vpop.f32.mrb[0].mxu0
        %v2149 = vadd.f32 0.0, %v2148
        %v2150 = vpop.f32.mrb[0].mxu0
        %2151 = vmatprep.mubr.f32.mxu0 0.0
        %2152 = vmatmul.mubr.f32.gmra.mrb[0].mxu0 %v1902
        %v2153 = vpop.f32.mrb[0].mxu0
        %v2154 = vadd.f32 0.0, %v2153
        %v2155 = vpop.f32.mrb[0].mxu0
        %2156 = vmatprep.mubr.f32.mxu0 0.0
        %2157 = vmatmul.mubr.f32.gmra.mrb[0].mxu0 %v1903
        %v2158 = vpop.f32.mrb[0].mxu0
        %v2159 = vadd.f32 0.0, %v2158
        %v2160 = vpop.f32.mrb[0].mxu0
        %2161 = vmatprep.mubr.f32.mxu0 0.0
        %2162 = vmatmul.mubr.f32.gmra.mrb[0].mxu0 %v1904
        %v2163 = vpop.f32.mrb[0].mxu0
        %v2164 = vadd.f32 0.0, %v2163
        %v2165 = vpop.f32.mrb[0].mxu0
        %2166 = vdwg.mxu0
        %v2167 = vadd.f32 %v1833, %v1989
        %v2168 = vadd.f32 %v1834, %v1994
        %v2169 = vadd.f32 %v1835, %v1999
        %v2170 = vadd.f32 %v1836, %v2004
        %v2171 = vadd.f32 %v1837, %v2009
        %v2172 = vadd.f32 %v1838, %v2014
        %v2173 = vadd.f32 %v1839, %v2019
        %v2174 = vadd.f32 %v1840, %v2024
        %v2175 = vadd.f32 %v1841, %v2029
        %v2176 = vadd.f32 %v1842, %v2034
        %v2177 = vadd.f32 %v1843, %v2039
        %v2178 = vadd.f32 %v1844, %v2044
        %v2179 = vadd.f32 %v1845, %v2049
        %v2180 = vadd.f32 %v1846, %v2054
        %v2181 = vadd.f32 %v1847, %v2059
        %v2182 = vadd.f32 %v1848, %v2064
        %v2183 = vadd.f32 %v1849, %v2069
        %v2184 = vadd.f32 %v1850, %v2074
        %v2185 = vadd.f32 %v1851, %v2079
        %v2186 = vadd.f32 %v1852, %v2084
        %v2187 = vadd.f32 %v1853, %v2089
        %v2188 = vadd.f32 %v1854, %v2094
        %v2189 = vadd.f32 %v1855, %v2099
        %v2190 = vadd.f32 %v1856, %v2104
        %v2191 = vadd.f32 %v1857, %v2109
        %v2192 = vadd.f32 %v1858, %v2114
        %v2193 = vadd.f32 %v1859, %v2119
        %v2194 = vadd.f32 %v1860, %v2124
        %v2195 = vadd.f32 %v1861, %v2129
        %v2196 = vadd.f32 %v1862, %v2134
        %v2197 = vadd.f32 %v1863, %v2139
        %v2198 = vadd.f32 %v1864, %v2144
        %v2199 = vadd.f32 %v1865, %v2149
        %v2200 = vadd.f32 %v1866, %v2154
        %v2201 = vadd.f32 %v1867, %v2159
        %v2202 = vadd.f32 %v1868, %v2164
        %v2203 = vld [vmem:[%s237 + $0x24] sm:$0xff]
        %v2204 = vld [vmem:[%s237 + $0x2c] sm:$0xff]
        %v2205 = vld [vmem:[%s237 + $0x34] sm:$0xff]
        %v2206 = vld [vmem:[%s237 + $0x3c] sm:$0xff]
        %v2207 = vld [vmem:[%s237 + $0x44] sm:$0xff]
        %v2208 = vld [vmem:[%s237 + $0x4c] sm:$0xff]
        %v2209 = vld [vmem:[%s237 + $0x54] sm:$0xff]
        %v2210 = vld [vmem:[%s237 + $0x5c] sm:$0xff]
        %v2211 = vld [vmem:[%s237 + $0x64] sm:$0xff]
        %v2212 = vld [vmem:[%s237 + $0x6c] sm:$0xff]
        %v2213 = vld [vmem:[%s237 + $0x74] sm:$0xff]
        %v2214 = vld [vmem:[%s237 + $0x7c] sm:$0xff]
        %v2215 = vld [vmem:[%s237 + $0x84] sm:$0xff]
        %v2216 = vld [vmem:[%s237 + $0x8c] sm:$0xff]
        %v2217 = vld [vmem:[%s237 + $0x94] sm:$0xff]
        %v2218 = vld [vmem:[%s237 + $0x9c] sm:$0xff]
        %v2219 = vld [vmem:[%s237 + $0xa4] sm:$0xff]
        %v2220 = vld [vmem:[%s237 + $0xac] sm:$0xff]
        %v2221 = vld [vmem:[%s237 + $0xb4] sm:$0xff]
        %v2222 = vld [vmem:[%s237 + $0xbc] sm:$0xff]
        %v2223 = vld [vmem:[%s237 + $0xc4] sm:$0xff]
        %v2224 = vld [vmem:[%s237 + $0xcc] sm:$0xff]
        %v2225 = vld [vmem:[%s237 + $0xd4] sm:$0xff]
        %v2226 = vld [vmem:[%s237 + $0xdc] sm:$0xff]
        %v2227 = vld [vmem:[%s237 + $0xe4] sm:$0xff]
        %v2228 = vld [vmem:[%s237 + $0xec] sm:$0xff]
        %v2229 = vld [vmem:[%s237 + $0xf4] sm:$0xff]
        %v2230 = vld [vmem:[%s237 + $0xfc] sm:$0xff]
        %v2231 = vld [vmem:[%s237 + $0x104] sm:$0xff]
        %v2232 = vld [vmem:[%s237 + $0x10c] sm:$0xff]
        %v2233 = vld [vmem:[%s237 + $0x114] sm:$0xff]
        %v2234 = vld [vmem:[%s237 + $0x11c] sm:$0xff]
        %v2235 = vld [vmem:[%s237 + $0x124] sm:$0xff]
        %v2236 = vld [vmem:[%s237 + $0x12c] sm:$0xff]
        %v2237 = vld [vmem:[%s237 + $0x134] sm:$0xff]
        %v2238 = vld [vmem:[%s237 + $0x13c] sm:$0xff]
        %s2239 = scalar_lea.vmem [#allocation6], 768
        %v2240 = vld [vmem:[%s2239] sm:$0xff]
        %v2241 = vld [vmem:[%s2239 + $0x8] sm:$0xff]
        %v2242 = vld [vmem:[%s2239 + $0x10] sm:$0xff]
        %v2243 = vld [vmem:[%s2239 + $0x18] sm:$0xff]
        %v2244 = vld [vmem:[%s2239 + $0x20] sm:$0xff]
        %v2245 = vld [vmem:[%s2239 + $0x28] sm:$0xff]
        %v2246 = vld [vmem:[%s2239 + $0x30] sm:$0xff]
        %v2247 = vld [vmem:[%s2239 + $0x38] sm:$0xff]
        %v2248 = vld [vmem:[%s2239 + $0x40] sm:$0xff]
        %v2249 = vld [vmem:[%s2239 + $0x48] sm:$0xff]
        %v2250 = vld [vmem:[%s2239 + $0x50] sm:$0xff]
        %v2251 = vld [vmem:[%s2239 + $0x58] sm:$0xff]
        %v2252 = vld [vmem:[%s2239 + $0x60] sm:$0xff]
        %v2253 = vld [vmem:[%s2239 + $0x68] sm:$0xff]
        %v2254 = vld [vmem:[%s2239 + $0x70] sm:$0xff]
        %v2255 = vld [vmem:[%s2239 + $0x78] sm:$0xff]
        %2256 = vmatprep.subr.mxu0 0.0
        %2257 = vmatpush1.msra.mxu0 %v2240
        %2258 = vmatprep.subr.mxu0 0.0
        %2259 = vmatpush1.msra.mxu0 %v2241
        %2260 = vmatprep.subr.mxu0 0.0
        %2261 = vmatpush1.msra.mxu0 %v2242
        %2262 = vmatprep.subr.mxu0 0.0
        %2263 = vmatpush1.msra.mxu0 %v2243
        %2264 = vmatprep.subr.mxu0 0.0
        %2265 = vmatpush1.msra.mxu0 %v2244
        %2266 = vmatprep.subr.mxu0 0.0
        %2267 = vmatpush1.msra.mxu0 %v2245
        %2268 = vmatprep.subr.mxu0 0.0
        %2269 = vmatpush1.msra.mxu0 %v2246
        %2270 = vmatprep.subr.mxu0 0.0
        %2271 = vmatpush1.msra.mxu0 %v2247
        %2272 = vmatprep.subr.mxu0 0.0
        %2273 = vmatpush1.msra.mxu0 %v2248
        %2274 = vmatprep.subr.mxu0 0.0
        %2275 = vmatpush1.msra.mxu0 %v2249
        %2276 = vmatprep.subr.mxu0 0.0
        %2277 = vmatpush1.msra.mxu0 %v2250
        %2278 = vmatprep.subr.mxu0 0.0
        %2279 = vmatpush1.msra.mxu0 %v2251
        %2280 = vmatprep.subr.mxu0 0.0
        %2281 = vmatpush1.msra.mxu0 %v2252
        %2282 = vmatprep.subr.mxu0 0.0
        %2283 = vmatpush1.msra.mxu0 %v2253
        %2284 = vmatprep.subr.mxu0 0.0
        %2285 = vmatpush1.msra.mxu0 %v2254
        %2286 = vmatprep.subr.mxu0 0.0
        %2287 = vmatpush1.msra.mxu0 %v2255
        %2288 = vmatprep.subr.mxu0 0.0
        %2289 = vmatpush1.msra.mxu0 0.0
        %2290 = vmatprep.subr.mxu0 0.0
        %2291 = vmatpush1.msra.mxu0 0.0
        %2292 = vmatprep.subr.mxu0 0.0
        %2293 = vmatpush1.msra.mxu0 0.0
        %2294 = vmatprep.subr.mxu0 0.0
        %2295 = vmatpush1.msra.mxu0 0.0
        %2296 = vmatprep.subr.mxu0 0.0
        %2297 = vmatpush1.msra.mxu0 0.0
        %2298 = vmatprep.subr.mxu0 0.0
        %2299 = vmatpush1.msra.mxu0 0.0
        %2300 = vmatprep.subr.mxu0 0.0
        %2301 = vmatpush1.msra.mxu0 0.0
        %2302 = vmatprep.subr.mxu0 0.0
        %2303 = vmatpush1.msra.mxu0 0.0
        %2304 = vmatprep.subr.mxu0 0.0
        %2305 = vmatpush1.msra.mxu0 0.0
        %2306 = vmatprep.subr.mxu0 0.0
        %2307 = vmatpush1.msra.mxu0 0.0
        %2308 = vmatprep.subr.mxu0 0.0
        %2309 = vmatpush1.msra.mxu0 0.0
        %2310 = vmatprep.subr.mxu0 0.0
        %2311 = vmatpush1.msra.mxu0 0.0
        %2312 = vmatprep.subr.mxu0 0.0
        %2313 = vmatpush1.msra.mxu0 0.0
        %2314 = vmatprep.subr.mxu0 0.0
        %2315 = vmatpush1.msra.mxu0 0.0
        %2316 = vmatprep.subr.mxu0 0.0
        %2317 = vmatpush1.msra.mxu0 0.0
        %2318 = vmatprep.subr.mxu0 0.0
        %2319 = vmatpush1.msra.mxu0 0.0
        %2320 = vmatprep.mubr.f32.mxu0 0.0
        %2321 = vmatmul.mubr.f32.gmra.mrb[0].mxu0 %v2203
        %v2322 = vpop.f32.mrb[0].mxu0
        %v2323 = vadd.f32 0.0, %v2322
        %v2324 = vpop.f32.mrb[0].mxu0
        %2325 = vmatprep.mubr.f32.mxu0 0.0
        %2326 = vmatmul.mubr.f32.gmra.mrb[0].mxu0 %v2204
        %v2327 = vpop.f32.mrb[0].mxu0
        %v2328 = vadd.f32 0.0, %v2327
        %v2329 = vpop.f32.mrb[0].mxu0
        %2330 = vmatprep.mubr.f32.mxu0 0.0
        %2331 = vmatmul.mubr.f32.gmra.mrb[0].mxu0 %v2205
        %v2332 = vpop.f32.mrb[0].mxu0
        %v2333 = vadd.f32 0.0, %v2332
        %v2334 = vpop.f32.mrb[0].mxu0
        %2335 = vmatprep.mubr.f32.mxu0 0.0
        %2336 = vmatmul.mubr.f32.gmra.mrb[0].mxu0 %v2206
        %v2337 = vpop.f32.mrb[0].mxu0
        %v2338 = vadd.f32 0.0, %v2337
        %v2339 = vpop.f32.mrb[0].mxu0
        %2340 = vmatprep.mubr.f32.mxu0 0.0
        %2341 = vmatmul.mubr.f32.gmra.mrb[0].mxu0 %v2207
        %v2342 = vpop.f32.mrb[0].mxu0
        %v2343 = vadd.f32 0.0, %v2342
        %v2344 = vpop.f32.mrb[0].mxu0
        %2345 = vmatprep.mubr.f32.mxu0 0.0
        %2346 = vmatmul.mubr.f32.gmra.mrb[0].mxu0 %v2208
        %v2347 = vpop.f32.mrb[0].mxu0
        %v2348 = vadd.f32 0.0, %v2347
        %v2349 = vpop.f32.mrb[0].mxu0
        %2350 = vmatprep.mubr.f32.mxu0 0.0
        %2351 = vmatmul.mubr.f32.gmra.mrb[0].mxu0 %v2209
        %v2352 = vpop.f32.mrb[0].mxu0
        %v2353 = vadd.f32 0.0, %v2352
        %v2354 = vpop.f32.mrb[0].mxu0
        %2355 = vmatprep.mubr.f32.mxu0 0.0
        %2356 = vmatmul.mubr.f32.gmra.mrb[0].mxu0 %v2210
        %v2357 = vpop.f32.mrb[0].mxu0
        %v2358 = vadd.f32 0.0, %v2357
        %v2359 = vpop.f32.mrb[0].mxu0
        %2360 = vmatprep.mubr.f32.mxu0 0.0
        %2361 = vmatmul.mubr.f32.gmra.mrb[0].mxu0 %v2211
        %v2362 = vpop.f32.mrb[0].mxu0
        %v2363 = vadd.f32 0.0, %v2362
        %v2364 = vpop.f32.mrb[0].mxu0
        %2365 = vmatprep.mubr.f32.mxu0 0.0
        %2366 = vmatmul.mubr.f32.gmra.mrb[0].mxu0 %v2212
        %v2367 = vpop.f32.mrb[0].mxu0
        %v2368 = vadd.f32 0.0, %v2367
        %v2369 = vpop.f32.mrb[0].mxu0
        %2370 = vmatprep.mubr.f32.mxu0 0.0
        %2371 = vmatmul.mubr.f32.gmra.mrb[0].mxu0 %v2213
        %v2372 = vpop.f32.mrb[0].mxu0
        %v2373 = vadd.f32 0.0, %v2372
        %v2374 = vpop.f32.mrb[0].mxu0
        %2375 = vmatprep.mubr.f32.mxu0 0.0
        %2376 = vmatmul.mubr.f32.gmra.mrb[0].mxu0 %v2214
        %v2377 = vpop.f32.mrb[0].mxu0
        %v2378 = vadd.f32 0.0, %v2377
        %v2379 = vpop.f32.mrb[0].mxu0
        %2380 = vmatprep.mubr.f32.mxu0 0.0
        %2381 = vmatmul.mubr.f32.gmra.mrb[0].mxu0 %v2215
        %v2382 = vpop.f32.mrb[0].mxu0
        %v2383 = vadd.f32 0.0, %v2382
        %v2384 = vpop.f32.mrb[0].mxu0
        %2385 = vmatprep.mubr.f32.mxu0 0.0
        %2386 = vmatmul.mubr.f32.gmra.mrb[0].mxu0 %v2216
        %v2387 = vpop.f32.mrb[0].mxu0
        %v2388 = vadd.f32 0.0, %v2387
        %v2389 = vpop.f32.mrb[0].mxu0
        %2390 = vmatprep.mubr.f32.mxu0 0.0
        %2391 = vmatmul.mubr.f32.gmra.mrb[0].mxu0 %v2217
        %v2392 = vpop.f32.mrb[0].mxu0
        %v2393 = vadd.f32 0.0, %v2392
        %v2394 = vpop.f32.mrb[0].mxu0
        %2395 = vmatprep.mubr.f32.mxu0 0.0
        %2396 = vmatmul.mubr.f32.gmra.mrb[0].mxu0 %v2218
        %v2397 = vpop.f32.mrb[0].mxu0
        %v2398 = vadd.f32 0.0, %v2397
        %v2399 = vpop.f32.mrb[0].mxu0
        %2400 = vmatprep.mubr.f32.mxu0 0.0
        %2401 = vmatmul.mubr.f32.gmra.mrb[0].mxu0 %v2219
        %v2402 = vpop.f32.mrb[0].mxu0
        %v2403 = vadd.f32 0.0, %v2402
        %v2404 = vpop.f32.mrb[0].mxu0
        %2405 = vmatprep.mubr.f32.mxu0 0.0
        %2406 = vmatmul.mubr.f32.gmra.mrb[0].mxu0 %v2220
        %v2407 = vpop.f32.mrb[0].mxu0
        %v2408 = vadd.f32 0.0, %v2407
        %v2409 = vpop.f32.mrb[0].mxu0
        %2410 = vmatprep.mubr.f32.mxu0 0.0
        %2411 = vmatmul.mubr.f32.gmra.mrb[0].mxu0 %v2221
        %v2412 = vpop.f32.mrb[0].mxu0
        %v2413 = vadd.f32 0.0, %v2412
        %v2414 = vpop.f32.mrb[0].mxu0
        %2415 = vmatprep.mubr.f32.mxu0 0.0
        %2416 = vmatmul.mubr.f32.gmra.mrb[0].mxu0 %v2222
        %v2417 = vpop.f32.mrb[0].mxu0
        %v2418 = vadd.f32 0.0, %v2417
        %v2419 = vpop.f32.mrb[0].mxu0
        %2420 = vmatprep.mubr.f32.mxu0 0.0
        %2421 = vmatmul.mubr.f32.gmra.mrb[0].mxu0 %v2223
        %v2422 = vpop.f32.mrb[0].mxu0
        %v2423 = vadd.f32 0.0, %v2422
        %v2424 = vpop.f32.mrb[0].mxu0
        %2425 = vmatprep.mubr.f32.mxu0 0.0
        %2426 = vmatmul.mubr.f32.gmra.mrb[0].mxu0 %v2224
        %v2427 = vpop.f32.mrb[0].mxu0
        %v2428 = vadd.f32 0.0, %v2427
        %v2429 = vpop.f32.mrb[0].mxu0
        %2430 = vmatprep.mubr.f32.mxu0 0.0
        %2431 = vmatmul.mubr.f32.gmra.mrb[0].mxu0 %v2225
        %v2432 = vpop.f32.mrb[0].mxu0
        %v2433 = vadd.f32 0.0, %v2432
        %v2434 = vpop.f32.mrb[0].mxu0
        %2435 = vmatprep.mubr.f32.mxu0 0.0
        %2436 = vmatmul.mubr.f32.gmra.mrb[0].mxu0 %v2226
        %v2437 = vpop.f32.mrb[0].mxu0
        %v2438 = vadd.f32 0.0, %v2437
        %v2439 = vpop.f32.mrb[0].mxu0
        %2440 = vmatprep.mubr.f32.mxu0 0.0
        %2441 = vmatmul.mubr.f32.gmra.mrb[0].mxu0 %v2227
        %v2442 = vpop.f32.mrb[0].mxu0
        %v2443 = vadd.f32 0.0, %v2442
        %v2444 = vpop.f32.mrb[0].mxu0
        %2445 = vmatprep.mubr.f32.mxu0 0.0
        %2446 = vmatmul.mubr.f32.gmra.mrb[0].mxu0 %v2228
        %v2447 = vpop.f32.mrb[0].mxu0
        %v2448 = vadd.f32 0.0, %v2447
        %v2449 = vpop.f32.mrb[0].mxu0
        %2450 = vmatprep.mubr.f32.mxu0 0.0
        %2451 = vmatmul.mubr.f32.gmra.mrb[0].mxu0 %v2229
        %v2452 = vpop.f32.mrb[0].mxu0
        %v2453 = vadd.f32 0.0, %v2452
        %v2454 = vpop.f32.mrb[0].mxu0
        %2455 = vmatprep.mubr.f32.mxu0 0.0
        %2456 = vmatmul.mubr.f32.gmra.mrb[0].mxu0 %v2230
        %v2457 = vpop.f32.mrb[0].mxu0
        %v2458 = vadd.f32 0.0, %v2457
        %v2459 = vpop.f32.mrb[0].mxu0
        %2460 = vmatprep.mubr.f32.mxu0 0.0
        %2461 = vmatmul.mubr.f32.gmra.mrb[0].mxu0 %v2231
        %v2462 = vpop.f32.mrb[0].mxu0
        %v2463 = vadd.f32 0.0, %v2462
        %v2464 = vpop.f32.mrb[0].mxu0
        %2465 = vmatprep.mubr.f32.mxu0 0.0
        %2466 = vmatmul.mubr.f32.gmra.mrb[0].mxu0 %v2232
        %v2467 = vpop.f32.mrb[0].mxu0
        %v2468 = vadd.f32 0.0, %v2467
        %v2469 = vpop.f32.mrb[0].mxu0
        %2470 = vmatprep.mubr.f32.mxu0 0.0
        %2471 = vmatmul.mubr.f32.gmra.mrb[0].mxu0 %v2233
        %v2472 = vpop.f32.mrb[0].mxu0
        %v2473 = vadd.f32 0.0, %v2472
        %v2474 = vpop.f32.mrb[0].mxu0
        %2475 = vmatprep.mubr.f32.mxu0 0.0
        %2476 = vmatmul.mubr.f32.gmra.mrb[0].mxu0 %v2234
        %v2477 = vpop.f32.mrb[0].mxu0
        %v2478 = vadd.f32 0.0, %v2477
        %v2479 = vpop.f32.mrb[0].mxu0
        %2480 = vmatprep.mubr.f32.mxu0 0.0
        %2481 = vmatmul.mubr.f32.gmra.mrb[0].mxu0 %v2235
        %v2482 = vpop.f32.mrb[0].mxu0
        %v2483 = vadd.f32 0.0, %v2482
        %v2484 = vpop.f32.mrb[0].mxu0
        %2485 = vmatprep.mubr.f32.mxu0 0.0
        %2486 = vmatmul.mubr.f32.gmra.mrb[0].mxu0 %v2236
        %v2487 = vpop.f32.mrb[0].mxu0
        %v2488 = vadd.f32 0.0, %v2487
        %v2489 = vpop.f32.mrb[0].mxu0
        %2490 = vmatprep.mubr.f32.mxu0 0.0
        %2491 = vmatmul.mubr.f32.gmra.mrb[0].mxu0 %v2237
        %v2492 = vpop.f32.mrb[0].mxu0
        %v2493 = vadd.f32 0.0, %v2492
        %v2494 = vpop.f32.mrb[0].mxu0
        %2495 = vmatprep.mubr.f32.mxu0 0.0
        %2496 = vmatmul.mubr.f32.gmra.mrb[0].mxu0 %v2238
        %v2497 = vpop.f32.mrb[0].mxu0
        %v2498 = vadd.f32 0.0, %v2497
        %v2499 = vpop.f32.mrb[0].mxu0
        %2500 = vdwg.mxu0
        %v2501 = vadd.f32 %v2167, %v2323
        %v2502 = vadd.f32 %v2168, %v2328
        %v2503 = vadd.f32 %v2169, %v2333
        %v2504 = vadd.f32 %v2170, %v2338
        %v2505 = vadd.f32 %v2171, %v2343
        %v2506 = vadd.f32 %v2172, %v2348
        %v2507 = vadd.f32 %v2173, %v2353
        %v2508 = vadd.f32 %v2174, %v2358
        %v2509 = vadd.f32 %v2175, %v2363
        %v2510 = vadd.f32 %v2176, %v2368
        %v2511 = vadd.f32 %v2177, %v2373
        %v2512 = vadd.f32 %v2178, %v2378
        %v2513 = vadd.f32 %v2179, %v2383
        %v2514 = vadd.f32 %v2180, %v2388
        %v2515 = vadd.f32 %v2181, %v2393
        %v2516 = vadd.f32 %v2182, %v2398
        %v2517 = vadd.f32 %v2183, %v2403
        %v2518 = vadd.f32 %v2184, %v2408
        %v2519 = vadd.f32 %v2185, %v2413
        %v2520 = vadd.f32 %v2186, %v2418
        %v2521 = vadd.f32 %v2187, %v2423
        %v2522 = vadd.f32 %v2188, %v2428
        %v2523 = vadd.f32 %v2189, %v2433
        %v2524 = vadd.f32 %v2190, %v2438
        %v2525 = vadd.f32 %v2191, %v2443
        %v2526 = vadd.f32 %v2192, %v2448
        %v2527 = vadd.f32 %v2193, %v2453
        %v2528 = vadd.f32 %v2194, %v2458
        %v2529 = vadd.f32 %v2195, %v2463
        %v2530 = vadd.f32 %v2196, %v2468
        %v2531 = vadd.f32 %v2197, %v2473
        %v2532 = vadd.f32 %v2198, %v2478
        %v2533 = vadd.f32 %v2199, %v2483
        %v2534 = vadd.f32 %v2200, %v2488
        %v2535 = vadd.f32 %v2201, %v2493
        %v2536 = vadd.f32 %v2202, %v2498
        %v2537 = vld [vmem:[%s237 + $0x25] sm:$0xff]
        %v2538 = vld [vmem:[%s237 + $0x2d] sm:$0xff]
        %v2539 = vld [vmem:[%s237 + $0x35] sm:$0xff]
        %v2540 = vld [vmem:[%s237 + $0x3d] sm:$0xff]
        %v2541 = vld [vmem:[%s237 + $0x45] sm:$0xff]
        %v2542 = vld [vmem:[%s237 + $0x4d] sm:$0xff]
        %v2543 = vld [vmem:[%s237 + $0x55] sm:$0xff]
        %v2544 = vld [vmem:[%s237 + $0x5d] sm:$0xff]
        %v2545 = vld [vmem:[%s237 + $0x65] sm:$0xff]
        %v2546 = vld [vmem:[%s237 + $0x6d] sm:$0xff]
        %v2547 = vld [vmem:[%s237 + $0x75] sm:$0xff]
        %v2548 = vld [vmem:[%s237 + $0x7d] sm:$0xff]
        %v2549 = vld [vmem:[%s237 + $0x85] sm:$0xff]
        %v2550 = vld [vmem:[%s237 + $0x8d] sm:$0xff]
        %v2551 = vld [vmem:[%s237 + $0x95] sm:$0xff]
        %v2552 = vld [vmem:[%s237 + $0x9d] sm:$0xff]
        %v2553 = vld [vmem:[%s237 + $0xa5] sm:$0xff]
        %v2554 = vld [vmem:[%s237 + $0xad] sm:$0xff]
        %v2555 = vld [vmem:[%s237 + $0xb5] sm:$0xff]
        %v2556 = vld [vmem:[%s237 + $0xbd] sm:$0xff]
        %v2557 = vld [vmem:[%s237 + $0xc5] sm:$0xff]
        %v2558 = vld [vmem:[%s237 + $0xcd] sm:$0xff]
        %v2559 = vld [vmem:[%s237 + $0xd5] sm:$0xff]
        %v2560 = vld [vmem:[%s237 + $0xdd] sm:$0xff]
        %v2561 = vld [vmem:[%s237 + $0xe5] sm:$0xff]
        %v2562 = vld [vmem:[%s237 + $0xed] sm:$0xff]
        %v2563 = vld [vmem:[%s237 + $0xf5] sm:$0xff]
        %v2564 = vld [vmem:[%s237 + $0xfd] sm:$0xff]
        %v2565 = vld [vmem:[%s237 + $0x105] sm:$0xff]
        %v2566 = vld [vmem:[%s237 + $0x10d] sm:$0xff]
        %v2567 = vld [vmem:[%s237 + $0x115] sm:$0xff]
        %v2568 = vld [vmem:[%s237 + $0x11d] sm:$0xff]
        %v2569 = vld [vmem:[%s237 + $0x125] sm:$0xff]
        %v2570 = vld [vmem:[%s237 + $0x12d] sm:$0xff]
        %v2571 = vld [vmem:[%s237 + $0x135] sm:$0xff]
        %v2572 = vld [vmem:[%s237 + $0x13d] sm:$0xff]
        %s2573 = scalar_lea.vmem [#allocation6], 896
        %v2574 = vld [vmem:[%s2573] sm:$0xff]
        %v2575 = vld [vmem:[%s2573 + $0x8] sm:$0xff]
        %v2576 = vld [vmem:[%s2573 + $0x10] sm:$0xff]
        %v2577 = vld [vmem:[%s2573 + $0x18] sm:$0xff]
        %v2578 = vld [vmem:[%s2573 + $0x20] sm:$0xff]
        %v2579 = vld [vmem:[%s2573 + $0x28] sm:$0xff]
        %v2580 = vld [vmem:[%s2573 + $0x30] sm:$0xff]
        %v2581 = vld [vmem:[%s2573 + $0x38] sm:$0xff]
        %v2582 = vld [vmem:[%s2573 + $0x40] sm:$0xff]
        %v2583 = vld [vmem:[%s2573 + $0x48] sm:$0xff]
        %v2584 = vld [vmem:[%s2573 + $0x50] sm:$0xff]
        %v2585 = vld [vmem:[%s2573 + $0x58] sm:$0xff]
        %v2586 = vld [vmem:[%s2573 + $0x60] sm:$0xff]
        %v2587 = vld [vmem:[%s2573 + $0x68] sm:$0xff]
        %v2588 = vld [vmem:[%s2573 + $0x70] sm:$0xff]
        %v2589 = vld [vmem:[%s2573 + $0x78] sm:$0xff]
        %2590 = vmatprep.subr.mxu0 0.0
        %2591 = vmatpush1.msra.mxu0 %v2574
        %2592 = vmatprep.subr.mxu0 0.0
        %2593 = vmatpush1.msra.mxu0 %v2575
        %2594 = vmatprep.subr.mxu0 0.0
        %2595 = vmatpush1.msra.mxu0 %v2576
        %2596 = vmatprep.subr.mxu0 0.0
        %2597 = vmatpush1.msra.mxu0 %v2577
        %2598 = vmatprep.subr.mxu0 0.0
        %2599 = vmatpush1.msra.mxu0 %v2578
        %2600 = vmatprep.subr.mxu0 0.0
        %2601 = vmatpush1.msra.mxu0 %v2579
        %2602 = vmatprep.subr.mxu0 0.0
        %2603 = vmatpush1.msra.mxu0 %v2580
        %2604 = vmatprep.subr.mxu0 0.0
        %2605 = vmatpush1.msra.mxu0 %v2581
        %2606 = vmatprep.subr.mxu0 0.0
        %2607 = vmatpush1.msra.mxu0 %v2582
        %2608 = vmatprep.subr.mxu0 0.0
        %2609 = vmatpush1.msra.mxu0 %v2583
        %2610 = vmatprep.subr.mxu0 0.0
        %2611 = vmatpush1.msra.mxu0 %v2584
        %2612 = vmatprep.subr.mxu0 0.0
        %2613 = vmatpush1.msra.mxu0 %v2585
        %2614 = vmatprep.subr.mxu0 0.0
        %2615 = vmatpush1.msra.mxu0 %v2586
        %2616 = vmatprep.subr.mxu0 0.0
        %2617 = vmatpush1.msra.mxu0 %v2587
        %2618 = vmatprep.subr.mxu0 0.0
        %2619 = vmatpush1.msra.mxu0 %v2588
        %2620 = vmatprep.subr.mxu0 0.0
        %2621 = vmatpush1.msra.mxu0 %v2589
        %2622 = vmatprep.subr.mxu0 0.0
        %2623 = vmatpush1.msra.mxu0 0.0
        %2624 = vmatprep.subr.mxu0 0.0
        %2625 = vmatpush1.msra.mxu0 0.0
        %2626 = vmatprep.subr.mxu0 0.0
        %2627 = vmatpush1.msra.mxu0 0.0
        %2628 = vmatprep.subr.mxu0 0.0
        %2629 = vmatpush1.msra.mxu0 0.0
        %2630 = vmatprep.subr.mxu0 0.0
        %2631 = vmatpush1.msra.mxu0 0.0
        %2632 = vmatprep.subr.mxu0 0.0
        %2633 = vmatpush1.msra.mxu0 0.0
        %2634 = vmatprep.subr.mxu0 0.0
        %2635 = vmatpush1.msra.mxu0 0.0
        %2636 = vmatprep.subr.mxu0 0.0
        %2637 = vmatpush1.msra.mxu0 0.0
        %2638 = vmatprep.subr.mxu0 0.0
        %2639 = vmatpush1.msra.mxu0 0.0
        %2640 = vmatprep.subr.mxu0 0.0
        %2641 = vmatpush1.msra.mxu0 0.0
        %2642 = vmatprep.subr.mxu0 0.0
        %2643 = vmatpush1.msra.mxu0 0.0
        %2644 = vmatprep.subr.mxu0 0.0
        %2645 = vmatpush1.msra.mxu0 0.0
        %2646 = vmatprep.subr.mxu0 0.0
        %2647 = vmatpush1.msra.mxu0 0.0
        %2648 = vmatprep.subr.mxu0 0.0
        %2649 = vmatpush1.msra.mxu0 0.0
        %2650 = vmatprep.subr.mxu0 0.0
        %2651 = vmatpush1.msra.mxu0 0.0
        %2652 = vmatprep.subr.mxu0 0.0
        %2653 = vmatpush1.msra.mxu0 0.0
        %2654 = vmatprep.mubr.f32.mxu0 0.0
        %2655 = vmatmul.mubr.f32.gmra.mrb[0].mxu0 %v2537
        %v2656 = vpop.f32.mrb[0].mxu0
        %v2657 = vadd.f32 0.0, %v2656
        %v2658 = vpop.f32.mrb[0].mxu0
        %2659 = vmatprep.mubr.f32.mxu0 0.0
        %2660 = vmatmul.mubr.f32.gmra.mrb[0].mxu0 %v2538
        %v2661 = vpop.f32.mrb[0].mxu0
        %v2662 = vadd.f32 0.0, %v2661
        %v2663 = vpop.f32.mrb[0].mxu0
        %2664 = vmatprep.mubr.f32.mxu0 0.0
        %2665 = vmatmul.mubr.f32.gmra.mrb[0].mxu0 %v2539
        %v2666 = vpop.f32.mrb[0].mxu0
        %v2667 = vadd.f32 0.0, %v2666
        %v2668 = vpop.f32.mrb[0].mxu0
        %2669 = vmatprep.mubr.f32.mxu0 0.0
        %2670 = vmatmul.mubr.f32.gmra.mrb[0].mxu0 %v2540
        %v2671 = vpop.f32.mrb[0].mxu0
        %v2672 = vadd.f32 0.0, %v2671
        %v2673 = vpop.f32.mrb[0].mxu0
        %2674 = vmatprep.mubr.f32.mxu0 0.0
        %2675 = vmatmul.mubr.f32.gmra.mrb[0].mxu0 %v2541
        %v2676 = vpop.f32.mrb[0].mxu0
        %v2677 = vadd.f32 0.0, %v2676
        %v2678 = vpop.f32.mrb[0].mxu0
        %2679 = vmatprep.mubr.f32.mxu0 0.0
        %2680 = vmatmul.mubr.f32.gmra.mrb[0].mxu0 %v2542
        %v2681 = vpop.f32.mrb[0].mxu0
        %v2682 = vadd.f32 0.0, %v2681
        %v2683 = vpop.f32.mrb[0].mxu0
        %2684 = vmatprep.mubr.f32.mxu0 0.0
        %2685 = vmatmul.mubr.f32.gmra.mrb[0].mxu0 %v2543
        %v2686 = vpop.f32.mrb[0].mxu0
        %v2687 = vadd.f32 0.0, %v2686
        %v2688 = vpop.f32.mrb[0].mxu0
        %2689 = vmatprep.mubr.f32.mxu0 0.0
        %2690 = vmatmul.mubr.f32.gmra.mrb[0].mxu0 %v2544
        %v2691 = vpop.f32.mrb[0].mxu0
        %v2692 = vadd.f32 0.0, %v2691
        %v2693 = vpop.f32.mrb[0].mxu0
        %2694 = vmatprep.mubr.f32.mxu0 0.0
        %2695 = vmatmul.mubr.f32.gmra.mrb[0].mxu0 %v2545
        %v2696 = vpop.f32.mrb[0].mxu0
        %v2697 = vadd.f32 0.0, %v2696
        %v2698 = vpop.f32.mrb[0].mxu0
        %2699 = vmatprep.mubr.f32.mxu0 0.0
        %2700 = vmatmul.mubr.f32.gmra.mrb[0].mxu0 %v2546
        %v2701 = vpop.f32.mrb[0].mxu0
        %v2702 = vadd.f32 0.0, %v2701
        %v2703 = vpop.f32.mrb[0].mxu0
        %2704 = vmatprep.mubr.f32.mxu0 0.0
        %2705 = vmatmul.mubr.f32.gmra.mrb[0].mxu0 %v2547
        %v2706 = vpop.f32.mrb[0].mxu0
        %v2707 = vadd.f32 0.0, %v2706
        %v2708 = vpop.f32.mrb[0].mxu0
        %2709 = vmatprep.mubr.f32.mxu0 0.0
        %2710 = vmatmul.mubr.f32.gmra.mrb[0].mxu0 %v2548
        %v2711 = vpop.f32.mrb[0].mxu0
        %v2712 = vadd.f32 0.0, %v2711
        %v2713 = vpop.f32.mrb[0].mxu0
        %2714 = vmatprep.mubr.f32.mxu0 0.0
        %2715 = vmatmul.mubr.f32.gmra.mrb[0].mxu0 %v2549
        %v2716 = vpop.f32.mrb[0].mxu0
        %v2717 = vadd.f32 0.0, %v2716
        %v2718 = vpop.f32.mrb[0].mxu0
        %2719 = vmatprep.mubr.f32.mxu0 0.0
        %2720 = vmatmul.mubr.f32.gmra.mrb[0].mxu0 %v2550
        %v2721 = vpop.f32.mrb[0].mxu0
        %v2722 = vadd.f32 0.0, %v2721
        %v2723 = vpop.f32.mrb[0].mxu0
        %2724 = vmatprep.mubr.f32.mxu0 0.0
        %2725 = vmatmul.mubr.f32.gmra.mrb[0].mxu0 %v2551
        %v2726 = vpop.f32.mrb[0].mxu0
        %v2727 = vadd.f32 0.0, %v2726
        %v2728 = vpop.f32.mrb[0].mxu0
        %2729 = vmatprep.mubr.f32.mxu0 0.0
        %2730 = vmatmul.mubr.f32.gmra.mrb[0].mxu0 %v2552
        %v2731 = vpop.f32.mrb[0].mxu0
        %v2732 = vadd.f32 0.0, %v2731
        %v2733 = vpop.f32.mrb[0].mxu0
        %2734 = vmatprep.mubr.f32.mxu0 0.0
        %2735 = vmatmul.mubr.f32.gmra.mrb[0].mxu0 %v2553
        %v2736 = vpop.f32.mrb[0].mxu0
        %v2737 = vadd.f32 0.0, %v2736
        %v2738 = vpop.f32.mrb[0].mxu0
        %2739 = vmatprep.mubr.f32.mxu0 0.0
        %2740 = vmatmul.mubr.f32.gmra.mrb[0].mxu0 %v2554
        %v2741 = vpop.f32.mrb[0].mxu0
        %v2742 = vadd.f32 0.0, %v2741
        %v2743 = vpop.f32.mrb[0].mxu0
        %2744 = vmatprep.mubr.f32.mxu0 0.0
        %2745 = vmatmul.mubr.f32.gmra.mrb[0].mxu0 %v2555
        %v2746 = vpop.f32.mrb[0].mxu0
        %v2747 = vadd.f32 0.0, %v2746
        %v2748 = vpop.f32.mrb[0].mxu0
        %2749 = vmatprep.mubr.f32.mxu0 0.0
        %2750 = vmatmul.mubr.f32.gmra.mrb[0].mxu0 %v2556
        %v2751 = vpop.f32.mrb[0].mxu0
        %v2752 = vadd.f32 0.0, %v2751
        %v2753 = vpop.f32.mrb[0].mxu0
        %2754 = vmatprep.mubr.f32.mxu0 0.0
        %2755 = vmatmul.mubr.f32.gmra.mrb[0].mxu0 %v2557
        %v2756 = vpop.f32.mrb[0].mxu0
        %v2757 = vadd.f32 0.0, %v2756
        %v2758 = vpop.f32.mrb[0].mxu0
        %2759 = vmatprep.mubr.f32.mxu0 0.0
        %2760 = vmatmul.mubr.f32.gmra.mrb[0].mxu0 %v2558
        %v2761 = vpop.f32.mrb[0].mxu0
        %v2762 = vadd.f32 0.0, %v2761
        %v2763 = vpop.f32.mrb[0].mxu0
        %2764 = vmatprep.mubr.f32.mxu0 0.0
        %2765 = vmatmul.mubr.f32.gmra.mrb[0].mxu0 %v2559
        %v2766 = vpop.f32.mrb[0].mxu0
        %v2767 = vadd.f32 0.0, %v2766
        %v2768 = vpop.f32.mrb[0].mxu0
        %2769 = vmatprep.mubr.f32.mxu0 0.0
        %2770 = vmatmul.mubr.f32.gmra.mrb[0].mxu0 %v2560
        %v2771 = vpop.f32.mrb[0].mxu0
        %v2772 = vadd.f32 0.0, %v2771
        %v2773 = vpop.f32.mrb[0].mxu0
        %2774 = vmatprep.mubr.f32.mxu0 0.0
        %2775 = vmatmul.mubr.f32.gmra.mrb[0].mxu0 %v2561
        %v2776 = vpop.f32.mrb[0].mxu0
        %v2777 = vadd.f32 0.0, %v2776
        %v2778 = vpop.f32.mrb[0].mxu0
        %2779 = vmatprep.mubr.f32.mxu0 0.0
        %2780 = vmatmul.mubr.f32.gmra.mrb[0].mxu0 %v2562
        %v2781 = vpop.f32.mrb[0].mxu0
        %v2782 = vadd.f32 0.0, %v2781
        %v2783 = vpop.f32.mrb[0].mxu0
        %2784 = vmatprep.mubr.f32.mxu0 0.0
        %2785 = vmatmul.mubr.f32.gmra.mrb[0].mxu0 %v2563
        %v2786 = vpop.f32.mrb[0].mxu0
        %v2787 = vadd.f32 0.0, %v2786
        %v2788 = vpop.f32.mrb[0].mxu0
        %2789 = vmatprep.mubr.f32.mxu0 0.0
        %2790 = vmatmul.mubr.f32.gmra.mrb[0].mxu0 %v2564
        %v2791 = vpop.f32.mrb[0].mxu0
        %v2792 = vadd.f32 0.0, %v2791
        %v2793 = vpop.f32.mrb[0].mxu0
        %2794 = vmatprep.mubr.f32.mxu0 0.0
        %2795 = vmatmul.mubr.f32.gmra.mrb[0].mxu0 %v2565
        %v2796 = vpop.f32.mrb[0].mxu0
        %v2797 = vadd.f32 0.0, %v2796
        %v2798 = vpop.f32.mrb[0].mxu0
        %2799 = vmatprep.mubr.f32.mxu0 0.0
        %2800 = vmatmul.mubr.f32.gmra.mrb[0].mxu0 %v2566
        %v2801 = vpop.f32.mrb[0].mxu0
        %v2802 = vadd.f32 0.0, %v2801
        %v2803 = vpop.f32.mrb[0].mxu0
        %2804 = vmatprep.mubr.f32.mxu0 0.0
        %2805 = vmatmul.mubr.f32.gmra.mrb[0].mxu0 %v2567
        %v2806 = vpop.f32.mrb[0].mxu0
        %v2807 = vadd.f32 0.0, %v2806
        %v2808 = vpop.f32.mrb[0].mxu0
        %2809 = vmatprep.mubr.f32.mxu0 0.0
        %2810 = vmatmul.mubr.f32.gmra.mrb[0].mxu0 %v2568
        %v2811 = vpop.f32.mrb[0].mxu0
        %v2812 = vadd.f32 0.0, %v2811
        %v2813 = vpop.f32.mrb[0].mxu0
        %2814 = vmatprep.mubr.f32.mxu0 0.0
        %2815 = vmatmul.mubr.f32.gmra.mrb[0].mxu0 %v2569
        %v2816 = vpop.f32.mrb[0].mxu0
        %v2817 = vadd.f32 0.0, %v2816
        %v2818 = vpop.f32.mrb[0].mxu0
        %2819 = vmatprep.mubr.f32.mxu0 0.0
        %2820 = vmatmul.mubr.f32.gmra.mrb[0].mxu0 %v2570
        %v2821 = vpop.f32.mrb[0].mxu0
        %v2822 = vadd.f32 0.0, %v2821
        %v2823 = vpop.f32.mrb[0].mxu0
        %2824 = vmatprep.mubr.f32.mxu0 0.0
        %2825 = vmatmul.mubr.f32.gmra.mrb[0].mxu0 %v2571
        %v2826 = vpop.f32.mrb[0].mxu0
        %v2827 = vadd.f32 0.0, %v2826
        %v2828 = vpop.f32.mrb[0].mxu0
        %2829 = vmatprep.mubr.f32.mxu0 0.0
        %2830 = vmatmul.mubr.f32.gmra.mrb[0].mxu0 %v2572
        %v2831 = vpop.f32.mrb[0].mxu0
        %v2832 = vadd.f32 0.0, %v2831
        %v2833 = vpop.f32.mrb[0].mxu0
        %2834 = vdwg.mxu0
        %v2835 = vadd.f32 %v2501, %v2657
        %v2836 = vadd.f32 %v2502, %v2662
        %v2837 = vadd.f32 %v2503, %v2667
        %v2838 = vadd.f32 %v2504, %v2672
        %v2839 = vadd.f32 %v2505, %v2677
        %v2840 = vadd.f32 %v2506, %v2682
        %v2841 = vadd.f32 %v2507, %v2687
        %v2842 = vadd.f32 %v2508, %v2692
        %v2843 = vadd.f32 %v2509, %v2697
        %v2844 = vadd.f32 %v2510, %v2702
        %v2845 = vadd.f32 %v2511, %v2707
        %v2846 = vadd.f32 %v2512, %v2712
        %v2847 = vadd.f32 %v2513, %v2717
        %v2848 = vadd.f32 %v2514, %v2722
        %v2849 = vadd.f32 %v2515, %v2727
        %v2850 = vadd.f32 %v2516, %v2732
        %v2851 = vadd.f32 %v2517, %v2737
        %v2852 = vadd.f32 %v2518, %v2742
        %v2853 = vadd.f32 %v2519, %v2747
        %v2854 = vadd.f32 %v2520, %v2752
        %v2855 = vadd.f32 %v2521, %v2757
        %v2856 = vadd.f32 %v2522, %v2762
        %v2857 = vadd.f32 %v2523, %v2767
        %v2858 = vadd.f32 %v2524, %v2772
        %v2859 = vadd.f32 %v2525, %v2777
        %v2860 = vadd.f32 %v2526, %v2782
        %v2861 = vadd.f32 %v2527, %v2787
        %v2862 = vadd.f32 %v2528, %v2792
        %v2863 = vadd.f32 %v2529, %v2797
        %v2864 = vadd.f32 %v2530, %v2802
        %v2865 = vadd.f32 %v2531, %v2807
        %v2866 = vadd.f32 %v2532, %v2812
        %v2867 = vadd.f32 %v2533, %v2817
        %v2868 = vadd.f32 %v2534, %v2822
        %v2869 = vadd.f32 %v2535, %v2827
        %v2870 = vadd.f32 %v2536, %v2832
        %v2871 = vld [vmem:[%s237 + $0x26] sm:$0xff]
        %v2872 = vld [vmem:[%s237 + $0x2e] sm:$0xff]
        %v2873 = vld [vmem:[%s237 + $0x36] sm:$0xff]
        %v2874 = vld [vmem:[%s237 + $0x3e] sm:$0xff]
        %v2875 = vld [vmem:[%s237 + $0x46] sm:$0xff]
        %v2876 = vld [vmem:[%s237 + $0x4e] sm:$0xff]
        %v2877 = vld [vmem:[%s237 + $0x56] sm:$0xff]
        %v2878 = vld [vmem:[%s237 + $0x5e] sm:$0xff]
        %v2879 = vld [vmem:[%s237 + $0x66] sm:$0xff]
        %v2880 = vld [vmem:[%s237 + $0x6e] sm:$0xff]
        %v2881 = vld [vmem:[%s237 + $0x76] sm:$0xff]
        %v2882 = vld [vmem:[%s237 + $0x7e] sm:$0xff]
        %v2883 = vld [vmem:[%s237 + $0x86] sm:$0xff]
        %v2884 = vld [vmem:[%s237 + $0x8e] sm:$0xff]
        %v2885 = vld [vmem:[%s237 + $0x96] sm:$0xff]
        %v2886 = vld [vmem:[%s237 + $0x9e] sm:$0xff]
        %v2887 = vld [vmem:[%s237 + $0xa6] sm:$0xff]
        %v2888 = vld [vmem:[%s237 + $0xae] sm:$0xff]
        %v2889 = vld [vmem:[%s237 + $0xb6] sm:$0xff]
        %v2890 = vld [vmem:[%s237 + $0xbe] sm:$0xff]
        %v2891 = vld [vmem:[%s237 + $0xc6] sm:$0xff]
        %v2892 = vld [vmem:[%s237 + $0xce] sm:$0xff]
        %v2893 = vld [vmem:[%s237 + $0xd6] sm:$0xff]
        %v2894 = vld [vmem:[%s237 + $0xde] sm:$0xff]
        %v2895 = vld [vmem:[%s237 + $0xe6] sm:$0xff]
        %v2896 = vld [vmem:[%s237 + $0xee] sm:$0xff]
        %v2897 = vld [vmem:[%s237 + $0xf6] sm:$0xff]
        %v2898 = vld [vmem:[%s237 + $0xfe] sm:$0xff]
        %v2899 = vld [vmem:[%s237 + $0x106] sm:$0xff]
        %v2900 = vld [vmem:[%s237 + $0x10e] sm:$0xff]
        %v2901 = vld [vmem:[%s237 + $0x116] sm:$0xff]
        %v2902 = vld [vmem:[%s237 + $0x11e] sm:$0xff]
        %v2903 = vld [vmem:[%s237 + $0x126] sm:$0xff]
        %v2904 = vld [vmem:[%s237 + $0x12e] sm:$0xff]
        %v2905 = vld [vmem:[%s237 + $0x136] sm:$0xff]
        %v2906 = vld [vmem:[%s237 + $0x13e] sm:$0xff]
        %s2907 = scalar_lea.vmem [#allocation6], 1024
        %v2908 = vld [vmem:[%s2907] sm:$0xff]
        %v2909 = vld [vmem:[%s2907 + $0x8] sm:$0xff]
        %v2910 = vld [vmem:[%s2907 + $0x10] sm:$0xff]
        %v2911 = vld [vmem:[%s2907 + $0x18] sm:$0xff]
        %v2912 = vld [vmem:[%s2907 + $0x20] sm:$0xff]
        %v2913 = vld [vmem:[%s2907 + $0x28] sm:$0xff]
        %v2914 = vld [vmem:[%s2907 + $0x30] sm:$0xff]
        %v2915 = vld [vmem:[%s2907 + $0x38] sm:$0xff]
        %v2916 = vld [vmem:[%s2907 + $0x40] sm:$0xff]
        %v2917 = vld [vmem:[%s2907 + $0x48] sm:$0xff]
        %v2918 = vld [vmem:[%s2907 + $0x50] sm:$0xff]
        %v2919 = vld [vmem:[%s2907 + $0x58] sm:$0xff]
        %v2920 = vld [vmem:[%s2907 + $0x60] sm:$0xff]
        %v2921 = vld [vmem:[%s2907 + $0x68] sm:$0xff]
        %v2922 = vld [vmem:[%s2907 + $0x70] sm:$0xff]
        %v2923 = vld [vmem:[%s2907 + $0x78] sm:$0xff]
        %2924 = vmatprep.subr.mxu0 0.0
        %2925 = vmatpush1.msra.mxu0 %v2908
        %2926 = vmatprep.subr.mxu0 0.0
        %2927 = vmatpush1.msra.mxu0 %v2909
        %2928 = vmatprep.subr.mxu0 0.0
        %2929 = vmatpush1.msra.mxu0 %v2910
        %2930 = vmatprep.subr.mxu0 0.0
        %2931 = vmatpush1.msra.mxu0 %v2911
        %2932 = vmatprep.subr.mxu0 0.0
        %2933 = vmatpush1.msra.mxu0 %v2912
        %2934 = vmatprep.subr.mxu0 0.0
        %2935 = vmatpush1.msra.mxu0 %v2913
        %2936 = vmatprep.subr.mxu0 0.0
        %2937 = vmatpush1.msra.mxu0 %v2914
        %2938 = vmatprep.subr.mxu0 0.0
        %2939 = vmatpush1.msra.mxu0 %v2915
        %2940 = vmatprep.subr.mxu0 0.0
        %2941 = vmatpush1.msra.mxu0 %v2916
        %2942 = vmatprep.subr.mxu0 0.0
        %2943 = vmatpush1.msra.mxu0 %v2917
        %2944 = vmatprep.subr.mxu0 0.0
        %2945 = vmatpush1.msra.mxu0 %v2918
        %2946 = vmatprep.subr.mxu0 0.0
        %2947 = vmatpush1.msra.mxu0 %v2919
        %2948 = vmatprep.subr.mxu0 0.0
        %2949 = vmatpush1.msra.mxu0 %v2920
        %2950 = vmatprep.subr.mxu0 0.0
        %2951 = vmatpush1.msra.mxu0 %v2921
        %2952 = vmatprep.subr.mxu0 0.0
        %2953 = vmatpush1.msra.mxu0 %v2922
        %2954 = vmatprep.subr.mxu0 0.0
        %2955 = vmatpush1.msra.mxu0 %v2923
        %2956 = vmatprep.subr.mxu0 0.0
        %2957 = vmatpush1.msra.mxu0 0.0
        %2958 = vmatprep.subr.mxu0 0.0
        %2959 = vmatpush1.msra.mxu0 0.0
        %2960 = vmatprep.subr.mxu0 0.0
        %2961 = vmatpush1.msra.mxu0 0.0
        %2962 = vmatprep.subr.mxu0 0.0
        %2963 = vmatpush1.msra.mxu0 0.0
        %2964 = vmatprep.subr.mxu0 0.0
        %2965 = vmatpush1.msra.mxu0 0.0
        %2966 = vmatprep.subr.mxu0 0.0
        %2967 = vmatpush1.msra.mxu0 0.0
        %2968 = vmatprep.subr.mxu0 0.0
        %2969 = vmatpush1.msra.mxu0 0.0
        %2970 = vmatprep.subr.mxu0 0.0
        %2971 = vmatpush1.msra.mxu0 0.0
        %2972 = vmatprep.subr.mxu0 0.0
        %2973 = vmatpush1.msra.mxu0 0.0
        %2974 = vmatprep.subr.mxu0 0.0
        %2975 = vmatpush1.msra.mxu0 0.0
        %2976 = vmatprep.subr.mxu0 0.0
        %2977 = vmatpush1.msra.mxu0 0.0
        %2978 = vmatprep.subr.mxu0 0.0
        %2979 = vmatpush1.msra.mxu0 0.0
        %2980 = vmatprep.subr.mxu0 0.0
        %2981 = vmatpush1.msra.mxu0 0.0
        %2982 = vmatprep.subr.mxu0 0.0
        %2983 = vmatpush1.msra.mxu0 0.0
        %2984 = vmatprep.subr.mxu0 0.0
        %2985 = vmatpush1.msra.mxu0 0.0
        %2986 = vmatprep.subr.mxu0 0.0
        %2987 = vmatpush1.msra.mxu0 0.0
        %2988 = vmatprep.mubr.f32.mxu0 0.0
        %2989 = vmatmul.mubr.f32.gmra.mrb[0].mxu0 %v2871
        %v2990 = vpop.f32.mrb[0].mxu0
        %v2991 = vadd.f32 0.0, %v2990
        %v2992 = vpop.f32.mrb[0].mxu0
        %2993 = vmatprep.mubr.f32.mxu0 0.0
        %2994 = vmatmul.mubr.f32.gmra.mrb[0].mxu0 %v2872
        %v2995 = vpop.f32.mrb[0].mxu0
        %v2996 = vadd.f32 0.0, %v2995
        %v2997 = vpop.f32.mrb[0].mxu0
        %2998 = vmatprep.mubr.f32.mxu0 0.0
        %2999 = vmatmul.mubr.f32.gmra.mrb[0].mxu0 %v2873
        %v3000 = vpop.f32.mrb[0].mxu0
        %v3001 = vadd.f32 0.0, %v3000
        %v3002 = vpop.f32.mrb[0].mxu0
        %3003 = vmatprep.mubr.f32.mxu0 0.0
        %3004 = vmatmul.mubr.f32.gmra.mrb[0].mxu0 %v2874
        %v3005 = vpop.f32.mrb[0].mxu0
        %v3006 = vadd.f32 0.0, %v3005
        %v3007 = vpop.f32.mrb[0].mxu0
        %3008 = vmatprep.mubr.f32.mxu0 0.0
        %3009 = vmatmul.mubr.f32.gmra.mrb[0].mxu0 %v2875
        %v3010 = vpop.f32.mrb[0].mxu0
        %v3011 = vadd.f32 0.0, %v3010
        %v3012 = vpop.f32.mrb[0].mxu0
        %3013 = vmatprep.mubr.f32.mxu0 0.0
        %3014 = vmatmul.mubr.f32.gmra.mrb[0].mxu0 %v2876
        %v3015 = vpop.f32.mrb[0].mxu0
        %v3016 = vadd.f32 0.0, %v3015
        %v3017 = vpop.f32.mrb[0].mxu0
        %3018 = vmatprep.mubr.f32.mxu0 0.0
        %3019 = vmatmul.mubr.f32.gmra.mrb[0].mxu0 %v2877
        %v3020 = vpop.f32.mrb[0].mxu0
        %v3021 = vadd.f32 0.0, %v3020
        %v3022 = vpop.f32.mrb[0].mxu0
        %3023 = vmatprep.mubr.f32.mxu0 0.0
        %3024 = vmatmul.mubr.f32.gmra.mrb[0].mxu0 %v2878
        %v3025 = vpop.f32.mrb[0].mxu0
        %v3026 = vadd.f32 0.0, %v3025
        %v3027 = vpop.f32.mrb[0].mxu0
        %3028 = vmatprep.mubr.f32.mxu0 0.0
        %3029 = vmatmul.mubr.f32.gmra.mrb[0].mxu0 %v2879
        %v3030 = vpop.f32.mrb[0].mxu0
        %v3031 = vadd.f32 0.0, %v3030
        %v3032 = vpop.f32.mrb[0].mxu0
        %3033 = vmatprep.mubr.f32.mxu0 0.0
        %3034 = vmatmul.mubr.f32.gmra.mrb[0].mxu0 %v2880
        %v3035 = vpop.f32.mrb[0].mxu0
        %v3036 = vadd.f32 0.0, %v3035
        %v3037 = vpop.f32.mrb[0].mxu0
        %3038 = vmatprep.mubr.f32.mxu0 0.0
        %3039 = vmatmul.mubr.f32.gmra.mrb[0].mxu0 %v2881
        %v3040 = vpop.f32.mrb[0].mxu0
        %v3041 = vadd.f32 0.0, %v3040
        %v3042 = vpop.f32.mrb[0].mxu0
        %3043 = vmatprep.mubr.f32.mxu0 0.0
        %3044 = vmatmul.mubr.f32.gmra.mrb[0].mxu0 %v2882
        %v3045 = vpop.f32.mrb[0].mxu0
        %v3046 = vadd.f32 0.0, %v3045
        %v3047 = vpop.f32.mrb[0].mxu0
        %3048 = vmatprep.mubr.f32.mxu0 0.0
        %3049 = vmatmul.mubr.f32.gmra.mrb[0].mxu0 %v2883
        %v3050 = vpop.f32.mrb[0].mxu0
        %v3051 = vadd.f32 0.0, %v3050
        %v3052 = vpop.f32.mrb[0].mxu0
        %3053 = vmatprep.mubr.f32.mxu0 0.0
        %3054 = vmatmul.mubr.f32.gmra.mrb[0].mxu0 %v2884
        %v3055 = vpop.f32.mrb[0].mxu0
        %v3056 = vadd.f32 0.0, %v3055
        %v3057 = vpop.f32.mrb[0].mxu0
        %3058 = vmatprep.mubr.f32.mxu0 0.0
        %3059 = vmatmul.mubr.f32.gmra.mrb[0].mxu0 %v2885
        %v3060 = vpop.f32.mrb[0].mxu0
        %v3061 = vadd.f32 0.0, %v3060
        %v3062 = vpop.f32.mrb[0].mxu0
        %3063 = vmatprep.mubr.f32.mxu0 0.0
        %3064 = vmatmul.mubr.f32.gmra.mrb[0].mxu0 %v2886
        %v3065 = vpop.f32.mrb[0].mxu0
        %v3066 = vadd.f32 0.0, %v3065
        %v3067 = vpop.f32.mrb[0].mxu0
        %3068 = vmatprep.mubr.f32.mxu0 0.0
        %3069 = vmatmul.mubr.f32.gmra.mrb[0].mxu0 %v2887
        %v3070 = vpop.f32.mrb[0].mxu0
        %v3071 = vadd.f32 0.0, %v3070
        %v3072 = vpop.f32.mrb[0].mxu0
        %3073 = vmatprep.mubr.f32.mxu0 0.0
        %3074 = vmatmul.mubr.f32.gmra.mrb[0].mxu0 %v2888
        %v3075 = vpop.f32.mrb[0].mxu0
        %v3076 = vadd.f32 0.0, %v3075
        %v3077 = vpop.f32.mrb[0].mxu0
        %3078 = vmatprep.mubr.f32.mxu0 0.0
        %3079 = vmatmul.mubr.f32.gmra.mrb[0].mxu0 %v2889
        %v3080 = vpop.f32.mrb[0].mxu0
        %v3081 = vadd.f32 0.0, %v3080
        %v3082 = vpop.f32.mrb[0].mxu0
        %3083 = vmatprep.mubr.f32.mxu0 0.0
        %3084 = vmatmul.mubr.f32.gmra.mrb[0].mxu0 %v2890
        %v3085 = vpop.f32.mrb[0].mxu0
        %v3086 = vadd.f32 0.0, %v3085
        %v3087 = vpop.f32.mrb[0].mxu0
        %3088 = vmatprep.mubr.f32.mxu0 0.0
        %3089 = vmatmul.mubr.f32.gmra.mrb[0].mxu0 %v2891
        %v3090 = vpop.f32.mrb[0].mxu0
        %v3091 = vadd.f32 0.0, %v3090
        %v3092 = vpop.f32.mrb[0].mxu0
        %3093 = vmatprep.mubr.f32.mxu0 0.0
        %3094 = vmatmul.mubr.f32.gmra.mrb[0].mxu0 %v2892
        %v3095 = vpop.f32.mrb[0].mxu0
        %v3096 = vadd.f32 0.0, %v3095
        %v3097 = vpop.f32.mrb[0].mxu0
        %3098 = vmatprep.mubr.f32.mxu0 0.0
        %3099 = vmatmul.mubr.f32.gmra.mrb[0].mxu0 %v2893
        %v3100 = vpop.f32.mrb[0].mxu0
        %v3101 = vadd.f32 0.0, %v3100
        %v3102 = vpop.f32.mrb[0].mxu0
        %3103 = vmatprep.mubr.f32.mxu0 0.0
        %3104 = vmatmul.mubr.f32.gmra.mrb[0].mxu0 %v2894
        %v3105 = vpop.f32.mrb[0].mxu0
        %v3106 = vadd.f32 0.0, %v3105
        %v3107 = vpop.f32.mrb[0].mxu0
        %3108 = vmatprep.mubr.f32.mxu0 0.0
        %3109 = vmatmul.mubr.f32.gmra.mrb[0].mxu0 %v2895
        %v3110 = vpop.f32.mrb[0].mxu0
        %v3111 = vadd.f32 0.0, %v3110
        %v3112 = vpop.f32.mrb[0].mxu0
        %3113 = vmatprep.mubr.f32.mxu0 0.0
        %3114 = vmatmul.mubr.f32.gmra.mrb[0].mxu0 %v2896
        %v3115 = vpop.f32.mrb[0].mxu0
        %v3116 = vadd.f32 0.0, %v3115
        %v3117 = vpop.f32.mrb[0].mxu0
        %3118 = vmatprep.mubr.f32.mxu0 0.0
        %3119 = vmatmul.mubr.f32.gmra.mrb[0].mxu0 %v2897
        %v3120 = vpop.f32.mrb[0].mxu0
        %v3121 = vadd.f32 0.0, %v3120
        %v3122 = vpop.f32.mrb[0].mxu0
        %3123 = vmatprep.mubr.f32.mxu0 0.0
        %3124 = vmatmul.mubr.f32.gmra.mrb[0].mxu0 %v2898
        %v3125 = vpop.f32.mrb[0].mxu0
        %v3126 = vadd.f32 0.0, %v3125
        %v3127 = vpop.f32.mrb[0].mxu0
        %3128 = vmatprep.mubr.f32.mxu0 0.0
        %3129 = vmatmul.mubr.f32.gmra.mrb[0].mxu0 %v2899
        %v3130 = vpop.f32.mrb[0].mxu0
        %v3131 = vadd.f32 0.0, %v3130
        %v3132 = vpop.f32.mrb[0].mxu0
        %3133 = vmatprep.mubr.f32.mxu0 0.0
        %3134 = vmatmul.mubr.f32.gmra.mrb[0].mxu0 %v2900
        %v3135 = vpop.f32.mrb[0].mxu0
        %v3136 = vadd.f32 0.0, %v3135
        %v3137 = vpop.f32.mrb[0].mxu0
        %3138 = vmatprep.mubr.f32.mxu0 0.0
        %3139 = vmatmul.mubr.f32.gmra.mrb[0].mxu0 %v2901
        %v3140 = vpop.f32.mrb[0].mxu0
        %v3141 = vadd.f32 0.0, %v3140
        %v3142 = vpop.f32.mrb[0].mxu0
        %3143 = vmatprep.mubr.f32.mxu0 0.0
        %3144 = vmatmul.mubr.f32.gmra.mrb[0].mxu0 %v2902
        %v3145 = vpop.f32.mrb[0].mxu0
        %v3146 = vadd.f32 0.0, %v3145
        %v3147 = vpop.f32.mrb[0].mxu0
        %3148 = vmatprep.mubr.f32.mxu0 0.0
        %3149 = vmatmul.mubr.f32.gmra.mrb[0].mxu0 %v2903
        %v3150 = vpop.f32.mrb[0].mxu0
        %v3151 = vadd.f32 0.0, %v3150
        %v3152 = vpop.f32.mrb[0].mxu0
        %3153 = vmatprep.mubr.f32.mxu0 0.0
        %3154 = vmatmul.mubr.f32.gmra.mrb[0].mxu0 %v2904
        %v3155 = vpop.f32.mrb[0].mxu0
        %v3156 = vadd.f32 0.0, %v3155
        %v3157 = vpop.f32.mrb[0].mxu0
        %3158 = vmatprep.mubr.f32.mxu0 0.0
        %3159 = vmatmul.mubr.f32.gmra.mrb[0].mxu0 %v2905
        %v3160 = vpop.f32.mrb[0].mxu0
        %v3161 = vadd.f32 0.0, %v3160
        %v3162 = vpop.f32.mrb[0].mxu0
        %3163 = vmatprep.mubr.f32.mxu0 0.0
        %3164 = vmatmul.mubr.f32.gmra.mrb[0].mxu0 %v2906
        %v3165 = vpop.f32.mrb[0].mxu0
        %v3166 = vadd.f32 0.0, %v3165
        %v3167 = vpop.f32.mrb[0].mxu0
        %3168 = vdwg.mxu0
        %v3169 = vadd.f32 %v2835, %v2991
        %v3170 = vadd.f32 %v2836, %v2996
        %v3171 = vadd.f32 %v2837, %v3001
        %v3172 = vadd.f32 %v2838, %v3006
        %v3173 = vadd.f32 %v2839, %v3011
        %v3174 = vadd.f32 %v2840, %v3016
        %v3175 = vadd.f32 %v2841, %v3021
        %v3176 = vadd.f32 %v2842, %v3026
        %v3177 = vadd.f32 %v2843, %v3031
        %v3178 = vadd.f32 %v2844, %v3036
        %v3179 = vadd.f32 %v2845, %v3041
        %v3180 = vadd.f32 %v2846, %v3046
        %v3181 = vadd.f32 %v2847, %v3051
        %v3182 = vadd.f32 %v2848, %v3056
        %v3183 = vadd.f32 %v2849, %v3061
        %v3184 = vadd.f32 %v2850, %v3066
        %v3185 = vadd.f32 %v2851, %v3071
        %v3186 = vadd.f32 %v2852, %v3076
        %v3187 = vadd.f32 %v2853, %v3081
        %v3188 = vadd.f32 %v2854, %v3086
        %v3189 = vadd.f32 %v2855, %v3091
        %v3190 = vadd.f32 %v2856, %v3096
        %v3191 = vadd.f32 %v2857, %v3101
        %v3192 = vadd.f32 %v2858, %v3106
        %v3193 = vadd.f32 %v2859, %v3111
        %v3194 = vadd.f32 %v2860, %v3116
        %v3195 = vadd.f32 %v2861, %v3121
        %v3196 = vadd.f32 %v2862, %v3126
        %v3197 = vadd.f32 %v2863, %v3131
        %v3198 = vadd.f32 %v2864, %v3136
        %v3199 = vadd.f32 %v2865, %v3141
        %v3200 = vadd.f32 %v2866, %v3146
        %v3201 = vadd.f32 %v2867, %v3151
        %v3202 = vadd.f32 %v2868, %v3156
        %v3203 = vadd.f32 %v2869, %v3161
        %v3204 = vadd.f32 %v2870, %v3166
        %v3205 = vld [vmem:[%s2] sm:$0x1]
        %v3207 = vlaneseq
        %v3208 = vshrl.u32 %v3207, 7
        %v3209 = vsub.s32 0, %v3208
        %v3210 = vrot.slane %v3205, %v3209
        %v3212 = vadd.f32 %v3169, %v3210
        %v3213 = vadd.f32 %v3170, %v3210
        %v3214 = vadd.f32 %v3171, %v3210
        %v3215 = vadd.f32 %v3172, %v3210
        %v3216 = vadd.f32 %v3173, %v3210
        %v3217 = vadd.f32 %v3174, %v3210
        %v3218 = vadd.f32 %v3175, %v3210
        %v3219 = vadd.f32 %v3176, %v3210
        %v3220 = vadd.f32 %v3177, %v3210
        %v3221 = vadd.f32 %v3178, %v3210
        %v3222 = vadd.f32 %v3179, %v3210
        %v3223 = vadd.f32 %v3180, %v3210
        %v3224 = vadd.f32 %v3181, %v3210
        %v3225 = vadd.f32 %v3182, %v3210
        %v3226 = vadd.f32 %v3183, %v3210
        %v3227 = vadd.f32 %v3184, %v3210
        %v3228 = vadd.f32 %v3185, %v3210
        %v3229 = vadd.f32 %v3186, %v3210
        %v3230 = vadd.f32 %v3187, %v3210
        %v3231 = vadd.f32 %v3188, %v3210
        %v3232 = vadd.f32 %v3189, %v3210
        %v3233 = vadd.f32 %v3190, %v3210
        %v3234 = vadd.f32 %v3191, %v3210
        %v3235 = vadd.f32 %v3192, %v3210
        %v3236 = vadd.f32 %v3193, %v3210
        %v3237 = vadd.f32 %v3194, %v3210
        %v3238 = vadd.f32 %v3195, %v3210
        %v3239 = vadd.f32 %v3196, %v3210
        %v3240 = vadd.f32 %v3197, %v3210
        %v3241 = vadd.f32 %v3198, %v3210
        %v3242 = vadd.f32 %v3199, %v3210
        %v3243 = vadd.f32 %v3200, %v3210
        %v3244 = vadd.f32 %v3201, %v3210
        %v3245 = vadd.f32 %v3202, %v3210
        %v3246 = vadd.f32 %v3203, %v3210
        %v3247 = vadd.f32 %v3204, %v3210
        %v3248 = vmax.f32 %v3212, 0.0
        %v3249 = vmax.f32 %v3213, 0.0
        %v3250 = vmax.f32 %v3214, 0.0
        %v3251 = vmax.f32 %v3215, 0.0
        %v3252 = vmax.f32 %v3216, 0.0
        %v3253 = vmax.f32 %v3217, 0.0
        %v3254 = vmax.f32 %v3218, 0.0
        %v3255 = vmax.f32 %v3219, 0.0
        %v3256 = vmax.f32 %v3220, 0.0
        %v3257 = vmax.f32 %v3221, 0.0
        %v3258 = vmax.f32 %v3222, 0.0
        %v3259 = vmax.f32 %v3223, 0.0
        %v3260 = vmax.f32 %v3224, 0.0
        %v3261 = vmax.f32 %v3225, 0.0
        %v3262 = vmax.f32 %v3226, 0.0
        %v3263 = vmax.f32 %v3227, 0.0
        %v3264 = vmax.f32 %v3228, 0.0
        %v3265 = vmax.f32 %v3229, 0.0
        %v3266 = vmax.f32 %v3230, 0.0
        %v3267 = vmax.f32 %v3231, 0.0
        %v3268 = vmax.f32 %v3232, 0.0
        %v3269 = vmax.f32 %v3233, 0.0
        %v3270 = vmax.f32 %v3234, 0.0
        %v3271 = vmax.f32 %v3235, 0.0
        %v3272 = vmax.f32 %v3236, 0.0
        %v3273 = vmax.f32 %v3237, 0.0
        %v3274 = vmax.f32 %v3238, 0.0
        %v3275 = vmax.f32 %v3239, 0.0
        %v3276 = vmax.f32 %v3240, 0.0
        %v3277 = vmax.f32 %v3241, 0.0
        %v3278 = vmax.f32 %v3242, 0.0
        %v3279 = vmax.f32 %v3243, 0.0
        %v3280 = vmax.f32 %v3244, 0.0
        %v3281 = vmax.f32 %v3245, 0.0
        %v3282 = vmax.f32 %v3246, 0.0
        %v3283 = vmax.f32 %v3247, 0.0
        %v3284 = vlaneseq
        %v3285 = vshrl.u32 %v3284, 7
        %v3286 = vadd.s32 %v3285, 8
        %v3287 = vadd.s32 %v3285, 16
        %v3288 = vadd.s32 %v3285, 24
        %v3289 = vadd.s32 %v3285, 32
        %v3290 = vadd.s32 %v3285, 40
        %v3291 = vadd.s32 %v3285, 48
        %v3292 = vadd.s32 %v3285, 56
        %v3293 = vadd.s32 %v3285, 64
        %v3294 = vadd.s32 %v3285, 72
        %v3295 = vadd.s32 %v3285, 80
        %v3296 = vadd.s32 %v3285, 88
        %v3297 = vadd.s32 %v3285, 96
        %v3298 = vadd.s32 %v3285, 104
        %v3299 = vadd.s32 %v3285, 112
        %v3300 = vadd.s32 %v3285, 120
        %v3301 = vadd.s32 %v3285, 128
        %v3302 = vadd.s32 %v3285, 136
        %v3303 = vadd.s32 %v3285, 144
        %v3304 = vadd.s32 %v3285, 152
        %v3305 = vadd.s32 %v3285, 160
        %v3306 = vadd.s32 %v3285, 168
        %v3307 = vadd.s32 %v3285, 176
        %v3308 = vadd.s32 %v3285, 184
        %v3309 = vadd.s32 %v3285, 192
        %v3310 = vadd.s32 %v3285, 200
        %v3311 = vadd.s32 %v3285, 208
        %v3312 = vadd.s32 %v3285, 216
        %v3313 = vadd.s32 %v3285, 224
        %v3314 = vadd.s32 %v3285, 232
        %v3315 = vadd.s32 %v3285, 240
        %v3316 = vadd.s32 %v3285, 248
        %v3317 = vadd.s32 %v3285, 256
        %v3318 = vadd.s32 %v3285, 264
        %v3319 = vadd.s32 %v3285, 272
        %v3320 = vadd.s32 %v3285, 280
        %vm3321 = vcmp.lt.s32.totalorder %v3285, 0
        %v3322 = vsub.s32 0, %v3285
        %v3323 = vsel %vm3321, %v3322, %v3285
        %v3324 = vmul.u32.u64.compose %v3323, 3817748708
        %v3325 = vextract.low.u32 %v3324
        %v3326 = vextract.high.u32 %v3324
        %v3327 = vshrl.u32 %v3326, 4
        %v3328 = vmul.u32 %v3327, 18
        %v3329 = vsub.s32 %v3323, %v3328
        %v3330 = vsub.s32 0, %v3329
        %v3331 = vsel %vm3321, %v3330, %v3329
        %vm3332 = vcmp.lt.s32.totalorder %v3286, 0
        %v3333 = vsub.s32 0, %v3286
        %v3334 = vsel %vm3332, %v3333, %v3286
        %v3335 = vmul.u32.u64.compose %v3334, 3817748708
        %v3336 = vextract.low.u32 %v3335
        %v3337 = vextract.high.u32 %v3335
        %v3338 = vshrl.u32 %v3337, 4
        %v3339 = vmul.u32 %v3338, 18
        %v3340 = vsub.s32 %v3334, %v3339
        %v3341 = vsub.s32 0, %v3340
        %v3342 = vsel %vm3332, %v3341, %v3340
        %vm3343 = vcmp.lt.s32.totalorder %v3287, 0
        %v3344 = vsub.s32 0, %v3287
        %v3345 = vsel %vm3343, %v3344, %v3287
        %v3346 = vmul.u32.u64.compose %v3345, 3817748708
        %v3347 = vextract.low.u32 %v3346
        %v3348 = vextract.high.u32 %v3346
        %v3349 = vshrl.u32 %v3348, 4
        %v3350 = vmul.u32 %v3349, 18
        %v3351 = vsub.s32 %v3345, %v3350
        %v3352 = vsub.s32 0, %v3351
        %v3353 = vsel %vm3343, %v3352, %v3351
        %vm3354 = vcmp.lt.s32.totalorder %v3288, 0
        %v3355 = vsub.s32 0, %v3288
        %v3356 = vsel %vm3354, %v3355, %v3288
        %v3357 = vmul.u32.u64.compose %v3356, 3817748708
        %v3358 = vextract.low.u32 %v3357
        %v3359 = vextract.high.u32 %v3357
        %v3360 = vshrl.u32 %v3359, 4
        %v3361 = vmul.u32 %v3360, 18
        %v3362 = vsub.s32 %v3356, %v3361
        %v3363 = vsub.s32 0, %v3362
        %v3364 = vsel %vm3354, %v3363, %v3362
        %vm3365 = vcmp.lt.s32.totalorder %v3289, 0
        %v3366 = vsub.s32 0, %v3289
        %v3367 = vsel %vm3365, %v3366, %v3289
        %v3368 = vmul.u32.u64.compose %v3367, 3817748708
        %v3369 = vextract.low.u32 %v3368
        %v3370 = vextract.high.u32 %v3368
        %v3371 = vshrl.u32 %v3370, 4
        %v3372 = vmul.u32 %v3371, 18
        %v3373 = vsub.s32 %v3367, %v3372
        %v3374 = vsub.s32 0, %v3373
        %v3375 = vsel %vm3365, %v3374, %v3373
        %vm3376 = vcmp.lt.s32.totalorder %v3290, 0
        %v3377 = vsub.s32 0, %v3290
        %v3378 = vsel %vm3376, %v3377, %v3290
        %v3379 = vmul.u32.u64.compose %v3378, 3817748708
        %v3380 = vextract.low.u32 %v3379
        %v3381 = vextract.high.u32 %v3379
        %v3382 = vshrl.u32 %v3381, 4
        %v3383 = vmul.u32 %v3382, 18
        %v3384 = vsub.s32 %v3378, %v3383
        %v3385 = vsub.s32 0, %v3384
        %v3386 = vsel %vm3376, %v3385, %v3384
        %vm3387 = vcmp.lt.s32.totalorder %v3291, 0
        %v3388 = vsub.s32 0, %v3291
        %v3389 = vsel %vm3387, %v3388, %v3291
        %v3390 = vmul.u32.u64.compose %v3389, 3817748708
        %v3391 = vextract.low.u32 %v3390
        %v3392 = vextract.high.u32 %v3390
        %v3393 = vshrl.u32 %v3392, 4
        %v3394 = vmul.u32 %v3393, 18
        %v3395 = vsub.s32 %v3389, %v3394
        %v3396 = vsub.s32 0, %v3395
        %v3397 = vsel %vm3387, %v3396, %v3395
        %vm3398 = vcmp.lt.s32.totalorder %v3292, 0
        %v3399 = vsub.s32 0, %v3292
        %v3400 = vsel %vm3398, %v3399, %v3292
        %v3401 = vmul.u32.u64.compose %v3400, 3817748708
        %v3402 = vextract.low.u32 %v3401
        %v3403 = vextract.high.u32 %v3401
        %v3404 = vshrl.u32 %v3403, 4
        %v3405 = vmul.u32 %v3404, 18
        %v3406 = vsub.s32 %v3400, %v3405
        %v3407 = vsub.s32 0, %v3406
        %v3408 = vsel %vm3398, %v3407, %v3406
        %vm3409 = vcmp.lt.s32.totalorder %v3293, 0
        %v3410 = vsub.s32 0, %v3293
        %v3411 = vsel %vm3409, %v3410, %v3293
        %v3412 = vmul.u32.u64.compose %v3411, 3817748708
        %v3413 = vextract.low.u32 %v3412
        %v3414 = vextract.high.u32 %v3412
        %v3415 = vshrl.u32 %v3414, 4
        %v3416 = vmul.u32 %v3415, 18
        %v3417 = vsub.s32 %v3411, %v3416
        %v3418 = vsub.s32 0, %v3417
        %v3419 = vsel %vm3409, %v3418, %v3417
        %vm3420 = vcmp.lt.s32.totalorder %v3294, 0
        %v3421 = vsub.s32 0, %v3294
        %v3422 = vsel %vm3420, %v3421, %v3294
        %v3423 = vmul.u32.u64.compose %v3422, 3817748708
        %v3424 = vextract.low.u32 %v3423
        %v3425 = vextract.high.u32 %v3423
        %v3426 = vshrl.u32 %v3425, 4
        %v3427 = vmul.u32 %v3426, 18
        %v3428 = vsub.s32 %v3422, %v3427
        %v3429 = vsub.s32 0, %v3428
        %v3430 = vsel %vm3420, %v3429, %v3428
        %vm3431 = vcmp.lt.s32.totalorder %v3295, 0
        %v3432 = vsub.s32 0, %v3295
        %v3433 = vsel %vm3431, %v3432, %v3295
        %v3434 = vmul.u32.u64.compose %v3433, 3817748708
        %v3435 = vextract.low.u32 %v3434
        %v3436 = vextract.high.u32 %v3434
        %v3437 = vshrl.u32 %v3436, 4
        %v3438 = vmul.u32 %v3437, 18
        %v3439 = vsub.s32 %v3433, %v3438
        %v3440 = vsub.s32 0, %v3439
        %v3441 = vsel %vm3431, %v3440, %v3439
        %vm3442 = vcmp.lt.s32.totalorder %v3296, 0
        %v3443 = vsub.s32 0, %v3296
        %v3444 = vsel %vm3442, %v3443, %v3296
        %v3445 = vmul.u32.u64.compose %v3444, 3817748708
        %v3446 = vextract.low.u32 %v3445
        %v3447 = vextract.high.u32 %v3445
        %v3448 = vshrl.u32 %v3447, 4
        %v3449 = vmul.u32 %v3448, 18
        %v3450 = vsub.s32 %v3444, %v3449
        %v3451 = vsub.s32 0, %v3450
        %v3452 = vsel %vm3442, %v3451, %v3450
        %vm3453 = vcmp.lt.s32.totalorder %v3297, 0
        %v3454 = vsub.s32 0, %v3297
        %v3455 = vsel %vm3453, %v3454, %v3297
        %v3456 = vmul.u32.u64.compose %v3455, 3817748708
        %v3457 = vextract.low.u32 %v3456
        %v3458 = vextract.high.u32 %v3456
        %v3459 = vshrl.u32 %v3458, 4
        %v3460 = vmul.u32 %v3459, 18
        %v3461 = vsub.s32 %v3455, %v3460
        %v3462 = vsub.s32 0, %v3461
        %v3463 = vsel %vm3453, %v3462, %v3461
        %vm3464 = vcmp.lt.s32.totalorder %v3298, 0
        %v3465 = vsub.s32 0, %v3298
        %v3466 = vsel %vm3464, %v3465, %v3298
        %v3467 = vmul.u32.u64.compose %v3466, 3817748708
        %v3468 = vextract.low.u32 %v3467
        %v3469 = vextract.high.u32 %v3467
        %v3470 = vshrl.u32 %v3469, 4
        %v3471 = vmul.u32 %v3470, 18
        %v3472 = vsub.s32 %v3466, %v3471
        %v3473 = vsub.s32 0, %v3472
        %v3474 = vsel %vm3464, %v3473, %v3472
        %vm3475 = vcmp.lt.s32.totalorder %v3299, 0
        %v3476 = vsub.s32 0, %v3299
        %v3477 = vsel %vm3475, %v3476, %v3299
        %v3478 = vmul.u32.u64.compose %v3477, 3817748708
        %v3479 = vextract.low.u32 %v3478
        %v3480 = vextract.high.u32 %v3478
        %v3481 = vshrl.u32 %v3480, 4
        %v3482 = vmul.u32 %v3481, 18
        %v3483 = vsub.s32 %v3477, %v3482
        %v3484 = vsub.s32 0, %v3483
        %v3485 = vsel %vm3475, %v3484, %v3483
        %vm3486 = vcmp.lt.s32.totalorder %v3300, 0
        %v3487 = vsub.s32 0, %v3300
        %v3488 = vsel %vm3486, %v3487, %v3300
        %v3489 = vmul.u32.u64.compose %v3488, 3817748708
        %v3490 = vextract.low.u32 %v3489
        %v3491 = vextract.high.u32 %v3489
        %v3492 = vshrl.u32 %v3491, 4
        %v3493 = vmul.u32 %v3492, 18
        %v3494 = vsub.s32 %v3488, %v3493
        %v3495 = vsub.s32 0, %v3494
        %v3496 = vsel %vm3486, %v3495, %v3494
        %vm3497 = vcmp.lt.s32.totalorder %v3301, 0
        %v3498 = vsub.s32 0, %v3301
        %v3499 = vsel %vm3497, %v3498, %v3301
        %v3500 = vmul.u32.u64.compose %v3499, 3817748708
        %v3501 = vextract.low.u32 %v3500
        %v3502 = vextract.high.u32 %v3500
        %v3503 = vshrl.u32 %v3502, 4
        %v3504 = vmul.u32 %v3503, 18
        %v3505 = vsub.s32 %v3499, %v3504
        %v3506 = vsub.s32 0, %v3505
        %v3507 = vsel %vm3497, %v3506, %v3505
        %vm3508 = vcmp.lt.s32.totalorder %v3302, 0
        %v3509 = vsub.s32 0, %v3302
        %v3510 = vsel %vm3508, %v3509, %v3302
        %v3511 = vmul.u32.u64.compose %v3510, 3817748708
        %v3512 = vextract.low.u32 %v3511
        %v3513 = vextract.high.u32 %v3511
        %v3514 = vshrl.u32 %v3513, 4
        %v3515 = vmul.u32 %v3514, 18
        %v3516 = vsub.s32 %v3510, %v3515
        %v3517 = vsub.s32 0, %v3516
        %v3518 = vsel %vm3508, %v3517, %v3516
        %vm3519 = vcmp.lt.s32.totalorder %v3303, 0
        %v3520 = vsub.s32 0, %v3303
        %v3521 = vsel %vm3519, %v3520, %v3303
        %v3522 = vmul.u32.u64.compose %v3521, 3817748708
        %v3523 = vextract.low.u32 %v3522
        %v3524 = vextract.high.u32 %v3522
        %v3525 = vshrl.u32 %v3524, 4
        %v3526 = vmul.u32 %v3525, 18
        %v3527 = vsub.s32 %v3521, %v3526
        %v3528 = vsub.s32 0, %v3527
        %v3529 = vsel %vm3519, %v3528, %v3527
        %vm3530 = vcmp.lt.s32.totalorder %v3304, 0
        %v3531 = vsub.s32 0, %v3304
        %v3532 = vsel %vm3530, %v3531, %v3304
        %v3533 = vmul.u32.u64.compose %v3532, 3817748708
        %v3534 = vextract.low.u32 %v3533
        %v3535 = vextract.high.u32 %v3533
        %v3536 = vshrl.u32 %v3535, 4
        %v3537 = vmul.u32 %v3536, 18
        %v3538 = vsub.s32 %v3532, %v3537
        %v3539 = vsub.s32 0, %v3538
        %v3540 = vsel %vm3530, %v3539, %v3538
        %vm3541 = vcmp.lt.s32.totalorder %v3305, 0
        %v3542 = vsub.s32 0, %v3305
        %v3543 = vsel %vm3541, %v3542, %v3305
        %v3544 = vmul.u32.u64.compose %v3543, 3817748708
        %v3545 = vextract.low.u32 %v3544
        %v3546 = vextract.high.u32 %v3544
        %v3547 = vshrl.u32 %v3546, 4
        %v3548 = vmul.u32 %v3547, 18
        %v3549 = vsub.s32 %v3543, %v3548
        %v3550 = vsub.s32 0, %v3549
        %v3551 = vsel %vm3541, %v3550, %v3549
        %vm3552 = vcmp.lt.s32.totalorder %v3306, 0
        %v3553 = vsub.s32 0, %v3306
        %v3554 = vsel %vm3552, %v3553, %v3306
        %v3555 = vmul.u32.u64.compose %v3554, 3817748708
        %v3556 = vextract.low.u32 %v3555
        %v3557 = vextract.high.u32 %v3555
        %v3558 = vshrl.u32 %v3557, 4
        %v3559 = vmul.u32 %v3558, 18
        %v3560 = vsub.s32 %v3554, %v3559
        %v3561 = vsub.s32 0, %v3560
        %v3562 = vsel %vm3552, %v3561, %v3560
        %vm3563 = vcmp.lt.s32.totalorder %v3307, 0
        %v3564 = vsub.s32 0, %v3307
        %v3565 = vsel %vm3563, %v3564, %v3307
        %v3566 = vmul.u32.u64.compose %v3565, 3817748708
        %v3567 = vextract.low.u32 %v3566
        %v3568 = vextract.high.u32 %v3566
        %v3569 = vshrl.u32 %v3568, 4
        %v3570 = vmul.u32 %v3569, 18
        %v3571 = vsub.s32 %v3565, %v3570
        %v3572 = vsub.s32 0, %v3571
        %v3573 = vsel %vm3563, %v3572, %v3571
        %vm3574 = vcmp.lt.s32.totalorder %v3308, 0
        %v3575 = vsub.s32 0, %v3308
        %v3576 = vsel %vm3574, %v3575, %v3308
        %v3577 = vmul.u32.u64.compose %v3576, 3817748708
        %v3578 = vextract.low.u32 %v3577
        %v3579 = vextract.high.u32 %v3577
        %v3580 = vshrl.u32 %v3579, 4
        %v3581 = vmul.u32 %v3580, 18
        %v3582 = vsub.s32 %v3576, %v3581
        %v3583 = vsub.s32 0, %v3582
        %v3584 = vsel %vm3574, %v3583, %v3582
        %vm3585 = vcmp.lt.s32.totalorder %v3309, 0
        %v3586 = vsub.s32 0, %v3309
        %v3587 = vsel %vm3585, %v3586, %v3309
        %v3588 = vmul.u32.u64.compose %v3587, 3817748708
        %v3589 = vextract.low.u32 %v3588
        %v3590 = vextract.high.u32 %v3588
        %v3591 = vshrl.u32 %v3590, 4
        %v3592 = vmul.u32 %v3591, 18
        %v3593 = vsub.s32 %v3587, %v3592
        %v3594 = vsub.s32 0, %v3593
        %v3595 = vsel %vm3585, %v3594, %v3593
        %vm3596 = vcmp.lt.s32.totalorder %v3310, 0
        %v3597 = vsub.s32 0, %v3310
        %v3598 = vsel %vm3596, %v3597, %v3310
        %v3599 = vmul.u32.u64.compose %v3598, 3817748708
        %v3600 = vextract.low.u32 %v3599
        %v3601 = vextract.high.u32 %v3599
        %v3602 = vshrl.u32 %v3601, 4
        %v3603 = vmul.u32 %v3602, 18
        %v3604 = vsub.s32 %v3598, %v3603
        %v3605 = vsub.s32 0, %v3604
        %v3606 = vsel %vm3596, %v3605, %v3604
        %vm3607 = vcmp.lt.s32.totalorder %v3311, 0
        %v3608 = vsub.s32 0, %v3311
        %v3609 = vsel %vm3607, %v3608, %v3311
        %v3610 = vmul.u32.u64.compose %v3609, 3817748708
        %v3611 = vextract.low.u32 %v3610
        %v3612 = vextract.high.u32 %v3610
        %v3613 = vshrl.u32 %v3612, 4
        %v3614 = vmul.u32 %v3613, 18
        %v3615 = vsub.s32 %v3609, %v3614
        %v3616 = vsub.s32 0, %v3615
        %v3617 = vsel %vm3607, %v3616, %v3615
        %vm3618 = vcmp.lt.s32.totalorder %v3312, 0
        %v3619 = vsub.s32 0, %v3312
        %v3620 = vsel %vm3618, %v3619, %v3312
        %v3621 = vmul.u32.u64.compose %v3620, 3817748708
        %v3622 = vextract.low.u32 %v3621
        %v3623 = vextract.high.u32 %v3621
        %v3624 = vshrl.u32 %v3623, 4
        %v3625 = vmul.u32 %v3624, 18
        %v3626 = vsub.s32 %v3620, %v3625
        %v3627 = vsub.s32 0, %v3626
        %v3628 = vsel %vm3618, %v3627, %v3626
        %vm3629 = vcmp.lt.s32.totalorder %v3313, 0
        %v3630 = vsub.s32 0, %v3313
        %v3631 = vsel %vm3629, %v3630, %v3313
        %v3632 = vmul.u32.u64.compose %v3631, 3817748708
        %v3633 = vextract.low.u32 %v3632
        %v3634 = vextract.high.u32 %v3632
        %v3635 = vshrl.u32 %v3634, 4
        %v3636 = vmul.u32 %v3635, 18
        %v3637 = vsub.s32 %v3631, %v3636
        %v3638 = vsub.s32 0, %v3637
        %v3639 = vsel %vm3629, %v3638, %v3637
        %vm3640 = vcmp.lt.s32.totalorder %v3314, 0
        %v3641 = vsub.s32 0, %v3314
        %v3642 = vsel %vm3640, %v3641, %v3314
        %v3643 = vmul.u32.u64.compose %v3642, 3817748708
        %v3644 = vextract.low.u32 %v3643
        %v3645 = vextract.high.u32 %v3643
        %v3646 = vshrl.u32 %v3645, 4
        %v3647 = vmul.u32 %v3646, 18
        %v3648 = vsub.s32 %v3642, %v3647
        %v3649 = vsub.s32 0, %v3648
        %v3650 = vsel %vm3640, %v3649, %v3648
        %vm3651 = vcmp.lt.s32.totalorder %v3315, 0
        %v3652 = vsub.s32 0, %v3315
        %v3653 = vsel %vm3651, %v3652, %v3315
        %v3654 = vmul.u32.u64.compose %v3653, 3817748708
        %v3655 = vextract.low.u32 %v3654
        %v3656 = vextract.high.u32 %v3654
        %v3657 = vshrl.u32 %v3656, 4
        %v3658 = vmul.u32 %v3657, 18
        %v3659 = vsub.s32 %v3653, %v3658
        %v3660 = vsub.s32 0, %v3659
        %v3661 = vsel %vm3651, %v3660, %v3659
        %vm3662 = vcmp.lt.s32.totalorder %v3316, 0
        %v3663 = vsub.s32 0, %v3316
        %v3664 = vsel %vm3662, %v3663, %v3316
        %v3665 = vmul.u32.u64.compose %v3664, 3817748708
        %v3666 = vextract.low.u32 %v3665
        %v3667 = vextract.high.u32 %v3665
        %v3668 = vshrl.u32 %v3667, 4
        %v3669 = vmul.u32 %v3668, 18
        %v3670 = vsub.s32 %v3664, %v3669
        %v3671 = vsub.s32 0, %v3670
        %v3672 = vsel %vm3662, %v3671, %v3670
        %vm3673 = vcmp.lt.s32.totalorder %v3317, 0
        %v3674 = vsub.s32 0, %v3317
        %v3675 = vsel %vm3673, %v3674, %v3317
        %v3676 = vmul.u32.u64.compose %v3675, 3817748708
        %v3677 = vextract.low.u32 %v3676
        %v3678 = vextract.high.u32 %v3676
        %v3679 = vshrl.u32 %v3678, 4
        %v3680 = vmul.u32 %v3679, 18
        %v3681 = vsub.s32 %v3675, %v3680
        %v3682 = vsub.s32 0, %v3681
        %v3683 = vsel %vm3673, %v3682, %v3681
        %vm3684 = vcmp.lt.s32.totalorder %v3318, 0
        %v3685 = vsub.s32 0, %v3318
        %v3686 = vsel %vm3684, %v3685, %v3318
        %v3687 = vmul.u32.u64.compose %v3686, 3817748708
        %v3688 = vextract.low.u32 %v3687
        %v3689 = vextract.high.u32 %v3687
        %v3690 = vshrl.u32 %v3689, 4
        %v3691 = vmul.u32 %v3690, 18
        %v3692 = vsub.s32 %v3686, %v3691
        %v3693 = vsub.s32 0, %v3692
        %v3694 = vsel %vm3684, %v3693, %v3692
        %vm3695 = vcmp.lt.s32.totalorder %v3319, 0
        %v3696 = vsub.s32 0, %v3319
        %v3697 = vsel %vm3695, %v3696, %v3319
        %v3698 = vmul.u32.u64.compose %v3697, 3817748708
        %v3699 = vextract.low.u32 %v3698
        %v3700 = vextract.high.u32 %v3698
        %v3701 = vshrl.u32 %v3700, 4
        %v3702 = vmul.u32 %v3701, 18
        %v3703 = vsub.s32 %v3697, %v3702
        %v3704 = vsub.s32 0, %v3703
        %v3705 = vsel %vm3695, %v3704, %v3703
        %vm3706 = vcmp.lt.s32.totalorder %v3320, 0
        %v3707 = vsub.s32 0, %v3320
        %v3708 = vsel %vm3706, %v3707, %v3320
        %v3709 = vmul.u32.u64.compose %v3708, 3817748708
        %v3710 = vextract.low.u32 %v3709
        %v3711 = vextract.high.u32 %v3709
        %v3712 = vshrl.u32 %v3711, 4
        %v3713 = vmul.u32 %v3712, 18
        %v3714 = vsub.s32 %v3708, %v3713
        %v3715 = vsub.s32 0, %v3714
        %v3716 = vsel %vm3706, %v3715, %v3714
        %vm3717 = vcmp.ne.s32.totalorder %v3331, 0
        %vm3718 = vcmp.ne.s32.totalorder %v3342, 0
        %vm3719 = vcmp.ne.s32.totalorder %v3353, 0
        %vm3720 = vcmp.ne.s32.totalorder %v3364, 0
        %vm3721 = vcmp.ne.s32.totalorder %v3375, 0
        %vm3722 = vcmp.ne.s32.totalorder %v3386, 0
        %vm3723 = vcmp.ne.s32.totalorder %v3397, 0
        %vm3724 = vcmp.ne.s32.totalorder %v3408, 0
        %vm3725 = vcmp.ne.s32.totalorder %v3419, 0
        %vm3726 = vcmp.ne.s32.totalorder %v3430, 0
        %vm3727 = vcmp.ne.s32.totalorder %v3441, 0
        %vm3728 = vcmp.ne.s32.totalorder %v3452, 0
        %vm3729 = vcmp.ne.s32.totalorder %v3463, 0
        %vm3730 = vcmp.ne.s32.totalorder %v3474, 0
        %vm3731 = vcmp.ne.s32.totalorder %v3485, 0
        %vm3732 = vcmp.ne.s32.totalorder %v3496, 0
        %vm3733 = vcmp.ne.s32.totalorder %v3507, 0
        %vm3734 = vcmp.ne.s32.totalorder %v3518, 0
        %vm3735 = vcmp.ne.s32.totalorder %v3529, 0
        %vm3736 = vcmp.ne.s32.totalorder %v3540, 0
        %vm3737 = vcmp.ne.s32.totalorder %v3551, 0
        %vm3738 = vcmp.ne.s32.totalorder %v3562, 0
        %vm3739 = vcmp.ne.s32.totalorder %v3573, 0
        %vm3740 = vcmp.ne.s32.totalorder %v3584, 0
        %vm3741 = vcmp.ne.s32.totalorder %v3595, 0
        %vm3742 = vcmp.ne.s32.totalorder %v3606, 0
        %vm3743 = vcmp.ne.s32.totalorder %v3617, 0
        %vm3744 = vcmp.ne.s32.totalorder %v3628, 0
        %vm3745 = vcmp.ne.s32.totalorder %v3639, 0
        %vm3746 = vcmp.ne.s32.totalorder %v3650, 0
        %vm3747 = vcmp.ne.s32.totalorder %v3661, 0
        %vm3748 = vcmp.ne.s32.totalorder %v3672, 0
        %vm3749 = vcmp.ne.s32.totalorder %v3683, 0
        %vm3750 = vcmp.ne.s32.totalorder %v3694, 0
        %vm3751 = vcmp.ne.s32.totalorder %v3705, 0
        %vm3752 = vcmp.ne.s32.totalorder %v3716, 0
        %vm3753 = vcmp.lt.s32.totalorder %v3331, 0
        %vm3754 = vcmp.lt.s32.totalorder %v3342, 0
        %vm3755 = vcmp.lt.s32.totalorder %v3353, 0
        %vm3756 = vcmp.lt.s32.totalorder %v3364, 0
        %vm3757 = vcmp.lt.s32.totalorder %v3375, 0
        %vm3758 = vcmp.lt.s32.totalorder %v3386, 0
        %vm3759 = vcmp.lt.s32.totalorder %v3397, 0
        %vm3760 = vcmp.lt.s32.totalorder %v3408, 0
        %vm3761 = vcmp.lt.s32.totalorder %v3419, 0
        %vm3762 = vcmp.lt.s32.totalorder %v3430, 0
        %vm3763 = vcmp.lt.s32.totalorder %v3441, 0
        %vm3764 = vcmp.lt.s32.totalorder %v3452, 0
        %vm3765 = vcmp.lt.s32.totalorder %v3463, 0
        %vm3766 = vcmp.lt.s32.totalorder %v3474, 0
        %vm3767 = vcmp.lt.s32.totalorder %v3485, 0
        %vm3768 = vcmp.lt.s32.totalorder %v3496, 0
        %vm3769 = vcmp.lt.s32.totalorder %v3507, 0
        %vm3770 = vcmp.lt.s32.totalorder %v3518, 0
        %vm3771 = vcmp.lt.s32.totalorder %v3529, 0
        %vm3772 = vcmp.lt.s32.totalorder %v3540, 0
        %vm3773 = vcmp.lt.s32.totalorder %v3551, 0
        %vm3774 = vcmp.lt.s32.totalorder %v3562, 0
        %vm3775 = vcmp.lt.s32.totalorder %v3573, 0
        %vm3776 = vcmp.lt.s32.totalorder %v3584, 0
        %vm3777 = vcmp.lt.s32.totalorder %v3595, 0
        %vm3778 = vcmp.lt.s32.totalorder %v3606, 0
        %vm3779 = vcmp.lt.s32.totalorder %v3617, 0
        %vm3780 = vcmp.lt.s32.totalorder %v3628, 0
        %vm3781 = vcmp.lt.s32.totalorder %v3639, 0
        %vm3782 = vcmp.lt.s32.totalorder %v3650, 0
        %vm3783 = vcmp.lt.s32.totalorder %v3661, 0
        %vm3784 = vcmp.lt.s32.totalorder %v3672, 0
        %vm3785 = vcmp.lt.s32.totalorder %v3683, 0
        %vm3786 = vcmp.lt.s32.totalorder %v3694, 0
        %vm3787 = vcmp.lt.s32.totalorder %v3705, 0
        %vm3788 = vcmp.lt.s32.totalorder %v3716, 0
        %vm3789 = vmand %vm3753, %vm3717
        %vm3790 = vmand %vm3754, %vm3718
        %vm3791 = vmand %vm3755, %vm3719
        %vm3792 = vmand %vm3756, %vm3720
        %vm3793 = vmand %vm3757, %vm3721
        %vm3794 = vmand %vm3758, %vm3722
        %vm3795 = vmand %vm3759, %vm3723
        %vm3796 = vmand %vm3760, %vm3724
        %vm3797 = vmand %vm3761, %vm3725
        %vm3798 = vmand %vm3762, %vm3726
        %vm3799 = vmand %vm3763, %vm3727
        %vm3800 = vmand %vm3764, %vm3728
        %vm3801 = vmand %vm3765, %vm3729
        %vm3802 = vmand %vm3766, %vm3730
        %vm3803 = vmand %vm3767, %vm3731
        %vm3804 = vmand %vm3768, %vm3732
        %vm3805 = vmand %vm3769, %vm3733
        %vm3806 = vmand %vm3770, %vm3734
        %vm3807 = vmand %vm3771, %vm3735
        %vm3808 = vmand %vm3772, %vm3736
        %vm3809 = vmand %vm3773, %vm3737
        %vm3810 = vmand %vm3774, %vm3738
        %vm3811 = vmand %vm3775, %vm3739
        %vm3812 = vmand %vm3776, %vm3740
        %vm3813 = vmand %vm3777, %vm3741
        %vm3814 = vmand %vm3778, %vm3742
        %vm3815 = vmand %vm3779, %vm3743
        %vm3816 = vmand %vm3780, %vm3744
        %vm3817 = vmand %vm3781, %vm3745
        %vm3818 = vmand %vm3782, %vm3746
        %vm3819 = vmand %vm3783, %vm3747
        %vm3820 = vmand %vm3784, %vm3748
        %vm3821 = vmand %vm3785, %vm3749
        %vm3822 = vmand %vm3786, %vm3750
        %vm3823 = vmand %vm3787, %vm3751
        %vm3824 = vmand %vm3788, %vm3752
        %v3825 = vadd.s32 %v3331, 18
        %v3826 = vadd.s32 %v3342, 18
        %v3827 = vadd.s32 %v3353, 18
        %v3828 = vadd.s32 %v3364, 18
        %v3829 = vadd.s32 %v3375, 18
        %v3830 = vadd.s32 %v3386, 18
        %v3831 = vadd.s32 %v3397, 18
        %v3832 = vadd.s32 %v3408, 18
        %v3833 = vadd.s32 %v3419, 18
        %v3834 = vadd.s32 %v3430, 18
        %v3835 = vadd.s32 %v3441, 18
        %v3836 = vadd.s32 %v3452, 18
        %v3837 = vadd.s32 %v3463, 18
        %v3838 = vadd.s32 %v3474, 18
        %v3839 = vadd.s32 %v3485, 18
        %v3840 = vadd.s32 %v3496, 18
        %v3841 = vadd.s32 %v3507, 18
        %v3842 = vadd.s32 %v3518, 18
        %v3843 = vadd.s32 %v3529, 18
        %v3844 = vadd.s32 %v3540, 18
        %v3845 = vadd.s32 %v3551, 18
        %v3846 = vadd.s32 %v3562, 18
        %v3847 = vadd.s32 %v3573, 18
        %v3848 = vadd.s32 %v3584, 18
        %v3849 = vadd.s32 %v3595, 18
        %v3850 = vadd.s32 %v3606, 18
        %v3851 = vadd.s32 %v3617, 18
        %v3852 = vadd.s32 %v3628, 18
        %v3853 = vadd.s32 %v3639, 18
        %v3854 = vadd.s32 %v3650, 18
        %v3855 = vadd.s32 %v3661, 18
        %v3856 = vadd.s32 %v3672, 18
        %v3857 = vadd.s32 %v3683, 18
        %v3858 = vadd.s32 %v3694, 18
        %v3859 = vadd.s32 %v3705, 18
        %v3860 = vadd.s32 %v3716, 18
        %v3861 = vsel %vm3789, %v3825, %v3331
        %v3862 = vsel %vm3790, %v3826, %v3342
        %v3863 = vsel %vm3791, %v3827, %v3353
        %v3864 = vsel %vm3792, %v3828, %v3364
        %v3865 = vsel %vm3793, %v3829, %v3375
        %v3866 = vsel %vm3794, %v3830, %v3386
        %v3867 = vsel %vm3795, %v3831, %v3397
        %v3868 = vsel %vm3796, %v3832, %v3408
        %v3869 = vsel %vm3797, %v3833, %v3419
        %v3870 = vsel %vm3798, %v3834, %v3430
        %v3871 = vsel %vm3799, %v3835, %v3441
        %v3872 = vsel %vm3800, %v3836, %v3452
        %v3873 = vsel %vm3801, %v3837, %v3463
        %v3874 = vsel %vm3802, %v3838, %v3474
        %v3875 = vsel %vm3803, %v3839, %v3485
        %v3876 = vsel %vm3804, %v3840, %v3496
        %v3877 = vsel %vm3805, %v3841, %v3507
        %v3878 = vsel %vm3806, %v3842, %v3518
        %v3879 = vsel %vm3807, %v3843, %v3529
        %v3880 = vsel %vm3808, %v3844, %v3540
        %v3881 = vsel %vm3809, %v3845, %v3551
        %v3882 = vsel %vm3810, %v3846, %v3562
        %v3883 = vsel %vm3811, %v3847, %v3573
        %v3884 = vsel %vm3812, %v3848, %v3584
        %v3885 = vsel %vm3813, %v3849, %v3595
        %v3886 = vsel %vm3814, %v3850, %v3606
        %v3887 = vsel %vm3815, %v3851, %v3617
        %v3888 = vsel %vm3816, %v3852, %v3628
        %v3889 = vsel %vm3817, %v3853, %v3639
        %v3890 = vsel %vm3818, %v3854, %v3650
        %v3891 = vsel %vm3819, %v3855, %v3661
        %v3892 = vsel %vm3820, %v3856, %v3672
        %v3893 = vsel %vm3821, %v3857, %v3683
        %v3894 = vsel %vm3822, %v3858, %v3694
        %v3895 = vsel %vm3823, %v3859, %v3705
        %v3896 = vsel %vm3824, %v3860, %v3716
        %vm3897 = vcmp.lt.s32.totalorder %v3861, 16
        %vm3898 = vcmp.lt.s32.totalorder %v3862, 16
        %vm3899 = vcmp.lt.s32.totalorder %v3863, 16
        %vm3900 = vcmp.lt.s32.totalorder %v3864, 16
        %vm3901 = vcmp.lt.s32.totalorder %v3865, 16
        %vm3902 = vcmp.lt.s32.totalorder %v3866, 16
        %vm3903 = vcmp.lt.s32.totalorder %v3867, 16
        %vm3904 = vcmp.lt.s32.totalorder %v3868, 16
        %vm3905 = vcmp.lt.s32.totalorder %v3869, 16
        %vm3906 = vcmp.lt.s32.totalorder %v3870, 16
        %vm3907 = vcmp.lt.s32.totalorder %v3871, 16
        %vm3908 = vcmp.lt.s32.totalorder %v3872, 16
        %vm3909 = vcmp.lt.s32.totalorder %v3873, 16
        %vm3910 = vcmp.lt.s32.totalorder %v3874, 16
        %vm3911 = vcmp.lt.s32.totalorder %v3875, 16
        %vm3912 = vcmp.lt.s32.totalorder %v3876, 16
        %vm3913 = vcmp.lt.s32.totalorder %v3877, 16
        %vm3914 = vcmp.lt.s32.totalorder %v3878, 16
        %vm3915 = vcmp.lt.s32.totalorder %v3879, 16
        %vm3916 = vcmp.lt.s32.totalorder %v3880, 16
        %vm3917 = vcmp.lt.s32.totalorder %v3881, 16
        %vm3918 = vcmp.lt.s32.totalorder %v3882, 16
        %vm3919 = vcmp.lt.s32.totalorder %v3883, 16
        %vm3920 = vcmp.lt.s32.totalorder %v3884, 16
        %vm3921 = vcmp.lt.s32.totalorder %v3885, 16
        %vm3922 = vcmp.lt.s32.totalorder %v3886, 16
        %vm3923 = vcmp.lt.s32.totalorder %v3887, 16
        %vm3924 = vcmp.lt.s32.totalorder %v3888, 16
        %vm3925 = vcmp.lt.s32.totalorder %v3889, 16
        %vm3926 = vcmp.lt.s32.totalorder %v3890, 16
        %vm3927 = vcmp.lt.s32.totalorder %v3891, 16
        %vm3928 = vcmp.lt.s32.totalorder %v3892, 16
        %vm3929 = vcmp.lt.s32.totalorder %v3893, 16
        %vm3930 = vcmp.lt.s32.totalorder %v3894, 16
        %vm3931 = vcmp.lt.s32.totalorder %v3895, 16
        %vm3932 = vcmp.lt.s32.totalorder %v3896, 16
        %v3933 = vsel %vm3897, %v3248, 0.0
        %v3934 = vsel %vm3898, %v3249, 0.0
        %v3935 = vsel %vm3899, %v3250, 0.0
        %v3936 = vsel %vm3900, %v3251, 0.0
        %v3937 = vsel %vm3901, %v3252, 0.0
        %v3938 = vsel %vm3902, %v3253, 0.0
        %v3939 = vsel %vm3903, %v3254, 0.0
        %v3940 = vsel %vm3904, %v3255, 0.0
        %v3941 = vsel %vm3905, %v3256, 0.0
        %v3942 = vsel %vm3906, %v3257, 0.0
        %v3943 = vsel %vm3907, %v3258, 0.0
        %v3944 = vsel %vm3908, %v3259, 0.0
        %v3945 = vsel %vm3909, %v3260, 0.0
        %v3946 = vsel %vm3910, %v3261, 0.0
        %v3947 = vsel %vm3911, %v3262, 0.0
        %v3948 = vsel %vm3912, %v3263, 0.0
        %v3949 = vsel %vm3913, %v3264, 0.0
        %v3950 = vsel %vm3914, %v3265, 0.0
        %v3951 = vsel %vm3915, %v3266, 0.0
        %v3952 = vsel %vm3916, %v3267, 0.0
        %v3953 = vsel %vm3917, %v3268, 0.0
        %v3954 = vsel %vm3918, %v3269, 0.0
        %v3955 = vsel %vm3919, %v3270, 0.0
        %v3956 = vsel %vm3920, %v3271, 0.0
        %v3957 = vsel %vm3921, %v3272, 0.0
        %v3958 = vsel %vm3922, %v3273, 0.0
        %v3959 = vsel %vm3923, %v3274, 0.0
        %v3960 = vsel %vm3924, %v3275, 0.0
        %v3961 = vsel %vm3925, %v3276, 0.0
        %v3962 = vsel %vm3926, %v3277, 0.0
        %v3963 = vsel %vm3927, %v3278, 0.0
        %v3964 = vsel %vm3928, %v3279, 0.0
        %v3965 = vsel %vm3929, %v3280, 0.0
        %v3966 = vsel %vm3930, %v3281, 0.0
        %v3967 = vsel %vm3931, %v3282, 0.0
        %v3968 = vsel %vm3932, %v3283, 0.0
        %3969 = vst [vmem:[#allocation2] sm:$0xff] 0.0
        %3970 = vst [vmem:[#allocation2 + $0x8] sm:$0xff] 0.0
        %3971 = vst [vmem:[#allocation2 + $0x10] sm:$0xff] 0.0
        %3972 = vst [vmem:[#allocation2 + $0x138] sm:$0xff] 0.0
        %3973 = vst [vmem:[#allocation2 + $0x140] sm:$0xff] 0.0
        %3974 = vst [vmem:[#allocation2 + $0x148] sm:$0xff] 0.0
        %3975 = vst [vmem:[#allocation2 + $0x18] sm:$0xff] %v3933
        %3976 = vst [vmem:[#allocation2 + $0x20] sm:$0xff] %v3934
        %3977 = vst [vmem:[#allocation2 + $0x28] sm:$0xff] %v3935
        %3978 = vst [vmem:[#allocation2 + $0x30] sm:$0xff] %v3936
        %3979 = vst [vmem:[#allocation2 + $0x38] sm:$0xff] %v3937
        %3980 = vst [vmem:[#allocation2 + $0x40] sm:$0xff] %v3938
        %3981 = vst [vmem:[#allocation2 + $0x48] sm:$0xff] %v3939
        %3982 = vst [vmem:[#allocation2 + $0x50] sm:$0xff] %v3940
        %3983 = vst [vmem:[#allocation2 + $0x58] sm:$0xff] %v3941
        %3984 = vst [vmem:[#allocation2 + $0x60] sm:$0xff] %v3942
        %3985 = vst [vmem:[#allocation2 + $0x68] sm:$0xff] %v3943
        %3986 = vst [vmem:[#allocation2 + $0x70] sm:$0xff] %v3944
        %3987 = vst [vmem:[#allocation2 + $0x78] sm:$0xff] %v3945
        %3988 = vst [vmem:[#allocation2 + $0x80] sm:$0xff] %v3946
        %3989 = vst [vmem:[#allocation2 + $0x88] sm:$0xff] %v3947
        %3990 = vst [vmem:[#allocation2 + $0x90] sm:$0xff] %v3948
        %3991 = vst [vmem:[#allocation2 + $0x98] sm:$0xff] %v3949
        %3992 = vst [vmem:[#allocation2 + $0xa0] sm:$0xff] %v3950
        %3993 = vst [vmem:[#allocation2 + $0xa8] sm:$0xff] %v3951
        %3994 = vst [vmem:[#allocation2 + $0xb0] sm:$0xff] %v3952
        %3995 = vst [vmem:[#allocation2 + $0xb8] sm:$0xff] %v3953
        %3996 = vst [vmem:[#allocation2 + $0xc0] sm:$0xff] %v3954
        %3997 = vst [vmem:[#allocation2 + $0xc8] sm:$0xff] %v3955
        %3998 = vst [vmem:[#allocation2 + $0xd0] sm:$0xff] %v3956
        %3999 = vst [vmem:[#allocation2 + $0xd8] sm:$0xff] %v3957
        %4000 = vst [vmem:[#allocation2 + $0xe0] sm:$0xff] %v3958
        %4001 = vst [vmem:[#allocation2 + $0xe8] sm:$0xff] %v3959
        %4002 = vst [vmem:[#allocation2 + $0xf0] sm:$0xff] %v3960
        %4003 = vst [vmem:[#allocation2 + $0xf8] sm:$0xff] %v3961
        %4004 = vst [vmem:[#allocation2 + $0x100] sm:$0xff] %v3962
        %4005 = vst [vmem:[#allocation2 + $0x108] sm:$0xff] %v3963
        %4006 = vst [vmem:[#allocation2 + $0x110] sm:$0xff] %v3964
        %4007 = vst [vmem:[#allocation2 + $0x118] sm:$0xff] %v3965
        %4008 = vst [vmem:[#allocation2 + $0x120] sm:$0xff] %v3966
        %4009 = vst [vmem:[#allocation2 + $0x128] sm:$0xff] %v3967
        %4010 = vst [vmem:[#allocation2 + $0x130] sm:$0xff] %v3968
        %v4011 = vld [vmem:[#allocation2 + $0x5] sm:$0xff]
        %v4012 = vld [vmem:[#allocation2 + $0xd] sm:$0xff]
        %v4013 = vld [vmem:[#allocation2 + $0x15] sm:$0xff]
        %v4014 = vld [vmem:[#allocation2 + $0x1d] sm:$0xff]
        %v4015 = vld [vmem:[#allocation2 + $0x25] sm:$0xff]
        %v4016 = vld [vmem:[#allocation2 + $0x2d] sm:$0xff]
        %v4017 = vld [vmem:[#allocation2 + $0x35] sm:$0xff]
        %v4018 = vld [vmem:[#allocation2 + $0x3d] sm:$0xff]
        %v4019 = vld [vmem:[#allocation2 + $0x45] sm:$0xff]
        %v4020 = vld [vmem:[#allocation2 + $0x4d] sm:$0xff]
        %v4021 = vld [vmem:[#allocation2 + $0x55] sm:$0xff]
        %v4022 = vld [vmem:[#allocation2 + $0x5d] sm:$0xff]
        %v4023 = vld [vmem:[#allocation2 + $0x65] sm:$0xff]
        %v4024 = vld [vmem:[#allocation2 + $0x6d] sm:$0xff]
        %v4025 = vld [vmem:[#allocation2 + $0x75] sm:$0xff]
        %v4026 = vld [vmem:[#allocation2 + $0x7d] sm:$0xff]
        %v4027 = vld [vmem:[#allocation2 + $0x85] sm:$0xff]
        %v4028 = vld [vmem:[#allocation2 + $0x8d] sm:$0xff]
        %v4029 = vld [vmem:[#allocation2 + $0x95] sm:$0xff]
        %v4030 = vld [vmem:[#allocation2 + $0x9d] sm:$0xff]
        %v4031 = vld [vmem:[#allocation2 + $0xa5] sm:$0xff]
        %v4032 = vld [vmem:[#allocation2 + $0xad] sm:$0xff]
        %v4033 = vld [vmem:[#allocation2 + $0xb5] sm:$0xff]
        %v4034 = vld [vmem:[#allocation2 + $0xbd] sm:$0xff]
        %v4035 = vld [vmem:[#allocation2 + $0xc5] sm:$0xff]
        %v4036 = vld [vmem:[#allocation2 + $0xcd] sm:$0xff]
        %v4037 = vld [vmem:[#allocation2 + $0xd5] sm:$0xff]
        %v4038 = vld [vmem:[#allocation2 + $0xdd] sm:$0xff]
        %v4039 = vld [vmem:[#allocation2 + $0xe5] sm:$0xff]
        %v4040 = vld [vmem:[#allocation2 + $0xed] sm:$0xff]
        %v4041 = vld [vmem:[#allocation2 + $0xf5] sm:$0xff]
        %v4042 = vld [vmem:[#allocation2 + $0xfd] sm:$0xff]
        %v4043 = vld [vmem:[#allocation2 + $0x105] sm:$0xff]
        %v4044 = vld [vmem:[#allocation2 + $0x10d] sm:$0xff]
        %v4045 = vld [vmem:[#allocation2 + $0x115] sm:$0xff]
        %v4046 = vld [vmem:[#allocation2 + $0x11d] sm:$0xff]
        %v4047 = vld [vmem:[#allocation8] sm:$0xff]
        %v4048 = vld [vmem:[#allocation8 + $0x8] sm:$0xff]
        %v4049 = vld [vmem:[#allocation8 + $0x10] sm:$0xff]
        %v4050 = vld [vmem:[#allocation8 + $0x18] sm:$0xff]
        %v4051 = vld [vmem:[#allocation8 + $0x20] sm:$0xff]
        %v4052 = vld [vmem:[#allocation8 + $0x28] sm:$0xff]
        %v4053 = vld [vmem:[#allocation8 + $0x30] sm:$0xff]
        %v4054 = vld [vmem:[#allocation8 + $0x38] sm:$0xff]
        %v4055 = vld [vmem:[#allocation8 + $0x40] sm:$0xff]
        %v4056 = vld [vmem:[#allocation8 + $0x48] sm:$0xff]
        %v4057 = vld [vmem:[#allocation8 + $0x50] sm:$0xff]
        %v4058 = vld [vmem:[#allocation8 + $0x58] sm:$0xff]
        %v4059 = vld [vmem:[#allocation8 + $0x60] sm:$0xff]
        %v4060 = vld [vmem:[#allocation8 + $0x68] sm:$0xff]
        %v4061 = vld [vmem:[#allocation8 + $0x70] sm:$0xff]
        %v4062 = vld [vmem:[#allocation8 + $0x78] sm:$0xff]
        %v4063 = vld [vmem:[#allocation2 + $0x6] sm:$0xff]
        %v4064 = vld [vmem:[#allocation2 + $0xe] sm:$0xff]
        %v4065 = vld [vmem:[#allocation2 + $0x16] sm:$0xff]
        %v4066 = vld [vmem:[#allocation2 + $0x1e] sm:$0xff]
        %v4067 = vld [vmem:[#allocation2 + $0x26] sm:$0xff]
        %v4068 = vld [vmem:[#allocation2 + $0x2e] sm:$0xff]
        %v4069 = vld [vmem:[#allocation2 + $0x36] sm:$0xff]
        %v4070 = vld [vmem:[#allocation2 + $0x3e] sm:$0xff]
        %v4071 = vld [vmem:[#allocation2 + $0x46] sm:$0xff]
        %v4072 = vld [vmem:[#allocation2 + $0x4e] sm:$0xff]
        %v4073 = vld [vmem:[#allocation2 + $0x56] sm:$0xff]
        %v4074 = vld [vmem:[#allocation2 + $0x5e] sm:$0xff]
        %v4075 = vld [vmem:[#allocation2 + $0x66] sm:$0xff]
        %v4076 = vld [vmem:[#allocation2 + $0x6e] sm:$0xff]
        %v4077 = vld [vmem:[#allocation2 + $0x76] sm:$0xff]
        %v4078 = vld [vmem:[#allocation2 + $0x7e] sm:$0xff]
        %v4079 = vld [vmem:[#allocation2 + $0x86] sm:$0xff]
        %v4080 = vld [vmem:[#allocation2 + $0x8e] sm:$0xff]
        %v4081 = vld [vmem:[#allocation2 + $0x96] sm:$0xff]
        %v4082 = vld [vmem:[#allocation2 + $0x9e] sm:$0xff]
        %v4083 = vld [vmem:[#allocation2 + $0xa6] sm:$0xff]
        %v4084 = vld [vmem:[#allocation2 + $0xae] sm:$0xff]
        %v4085 = vld [vmem:[#allocation2 + $0xb6] sm:$0xff]
        %v4086 = vld [vmem:[#allocation2 + $0xbe] sm:$0xff]
        %v4087 = vld [vmem:[#allocation2 + $0xc6] sm:$0xff]
        %v4088 = vld [vmem:[#allocation2 + $0xce] sm:$0xff]
        %v4089 = vld [vmem:[#allocation2 + $0xd6] sm:$0xff]
        %v4090 = vld [vmem:[#allocation2 + $0xde] sm:$0xff]
        %v4091 = vld [vmem:[#allocation2 + $0xe6] sm:$0xff]
        %v4092 = vld [vmem:[#allocation2 + $0xee] sm:$0xff]
        %v4093 = vld [vmem:[#allocation2 + $0xf6] sm:$0xff]
        %v4094 = vld [vmem:[#allocation2 + $0xfe] sm:$0xff]
        %v4095 = vld [vmem:[#allocation2 + $0x106] sm:$0xff]
        %v4096 = vld [vmem:[#allocation2 + $0x10e] sm:$0xff]
        %v4097 = vld [vmem:[#allocation2 + $0x116] sm:$0xff]
        %v4098 = vld [vmem:[#allocation2 + $0x11e] sm:$0xff]
        %s4099 = scalar_lea.vmem [#allocation8], 128
        %v4100 = vld [vmem:[%s4099] sm:$0xff]
        %v4101 = vld [vmem:[%s4099 + $0x8] sm:$0xff]
        %v4102 = vld [vmem:[%s4099 + $0x10] sm:$0xff]
        %v4103 = vld [vmem:[%s4099 + $0x18] sm:$0xff]
        %v4104 = vld [vmem:[%s4099 + $0x20] sm:$0xff]
        %v4105 = vld [vmem:[%s4099 + $0x28] sm:$0xff]
        %v4106 = vld [vmem:[%s4099 + $0x30] sm:$0xff]
        %v4107 = vld [vmem:[%s4099 + $0x38] sm:$0xff]
        %v4108 = vld [vmem:[%s4099 + $0x40] sm:$0xff]
        %v4109 = vld [vmem:[%s4099 + $0x48] sm:$0xff]
        %v4110 = vld [vmem:[%s4099 + $0x50] sm:$0xff]
        %v4111 = vld [vmem:[%s4099 + $0x58] sm:$0xff]
        %v4112 = vld [vmem:[%s4099 + $0x60] sm:$0xff]
        %v4113 = vld [vmem:[%s4099 + $0x68] sm:$0xff]
        %v4114 = vld [vmem:[%s4099 + $0x70] sm:$0xff]
        %v4115 = vld [vmem:[%s4099 + $0x78] sm:$0xff]
        %4116 = vmatprep.subr.mxu0 0.0
        %4117 = vmatpush1.msra.mxu0 %v4100
        %4118 = vmatprep.subr.mxu0 0.0
        %4119 = vmatpush1.msra.mxu0 %v4101
        %4120 = vmatprep.subr.mxu0 0.0
        %4121 = vmatpush1.msra.mxu0 %v4102
        %4122 = vmatprep.subr.mxu0 0.0
        %4123 = vmatpush1.msra.mxu0 %v4103
        %4124 = vmatprep.subr.mxu0 0.0
        %4125 = vmatpush1.msra.mxu0 %v4104
        %4126 = vmatprep.subr.mxu0 0.0
        %4127 = vmatpush1.msra.mxu0 %v4105
        %4128 = vmatprep.subr.mxu0 0.0
        %4129 = vmatpush1.msra.mxu0 %v4106
        %4130 = vmatprep.subr.mxu0 0.0
        %4131 = vmatpush1.msra.mxu0 %v4107
        %4132 = vmatprep.subr.mxu0 0.0
        %4133 = vmatpush1.msra.mxu0 %v4108
        %4134 = vmatprep.subr.mxu0 0.0
        %4135 = vmatpush1.msra.mxu0 %v4109
        %4136 = vmatprep.subr.mxu0 0.0
        %4137 = vmatpush1.msra.mxu0 %v4110
        %4138 = vmatprep.subr.mxu0 0.0
        %4139 = vmatpush1.msra.mxu0 %v4111
        %4140 = vmatprep.subr.mxu0 0.0
        %4141 = vmatpush1.msra.mxu0 %v4112
        %4142 = vmatprep.subr.mxu0 0.0
        %4143 = vmatpush1.msra.mxu0 %v4113
        %4144 = vmatprep.subr.mxu0 0.0
        %4145 = vmatpush1.msra.mxu0 %v4114
        %4146 = vmatprep.subr.mxu0 0.0
        %4147 = vmatpush1.msra.mxu0 %v4115
        %4148 = vmatprep.subr.mxu0 0.0
        %4149 = vmatpush1.msra.mxu0 0.0
        %4150 = vmatprep.subr.mxu0 0.0
        %4151 = vmatpush1.msra.mxu0 0.0
        %4152 = vmatprep.subr.mxu0 0.0
        %4153 = vmatpush1.msra.mxu0 0.0
        %4154 = vmatprep.subr.mxu0 0.0
        %4155 = vmatpush1.msra.mxu0 0.0
        %4156 = vmatprep.subr.mxu0 0.0
        %4157 = vmatpush1.msra.mxu0 0.0
        %4158 = vmatprep.subr.mxu0 0.0
        %4159 = vmatpush1.msra.mxu0 0.0
        %4160 = vmatprep.subr.mxu0 0.0
        %4161 = vmatpush1.msra.mxu0 0.0
        %4162 = vmatprep.subr.mxu0 0.0
        %4163 = vmatpush1.msra.mxu0 0.0
        %4164 = vmatprep.subr.mxu0 0.0
        %4165 = vmatpush1.msra.mxu0 0.0
        %4166 = vmatprep.subr.mxu0 0.0
        %4167 = vmatpush1.msra.mxu0 0.0
        %4168 = vmatprep.subr.mxu0 0.0
        %4169 = vmatpush1.msra.mxu0 0.0
        %4170 = vmatprep.subr.mxu0 0.0
        %4171 = vmatpush1.msra.mxu0 0.0
        %4172 = vmatprep.subr.mxu0 0.0
        %4173 = vmatpush1.msra.mxu0 0.0
        %4174 = vmatprep.subr.mxu0 0.0
        %4175 = vmatpush1.msra.mxu0 0.0
        %4176 = vmatprep.subr.mxu0 0.0
        %4177 = vmatpush1.msra.mxu0 0.0
        %4178 = vmatprep.subr.mxu0 0.0
        %4179 = vmatpush1.msra.mxu0 0.0
        %4180 = vmatprep.mubr.f32.mxu0 0.0
        %4181 = vmatmul.mubr.f32.gmra.mrb[0].mxu0 %v4063
        %v4182 = vpop.f32.mrb[0].mxu0
        %v4183 = vadd.f32 0.0, %v4182
        %v4184 = vpop.f32.mrb[0].mxu0
        %4185 = vmatprep.mubr.f32.mxu0 0.0
        %4186 = vmatmul.mubr.f32.gmra.mrb[0].mxu0 %v4064
        %v4187 = vpop.f32.mrb[0].mxu0
        %v4188 = vadd.f32 0.0, %v4187
        %v4189 = vpop.f32.mrb[0].mxu0
        %4190 = vmatprep.mubr.f32.mxu0 0.0
        %4191 = vmatmul.mubr.f32.gmra.mrb[0].mxu0 %v4065
        %v4192 = vpop.f32.mrb[0].mxu0
        %v4193 = vadd.f32 0.0, %v4192
        %v4194 = vpop.f32.mrb[0].mxu0
        %4195 = vmatprep.mubr.f32.mxu0 0.0
        %4196 = vmatmul.mubr.f32.gmra.mrb[0].mxu0 %v4066
        %v4197 = vpop.f32.mrb[0].mxu0
        %v4198 = vadd.f32 0.0, %v4197
        %v4199 = vpop.f32.mrb[0].mxu0
        %4200 = vmatprep.mubr.f32.mxu0 0.0
        %4201 = vmatmul.mubr.f32.gmra.mrb[0].mxu0 %v4067
        %v4202 = vpop.f32.mrb[0].mxu0
        %v4203 = vadd.f32 0.0, %v4202
        %v4204 = vpop.f32.mrb[0].mxu0
        %4205 = vmatprep.mubr.f32.mxu0 0.0
        %4206 = vmatmul.mubr.f32.gmra.mrb[0].mxu0 %v4068
        %v4207 = vpop.f32.mrb[0].mxu0
        %v4208 = vadd.f32 0.0, %v4207
        %v4209 = vpop.f32.mrb[0].mxu0
        %4210 = vmatprep.mubr.f32.mxu0 0.0
        %4211 = vmatmul.mubr.f32.gmra.mrb[0].mxu0 %v4069
        %v4212 = vpop.f32.mrb[0].mxu0
        %v4213 = vadd.f32 0.0, %v4212
        %v4214 = vpop.f32.mrb[0].mxu0
        %4215 = vmatprep.mubr.f32.mxu0 0.0
        %4216 = vmatmul.mubr.f32.gmra.mrb[0].mxu0 %v4070
        %v4217 = vpop.f32.mrb[0].mxu0
        %v4218 = vadd.f32 0.0, %v4217
        %v4219 = vpop.f32.mrb[0].mxu0
        %4220 = vmatprep.mubr.f32.mxu0 0.0
        %4221 = vmatmul.mubr.f32.gmra.mrb[0].mxu0 %v4071
        %v4222 = vpop.f32.mrb[0].mxu0
        %v4223 = vadd.f32 0.0, %v4222
        %v4224 = vpop.f32.mrb[0].mxu0
        %4225 = vmatprep.mubr.f32.mxu0 0.0
        %4226 = vmatmul.mubr.f32.gmra.mrb[0].mxu0 %v4072
        %v4227 = vpop.f32.mrb[0].mxu0
        %v4228 = vadd.f32 0.0, %v4227
        %v4229 = vpop.f32.mrb[0].mxu0
        %4230 = vmatprep.mubr.f32.mxu0 0.0
        %4231 = vmatmul.mubr.f32.gmra.mrb[0].mxu0 %v4073
        %v4232 = vpop.f32.mrb[0].mxu0
        %v4233 = vadd.f32 0.0, %v4232
        %v4234 = vpop.f32.mrb[0].mxu0
        %4235 = vmatprep.mubr.f32.mxu0 0.0
        %4236 = vmatmul.mubr.f32.gmra.mrb[0].mxu0 %v4074
        %v4237 = vpop.f32.mrb[0].mxu0
        %v4238 = vadd.f32 0.0, %v4237
        %v4239 = vpop.f32.mrb[0].mxu0
        %4240 = vmatprep.mubr.f32.mxu0 0.0
        %4241 = vmatmul.mubr.f32.gmra.mrb[0].mxu0 %v4075
        %v4242 = vpop.f32.mrb[0].mxu0
        %v4243 = vadd.f32 0.0, %v4242
        %v4244 = vpop.f32.mrb[0].mxu0
        %4245 = vmatprep.mubr.f32.mxu0 0.0
        %4246 = vmatmul.mubr.f32.gmra.mrb[0].mxu0 %v4076
        %v4247 = vpop.f32.mrb[0].mxu0
        %v4248 = vadd.f32 0.0, %v4247
        %v4249 = vpop.f32.mrb[0].mxu0
        %4250 = vmatprep.mubr.f32.mxu0 0.0
        %4251 = vmatmul.mubr.f32.gmra.mrb[0].mxu0 %v4077
        %v4252 = vpop.f32.mrb[0].mxu0
        %v4253 = vadd.f32 0.0, %v4252
        %v4254 = vpop.f32.mrb[0].mxu0
        %4255 = vmatprep.mubr.f32.mxu0 0.0
        %4256 = vmatmul.mubr.f32.gmra.mrb[0].mxu0 %v4078
        %v4257 = vpop.f32.mrb[0].mxu0
        %v4258 = vadd.f32 0.0, %v4257
        %v4259 = vpop.f32.mrb[0].mxu0
        %4260 = vmatprep.mubr.f32.mxu0 0.0
        %4261 = vmatmul.mubr.f32.gmra.mrb[0].mxu0 %v4079
        %v4262 = vpop.f32.mrb[0].mxu0
        %v4263 = vadd.f32 0.0, %v4262
        %v4264 = vpop.f32.mrb[0].mxu0
        %4265 = vmatprep.mubr.f32.mxu0 0.0
        %4266 = vmatmul.mubr.f32.gmra.mrb[0].mxu0 %v4080
        %v4267 = vpop.f32.mrb[0].mxu0
        %v4268 = vadd.f32 0.0, %v4267
        %v4269 = vpop.f32.mrb[0].mxu0
        %4270 = vmatprep.mubr.f32.mxu0 0.0
        %4271 = vmatmul.mubr.f32.gmra.mrb[0].mxu0 %v4081
        %v4272 = vpop.f32.mrb[0].mxu0
        %v4273 = vadd.f32 0.0, %v4272
        %v4274 = vpop.f32.mrb[0].mxu0
        %4275 = vmatprep.mubr.f32.mxu0 0.0
        %4276 = vmatmul.mubr.f32.gmra.mrb[0].mxu0 %v4082
        %v4277 = vpop.f32.mrb[0].mxu0
        %v4278 = vadd.f32 0.0, %v4277
        %v4279 = vpop.f32.mrb[0].mxu0
        %4280 = vmatprep.mubr.f32.mxu0 0.0
        %4281 = vmatmul.mubr.f32.gmra.mrb[0].mxu0 %v4083
        %v4282 = vpop.f32.mrb[0].mxu0
        %v4283 = vadd.f32 0.0, %v4282
        %v4284 = vpop.f32.mrb[0].mxu0
        %4285 = vmatprep.mubr.f32.mxu0 0.0
        %4286 = vmatmul.mubr.f32.gmra.mrb[0].mxu0 %v4084
        %v4287 = vpop.f32.mrb[0].mxu0
        %v4288 = vadd.f32 0.0, %v4287
        %v4289 = vpop.f32.mrb[0].mxu0
        %4290 = vmatprep.mubr.f32.mxu0 0.0
        %4291 = vmatmul.mubr.f32.gmra.mrb[0].mxu0 %v4085
        %v4292 = vpop.f32.mrb[0].mxu0
        %v4293 = vadd.f32 0.0, %v4292
        %v4294 = vpop.f32.mrb[0].mxu0
        %4295 = vmatprep.mubr.f32.mxu0 0.0
        %4296 = vmatmul.mubr.f32.gmra.mrb[0].mxu0 %v4086
        %v4297 = vpop.f32.mrb[0].mxu0
        %v4298 = vadd.f32 0.0, %v4297
        %v4299 = vpop.f32.mrb[0].mxu0
        %4300 = vmatprep.mubr.f32.mxu0 0.0
        %4301 = vmatmul.mubr.f32.gmra.mrb[0].mxu0 %v4087
        %v4302 = vpop.f32.mrb[0].mxu0
        %v4303 = vadd.f32 0.0, %v4302
        %v4304 = vpop.f32.mrb[0].mxu0
        %4305 = vmatprep.mubr.f32.mxu0 0.0
        %4306 = vmatmul.mubr.f32.gmra.mrb[0].mxu0 %v4088
        %v4307 = vpop.f32.mrb[0].mxu0
        %v4308 = vadd.f32 0.0, %v4307
        %v4309 = vpop.f32.mrb[0].mxu0
        %4310 = vmatprep.mubr.f32.mxu0 0.0
        %4311 = vmatmul.mubr.f32.gmra.mrb[0].mxu0 %v4089
        %v4312 = vpop.f32.mrb[0].mxu0
        %v4313 = vadd.f32 0.0, %v4312
        %v4314 = vpop.f32.mrb[0].mxu0
        %4315 = vmatprep.mubr.f32.mxu0 0.0
        %4316 = vmatmul.mubr.f32.gmra.mrb[0].mxu0 %v4090
        %v4317 = vpop.f32.mrb[0].mxu0
        %v4318 = vadd.f32 0.0, %v4317
        %v4319 = vpop.f32.mrb[0].mxu0
        %4320 = vmatprep.mubr.f32.mxu0 0.0
        %4321 = vmatmul.mubr.f32.gmra.mrb[0].mxu0 %v4091
        %v4322 = vpop.f32.mrb[0].mxu0
        %v4323 = vadd.f32 0.0, %v4322
        %v4324 = vpop.f32.mrb[0].mxu0
        %4325 = vmatprep.mubr.f32.mxu0 0.0
        %4326 = vmatmul.mubr.f32.gmra.mrb[0].mxu0 %v4092
        %v4327 = vpop.f32.mrb[0].mxu0
        %v4328 = vadd.f32 0.0, %v4327
        %v4329 = vpop.f32.mrb[0].mxu0
        %4330 = vmatprep.mubr.f32.mxu0 0.0
        %4331 = vmatmul.mubr.f32.gmra.mrb[0].mxu0 %v4093
        %v4332 = vpop.f32.mrb[0].mxu0
        %v4333 = vadd.f32 0.0, %v4332
        %v4334 = vpop.f32.mrb[0].mxu0
        %4335 = vmatprep.mubr.f32.mxu0 0.0
        %4336 = vmatmul.mubr.f32.gmra.mrb[0].mxu0 %v4094
        %v4337 = vpop.f32.mrb[0].mxu0
        %v4338 = vadd.f32 0.0, %v4337
        %v4339 = vpop.f32.mrb[0].mxu0
        %4340 = vmatprep.mubr.f32.mxu0 0.0
        %4341 = vmatmul.mubr.f32.gmra.mrb[0].mxu0 %v4095
        %v4342 = vpop.f32.mrb[0].mxu0
        %v4343 = vadd.f32 0.0, %v4342
        %v4344 = vpop.f32.mrb[0].mxu0
        %4345 = vmatprep.mubr.f32.mxu0 0.0
        %4346 = vmatmul.mubr.f32.gmra.mrb[0].mxu0 %v4096
        %v4347 = vpop.f32.mrb[0].mxu0
        %v4348 = vadd.f32 0.0, %v4347
        %v4349 = vpop.f32.mrb[0].mxu0
        %4350 = vmatprep.mubr.f32.mxu0 0.0
        %4351 = vmatmul.mubr.f32.gmra.mrb[0].mxu0 %v4097
        %v4352 = vpop.f32.mrb[0].mxu0
        %v4353 = vadd.f32 0.0, %v4352
        %v4354 = vpop.f32.mrb[0].mxu0
        %4355 = vmatprep.mubr.f32.mxu0 0.0
        %4356 = vmatmul.mubr.f32.gmra.mrb[0].mxu0 %v4098
        %v4357 = vpop.f32.mrb[0].mxu0
        %v4358 = vadd.f32 0.0, %v4357
        %v4359 = vpop.f32.mrb[0].mxu0
        %4360 = vdwg.mxu0
        %4361 = vmatprep.subr.mxu0 0.0
        %4362 = vmatpush1.msra.mxu0 %v4047
        %4363 = vmatprep.subr.mxu0 0.0
        %4364 = vmatpush1.msra.mxu0 %v4048
        %4365 = vmatprep.subr.mxu0 0.0
        %4366 = vmatpush1.msra.mxu0 %v4049
        %4367 = vmatprep.subr.mxu0 0.0
        %4368 = vmatpush1.msra.mxu0 %v4050
        %4369 = vmatprep.subr.mxu0 0.0
        %4370 = vmatpush1.msra.mxu0 %v4051
        %4371 = vmatprep.subr.mxu0 0.0
        %4372 = vmatpush1.msra.mxu0 %v4052
        %4373 = vmatprep.subr.mxu0 0.0
        %4374 = vmatpush1.msra.mxu0 %v4053
        %4375 = vmatprep.subr.mxu0 0.0
        %4376 = vmatpush1.msra.mxu0 %v4054
        %4377 = vmatprep.subr.mxu0 0.0
        %4378 = vmatpush1.msra.mxu0 %v4055
        %4379 = vmatprep.subr.mxu0 0.0
        %4380 = vmatpush1.msra.mxu0 %v4056
        %4381 = vmatprep.subr.mxu0 0.0
        %4382 = vmatpush1.msra.mxu0 %v4057
        %4383 = vmatprep.subr.mxu0 0.0
        %4384 = vmatpush1.msra.mxu0 %v4058
        %4385 = vmatprep.subr.mxu0 0.0
        %4386 = vmatpush1.msra.mxu0 %v4059
        %4387 = vmatprep.subr.mxu0 0.0
        %4388 = vmatpush1.msra.mxu0 %v4060
        %4389 = vmatprep.subr.mxu0 0.0
        %4390 = vmatpush1.msra.mxu0 %v4061
        %4391 = vmatprep.subr.mxu0 0.0
        %4392 = vmatpush1.msra.mxu0 %v4062
        %4393 = vmatprep.subr.mxu0 0.0
        %4394 = vmatpush1.msra.mxu0 0.0
        %4395 = vmatprep.subr.mxu0 0.0
        %4396 = vmatpush1.msra.mxu0 0.0
        %4397 = vmatprep.subr.mxu0 0.0
        %4398 = vmatpush1.msra.mxu0 0.0
        %4399 = vmatprep.subr.mxu0 0.0
        %4400 = vmatpush1.msra.mxu0 0.0
        %4401 = vmatprep.subr.mxu0 0.0
        %4402 = vmatpush1.msra.mxu0 0.0
        %4403 = vmatprep.subr.mxu0 0.0
        %4404 = vmatpush1.msra.mxu0 0.0
        %4405 = vmatprep.subr.mxu0 0.0
        %4406 = vmatpush1.msra.mxu0 0.0
        %4407 = vmatprep.subr.mxu0 0.0
        %4408 = vmatpush1.msra.mxu0 0.0
        %4409 = vmatprep.subr.mxu0 0.0
        %4410 = vmatpush1.msra.mxu0 0.0
        %4411 = vmatprep.subr.mxu0 0.0
        %4412 = vmatpush1.msra.mxu0 0.0
        %4413 = vmatprep.subr.mxu0 0.0
        %4414 = vmatpush1.msra.mxu0 0.0
        %4415 = vmatprep.subr.mxu0 0.0
        %4416 = vmatpush1.msra.mxu0 0.0
        %4417 = vmatprep.subr.mxu0 0.0
        %4418 = vmatpush1.msra.mxu0 0.0
        %4419 = vmatprep.subr.mxu0 0.0
        %4420 = vmatpush1.msra.mxu0 0.0
        %4421 = vmatprep.subr.mxu0 0.0
        %4422 = vmatpush1.msra.mxu0 0.0
        %4423 = vmatprep.subr.mxu0 0.0
        %4424 = vmatpush1.msra.mxu0 0.0
        %4425 = vmatprep.mubr.f32.mxu0 0.0
        %4426 = vmatmul.mubr.f32.gmra.mrb[0].mxu0 %v4011
        %v4427 = vpop.f32.mrb[0].mxu0
        %v4428 = vadd.f32 %v4183, %v4427
        %v4429 = vpop.f32.mrb[0].mxu0
        %4430 = vmatprep.mubr.f32.mxu0 0.0
        %4431 = vmatmul.mubr.f32.gmra.mrb[0].mxu0 %v4012
        %v4432 = vpop.f32.mrb[0].mxu0
        %v4433 = vadd.f32 %v4188, %v4432
        %v4434 = vpop.f32.mrb[0].mxu0
        %4435 = vmatprep.mubr.f32.mxu0 0.0
        %4436 = vmatmul.mubr.f32.gmra.mrb[0].mxu0 %v4013
        %v4437 = vpop.f32.mrb[0].mxu0
        %v4438 = vadd.f32 %v4193, %v4437
        %v4439 = vpop.f32.mrb[0].mxu0
        %4440 = vmatprep.mubr.f32.mxu0 0.0
        %4441 = vmatmul.mubr.f32.gmra.mrb[0].mxu0 %v4014
        %v4442 = vpop.f32.mrb[0].mxu0
        %v4443 = vadd.f32 %v4198, %v4442
        %v4444 = vpop.f32.mrb[0].mxu0
        %4445 = vmatprep.mubr.f32.mxu0 0.0
        %4446 = vmatmul.mubr.f32.gmra.mrb[0].mxu0 %v4015
        %v4447 = vpop.f32.mrb[0].mxu0
        %v4448 = vadd.f32 %v4203, %v4447
        %v4449 = vpop.f32.mrb[0].mxu0
        %4450 = vmatprep.mubr.f32.mxu0 0.0
        %4451 = vmatmul.mubr.f32.gmra.mrb[0].mxu0 %v4016
        %v4452 = vpop.f32.mrb[0].mxu0
        %v4453 = vadd.f32 %v4208, %v4452
        %v4454 = vpop.f32.mrb[0].mxu0
        %4455 = vmatprep.mubr.f32.mxu0 0.0
        %4456 = vmatmul.mubr.f32.gmra.mrb[0].mxu0 %v4017
        %v4457 = vpop.f32.mrb[0].mxu0
        %v4458 = vadd.f32 %v4213, %v4457
        %v4459 = vpop.f32.mrb[0].mxu0
        %4460 = vmatprep.mubr.f32.mxu0 0.0
        %4461 = vmatmul.mubr.f32.gmra.mrb[0].mxu0 %v4018
        %v4462 = vpop.f32.mrb[0].mxu0
        %v4463 = vadd.f32 %v4218, %v4462
        %v4464 = vpop.f32.mrb[0].mxu0
        %4465 = vmatprep.mubr.f32.mxu0 0.0
        %4466 = vmatmul.mubr.f32.gmra.mrb[0].mxu0 %v4019
        %v4467 = vpop.f32.mrb[0].mxu0
        %v4468 = vadd.f32 %v4223, %v4467
        %v4469 = vpop.f32.mrb[0].mxu0
        %4470 = vmatprep.mubr.f32.mxu0 0.0
        %4471 = vmatmul.mubr.f32.gmra.mrb[0].mxu0 %v4020
        %v4472 = vpop.f32.mrb[0].mxu0
        %v4473 = vadd.f32 %v4228, %v4472
        %v4474 = vpop.f32.mrb[0].mxu0
        %4475 = vmatprep.mubr.f32.mxu0 0.0
        %4476 = vmatmul.mubr.f32.gmra.mrb[0].mxu0 %v4021
        %v4477 = vpop.f32.mrb[0].mxu0
        %v4478 = vadd.f32 %v4233, %v4477
        %v4479 = vpop.f32.mrb[0].mxu0
        %4480 = vmatprep.mubr.f32.mxu0 0.0
        %4481 = vmatmul.mubr.f32.gmra.mrb[0].mxu0 %v4022
        %v4482 = vpop.f32.mrb[0].mxu0
        %v4483 = vadd.f32 %v4238, %v4482
        %v4484 = vpop.f32.mrb[0].mxu0
        %4485 = vmatprep.mubr.f32.mxu0 0.0
        %4486 = vmatmul.mubr.f32.gmra.mrb[0].mxu0 %v4023
        %v4487 = vpop.f32.mrb[0].mxu0
        %v4488 = vadd.f32 %v4243, %v4487
        %v4489 = vpop.f32.mrb[0].mxu0
        %4490 = vmatprep.mubr.f32.mxu0 0.0
        %4491 = vmatmul.mubr.f32.gmra.mrb[0].mxu0 %v4024
        %v4492 = vpop.f32.mrb[0].mxu0
        %v4493 = vadd.f32 %v4248, %v4492
        %v4494 = vpop.f32.mrb[0].mxu0
        %4495 = vmatprep.mubr.f32.mxu0 0.0
        %4496 = vmatmul.mubr.f32.gmra.mrb[0].mxu0 %v4025
        %v4497 = vpop.f32.mrb[0].mxu0
        %v4498 = vadd.f32 %v4253, %v4497
        %v4499 = vpop.f32.mrb[0].mxu0
        %4500 = vmatprep.mubr.f32.mxu0 0.0
        %4501 = vmatmul.mubr.f32.gmra.mrb[0].mxu0 %v4026
        %v4502 = vpop.f32.mrb[0].mxu0
        %v4503 = vadd.f32 %v4258, %v4502
        %v4504 = vpop.f32.mrb[0].mxu0
        %4505 = vmatprep.mubr.f32.mxu0 0.0
        %4506 = vmatmul.mubr.f32.gmra.mrb[0].mxu0 %v4027
        %v4507 = vpop.f32.mrb[0].mxu0
        %v4508 = vadd.f32 %v4263, %v4507
        %v4509 = vpop.f32.mrb[0].mxu0
        %4510 = vmatprep.mubr.f32.mxu0 0.0
        %4511 = vmatmul.mubr.f32.gmra.mrb[0].mxu0 %v4028
        %v4512 = vpop.f32.mrb[0].mxu0
        %v4513 = vadd.f32 %v4268, %v4512
        %v4514 = vpop.f32.mrb[0].mxu0
        %4515 = vmatprep.mubr.f32.mxu0 0.0
        %4516 = vmatmul.mubr.f32.gmra.mrb[0].mxu0 %v4029
        %v4517 = vpop.f32.mrb[0].mxu0
        %v4518 = vadd.f32 %v4273, %v4517
        %v4519 = vpop.f32.mrb[0].mxu0
        %4520 = vmatprep.mubr.f32.mxu0 0.0
        %4521 = vmatmul.mubr.f32.gmra.mrb[0].mxu0 %v4030
        %v4522 = vpop.f32.mrb[0].mxu0
        %v4523 = vadd.f32 %v4278, %v4522
        %v4524 = vpop.f32.mrb[0].mxu0
        %4525 = vmatprep.mubr.f32.mxu0 0.0
        %4526 = vmatmul.mubr.f32.gmra.mrb[0].mxu0 %v4031
        %v4527 = vpop.f32.mrb[0].mxu0
        %v4528 = vadd.f32 %v4283, %v4527
        %v4529 = vpop.f32.mrb[0].mxu0
        %4530 = vmatprep.mubr.f32.mxu0 0.0
        %4531 = vmatmul.mubr.f32.gmra.mrb[0].mxu0 %v4032
        %v4532 = vpop.f32.mrb[0].mxu0
        %v4533 = vadd.f32 %v4288, %v4532
        %v4534 = vpop.f32.mrb[0].mxu0
        %4535 = vmatprep.mubr.f32.mxu0 0.0
        %4536 = vmatmul.mubr.f32.gmra.mrb[0].mxu0 %v4033
        %v4537 = vpop.f32.mrb[0].mxu0
        %v4538 = vadd.f32 %v4293, %v4537
        %v4539 = vpop.f32.mrb[0].mxu0
        %4540 = vmatprep.mubr.f32.mxu0 0.0
        %4541 = vmatmul.mubr.f32.gmra.mrb[0].mxu0 %v4034
        %v4542 = vpop.f32.mrb[0].mxu0
        %v4543 = vadd.f32 %v4298, %v4542
        %v4544 = vpop.f32.mrb[0].mxu0
        %4545 = vmatprep.mubr.f32.mxu0 0.0
        %4546 = vmatmul.mubr.f32.gmra.mrb[0].mxu0 %v4035
        %v4547 = vpop.f32.mrb[0].mxu0
        %v4548 = vadd.f32 %v4303, %v4547
        %v4549 = vpop.f32.mrb[0].mxu0
        %4550 = vmatprep.mubr.f32.mxu0 0.0
        %4551 = vmatmul.mubr.f32.gmra.mrb[0].mxu0 %v4036
        %v4552 = vpop.f32.mrb[0].mxu0
        %v4553 = vadd.f32 %v4308, %v4552
        %v4554 = vpop.f32.mrb[0].mxu0
        %4555 = vmatprep.mubr.f32.mxu0 0.0
        %4556 = vmatmul.mubr.f32.gmra.mrb[0].mxu0 %v4037
        %v4557 = vpop.f32.mrb[0].mxu0
        %v4558 = vadd.f32 %v4313, %v4557
        %v4559 = vpop.f32.mrb[0].mxu0
        %4560 = vmatprep.mubr.f32.mxu0 0.0
        %4561 = vmatmul.mubr.f32.gmra.mrb[0].mxu0 %v4038
        %v4562 = vpop.f32.mrb[0].mxu0
        %v4563 = vadd.f32 %v4318, %v4562
        %v4564 = vpop.f32.mrb[0].mxu0
        %4565 = vmatprep.mubr.f32.mxu0 0.0
        %4566 = vmatmul.mubr.f32.gmra.mrb[0].mxu0 %v4039
        %v4567 = vpop.f32.mrb[0].mxu0
        %v4568 = vadd.f32 %v4323, %v4567
        %v4569 = vpop.f32.mrb[0].mxu0
        %4570 = vmatprep.mubr.f32.mxu0 0.0
        %4571 = vmatmul.mubr.f32.gmra.mrb[0].mxu0 %v4040
        %v4572 = vpop.f32.mrb[0].mxu0
        %v4573 = vadd.f32 %v4328, %v4572
        %v4574 = vpop.f32.mrb[0].mxu0
        %4575 = vmatprep.mubr.f32.mxu0 0.0
        %4576 = vmatmul.mubr.f32.gmra.mrb[0].mxu0 %v4041
        %v4577 = vpop.f32.mrb[0].mxu0
        %v4578 = vadd.f32 %v4333, %v4577
        %v4579 = vpop.f32.mrb[0].mxu0
        %4580 = vmatprep.mubr.f32.mxu0 0.0
        %4581 = vmatmul.mubr.f32.gmra.mrb[0].mxu0 %v4042
        %v4582 = vpop.f32.mrb[0].mxu0
        %v4583 = vadd.f32 %v4338, %v4582
        %v4584 = vpop.f32.mrb[0].mxu0
        %4585 = vmatprep.mubr.f32.mxu0 0.0
        %4586 = vmatmul.mubr.f32.gmra.mrb[0].mxu0 %v4043
        %v4587 = vpop.f32.mrb[0].mxu0
        %v4588 = vadd.f32 %v4343, %v4587
        %v4589 = vpop.f32.mrb[0].mxu0
        %4590 = vmatprep.mubr.f32.mxu0 0.0
        %4591 = vmatmul.mubr.f32.gmra.mrb[0].mxu0 %v4044
        %v4592 = vpop.f32.mrb[0].mxu0
        %v4593 = vadd.f32 %v4348, %v4592
        %v4594 = vpop.f32.mrb[0].mxu0
        %4595 = vmatprep.mubr.f32.mxu0 0.0
        %4596 = vmatmul.mubr.f32.gmra.mrb[0].mxu0 %v4045
        %v4597 = vpop.f32.mrb[0].mxu0
        %v4598 = vadd.f32 %v4353, %v4597
        %v4599 = vpop.f32.mrb[0].mxu0
        %4600 = vmatprep.mubr.f32.mxu0 0.0
        %4601 = vmatmul.mubr.f32.gmra.mrb[0].mxu0 %v4046
        %v4602 = vpop.f32.mrb[0].mxu0
        %v4603 = vadd.f32 %v4358, %v4602
        %v4604 = vpop.f32.mrb[0].mxu0
        %4605 = vdwg.mxu0
        %v4606 = vld [vmem:[#allocation2 + $0x7] sm:$0xff]
        %v4607 = vld [vmem:[#allocation2 + $0xf] sm:$0xff]
        %v4608 = vld [vmem:[#allocation2 + $0x17] sm:$0xff]
        %v4609 = vld [vmem:[#allocation2 + $0x1f] sm:$0xff]
        %v4610 = vld [vmem:[#allocation2 + $0x27] sm:$0xff]
        %v4611 = vld [vmem:[#allocation2 + $0x2f] sm:$0xff]
        %v4612 = vld [vmem:[#allocation2 + $0x37] sm:$0xff]
        %v4613 = vld [vmem:[#allocation2 + $0x3f] sm:$0xff]
        %v4614 = vld [vmem:[#allocation2 + $0x47] sm:$0xff]
        %v4615 = vld [vmem:[#allocation2 + $0x4f] sm:$0xff]
        %v4616 = vld [vmem:[#allocation2 + $0x57] sm:$0xff]
        %v4617 = vld [vmem:[#allocation2 + $0x5f] sm:$0xff]
        %v4618 = vld [vmem:[#allocation2 + $0x67] sm:$0xff]
        %v4619 = vld [vmem:[#allocation2 + $0x6f] sm:$0xff]
        %v4620 = vld [vmem:[#allocation2 + $0x77] sm:$0xff]
        %v4621 = vld [vmem:[#allocation2 + $0x7f] sm:$0xff]
        %v4622 = vld [vmem:[#allocation2 + $0x87] sm:$0xff]
        %v4623 = vld [vmem:[#allocation2 + $0x8f] sm:$0xff]
        %v4624 = vld [vmem:[#allocation2 + $0x97] sm:$0xff]
        %v4625 = vld [vmem:[#allocation2 + $0x9f] sm:$0xff]
        %v4626 = vld [vmem:[#allocation2 + $0xa7] sm:$0xff]
        %v4627 = vld [vmem:[#allocation2 + $0xaf] sm:$0xff]
        %v4628 = vld [vmem:[#allocation2 + $0xb7] sm:$0xff]
        %v4629 = vld [vmem:[#allocation2 + $0xbf] sm:$0xff]
        %v4630 = vld [vmem:[#allocation2 + $0xc7] sm:$0xff]
        %v4631 = vld [vmem:[#allocation2 + $0xcf] sm:$0xff]
        %v4632 = vld [vmem:[#allocation2 + $0xd7] sm:$0xff]
        %v4633 = vld [vmem:[#allocation2 + $0xdf] sm:$0xff]
        %v4634 = vld [vmem:[#allocation2 + $0xe7] sm:$0xff]
        %v4635 = vld [vmem:[#allocation2 + $0xef] sm:$0xff]
        %v4636 = vld [vmem:[#allocation2 + $0xf7] sm:$0xff]
        %v4637 = vld [vmem:[#allocation2 + $0xff] sm:$0xff]
        %v4638 = vld [vmem:[#allocation2 + $0x107] sm:$0xff]
        %v4639 = vld [vmem:[#allocation2 + $0x10f] sm:$0xff]
        %v4640 = vld [vmem:[#allocation2 + $0x117] sm:$0xff]
        %v4641 = vld [vmem:[#allocation2 + $0x11f] sm:$0xff]
        %s4642 = scalar_lea.vmem [#allocation8], 256
        %v4643 = vld [vmem:[%s4642] sm:$0xff]
        %v4644 = vld [vmem:[%s4642 + $0x8] sm:$0xff]
        %v4645 = vld [vmem:[%s4642 + $0x10] sm:$0xff]
        %v4646 = vld [vmem:[%s4642 + $0x18] sm:$0xff]
        %v4647 = vld [vmem:[%s4642 + $0x20] sm:$0xff]
        %v4648 = vld [vmem:[%s4642 + $0x28] sm:$0xff]
        %v4649 = vld [vmem:[%s4642 + $0x30] sm:$0xff]
        %v4650 = vld [vmem:[%s4642 + $0x38] sm:$0xff]
        %v4651 = vld [vmem:[%s4642 + $0x40] sm:$0xff]
        %v4652 = vld [vmem:[%s4642 + $0x48] sm:$0xff]
        %v4653 = vld [vmem:[%s4642 + $0x50] sm:$0xff]
        %v4654 = vld [vmem:[%s4642 + $0x58] sm:$0xff]
        %v4655 = vld [vmem:[%s4642 + $0x60] sm:$0xff]
        %v4656 = vld [vmem:[%s4642 + $0x68] sm:$0xff]
        %v4657 = vld [vmem:[%s4642 + $0x70] sm:$0xff]
        %v4658 = vld [vmem:[%s4642 + $0x78] sm:$0xff]
        %4659 = vmatprep.subr.mxu0 0.0
        %4660 = vmatpush1.msra.mxu0 %v4643
        %4661 = vmatprep.subr.mxu0 0.0
        %4662 = vmatpush1.msra.mxu0 %v4644
        %4663 = vmatprep.subr.mxu0 0.0
        %4664 = vmatpush1.msra.mxu0 %v4645
        %4665 = vmatprep.subr.mxu0 0.0
        %4666 = vmatpush1.msra.mxu0 %v4646
        %4667 = vmatprep.subr.mxu0 0.0
        %4668 = vmatpush1.msra.mxu0 %v4647
        %4669 = vmatprep.subr.mxu0 0.0
        %4670 = vmatpush1.msra.mxu0 %v4648
        %4671 = vmatprep.subr.mxu0 0.0
        %4672 = vmatpush1.msra.mxu0 %v4649
        %4673 = vmatprep.subr.mxu0 0.0
        %4674 = vmatpush1.msra.mxu0 %v4650
        %4675 = vmatprep.subr.mxu0 0.0
        %4676 = vmatpush1.msra.mxu0 %v4651
        %4677 = vmatprep.subr.mxu0 0.0
        %4678 = vmatpush1.msra.mxu0 %v4652
        %4679 = vmatprep.subr.mxu0 0.0
        %4680 = vmatpush1.msra.mxu0 %v4653
        %4681 = vmatprep.subr.mxu0 0.0
        %4682 = vmatpush1.msra.mxu0 %v4654
        %4683 = vmatprep.subr.mxu0 0.0
        %4684 = vmatpush1.msra.mxu0 %v4655
        %4685 = vmatprep.subr.mxu0 0.0
        %4686 = vmatpush1.msra.mxu0 %v4656
        %4687 = vmatprep.subr.mxu0 0.0
        %4688 = vmatpush1.msra.mxu0 %v4657
        %4689 = vmatprep.subr.mxu0 0.0
        %4690 = vmatpush1.msra.mxu0 %v4658
        %4691 = vmatprep.subr.mxu0 0.0
        %4692 = vmatpush1.msra.mxu0 0.0
        %4693 = vmatprep.subr.mxu0 0.0
        %4694 = vmatpush1.msra.mxu0 0.0
        %4695 = vmatprep.subr.mxu0 0.0
        %4696 = vmatpush1.msra.mxu0 0.0
        %4697 = vmatprep.subr.mxu0 0.0
        %4698 = vmatpush1.msra.mxu0 0.0
        %4699 = vmatprep.subr.mxu0 0.0
        %4700 = vmatpush1.msra.mxu0 0.0
        %4701 = vmatprep.subr.mxu0 0.0
        %4702 = vmatpush1.msra.mxu0 0.0
        %4703 = vmatprep.subr.mxu0 0.0
        %4704 = vmatpush1.msra.mxu0 0.0
        %4705 = vmatprep.subr.mxu0 0.0
        %4706 = vmatpush1.msra.mxu0 0.0
        %4707 = vmatprep.subr.mxu0 0.0
        %4708 = vmatpush1.msra.mxu0 0.0
        %4709 = vmatprep.subr.mxu0 0.0
        %4710 = vmatpush1.msra.mxu0 0.0
        %4711 = vmatprep.subr.mxu0 0.0
        %4712 = vmatpush1.msra.mxu0 0.0
        %4713 = vmatprep.subr.mxu0 0.0
        %4714 = vmatpush1.msra.mxu0 0.0
        %4715 = vmatprep.subr.mxu0 0.0
        %4716 = vmatpush1.msra.mxu0 0.0
        %4717 = vmatprep.subr.mxu0 0.0
        %4718 = vmatpush1.msra.mxu0 0.0
        %4719 = vmatprep.subr.mxu0 0.0
        %4720 = vmatpush1.msra.mxu0 0.0
        %4721 = vmatprep.subr.mxu0 0.0
        %4722 = vmatpush1.msra.mxu0 0.0
        %4723 = vmatprep.mubr.f32.mxu0 0.0
        %4724 = vmatmul.mubr.f32.gmra.mrb[0].mxu0 %v4606
        %v4725 = vpop.f32.mrb[0].mxu0
        %v4726 = vadd.f32 0.0, %v4725
        %v4727 = vpop.f32.mrb[0].mxu0
        %4728 = vmatprep.mubr.f32.mxu0 0.0
        %4729 = vmatmul.mubr.f32.gmra.mrb[0].mxu0 %v4607
        %v4730 = vpop.f32.mrb[0].mxu0
        %v4731 = vadd.f32 0.0, %v4730
        %v4732 = vpop.f32.mrb[0].mxu0
        %4733 = vmatprep.mubr.f32.mxu0 0.0
        %4734 = vmatmul.mubr.f32.gmra.mrb[0].mxu0 %v4608
        %v4735 = vpop.f32.mrb[0].mxu0
        %v4736 = vadd.f32 0.0, %v4735
        %v4737 = vpop.f32.mrb[0].mxu0
        %4738 = vmatprep.mubr.f32.mxu0 0.0
        %4739 = vmatmul.mubr.f32.gmra.mrb[0].mxu0 %v4609
        %v4740 = vpop.f32.mrb[0].mxu0
        %v4741 = vadd.f32 0.0, %v4740
        %v4742 = vpop.f32.mrb[0].mxu0
        %4743 = vmatprep.mubr.f32.mxu0 0.0
        %4744 = vmatmul.mubr.f32.gmra.mrb[0].mxu0 %v4610
        %v4745 = vpop.f32.mrb[0].mxu0
        %v4746 = vadd.f32 0.0, %v4745
        %v4747 = vpop.f32.mrb[0].mxu0
        %4748 = vmatprep.mubr.f32.mxu0 0.0
        %4749 = vmatmul.mubr.f32.gmra.mrb[0].mxu0 %v4611
        %v4750 = vpop.f32.mrb[0].mxu0
        %v4751 = vadd.f32 0.0, %v4750
        %v4752 = vpop.f32.mrb[0].mxu0
        %4753 = vmatprep.mubr.f32.mxu0 0.0
        %4754 = vmatmul.mubr.f32.gmra.mrb[0].mxu0 %v4612
        %v4755 = vpop.f32.mrb[0].mxu0
        %v4756 = vadd.f32 0.0, %v4755
        %v4757 = vpop.f32.mrb[0].mxu0
        %4758 = vmatprep.mubr.f32.mxu0 0.0
        %4759 = vmatmul.mubr.f32.gmra.mrb[0].mxu0 %v4613
        %v4760 = vpop.f32.mrb[0].mxu0
        %v4761 = vadd.f32 0.0, %v4760
        %v4762 = vpop.f32.mrb[0].mxu0
        %4763 = vmatprep.mubr.f32.mxu0 0.0
        %4764 = vmatmul.mubr.f32.gmra.mrb[0].mxu0 %v4614
        %v4765 = vpop.f32.mrb[0].mxu0
        %v4766 = vadd.f32 0.0, %v4765
        %v4767 = vpop.f32.mrb[0].mxu0
        %4768 = vmatprep.mubr.f32.mxu0 0.0
        %4769 = vmatmul.mubr.f32.gmra.mrb[0].mxu0 %v4615
        %v4770 = vpop.f32.mrb[0].mxu0
        %v4771 = vadd.f32 0.0, %v4770
        %v4772 = vpop.f32.mrb[0].mxu0
        %4773 = vmatprep.mubr.f32.mxu0 0.0
        %4774 = vmatmul.mubr.f32.gmra.mrb[0].mxu0 %v4616
        %v4775 = vpop.f32.mrb[0].mxu0
        %v4776 = vadd.f32 0.0, %v4775
        %v4777 = vpop.f32.mrb[0].mxu0
        %4778 = vmatprep.mubr.f32.mxu0 0.0
        %4779 = vmatmul.mubr.f32.gmra.mrb[0].mxu0 %v4617
        %v4780 = vpop.f32.mrb[0].mxu0
        %v4781 = vadd.f32 0.0, %v4780
        %v4782 = vpop.f32.mrb[0].mxu0
        %4783 = vmatprep.mubr.f32.mxu0 0.0
        %4784 = vmatmul.mubr.f32.gmra.mrb[0].mxu0 %v4618
        %v4785 = vpop.f32.mrb[0].mxu0
        %v4786 = vadd.f32 0.0, %v4785
        %v4787 = vpop.f32.mrb[0].mxu0
        %4788 = vmatprep.mubr.f32.mxu0 0.0
        %4789 = vmatmul.mubr.f32.gmra.mrb[0].mxu0 %v4619
        %v4790 = vpop.f32.mrb[0].mxu0
        %v4791 = vadd.f32 0.0, %v4790
        %v4792 = vpop.f32.mrb[0].mxu0
        %4793 = vmatprep.mubr.f32.mxu0 0.0
        %4794 = vmatmul.mubr.f32.gmra.mrb[0].mxu0 %v4620
        %v4795 = vpop.f32.mrb[0].mxu0
        %v4796 = vadd.f32 0.0, %v4795
        %v4797 = vpop.f32.mrb[0].mxu0
        %4798 = vmatprep.mubr.f32.mxu0 0.0
        %4799 = vmatmul.mubr.f32.gmra.mrb[0].mxu0 %v4621
        %v4800 = vpop.f32.mrb[0].mxu0
        %v4801 = vadd.f32 0.0, %v4800
        %v4802 = vpop.f32.mrb[0].mxu0
        %4803 = vmatprep.mubr.f32.mxu0 0.0
        %4804 = vmatmul.mubr.f32.gmra.mrb[0].mxu0 %v4622
        %v4805 = vpop.f32.mrb[0].mxu0
        %v4806 = vadd.f32 0.0, %v4805
        %v4807 = vpop.f32.mrb[0].mxu0
        %4808 = vmatprep.mubr.f32.mxu0 0.0
        %4809 = vmatmul.mubr.f32.gmra.mrb[0].mxu0 %v4623
        %v4810 = vpop.f32.mrb[0].mxu0
        %v4811 = vadd.f32 0.0, %v4810
        %v4812 = vpop.f32.mrb[0].mxu0
        %4813 = vmatprep.mubr.f32.mxu0 0.0
        %4814 = vmatmul.mubr.f32.gmra.mrb[0].mxu0 %v4624
        %v4815 = vpop.f32.mrb[0].mxu0
        %v4816 = vadd.f32 0.0, %v4815
        %v4817 = vpop.f32.mrb[0].mxu0
        %4818 = vmatprep.mubr.f32.mxu0 0.0
        %4819 = vmatmul.mubr.f32.gmra.mrb[0].mxu0 %v4625
        %v4820 = vpop.f32.mrb[0].mxu0
        %v4821 = vadd.f32 0.0, %v4820
        %v4822 = vpop.f32.mrb[0].mxu0
        %4823 = vmatprep.mubr.f32.mxu0 0.0
        %4824 = vmatmul.mubr.f32.gmra.mrb[0].mxu0 %v4626
        %v4825 = vpop.f32.mrb[0].mxu0
        %v4826 = vadd.f32 0.0, %v4825
        %v4827 = vpop.f32.mrb[0].mxu0
        %4828 = vmatprep.mubr.f32.mxu0 0.0
        %4829 = vmatmul.mubr.f32.gmra.mrb[0].mxu0 %v4627
        %v4830 = vpop.f32.mrb[0].mxu0
        %v4831 = vadd.f32 0.0, %v4830
        %v4832 = vpop.f32.mrb[0].mxu0
        %4833 = vmatprep.mubr.f32.mxu0 0.0
        %4834 = vmatmul.mubr.f32.gmra.mrb[0].mxu0 %v4628
        %v4835 = vpop.f32.mrb[0].mxu0
        %v4836 = vadd.f32 0.0, %v4835
        %v4837 = vpop.f32.mrb[0].mxu0
        %4838 = vmatprep.mubr.f32.mxu0 0.0
        %4839 = vmatmul.mubr.f32.gmra.mrb[0].mxu0 %v4629
        %v4840 = vpop.f32.mrb[0].mxu0
        %v4841 = vadd.f32 0.0, %v4840
        %v4842 = vpop.f32.mrb[0].mxu0
        %4843 = vmatprep.mubr.f32.mxu0 0.0
        %4844 = vmatmul.mubr.f32.gmra.mrb[0].mxu0 %v4630
        %v4845 = vpop.f32.mrb[0].mxu0
        %v4846 = vadd.f32 0.0, %v4845
        %v4847 = vpop.f32.mrb[0].mxu0
        %4848 = vmatprep.mubr.f32.mxu0 0.0
        %4849 = vmatmul.mubr.f32.gmra.mrb[0].mxu0 %v4631
        %v4850 = vpop.f32.mrb[0].mxu0
        %v4851 = vadd.f32 0.0, %v4850
        %v4852 = vpop.f32.mrb[0].mxu0
        %4853 = vmatprep.mubr.f32.mxu0 0.0
        %4854 = vmatmul.mubr.f32.gmra.mrb[0].mxu0 %v4632
        %v4855 = vpop.f32.mrb[0].mxu0
        %v4856 = vadd.f32 0.0, %v4855
        %v4857 = vpop.f32.mrb[0].mxu0
        %4858 = vmatprep.mubr.f32.mxu0 0.0
        %4859 = vmatmul.mubr.f32.gmra.mrb[0].mxu0 %v4633
        %v4860 = vpop.f32.mrb[0].mxu0
        %v4861 = vadd.f32 0.0, %v4860
        %v4862 = vpop.f32.mrb[0].mxu0
        %4863 = vmatprep.mubr.f32.mxu0 0.0
        %4864 = vmatmul.mubr.f32.gmra.mrb[0].mxu0 %v4634
        %v4865 = vpop.f32.mrb[0].mxu0
        %v4866 = vadd.f32 0.0, %v4865
        %v4867 = vpop.f32.mrb[0].mxu0
        %4868 = vmatprep.mubr.f32.mxu0 0.0
        %4869 = vmatmul.mubr.f32.gmra.mrb[0].mxu0 %v4635
        %v4870 = vpop.f32.mrb[0].mxu0
        %v4871 = vadd.f32 0.0, %v4870
        %v4872 = vpop.f32.mrb[0].mxu0
        %4873 = vmatprep.mubr.f32.mxu0 0.0
        %4874 = vmatmul.mubr.f32.gmra.mrb[0].mxu0 %v4636
        %v4875 = vpop.f32.mrb[0].mxu0
        %v4876 = vadd.f32 0.0, %v4875
        %v4877 = vpop.f32.mrb[0].mxu0
        %4878 = vmatprep.mubr.f32.mxu0 0.0
        %4879 = vmatmul.mubr.f32.gmra.mrb[0].mxu0 %v4637
        %v4880 = vpop.f32.mrb[0].mxu0
        %v4881 = vadd.f32 0.0, %v4880
        %v4882 = vpop.f32.mrb[0].mxu0
        %4883 = vmatprep.mubr.f32.mxu0 0.0
        %4884 = vmatmul.mubr.f32.gmra.mrb[0].mxu0 %v4638
        %v4885 = vpop.f32.mrb[0].mxu0
        %v4886 = vadd.f32 0.0, %v4885
        %v4887 = vpop.f32.mrb[0].mxu0
        %4888 = vmatprep.mubr.f32.mxu0 0.0
        %4889 = vmatmul.mubr.f32.gmra.mrb[0].mxu0 %v4639
        %v4890 = vpop.f32.mrb[0].mxu0
        %v4891 = vadd.f32 0.0, %v4890
        %v4892 = vpop.f32.mrb[0].mxu0
        %4893 = vmatprep.mubr.f32.mxu0 0.0
        %4894 = vmatmul.mubr.f32.gmra.mrb[0].mxu0 %v4640
        %v4895 = vpop.f32.mrb[0].mxu0
        %v4896 = vadd.f32 0.0, %v4895
        %v4897 = vpop.f32.mrb[0].mxu0
        %4898 = vmatprep.mubr.f32.mxu0 0.0
        %4899 = vmatmul.mubr.f32.gmra.mrb[0].mxu0 %v4641
        %v4900 = vpop.f32.mrb[0].mxu0
        %v4901 = vadd.f32 0.0, %v4900
        %v4902 = vpop.f32.mrb[0].mxu0
        %4903 = vdwg.mxu0
        %v4904 = vadd.f32 %v4428, %v4726
        %v4905 = vadd.f32 %v4433, %v4731
        %v4906 = vadd.f32 %v4438, %v4736
        %v4907 = vadd.f32 %v4443, %v4741
        %v4908 = vadd.f32 %v4448, %v4746
        %v4909 = vadd.f32 %v4453, %v4751
        %v4910 = vadd.f32 %v4458, %v4756
        %v4911 = vadd.f32 %v4463, %v4761
        %v4912 = vadd.f32 %v4468, %v4766
        %v4913 = vadd.f32 %v4473, %v4771
        %v4914 = vadd.f32 %v4478, %v4776
        %v4915 = vadd.f32 %v4483, %v4781
        %v4916 = vadd.f32 %v4488, %v4786
        %v4917 = vadd.f32 %v4493, %v4791
        %v4918 = vadd.f32 %v4498, %v4796
        %v4919 = vadd.f32 %v4503, %v4801
        %v4920 = vadd.f32 %v4508, %v4806
        %v4921 = vadd.f32 %v4513, %v4811
        %v4922 = vadd.f32 %v4518, %v4816
        %v4923 = vadd.f32 %v4523, %v4821
        %v4924 = vadd.f32 %v4528, %v4826
        %v4925 = vadd.f32 %v4533, %v4831
        %v4926 = vadd.f32 %v4538, %v4836
        %v4927 = vadd.f32 %v4543, %v4841
        %v4928 = vadd.f32 %v4548, %v4846
        %v4929 = vadd.f32 %v4553, %v4851
        %v4930 = vadd.f32 %v4558, %v4856
        %v4931 = vadd.f32 %v4563, %v4861
        %v4932 = vadd.f32 %v4568, %v4866
        %v4933 = vadd.f32 %v4573, %v4871
        %v4934 = vadd.f32 %v4578, %v4876
        %v4935 = vadd.f32 %v4583, %v4881
        %v4936 = vadd.f32 %v4588, %v4886
        %v4937 = vadd.f32 %v4593, %v4891
        %v4938 = vadd.f32 %v4598, %v4896
        %v4939 = vadd.f32 %v4603, %v4901
        %v4940 = vld [vmem:[#allocation2 + $0x17] sm:$0xff]
        %v4941 = vld [vmem:[#allocation2 + $0x1f] sm:$0xff]
        %v4942 = vld [vmem:[#allocation2 + $0x27] sm:$0xff]
        %v4943 = vld [vmem:[#allocation2 + $0x2f] sm:$0xff]
        %v4944 = vld [vmem:[#allocation2 + $0x37] sm:$0xff]
        %v4945 = vld [vmem:[#allocation2 + $0x3f] sm:$0xff]
        %v4946 = vld [vmem:[#allocation2 + $0x47] sm:$0xff]
        %v4947 = vld [vmem:[#allocation2 + $0x4f] sm:$0xff]
        %v4948 = vld [vmem:[#allocation2 + $0x57] sm:$0xff]
        %v4949 = vld [vmem:[#allocation2 + $0x5f] sm:$0xff]
        %v4950 = vld [vmem:[#allocation2 + $0x67] sm:$0xff]
        %v4951 = vld [vmem:[#allocation2 + $0x6f] sm:$0xff]
        %v4952 = vld [vmem:[#allocation2 + $0x77] sm:$0xff]
        %v4953 = vld [vmem:[#allocation2 + $0x7f] sm:$0xff]
        %v4954 = vld [vmem:[#allocation2 + $0x87] sm:$0xff]
        %v4955 = vld [vmem:[#allocation2 + $0x8f] sm:$0xff]
        %v4956 = vld [vmem:[#allocation2 + $0x97] sm:$0xff]
        %v4957 = vld [vmem:[#allocation2 + $0x9f] sm:$0xff]
        %v4958 = vld [vmem:[#allocation2 + $0xa7] sm:$0xff]
        %v4959 = vld [vmem:[#allocation2 + $0xaf] sm:$0xff]
        %v4960 = vld [vmem:[#allocation2 + $0xb7] sm:$0xff]
        %v4961 = vld [vmem:[#allocation2 + $0xbf] sm:$0xff]
        %v4962 = vld [vmem:[#allocation2 + $0xc7] sm:$0xff]
        %v4963 = vld [vmem:[#allocation2 + $0xcf] sm:$0xff]
        %v4964 = vld [vmem:[#allocation2 + $0xd7] sm:$0xff]
        %v4965 = vld [vmem:[#allocation2 + $0xdf] sm:$0xff]
        %v4966 = vld [vmem:[#allocation2 + $0xe7] sm:$0xff]
        %v4967 = vld [vmem:[#allocation2 + $0xef] sm:$0xff]
        %v4968 = vld [vmem:[#allocation2 + $0xf7] sm:$0xff]
        %v4969 = vld [vmem:[#allocation2 + $0xff] sm:$0xff]
        %v4970 = vld [vmem:[#allocation2 + $0x107] sm:$0xff]
        %v4971 = vld [vmem:[#allocation2 + $0x10f] sm:$0xff]
        %v4972 = vld [vmem:[#allocation2 + $0x117] sm:$0xff]
        %v4973 = vld [vmem:[#allocation2 + $0x11f] sm:$0xff]
        %v4974 = vld [vmem:[#allocation2 + $0x127] sm:$0xff]
        %v4975 = vld [vmem:[#allocation2 + $0x12f] sm:$0xff]
        %s4976 = scalar_lea.vmem [#allocation8], 384
        %v4977 = vld [vmem:[%s4976] sm:$0xff]
        %v4978 = vld [vmem:[%s4976 + $0x8] sm:$0xff]
        %v4979 = vld [vmem:[%s4976 + $0x10] sm:$0xff]
        %v4980 = vld [vmem:[%s4976 + $0x18] sm:$0xff]
        %v4981 = vld [vmem:[%s4976 + $0x20] sm:$0xff]
        %v4982 = vld [vmem:[%s4976 + $0x28] sm:$0xff]
        %v4983 = vld [vmem:[%s4976 + $0x30] sm:$0xff]
        %v4984 = vld [vmem:[%s4976 + $0x38] sm:$0xff]
        %v4985 = vld [vmem:[%s4976 + $0x40] sm:$0xff]
        %v4986 = vld [vmem:[%s4976 + $0x48] sm:$0xff]
        %v4987 = vld [vmem:[%s4976 + $0x50] sm:$0xff]
        %v4988 = vld [vmem:[%s4976 + $0x58] sm:$0xff]
        %v4989 = vld [vmem:[%s4976 + $0x60] sm:$0xff]
        %v4990 = vld [vmem:[%s4976 + $0x68] sm:$0xff]
        %v4991 = vld [vmem:[%s4976 + $0x70] sm:$0xff]
        %v4992 = vld [vmem:[%s4976 + $0x78] sm:$0xff]
        %4993 = vmatprep.subr.mxu0 0.0
        %4994 = vmatpush1.msra.mxu0 %v4977
        %4995 = vmatprep.subr.mxu0 0.0
        %4996 = vmatpush1.msra.mxu0 %v4978
        %4997 = vmatprep.subr.mxu0 0.0
        %4998 = vmatpush1.msra.mxu0 %v4979
        %4999 = vmatprep.subr.mxu0 0.0
        %5000 = vmatpush1.msra.mxu0 %v4980
        %5001 = vmatprep.subr.mxu0 0.0
        %5002 = vmatpush1.msra.mxu0 %v4981
        %5003 = vmatprep.subr.mxu0 0.0
        %5004 = vmatpush1.msra.mxu0 %v4982
        %5005 = vmatprep.subr.mxu0 0.0
        %5006 = vmatpush1.msra.mxu0 %v4983
        %5007 = vmatprep.subr.mxu0 0.0
        %5008 = vmatpush1.msra.mxu0 %v4984
        %5009 = vmatprep.subr.mxu0 0.0
        %5010 = vmatpush1.msra.mxu0 %v4985
        %5011 = vmatprep.subr.mxu0 0.0
        %5012 = vmatpush1.msra.mxu0 %v4986
        %5013 = vmatprep.subr.mxu0 0.0
        %5014 = vmatpush1.msra.mxu0 %v4987
        %5015 = vmatprep.subr.mxu0 0.0
        %5016 = vmatpush1.msra.mxu0 %v4988
        %5017 = vmatprep.subr.mxu0 0.0
        %5018 = vmatpush1.msra.mxu0 %v4989
        %5019 = vmatprep.subr.mxu0 0.0
        %5020 = vmatpush1.msra.mxu0 %v4990
        %5021 = vmatprep.subr.mxu0 0.0
        %5022 = vmatpush1.msra.mxu0 %v4991
        %5023 = vmatprep.subr.mxu0 0.0
        %5024 = vmatpush1.msra.mxu0 %v4992
        %5025 = vmatprep.subr.mxu0 0.0
        %5026 = vmatpush1.msra.mxu0 0.0
        %5027 = vmatprep.subr.mxu0 0.0
        %5028 = vmatpush1.msra.mxu0 0.0
        %5029 = vmatprep.subr.mxu0 0.0
        %5030 = vmatpush1.msra.mxu0 0.0
        %5031 = vmatprep.subr.mxu0 0.0
        %5032 = vmatpush1.msra.mxu0 0.0
        %5033 = vmatprep.subr.mxu0 0.0
        %5034 = vmatpush1.msra.mxu0 0.0
        %5035 = vmatprep.subr.mxu0 0.0
        %5036 = vmatpush1.msra.mxu0 0.0
        %5037 = vmatprep.subr.mxu0 0.0
        %5038 = vmatpush1.msra.mxu0 0.0
        %5039 = vmatprep.subr.mxu0 0.0
        %5040 = vmatpush1.msra.mxu0 0.0
        %5041 = vmatprep.subr.mxu0 0.0
        %5042 = vmatpush1.msra.mxu0 0.0
        %5043 = vmatprep.subr.mxu0 0.0
        %5044 = vmatpush1.msra.mxu0 0.0
        %5045 = vmatprep.subr.mxu0 0.0
        %5046 = vmatpush1.msra.mxu0 0.0
        %5047 = vmatprep.subr.mxu0 0.0
        %5048 = vmatpush1.msra.mxu0 0.0
        %5049 = vmatprep.subr.mxu0 0.0
        %5050 = vmatpush1.msra.mxu0 0.0
        %5051 = vmatprep.subr.mxu0 0.0
        %5052 = vmatpush1.msra.mxu0 0.0
        %5053 = vmatprep.subr.mxu0 0.0
        %5054 = vmatpush1.msra.mxu0 0.0
        %5055 = vmatprep.subr.mxu0 0.0
        %5056 = vmatpush1.msra.mxu0 0.0
        %5057 = vmatprep.mubr.f32.mxu0 0.0
        %5058 = vmatmul.mubr.f32.gmra.mrb[0].mxu0 %v4940
        %v5059 = vpop.f32.mrb[0].mxu0
        %v5060 = vadd.f32 0.0, %v5059
        %v5061 = vpop.f32.mrb[0].mxu0
        %5062 = vmatprep.mubr.f32.mxu0 0.0
        %5063 = vmatmul.mubr.f32.gmra.mrb[0].mxu0 %v4941
        %v5064 = vpop.f32.mrb[0].mxu0
        %v5065 = vadd.f32 0.0, %v5064
        %v5066 = vpop.f32.mrb[0].mxu0
        %5067 = vmatprep.mubr.f32.mxu0 0.0
        %5068 = vmatmul.mubr.f32.gmra.mrb[0].mxu0 %v4942
        %v5069 = vpop.f32.mrb[0].mxu0
        %v5070 = vadd.f32 0.0, %v5069
        %v5071 = vpop.f32.mrb[0].mxu0
        %5072 = vmatprep.mubr.f32.mxu0 0.0
        %5073 = vmatmul.mubr.f32.gmra.mrb[0].mxu0 %v4943
        %v5074 = vpop.f32.mrb[0].mxu0
        %v5075 = vadd.f32 0.0, %v5074
        %v5076 = vpop.f32.mrb[0].mxu0
        %5077 = vmatprep.mubr.f32.mxu0 0.0
        %5078 = vmatmul.mubr.f32.gmra.mrb[0].mxu0 %v4944
        %v5079 = vpop.f32.mrb[0].mxu0
        %v5080 = vadd.f32 0.0, %v5079
        %v5081 = vpop.f32.mrb[0].mxu0
        %5082 = vmatprep.mubr.f32.mxu0 0.0
        %5083 = vmatmul.mubr.f32.gmra.mrb[0].mxu0 %v4945
        %v5084 = vpop.f32.mrb[0].mxu0
        %v5085 = vadd.f32 0.0, %v5084
        %v5086 = vpop.f32.mrb[0].mxu0
        %5087 = vmatprep.mubr.f32.mxu0 0.0
        %5088 = vmatmul.mubr.f32.gmra.mrb[0].mxu0 %v4946
        %v5089 = vpop.f32.mrb[0].mxu0
        %v5090 = vadd.f32 0.0, %v5089
        %v5091 = vpop.f32.mrb[0].mxu0
        %5092 = vmatprep.mubr.f32.mxu0 0.0
        %5093 = vmatmul.mubr.f32.gmra.mrb[0].mxu0 %v4947
        %v5094 = vpop.f32.mrb[0].mxu0
        %v5095 = vadd.f32 0.0, %v5094
        %v5096 = vpop.f32.mrb[0].mxu0
        %5097 = vmatprep.mubr.f32.mxu0 0.0
        %5098 = vmatmul.mubr.f32.gmra.mrb[0].mxu0 %v4948
        %v5099 = vpop.f32.mrb[0].mxu0
        %v5100 = vadd.f32 0.0, %v5099
        %v5101 = vpop.f32.mrb[0].mxu0
        %5102 = vmatprep.mubr.f32.mxu0 0.0
        %5103 = vmatmul.mubr.f32.gmra.mrb[0].mxu0 %v4949
        %v5104 = vpop.f32.mrb[0].mxu0
        %v5105 = vadd.f32 0.0, %v5104
        %v5106 = vpop.f32.mrb[0].mxu0
        %5107 = vmatprep.mubr.f32.mxu0 0.0
        %5108 = vmatmul.mubr.f32.gmra.mrb[0].mxu0 %v4950
        %v5109 = vpop.f32.mrb[0].mxu0
        %v5110 = vadd.f32 0.0, %v5109
        %v5111 = vpop.f32.mrb[0].mxu0
        %5112 = vmatprep.mubr.f32.mxu0 0.0
        %5113 = vmatmul.mubr.f32.gmra.mrb[0].mxu0 %v4951
        %v5114 = vpop.f32.mrb[0].mxu0
        %v5115 = vadd.f32 0.0, %v5114
        %v5116 = vpop.f32.mrb[0].mxu0
        %5117 = vmatprep.mubr.f32.mxu0 0.0
        %5118 = vmatmul.mubr.f32.gmra.mrb[0].mxu0 %v4952
        %v5119 = vpop.f32.mrb[0].mxu0
        %v5120 = vadd.f32 0.0, %v5119
        %v5121 = vpop.f32.mrb[0].mxu0
        %5122 = vmatprep.mubr.f32.mxu0 0.0
        %5123 = vmatmul.mubr.f32.gmra.mrb[0].mxu0 %v4953
        %v5124 = vpop.f32.mrb[0].mxu0
        %v5125 = vadd.f32 0.0, %v5124
        %v5126 = vpop.f32.mrb[0].mxu0
        %5127 = vmatprep.mubr.f32.mxu0 0.0
        %5128 = vmatmul.mubr.f32.gmra.mrb[0].mxu0 %v4954
        %v5129 = vpop.f32.mrb[0].mxu0
        %v5130 = vadd.f32 0.0, %v5129
        %v5131 = vpop.f32.mrb[0].mxu0
        %5132 = vmatprep.mubr.f32.mxu0 0.0
        %5133 = vmatmul.mubr.f32.gmra.mrb[0].mxu0 %v4955
        %v5134 = vpop.f32.mrb[0].mxu0
        %v5135 = vadd.f32 0.0, %v5134
        %v5136 = vpop.f32.mrb[0].mxu0
        %5137 = vmatprep.mubr.f32.mxu0 0.0
        %5138 = vmatmul.mubr.f32.gmra.mrb[0].mxu0 %v4956
        %v5139 = vpop.f32.mrb[0].mxu0
        %v5140 = vadd.f32 0.0, %v5139
        %v5141 = vpop.f32.mrb[0].mxu0
        %5142 = vmatprep.mubr.f32.mxu0 0.0
        %5143 = vmatmul.mubr.f32.gmra.mrb[0].mxu0 %v4957
        %v5144 = vpop.f32.mrb[0].mxu0
        %v5145 = vadd.f32 0.0, %v5144
        %v5146 = vpop.f32.mrb[0].mxu0
        %5147 = vmatprep.mubr.f32.mxu0 0.0
        %5148 = vmatmul.mubr.f32.gmra.mrb[0].mxu0 %v4958
        %v5149 = vpop.f32.mrb[0].mxu0
        %v5150 = vadd.f32 0.0, %v5149
        %v5151 = vpop.f32.mrb[0].mxu0
        %5152 = vmatprep.mubr.f32.mxu0 0.0
        %5153 = vmatmul.mubr.f32.gmra.mrb[0].mxu0 %v4959
        %v5154 = vpop.f32.mrb[0].mxu0
        %v5155 = vadd.f32 0.0, %v5154
        %v5156 = vpop.f32.mrb[0].mxu0
        %5157 = vmatprep.mubr.f32.mxu0 0.0
        %5158 = vmatmul.mubr.f32.gmra.mrb[0].mxu0 %v4960
        %v5159 = vpop.f32.mrb[0].mxu0
        %v5160 = vadd.f32 0.0, %v5159
        %v5161 = vpop.f32.mrb[0].mxu0
        %5162 = vmatprep.mubr.f32.mxu0 0.0
        %5163 = vmatmul.mubr.f32.gmra.mrb[0].mxu0 %v4961
        %v5164 = vpop.f32.mrb[0].mxu0
        %v5165 = vadd.f32 0.0, %v5164
        %v5166 = vpop.f32.mrb[0].mxu0
        %5167 = vmatprep.mubr.f32.mxu0 0.0
        %5168 = vmatmul.mubr.f32.gmra.mrb[0].mxu0 %v4962
        %v5169 = vpop.f32.mrb[0].mxu0
        %v5170 = vadd.f32 0.0, %v5169
        %v5171 = vpop.f32.mrb[0].mxu0
        %5172 = vmatprep.mubr.f32.mxu0 0.0
        %5173 = vmatmul.mubr.f32.gmra.mrb[0].mxu0 %v4963
        %v5174 = vpop.f32.mrb[0].mxu0
        %v5175 = vadd.f32 0.0, %v5174
        %v5176 = vpop.f32.mrb[0].mxu0
        %5177 = vmatprep.mubr.f32.mxu0 0.0
        %5178 = vmatmul.mubr.f32.gmra.mrb[0].mxu0 %v4964
        %v5179 = vpop.f32.mrb[0].mxu0
        %v5180 = vadd.f32 0.0, %v5179
        %v5181 = vpop.f32.mrb[0].mxu0
        %5182 = vmatprep.mubr.f32.mxu0 0.0
        %5183 = vmatmul.mubr.f32.gmra.mrb[0].mxu0 %v4965
        %v5184 = vpop.f32.mrb[0].mxu0
        %v5185 = vadd.f32 0.0, %v5184
        %v5186 = vpop.f32.mrb[0].mxu0
        %5187 = vmatprep.mubr.f32.mxu0 0.0
        %5188 = vmatmul.mubr.f32.gmra.mrb[0].mxu0 %v4966
        %v5189 = vpop.f32.mrb[0].mxu0
        %v5190 = vadd.f32 0.0, %v5189
        %v5191 = vpop.f32.mrb[0].mxu0
        %5192 = vmatprep.mubr.f32.mxu0 0.0
        %5193 = vmatmul.mubr.f32.gmra.mrb[0].mxu0 %v4967
        %v5194 = vpop.f32.mrb[0].mxu0
        %v5195 = vadd.f32 0.0, %v5194
        %v5196 = vpop.f32.mrb[0].mxu0
        %5197 = vmatprep.mubr.f32.mxu0 0.0
        %5198 = vmatmul.mubr.f32.gmra.mrb[0].mxu0 %v4968
        %v5199 = vpop.f32.mrb[0].mxu0
        %v5200 = vadd.f32 0.0, %v5199
        %v5201 = vpop.f32.mrb[0].mxu0
        %5202 = vmatprep.mubr.f32.mxu0 0.0
        %5203 = vmatmul.mubr.f32.gmra.mrb[0].mxu0 %v4969
        %v5204 = vpop.f32.mrb[0].mxu0
        %v5205 = vadd.f32 0.0, %v5204
        %v5206 = vpop.f32.mrb[0].mxu0
        %5207 = vmatprep.mubr.f32.mxu0 0.0
        %5208 = vmatmul.mubr.f32.gmra.mrb[0].mxu0 %v4970
        %v5209 = vpop.f32.mrb[0].mxu0
        %v5210 = vadd.f32 0.0, %v5209
        %v5211 = vpop.f32.mrb[0].mxu0
        %5212 = vmatprep.mubr.f32.mxu0 0.0
        %5213 = vmatmul.mubr.f32.gmra.mrb[0].mxu0 %v4971
        %v5214 = vpop.f32.mrb[0].mxu0
        %v5215 = vadd.f32 0.0, %v5214
        %v5216 = vpop.f32.mrb[0].mxu0
        %5217 = vmatprep.mubr.f32.mxu0 0.0
        %5218 = vmatmul.mubr.f32.gmra.mrb[0].mxu0 %v4972
        %v5219 = vpop.f32.mrb[0].mxu0
        %v5220 = vadd.f32 0.0, %v5219
        %v5221 = vpop.f32.mrb[0].mxu0
        %5222 = vmatprep.mubr.f32.mxu0 0.0
        %5223 = vmatmul.mubr.f32.gmra.mrb[0].mxu0 %v4973
        %v5224 = vpop.f32.mrb[0].mxu0
        %v5225 = vadd.f32 0.0, %v5224
        %v5226 = vpop.f32.mrb[0].mxu0
        %5227 = vmatprep.mubr.f32.mxu0 0.0
        %5228 = vmatmul.mubr.f32.gmra.mrb[0].mxu0 %v4974
        %v5229 = vpop.f32.mrb[0].mxu0
        %v5230 = vadd.f32 0.0, %v5229
        %v5231 = vpop.f32.mrb[0].mxu0
        %5232 = vmatprep.mubr.f32.mxu0 0.0
        %5233 = vmatmul.mubr.f32.gmra.mrb[0].mxu0 %v4975
        %v5234 = vpop.f32.mrb[0].mxu0
        %v5235 = vadd.f32 0.0, %v5234
        %v5236 = vpop.f32.mrb[0].mxu0
        %5237 = vdwg.mxu0
        %v5238 = vadd.f32 %v4904, %v5060
        %v5239 = vadd.f32 %v4905, %v5065
        %v5240 = vadd.f32 %v4906, %v5070
        %v5241 = vadd.f32 %v4907, %v5075
        %v5242 = vadd.f32 %v4908, %v5080
        %v5243 = vadd.f32 %v4909, %v5085
        %v5244 = vadd.f32 %v4910, %v5090
        %v5245 = vadd.f32 %v4911, %v5095
        %v5246 = vadd.f32 %v4912, %v5100
        %v5247 = vadd.f32 %v4913, %v5105
        %v5248 = vadd.f32 %v4914, %v5110
        %v5249 = vadd.f32 %v4915, %v5115
        %v5250 = vadd.f32 %v4916, %v5120
        %v5251 = vadd.f32 %v4917, %v5125
        %v5252 = vadd.f32 %v4918, %v5130
        %v5253 = vadd.f32 %v4919, %v5135
        %v5254 = vadd.f32 %v4920, %v5140
        %v5255 = vadd.f32 %v4921, %v5145
        %v5256 = vadd.f32 %v4922, %v5150
        %v5257 = vadd.f32 %v4923, %v5155
        %v5258 = vadd.f32 %v4924, %v5160
        %v5259 = vadd.f32 %v4925, %v5165
        %v5260 = vadd.f32 %v4926, %v5170
        %v5261 = vadd.f32 %v4927, %v5175
        %v5262 = vadd.f32 %v4928, %v5180
        %v5263 = vadd.f32 %v4929, %v5185
        %v5264 = vadd.f32 %v4930, %v5190
        %v5265 = vadd.f32 %v4931, %v5195
        %v5266 = vadd.f32 %v4932, %v5200
        %v5267 = vadd.f32 %v4933, %v5205
        %v5268 = vadd.f32 %v4934, %v5210
        %v5269 = vadd.f32 %v4935, %v5215
        %v5270 = vadd.f32 %v4936, %v5220
        %v5271 = vadd.f32 %v4937, %v5225
        %v5272 = vadd.f32 %v4938, %v5230
        %v5273 = vadd.f32 %v4939, %v5235
        %v5274 = vld [vmem:[#allocation2 + $0x18] sm:$0xff]
        %v5275 = vld [vmem:[#allocation2 + $0x20] sm:$0xff]
        %v5276 = vld [vmem:[#allocation2 + $0x28] sm:$0xff]
        %v5277 = vld [vmem:[#allocation2 + $0x30] sm:$0xff]
        %v5278 = vld [vmem:[#allocation2 + $0x38] sm:$0xff]
        %v5279 = vld [vmem:[#allocation2 + $0x40] sm:$0xff]
        %v5280 = vld [vmem:[#allocation2 + $0x48] sm:$0xff]
        %v5281 = vld [vmem:[#allocation2 + $0x50] sm:$0xff]
        %v5282 = vld [vmem:[#allocation2 + $0x58] sm:$0xff]
        %v5283 = vld [vmem:[#allocation2 + $0x60] sm:$0xff]
        %v5284 = vld [vmem:[#allocation2 + $0x68] sm:$0xff]
        %v5285 = vld [vmem:[#allocation2 + $0x70] sm:$0xff]
        %v5286 = vld [vmem:[#allocation2 + $0x78] sm:$0xff]
        %v5287 = vld [vmem:[#allocation2 + $0x80] sm:$0xff]
        %v5288 = vld [vmem:[#allocation2 + $0x88] sm:$0xff]
        %v5289 = vld [vmem:[#allocation2 + $0x90] sm:$0xff]
        %v5290 = vld [vmem:[#allocation2 + $0x98] sm:$0xff]
        %v5291 = vld [vmem:[#allocation2 + $0xa0] sm:$0xff]
        %v5292 = vld [vmem:[#allocation2 + $0xa8] sm:$0xff]
        %v5293 = vld [vmem:[#allocation2 + $0xb0] sm:$0xff]
        %v5294 = vld [vmem:[#allocation2 + $0xb8] sm:$0xff]
        %v5295 = vld [vmem:[#allocation2 + $0xc0] sm:$0xff]
        %v5296 = vld [vmem:[#allocation2 + $0xc8] sm:$0xff]
        %v5297 = vld [vmem:[#allocation2 + $0xd0] sm:$0xff]
        %v5298 = vld [vmem:[#allocation2 + $0xd8] sm:$0xff]
        %v5299 = vld [vmem:[#allocation2 + $0xe0] sm:$0xff]
        %v5300 = vld [vmem:[#allocation2 + $0xe8] sm:$0xff]
        %v5301 = vld [vmem:[#allocation2 + $0xf0] sm:$0xff]
        %v5302 = vld [vmem:[#allocation2 + $0xf8] sm:$0xff]
        %v5303 = vld [vmem:[#allocation2 + $0x100] sm:$0xff]
        %v5304 = vld [vmem:[#allocation2 + $0x108] sm:$0xff]
        %v5305 = vld [vmem:[#allocation2 + $0x110] sm:$0xff]
        %v5306 = vld [vmem:[#allocation2 + $0x118] sm:$0xff]
        %v5307 = vld [vmem:[#allocation2 + $0x120] sm:$0xff]
        %v5308 = vld [vmem:[#allocation2 + $0x128] sm:$0xff]
        %v5309 = vld [vmem:[#allocation2 + $0x130] sm:$0xff]
        %s5310 = scalar_lea.vmem [#allocation8], 512
        %v5311 = vld [vmem:[%s5310] sm:$0xff]
        %v5312 = vld [vmem:[%s5310 + $0x8] sm:$0xff]
        %v5313 = vld [vmem:[%s5310 + $0x10] sm:$0xff]
        %v5314 = vld [vmem:[%s5310 + $0x18] sm:$0xff]
        %v5315 = vld [vmem:[%s5310 + $0x20] sm:$0xff]
        %v5316 = vld [vmem:[%s5310 + $0x28] sm:$0xff]
        %v5317 = vld [vmem:[%s5310 + $0x30] sm:$0xff]
        %v5318 = vld [vmem:[%s5310 + $0x38] sm:$0xff]
        %v5319 = vld [vmem:[%s5310 + $0x40] sm:$0xff]
        %v5320 = vld [vmem:[%s5310 + $0x48] sm:$0xff]
        %v5321 = vld [vmem:[%s5310 + $0x50] sm:$0xff]
        %v5322 = vld [vmem:[%s5310 + $0x58] sm:$0xff]
        %v5323 = vld [vmem:[%s5310 + $0x60] sm:$0xff]
        %v5324 = vld [vmem:[%s5310 + $0x68] sm:$0xff]
        %v5325 = vld [vmem:[%s5310 + $0x70] sm:$0xff]
        %v5326 = vld [vmem:[%s5310 + $0x78] sm:$0xff]
        %5327 = vmatprep.subr.mxu0 0.0
        %5328 = vmatpush1.msra.mxu0 %v5311
        %5329 = vmatprep.subr.mxu0 0.0
        %5330 = vmatpush1.msra.mxu0 %v5312
        %5331 = vmatprep.subr.mxu0 0.0
        %5332 = vmatpush1.msra.mxu0 %v5313
        %5333 = vmatprep.subr.mxu0 0.0
        %5334 = vmatpush1.msra.mxu0 %v5314
        %5335 = vmatprep.subr.mxu0 0.0
        %5336 = vmatpush1.msra.mxu0 %v5315
        %5337 = vmatprep.subr.mxu0 0.0
        %5338 = vmatpush1.msra.mxu0 %v5316
        %5339 = vmatprep.subr.mxu0 0.0
        %5340 = vmatpush1.msra.mxu0 %v5317
        %5341 = vmatprep.subr.mxu0 0.0
        %5342 = vmatpush1.msra.mxu0 %v5318
        %5343 = vmatprep.subr.mxu0 0.0
        %5344 = vmatpush1.msra.mxu0 %v5319
        %5345 = vmatprep.subr.mxu0 0.0
        %5346 = vmatpush1.msra.mxu0 %v5320
        %5347 = vmatprep.subr.mxu0 0.0
        %5348 = vmatpush1.msra.mxu0 %v5321
        %5349 = vmatprep.subr.mxu0 0.0
        %5350 = vmatpush1.msra.mxu0 %v5322
        %5351 = vmatprep.subr.mxu0 0.0
        %5352 = vmatpush1.msra.mxu0 %v5323
        %5353 = vmatprep.subr.mxu0 0.0
        %5354 = vmatpush1.msra.mxu0 %v5324
        %5355 = vmatprep.subr.mxu0 0.0
        %5356 = vmatpush1.msra.mxu0 %v5325
        %5357 = vmatprep.subr.mxu0 0.0
        %5358 = vmatpush1.msra.mxu0 %v5326
        %5359 = vmatprep.subr.mxu0 0.0
        %5360 = vmatpush1.msra.mxu0 0.0
        %5361 = vmatprep.subr.mxu0 0.0
        %5362 = vmatpush1.msra.mxu0 0.0
        %5363 = vmatprep.subr.mxu0 0.0
        %5364 = vmatpush1.msra.mxu0 0.0
        %5365 = vmatprep.subr.mxu0 0.0
        %5366 = vmatpush1.msra.mxu0 0.0
        %5367 = vmatprep.subr.mxu0 0.0
        %5368 = vmatpush1.msra.mxu0 0.0
        %5369 = vmatprep.subr.mxu0 0.0
        %5370 = vmatpush1.msra.mxu0 0.0
        %5371 = vmatprep.subr.mxu0 0.0
        %5372 = vmatpush1.msra.mxu0 0.0
        %5373 = vmatprep.subr.mxu0 0.0
        %5374 = vmatpush1.msra.mxu0 0.0
        %5375 = vmatprep.subr.mxu0 0.0
        %5376 = vmatpush1.msra.mxu0 0.0
        %5377 = vmatprep.subr.mxu0 0.0
        %5378 = vmatpush1.msra.mxu0 0.0
        %5379 = vmatprep.subr.mxu0 0.0
        %5380 = vmatpush1.msra.mxu0 0.0
        %5381 = vmatprep.subr.mxu0 0.0
        %5382 = vmatpush1.msra.mxu0 0.0
        %5383 = vmatprep.subr.mxu0 0.0
        %5384 = vmatpush1.msra.mxu0 0.0
        %5385 = vmatprep.subr.mxu0 0.0
        %5386 = vmatpush1.msra.mxu0 0.0
        %5387 = vmatprep.subr.mxu0 0.0
        %5388 = vmatpush1.msra.mxu0 0.0
        %5389 = vmatprep.subr.mxu0 0.0
        %5390 = vmatpush1.msra.mxu0 0.0
        %5391 = vmatprep.mubr.f32.mxu0 0.0
        %5392 = vmatmul.mubr.f32.gmra.mrb[0].mxu0 %v5274
        %v5393 = vpop.f32.mrb[0].mxu0
        %v5394 = vadd.f32 0.0, %v5393
        %v5395 = vpop.f32.mrb[0].mxu0
        %5396 = vmatprep.mubr.f32.mxu0 0.0
        %5397 = vmatmul.mubr.f32.gmra.mrb[0].mxu0 %v5275
        %v5398 = vpop.f32.mrb[0].mxu0
        %v5399 = vadd.f32 0.0, %v5398
        %v5400 = vpop.f32.mrb[0].mxu0
        %5401 = vmatprep.mubr.f32.mxu0 0.0
        %5402 = vmatmul.mubr.f32.gmra.mrb[0].mxu0 %v5276
        %v5403 = vpop.f32.mrb[0].mxu0
        %v5404 = vadd.f32 0.0, %v5403
        %v5405 = vpop.f32.mrb[0].mxu0
        %5406 = vmatprep.mubr.f32.mxu0 0.0
        %5407 = vmatmul.mubr.f32.gmra.mrb[0].mxu0 %v5277
        %v5408 = vpop.f32.mrb[0].mxu0
        %v5409 = vadd.f32 0.0, %v5408
        %v5410 = vpop.f32.mrb[0].mxu0
        %5411 = vmatprep.mubr.f32.mxu0 0.0
        %5412 = vmatmul.mubr.f32.gmra.mrb[0].mxu0 %v5278
        %v5413 = vpop.f32.mrb[0].mxu0
        %v5414 = vadd.f32 0.0, %v5413
        %v5415 = vpop.f32.mrb[0].mxu0
        %5416 = vmatprep.mubr.f32.mxu0 0.0
        %5417 = vmatmul.mubr.f32.gmra.mrb[0].mxu0 %v5279
        %v5418 = vpop.f32.mrb[0].mxu0
        %v5419 = vadd.f32 0.0, %v5418
        %v5420 = vpop.f32.mrb[0].mxu0
        %5421 = vmatprep.mubr.f32.mxu0 0.0
        %5422 = vmatmul.mubr.f32.gmra.mrb[0].mxu0 %v5280
        %v5423 = vpop.f32.mrb[0].mxu0
        %v5424 = vadd.f32 0.0, %v5423
        %v5425 = vpop.f32.mrb[0].mxu0
        %5426 = vmatprep.mubr.f32.mxu0 0.0
        %5427 = vmatmul.mubr.f32.gmra.mrb[0].mxu0 %v5281
        %v5428 = vpop.f32.mrb[0].mxu0
        %v5429 = vadd.f32 0.0, %v5428
        %v5430 = vpop.f32.mrb[0].mxu0
        %5431 = vmatprep.mubr.f32.mxu0 0.0
        %5432 = vmatmul.mubr.f32.gmra.mrb[0].mxu0 %v5282
        %v5433 = vpop.f32.mrb[0].mxu0
        %v5434 = vadd.f32 0.0, %v5433
        %v5435 = vpop.f32.mrb[0].mxu0
        %5436 = vmatprep.mubr.f32.mxu0 0.0
        %5437 = vmatmul.mubr.f32.gmra.mrb[0].mxu0 %v5283
        %v5438 = vpop.f32.mrb[0].mxu0
        %v5439 = vadd.f32 0.0, %v5438
        %v5440 = vpop.f32.mrb[0].mxu0
        %5441 = vmatprep.mubr.f32.mxu0 0.0
        %5442 = vmatmul.mubr.f32.gmra.mrb[0].mxu0 %v5284
        %v5443 = vpop.f32.mrb[0].mxu0
        %v5444 = vadd.f32 0.0, %v5443
        %v5445 = vpop.f32.mrb[0].mxu0
        %5446 = vmatprep.mubr.f32.mxu0 0.0
        %5447 = vmatmul.mubr.f32.gmra.mrb[0].mxu0 %v5285
        %v5448 = vpop.f32.mrb[0].mxu0
        %v5449 = vadd.f32 0.0, %v5448
        %v5450 = vpop.f32.mrb[0].mxu0
        %5451 = vmatprep.mubr.f32.mxu0 0.0
        %5452 = vmatmul.mubr.f32.gmra.mrb[0].mxu0 %v5286
        %v5453 = vpop.f32.mrb[0].mxu0
        %v5454 = vadd.f32 0.0, %v5453
        %v5455 = vpop.f32.mrb[0].mxu0
        %5456 = vmatprep.mubr.f32.mxu0 0.0
        %5457 = vmatmul.mubr.f32.gmra.mrb[0].mxu0 %v5287
        %v5458 = vpop.f32.mrb[0].mxu0
        %v5459 = vadd.f32 0.0, %v5458
        %v5460 = vpop.f32.mrb[0].mxu0
        %5461 = vmatprep.mubr.f32.mxu0 0.0
        %5462 = vmatmul.mubr.f32.gmra.mrb[0].mxu0 %v5288
        %v5463 = vpop.f32.mrb[0].mxu0
        %v5464 = vadd.f32 0.0, %v5463
        %v5465 = vpop.f32.mrb[0].mxu0
        %5466 = vmatprep.mubr.f32.mxu0 0.0
        %5467 = vmatmul.mubr.f32.gmra.mrb[0].mxu0 %v5289
        %v5468 = vpop.f32.mrb[0].mxu0
        %v5469 = vadd.f32 0.0, %v5468
        %v5470 = vpop.f32.mrb[0].mxu0
        %5471 = vmatprep.mubr.f32.mxu0 0.0
        %5472 = vmatmul.mubr.f32.gmra.mrb[0].mxu0 %v5290
        %v5473 = vpop.f32.mrb[0].mxu0
        %v5474 = vadd.f32 0.0, %v5473
        %v5475 = vpop.f32.mrb[0].mxu0
        %5476 = vmatprep.mubr.f32.mxu0 0.0
        %5477 = vmatmul.mubr.f32.gmra.mrb[0].mxu0 %v5291
        %v5478 = vpop.f32.mrb[0].mxu0
        %v5479 = vadd.f32 0.0, %v5478
        %v5480 = vpop.f32.mrb[0].mxu0
        %5481 = vmatprep.mubr.f32.mxu0 0.0
        %5482 = vmatmul.mubr.f32.gmra.mrb[0].mxu0 %v5292
        %v5483 = vpop.f32.mrb[0].mxu0
        %v5484 = vadd.f32 0.0, %v5483
        %v5485 = vpop.f32.mrb[0].mxu0
        %5486 = vmatprep.mubr.f32.mxu0 0.0
        %5487 = vmatmul.mubr.f32.gmra.mrb[0].mxu0 %v5293
        %v5488 = vpop.f32.mrb[0].mxu0
        %v5489 = vadd.f32 0.0, %v5488
        %v5490 = vpop.f32.mrb[0].mxu0
        %5491 = vmatprep.mubr.f32.mxu0 0.0
        %5492 = vmatmul.mubr.f32.gmra.mrb[0].mxu0 %v5294
        %v5493 = vpop.f32.mrb[0].mxu0
        %v5494 = vadd.f32 0.0, %v5493
        %v5495 = vpop.f32.mrb[0].mxu0
        %5496 = vmatprep.mubr.f32.mxu0 0.0
        %5497 = vmatmul.mubr.f32.gmra.mrb[0].mxu0 %v5295
        %v5498 = vpop.f32.mrb[0].mxu0
        %v5499 = vadd.f32 0.0, %v5498
        %v5500 = vpop.f32.mrb[0].mxu0
        %5501 = vmatprep.mubr.f32.mxu0 0.0
        %5502 = vmatmul.mubr.f32.gmra.mrb[0].mxu0 %v5296
        %v5503 = vpop.f32.mrb[0].mxu0
        %v5504 = vadd.f32 0.0, %v5503
        %v5505 = vpop.f32.mrb[0].mxu0
        %5506 = vmatprep.mubr.f32.mxu0 0.0
        %5507 = vmatmul.mubr.f32.gmra.mrb[0].mxu0 %v5297
        %v5508 = vpop.f32.mrb[0].mxu0
        %v5509 = vadd.f32 0.0, %v5508
        %v5510 = vpop.f32.mrb[0].mxu0
        %5511 = vmatprep.mubr.f32.mxu0 0.0
        %5512 = vmatmul.mubr.f32.gmra.mrb[0].mxu0 %v5298
        %v5513 = vpop.f32.mrb[0].mxu0
        %v5514 = vadd.f32 0.0, %v5513
        %v5515 = vpop.f32.mrb[0].mxu0
        %5516 = vmatprep.mubr.f32.mxu0 0.0
        %5517 = vmatmul.mubr.f32.gmra.mrb[0].mxu0 %v5299
        %v5518 = vpop.f32.mrb[0].mxu0
        %v5519 = vadd.f32 0.0, %v5518
        %v5520 = vpop.f32.mrb[0].mxu0
        %5521 = vmatprep.mubr.f32.mxu0 0.0
        %5522 = vmatmul.mubr.f32.gmra.mrb[0].mxu0 %v5300
        %v5523 = vpop.f32.mrb[0].mxu0
        %v5524 = vadd.f32 0.0, %v5523
        %v5525 = vpop.f32.mrb[0].mxu0
        %5526 = vmatprep.mubr.f32.mxu0 0.0
        %5527 = vmatmul.mubr.f32.gmra.mrb[0].mxu0 %v5301
        %v5528 = vpop.f32.mrb[0].mxu0
        %v5529 = vadd.f32 0.0, %v5528
        %v5530 = vpop.f32.mrb[0].mxu0
        %5531 = vmatprep.mubr.f32.mxu0 0.0
        %5532 = vmatmul.mubr.f32.gmra.mrb[0].mxu0 %v5302
        %v5533 = vpop.f32.mrb[0].mxu0
        %v5534 = vadd.f32 0.0, %v5533
        %v5535 = vpop.f32.mrb[0].mxu0
        %5536 = vmatprep.mubr.f32.mxu0 0.0
        %5537 = vmatmul.mubr.f32.gmra.mrb[0].mxu0 %v5303
        %v5538 = vpop.f32.mrb[0].mxu0
        %v5539 = vadd.f32 0.0, %v5538
        %v5540 = vpop.f32.mrb[0].mxu0
        %5541 = vmatprep.mubr.f32.mxu0 0.0
        %5542 = vmatmul.mubr.f32.gmra.mrb[0].mxu0 %v5304
        %v5543 = vpop.f32.mrb[0].mxu0
        %v5544 = vadd.f32 0.0, %v5543
        %v5545 = vpop.f32.mrb[0].mxu0
        %5546 = vmatprep.mubr.f32.mxu0 0.0
        %5547 = vmatmul.mubr.f32.gmra.mrb[0].mxu0 %v5305
        %v5548 = vpop.f32.mrb[0].mxu0
        %v5549 = vadd.f32 0.0, %v5548
        %v5550 = vpop.f32.mrb[0].mxu0
        %5551 = vmatprep.mubr.f32.mxu0 0.0
        %5552 = vmatmul.mubr.f32.gmra.mrb[0].mxu0 %v5306
        %v5553 = vpop.f32.mrb[0].mxu0
        %v5554 = vadd.f32 0.0, %v5553
        %v5555 = vpop.f32.mrb[0].mxu0
        %5556 = vmatprep.mubr.f32.mxu0 0.0
        %5557 = vmatmul.mubr.f32.gmra.mrb[0].mxu0 %v5307
        %v5558 = vpop.f32.mrb[0].mxu0
        %v5559 = vadd.f32 0.0, %v5558
        %v5560 = vpop.f32.mrb[0].mxu0
        %5561 = vmatprep.mubr.f32.mxu0 0.0
        %5562 = vmatmul.mubr.f32.gmra.mrb[0].mxu0 %v5308
        %v5563 = vpop.f32.mrb[0].mxu0
        %v5564 = vadd.f32 0.0, %v5563
        %v5565 = vpop.f32.mrb[0].mxu0
        %5566 = vmatprep.mubr.f32.mxu0 0.0
        %5567 = vmatmul.mubr.f32.gmra.mrb[0].mxu0 %v5309
        %v5568 = vpop.f32.mrb[0].mxu0
        %v5569 = vadd.f32 0.0, %v5568
        %v5570 = vpop.f32.mrb[0].mxu0
        %5571 = vdwg.mxu0
        %v5572 = vadd.f32 %v5238, %v5394
        %v5573 = vadd.f32 %v5239, %v5399
        %v5574 = vadd.f32 %v5240, %v5404
        %v5575 = vadd.f32 %v5241, %v5409
        %v5576 = vadd.f32 %v5242, %v5414
        %v5577 = vadd.f32 %v5243, %v5419
        %v5578 = vadd.f32 %v5244, %v5424
        %v5579 = vadd.f32 %v5245, %v5429
        %v5580 = vadd.f32 %v5246, %v5434
        %v5581 = vadd.f32 %v5247, %v5439
        %v5582 = vadd.f32 %v5248, %v5444
        %v5583 = vadd.f32 %v5249, %v5449
        %v5584 = vadd.f32 %v5250, %v5454
        %v5585 = vadd.f32 %v5251, %v5459
        %v5586 = vadd.f32 %v5252, %v5464
        %v5587 = vadd.f32 %v5253, %v5469
        %v5588 = vadd.f32 %v5254, %v5474
        %v5589 = vadd.f32 %v5255, %v5479
        %v5590 = vadd.f32 %v5256, %v5484
        %v5591 = vadd.f32 %v5257, %v5489
        %v5592 = vadd.f32 %v5258, %v5494
        %v5593 = vadd.f32 %v5259, %v5499
        %v5594 = vadd.f32 %v5260, %v5504
        %v5595 = vadd.f32 %v5261, %v5509
        %v5596 = vadd.f32 %v5262, %v5514
        %v5597 = vadd.f32 %v5263, %v5519
        %v5598 = vadd.f32 %v5264, %v5524
        %v5599 = vadd.f32 %v5265, %v5529
        %v5600 = vadd.f32 %v5266, %v5534
        %v5601 = vadd.f32 %v5267, %v5539
        %v5602 = vadd.f32 %v5268, %v5544
        %v5603 = vadd.f32 %v5269, %v5549
        %v5604 = vadd.f32 %v5270, %v5554
        %v5605 = vadd.f32 %v5271, %v5559
        %v5606 = vadd.f32 %v5272, %v5564
        %v5607 = vadd.f32 %v5273, %v5569
        %v5608 = vld [vmem:[#allocation2 + $0x19] sm:$0xff]
        %v5609 = vld [vmem:[#allocation2 + $0x21] sm:$0xff]
        %v5610 = vld [vmem:[#allocation2 + $0x29] sm:$0xff]
        %v5611 = vld [vmem:[#allocation2 + $0x31] sm:$0xff]
        %v5612 = vld [vmem:[#allocation2 + $0x39] sm:$0xff]
        %v5613 = vld [vmem:[#allocation2 + $0x41] sm:$0xff]
        %v5614 = vld [vmem:[#allocation2 + $0x49] sm:$0xff]
        %v5615 = vld [vmem:[#allocation2 + $0x51] sm:$0xff]
        %v5616 = vld [vmem:[#allocation2 + $0x59] sm:$0xff]
        %v5617 = vld [vmem:[#allocation2 + $0x61] sm:$0xff]
        %v5618 = vld [vmem:[#allocation2 + $0x69] sm:$0xff]
        %v5619 = vld [vmem:[#allocation2 + $0x71] sm:$0xff]
        %v5620 = vld [vmem:[#allocation2 + $0x79] sm:$0xff]
        %v5621 = vld [vmem:[#allocation2 + $0x81] sm:$0xff]
        %v5622 = vld [vmem:[#allocation2 + $0x89] sm:$0xff]
        %v5623 = vld [vmem:[#allocation2 + $0x91] sm:$0xff]
        %v5624 = vld [vmem:[#allocation2 + $0x99] sm:$0xff]
        %v5625 = vld [vmem:[#allocation2 + $0xa1] sm:$0xff]
        %v5626 = vld [vmem:[#allocation2 + $0xa9] sm:$0xff]
        %v5627 = vld [vmem:[#allocation2 + $0xb1] sm:$0xff]
        %v5628 = vld [vmem:[#allocation2 + $0xb9] sm:$0xff]
        %v5629 = vld [vmem:[#allocation2 + $0xc1] sm:$0xff]
        %v5630 = vld [vmem:[#allocation2 + $0xc9] sm:$0xff]
        %v5631 = vld [vmem:[#allocation2 + $0xd1] sm:$0xff]
        %v5632 = vld [vmem:[#allocation2 + $0xd9] sm:$0xff]
        %v5633 = vld [vmem:[#allocation2 + $0xe1] sm:$0xff]
        %v5634 = vld [vmem:[#allocation2 + $0xe9] sm:$0xff]
        %v5635 = vld [vmem:[#allocation2 + $0xf1] sm:$0xff]
        %v5636 = vld [vmem:[#allocation2 + $0xf9] sm:$0xff]
        %v5637 = vld [vmem:[#allocation2 + $0x101] sm:$0xff]
        %v5638 = vld [vmem:[#allocation2 + $0x109] sm:$0xff]
        %v5639 = vld [vmem:[#allocation2 + $0x111] sm:$0xff]
        %v5640 = vld [vmem:[#allocation2 + $0x119] sm:$0xff]
        %v5641 = vld [vmem:[#allocation2 + $0x121] sm:$0xff]
        %v5642 = vld [vmem:[#allocation2 + $0x129] sm:$0xff]
        %v5643 = vld [vmem:[#allocation2 + $0x131] sm:$0xff]
        %s5644 = scalar_lea.vmem [#allocation8], 640
        %v5645 = vld [vmem:[%s5644] sm:$0xff]
        %v5646 = vld [vmem:[%s5644 + $0x8] sm:$0xff]
        %v5647 = vld [vmem:[%s5644 + $0x10] sm:$0xff]
        %v5648 = vld [vmem:[%s5644 + $0x18] sm:$0xff]
        %v5649 = vld [vmem:[%s5644 + $0x20] sm:$0xff]
        %v5650 = vld [vmem:[%s5644 + $0x28] sm:$0xff]
        %v5651 = vld [vmem:[%s5644 + $0x30] sm:$0xff]
        %v5652 = vld [vmem:[%s5644 + $0x38] sm:$0xff]
        %v5653 = vld [vmem:[%s5644 + $0x40] sm:$0xff]
        %v5654 = vld [vmem:[%s5644 + $0x48] sm:$0xff]
        %v5655 = vld [vmem:[%s5644 + $0x50] sm:$0xff]
        %v5656 = vld [vmem:[%s5644 + $0x58] sm:$0xff]
        %v5657 = vld [vmem:[%s5644 + $0x60] sm:$0xff]
        %v5658 = vld [vmem:[%s5644 + $0x68] sm:$0xff]
        %v5659 = vld [vmem:[%s5644 + $0x70] sm:$0xff]
        %v5660 = vld [vmem:[%s5644 + $0x78] sm:$0xff]
        %5661 = vmatprep.subr.mxu0 0.0
        %5662 = vmatpush1.msra.mxu0 %v5645
        %5663 = vmatprep.subr.mxu0 0.0
        %5664 = vmatpush1.msra.mxu0 %v5646
        %5665 = vmatprep.subr.mxu0 0.0
        %5666 = vmatpush1.msra.mxu0 %v5647
        %5667 = vmatprep.subr.mxu0 0.0
        %5668 = vmatpush1.msra.mxu0 %v5648
        %5669 = vmatprep.subr.mxu0 0.0
        %5670 = vmatpush1.msra.mxu0 %v5649
        %5671 = vmatprep.subr.mxu0 0.0
        %5672 = vmatpush1.msra.mxu0 %v5650
        %5673 = vmatprep.subr.mxu0 0.0
        %5674 = vmatpush1.msra.mxu0 %v5651
        %5675 = vmatprep.subr.mxu0 0.0
        %5676 = vmatpush1.msra.mxu0 %v5652
        %5677 = vmatprep.subr.mxu0 0.0
        %5678 = vmatpush1.msra.mxu0 %v5653
        %5679 = vmatprep.subr.mxu0 0.0
        %5680 = vmatpush1.msra.mxu0 %v5654
        %5681 = vmatprep.subr.mxu0 0.0
        %5682 = vmatpush1.msra.mxu0 %v5655
        %5683 = vmatprep.subr.mxu0 0.0
        %5684 = vmatpush1.msra.mxu0 %v5656
        %5685 = vmatprep.subr.mxu0 0.0
        %5686 = vmatpush1.msra.mxu0 %v5657
        %5687 = vmatprep.subr.mxu0 0.0
        %5688 = vmatpush1.msra.mxu0 %v5658
        %5689 = vmatprep.subr.mxu0 0.0
        %5690 = vmatpush1.msra.mxu0 %v5659
        %5691 = vmatprep.subr.mxu0 0.0
        %5692 = vmatpush1.msra.mxu0 %v5660
        %5693 = vmatprep.subr.mxu0 0.0
        %5694 = vmatpush1.msra.mxu0 0.0
        %5695 = vmatprep.subr.mxu0 0.0
        %5696 = vmatpush1.msra.mxu0 0.0
        %5697 = vmatprep.subr.mxu0 0.0
        %5698 = vmatpush1.msra.mxu0 0.0
        %5699 = vmatprep.subr.mxu0 0.0
        %5700 = vmatpush1.msra.mxu0 0.0
        %5701 = vmatprep.subr.mxu0 0.0
        %5702 = vmatpush1.msra.mxu0 0.0
        %5703 = vmatprep.subr.mxu0 0.0
        %5704 = vmatpush1.msra.mxu0 0.0
        %5705 = vmatprep.subr.mxu0 0.0
        %5706 = vmatpush1.msra.mxu0 0.0
        %5707 = vmatprep.subr.mxu0 0.0
        %5708 = vmatpush1.msra.mxu0 0.0
        %5709 = vmatprep.subr.mxu0 0.0
        %5710 = vmatpush1.msra.mxu0 0.0
        %5711 = vmatprep.subr.mxu0 0.0
        %5712 = vmatpush1.msra.mxu0 0.0
        %5713 = vmatprep.subr.mxu0 0.0
        %5714 = vmatpush1.msra.mxu0 0.0
        %5715 = vmatprep.subr.mxu0 0.0
        %5716 = vmatpush1.msra.mxu0 0.0
        %5717 = vmatprep.subr.mxu0 0.0
        %5718 = vmatpush1.msra.mxu0 0.0
        %5719 = vmatprep.subr.mxu0 0.0
        %5720 = vmatpush1.msra.mxu0 0.0
        %5721 = vmatprep.subr.mxu0 0.0
        %5722 = vmatpush1.msra.mxu0 0.0
        %5723 = vmatprep.subr.mxu0 0.0
        %5724 = vmatpush1.msra.mxu0 0.0
        %5725 = vmatprep.mubr.f32.mxu0 0.0
        %5726 = vmatmul.mubr.f32.gmra.mrb[0].mxu0 %v5608
        %v5727 = vpop.f32.mrb[0].mxu0
        %v5728 = vadd.f32 0.0, %v5727
        %v5729 = vpop.f32.mrb[0].mxu0
        %5730 = vmatprep.mubr.f32.mxu0 0.0
        %5731 = vmatmul.mubr.f32.gmra.mrb[0].mxu0 %v5609
        %v5732 = vpop.f32.mrb[0].mxu0
        %v5733 = vadd.f32 0.0, %v5732
        %v5734 = vpop.f32.mrb[0].mxu0
        %5735 = vmatprep.mubr.f32.mxu0 0.0
        %5736 = vmatmul.mubr.f32.gmra.mrb[0].mxu0 %v5610
        %v5737 = vpop.f32.mrb[0].mxu0
        %v5738 = vadd.f32 0.0, %v5737
        %v5739 = vpop.f32.mrb[0].mxu0
        %5740 = vmatprep.mubr.f32.mxu0 0.0
        %5741 = vmatmul.mubr.f32.gmra.mrb[0].mxu0 %v5611
        %v5742 = vpop.f32.mrb[0].mxu0
        %v5743 = vadd.f32 0.0, %v5742
        %v5744 = vpop.f32.mrb[0].mxu0
        %5745 = vmatprep.mubr.f32.mxu0 0.0
        %5746 = vmatmul.mubr.f32.gmra.mrb[0].mxu0 %v5612
        %v5747 = vpop.f32.mrb[0].mxu0
        %v5748 = vadd.f32 0.0, %v5747
        %v5749 = vpop.f32.mrb[0].mxu0
        %5750 = vmatprep.mubr.f32.mxu0 0.0
        %5751 = vmatmul.mubr.f32.gmra.mrb[0].mxu0 %v5613
        %v5752 = vpop.f32.mrb[0].mxu0
        %v5753 = vadd.f32 0.0, %v5752
        %v5754 = vpop.f32.mrb[0].mxu0
        %5755 = vmatprep.mubr.f32.mxu0 0.0
        %5756 = vmatmul.mubr.f32.gmra.mrb[0].mxu0 %v5614
        %v5757 = vpop.f32.mrb[0].mxu0
        %v5758 = vadd.f32 0.0, %v5757
        %v5759 = vpop.f32.mrb[0].mxu0
        %5760 = vmatprep.mubr.f32.mxu0 0.0
        %5761 = vmatmul.mubr.f32.gmra.mrb[0].mxu0 %v5615
        %v5762 = vpop.f32.mrb[0].mxu0
        %v5763 = vadd.f32 0.0, %v5762
        %v5764 = vpop.f32.mrb[0].mxu0
        %5765 = vmatprep.mubr.f32.mxu0 0.0
        %5766 = vmatmul.mubr.f32.gmra.mrb[0].mxu0 %v5616
        %v5767 = vpop.f32.mrb[0].mxu0
        %v5768 = vadd.f32 0.0, %v5767
        %v5769 = vpop.f32.mrb[0].mxu0
        %5770 = vmatprep.mubr.f32.mxu0 0.0
        %5771 = vmatmul.mubr.f32.gmra.mrb[0].mxu0 %v5617
        %v5772 = vpop.f32.mrb[0].mxu0
        %v5773 = vadd.f32 0.0, %v5772
        %v5774 = vpop.f32.mrb[0].mxu0
        %5775 = vmatprep.mubr.f32.mxu0 0.0
        %5776 = vmatmul.mubr.f32.gmra.mrb[0].mxu0 %v5618
        %v5777 = vpop.f32.mrb[0].mxu0
        %v5778 = vadd.f32 0.0, %v5777
        %v5779 = vpop.f32.mrb[0].mxu0
        %5780 = vmatprep.mubr.f32.mxu0 0.0
        %5781 = vmatmul.mubr.f32.gmra.mrb[0].mxu0 %v5619
        %v5782 = vpop.f32.mrb[0].mxu0
        %v5783 = vadd.f32 0.0, %v5782
        %v5784 = vpop.f32.mrb[0].mxu0
        %5785 = vmatprep.mubr.f32.mxu0 0.0
        %5786 = vmatmul.mubr.f32.gmra.mrb[0].mxu0 %v5620
        %v5787 = vpop.f32.mrb[0].mxu0
        %v5788 = vadd.f32 0.0, %v5787
        %v5789 = vpop.f32.mrb[0].mxu0
        %5790 = vmatprep.mubr.f32.mxu0 0.0
        %5791 = vmatmul.mubr.f32.gmra.mrb[0].mxu0 %v5621
        %v5792 = vpop.f32.mrb[0].mxu0
        %v5793 = vadd.f32 0.0, %v5792
        %v5794 = vpop.f32.mrb[0].mxu0
        %5795 = vmatprep.mubr.f32.mxu0 0.0
        %5796 = vmatmul.mubr.f32.gmra.mrb[0].mxu0 %v5622
        %v5797 = vpop.f32.mrb[0].mxu0
        %v5798 = vadd.f32 0.0, %v5797
        %v5799 = vpop.f32.mrb[0].mxu0
        %5800 = vmatprep.mubr.f32.mxu0 0.0
        %5801 = vmatmul.mubr.f32.gmra.mrb[0].mxu0 %v5623
        %v5802 = vpop.f32.mrb[0].mxu0
        %v5803 = vadd.f32 0.0, %v5802
        %v5804 = vpop.f32.mrb[0].mxu0
        %5805 = vmatprep.mubr.f32.mxu0 0.0
        %5806 = vmatmul.mubr.f32.gmra.mrb[0].mxu0 %v5624
        %v5807 = vpop.f32.mrb[0].mxu0
        %v5808 = vadd.f32 0.0, %v5807
        %v5809 = vpop.f32.mrb[0].mxu0
        %5810 = vmatprep.mubr.f32.mxu0 0.0
        %5811 = vmatmul.mubr.f32.gmra.mrb[0].mxu0 %v5625
        %v5812 = vpop.f32.mrb[0].mxu0
        %v5813 = vadd.f32 0.0, %v5812
        %v5814 = vpop.f32.mrb[0].mxu0
        %5815 = vmatprep.mubr.f32.mxu0 0.0
        %5816 = vmatmul.mubr.f32.gmra.mrb[0].mxu0 %v5626
        %v5817 = vpop.f32.mrb[0].mxu0
        %v5818 = vadd.f32 0.0, %v5817
        %v5819 = vpop.f32.mrb[0].mxu0
        %5820 = vmatprep.mubr.f32.mxu0 0.0
        %5821 = vmatmul.mubr.f32.gmra.mrb[0].mxu0 %v5627
        %v5822 = vpop.f32.mrb[0].mxu0
        %v5823 = vadd.f32 0.0, %v5822
        %v5824 = vpop.f32.mrb[0].mxu0
        %5825 = vmatprep.mubr.f32.mxu0 0.0
        %5826 = vmatmul.mubr.f32.gmra.mrb[0].mxu0 %v5628
        %v5827 = vpop.f32.mrb[0].mxu0
        %v5828 = vadd.f32 0.0, %v5827
        %v5829 = vpop.f32.mrb[0].mxu0
        %5830 = vmatprep.mubr.f32.mxu0 0.0
        %5831 = vmatmul.mubr.f32.gmra.mrb[0].mxu0 %v5629
        %v5832 = vpop.f32.mrb[0].mxu0
        %v5833 = vadd.f32 0.0, %v5832
        %v5834 = vpop.f32.mrb[0].mxu0
        %5835 = vmatprep.mubr.f32.mxu0 0.0
        %5836 = vmatmul.mubr.f32.gmra.mrb[0].mxu0 %v5630
        %v5837 = vpop.f32.mrb[0].mxu0
        %v5838 = vadd.f32 0.0, %v5837
        %v5839 = vpop.f32.mrb[0].mxu0
        %5840 = vmatprep.mubr.f32.mxu0 0.0
        %5841 = vmatmul.mubr.f32.gmra.mrb[0].mxu0 %v5631
        %v5842 = vpop.f32.mrb[0].mxu0
        %v5843 = vadd.f32 0.0, %v5842
        %v5844 = vpop.f32.mrb[0].mxu0
        %5845 = vmatprep.mubr.f32.mxu0 0.0
        %5846 = vmatmul.mubr.f32.gmra.mrb[0].mxu0 %v5632
        %v5847 = vpop.f32.mrb[0].mxu0
        %v5848 = vadd.f32 0.0, %v5847
        %v5849 = vpop.f32.mrb[0].mxu0
        %5850 = vmatprep.mubr.f32.mxu0 0.0
        %5851 = vmatmul.mubr.f32.gmra.mrb[0].mxu0 %v5633
        %v5852 = vpop.f32.mrb[0].mxu0
        %v5853 = vadd.f32 0.0, %v5852
        %v5854 = vpop.f32.mrb[0].mxu0
        %5855 = vmatprep.mubr.f32.mxu0 0.0
        %5856 = vmatmul.mubr.f32.gmra.mrb[0].mxu0 %v5634
        %v5857 = vpop.f32.mrb[0].mxu0
        %v5858 = vadd.f32 0.0, %v5857
        %v5859 = vpop.f32.mrb[0].mxu0
        %5860 = vmatprep.mubr.f32.mxu0 0.0
        %5861 = vmatmul.mubr.f32.gmra.mrb[0].mxu0 %v5635
        %v5862 = vpop.f32.mrb[0].mxu0
        %v5863 = vadd.f32 0.0, %v5862
        %v5864 = vpop.f32.mrb[0].mxu0
        %5865 = vmatprep.mubr.f32.mxu0 0.0
        %5866 = vmatmul.mubr.f32.gmra.mrb[0].mxu0 %v5636
        %v5867 = vpop.f32.mrb[0].mxu0
        %v5868 = vadd.f32 0.0, %v5867
        %v5869 = vpop.f32.mrb[0].mxu0
        %5870 = vmatprep.mubr.f32.mxu0 0.0
        %5871 = vmatmul.mubr.f32.gmra.mrb[0].mxu0 %v5637
        %v5872 = vpop.f32.mrb[0].mxu0
        %v5873 = vadd.f32 0.0, %v5872
        %v5874 = vpop.f32.mrb[0].mxu0
        %5875 = vmatprep.mubr.f32.mxu0 0.0
        %5876 = vmatmul.mubr.f32.gmra.mrb[0].mxu0 %v5638
        %v5877 = vpop.f32.mrb[0].mxu0
        %v5878 = vadd.f32 0.0, %v5877
        %v5879 = vpop.f32.mrb[0].mxu0
        %5880 = vmatprep.mubr.f32.mxu0 0.0
        %5881 = vmatmul.mubr.f32.gmra.mrb[0].mxu0 %v5639
        %v5882 = vpop.f32.mrb[0].mxu0
        %v5883 = vadd.f32 0.0, %v5882
        %v5884 = vpop.f32.mrb[0].mxu0
        %5885 = vmatprep.mubr.f32.mxu0 0.0
        %5886 = vmatmul.mubr.f32.gmra.mrb[0].mxu0 %v5640
        %v5887 = vpop.f32.mrb[0].mxu0
        %v5888 = vadd.f32 0.0, %v5887
        %v5889 = vpop.f32.mrb[0].mxu0
        %5890 = vmatprep.mubr.f32.mxu0 0.0
        %5891 = vmatmul.mubr.f32.gmra.mrb[0].mxu0 %v5641
        %v5892 = vpop.f32.mrb[0].mxu0
        %v5893 = vadd.f32 0.0, %v5892
        %v5894 = vpop.f32.mrb[0].mxu0
        %5895 = vmatprep.mubr.f32.mxu0 0.0
        %5896 = vmatmul.mubr.f32.gmra.mrb[0].mxu0 %v5642
        %v5897 = vpop.f32.mrb[0].mxu0
        %v5898 = vadd.f32 0.0, %v5897
        %v5899 = vpop.f32.mrb[0].mxu0
        %5900 = vmatprep.mubr.f32.mxu0 0.0
        %5901 = vmatmul.mubr.f32.gmra.mrb[0].mxu0 %v5643
        %v5902 = vpop.f32.mrb[0].mxu0
        %v5903 = vadd.f32 0.0, %v5902
        %v5904 = vpop.f32.mrb[0].mxu0
        %5905 = vdwg.mxu0
        %v5906 = vadd.f32 %v5572, %v5728
        %v5907 = vadd.f32 %v5573, %v5733
        %v5908 = vadd.f32 %v5574, %v5738
        %v5909 = vadd.f32 %v5575, %v5743
        %v5910 = vadd.f32 %v5576, %v5748
        %v5911 = vadd.f32 %v5577, %v5753
        %v5912 = vadd.f32 %v5578, %v5758
        %v5913 = vadd.f32 %v5579, %v5763
        %v5914 = vadd.f32 %v5580, %v5768
        %v5915 = vadd.f32 %v5581, %v5773
        %v5916 = vadd.f32 %v5582, %v5778
        %v5917 = vadd.f32 %v5583, %v5783
        %v5918 = vadd.f32 %v5584, %v5788
        %v5919 = vadd.f32 %v5585, %v5793
        %v5920 = vadd.f32 %v5586, %v5798
        %v5921 = vadd.f32 %v5587, %v5803
        %v5922 = vadd.f32 %v5588, %v5808
        %v5923 = vadd.f32 %v5589, %v5813
        %v5924 = vadd.f32 %v5590, %v5818
        %v5925 = vadd.f32 %v5591, %v5823
        %v5926 = vadd.f32 %v5592, %v5828
        %v5927 = vadd.f32 %v5593, %v5833
        %v5928 = vadd.f32 %v5594, %v5838
        %v5929 = vadd.f32 %v5595, %v5843
        %v5930 = vadd.f32 %v5596, %v5848
        %v5931 = vadd.f32 %v5597, %v5853
        %v5932 = vadd.f32 %v5598, %v5858
        %v5933 = vadd.f32 %v5599, %v5863
        %v5934 = vadd.f32 %v5600, %v5868
        %v5935 = vadd.f32 %v5601, %v5873
        %v5936 = vadd.f32 %v5602, %v5878
        %v5937 = vadd.f32 %v5603, %v5883
        %v5938 = vadd.f32 %v5604, %v5888
        %v5939 = vadd.f32 %v5605, %v5893
        %v5940 = vadd.f32 %v5606, %v5898
        %v5941 = vadd.f32 %v5607, %v5903
        %v5942 = vld [vmem:[#allocation2 + $0x29] sm:$0xff]
        %v5943 = vld [vmem:[#allocation2 + $0x31] sm:$0xff]
        %v5944 = vld [vmem:[#allocation2 + $0x39] sm:$0xff]
        %v5945 = vld [vmem:[#allocation2 + $0x41] sm:$0xff]
        %v5946 = vld [vmem:[#allocation2 + $0x49] sm:$0xff]
        %v5947 = vld [vmem:[#allocation2 + $0x51] sm:$0xff]
        %v5948 = vld [vmem:[#allocation2 + $0x59] sm:$0xff]
        %v5949 = vld [vmem:[#allocation2 + $0x61] sm:$0xff]
        %v5950 = vld [vmem:[#allocation2 + $0x69] sm:$0xff]
        %v5951 = vld [vmem:[#allocation2 + $0x71] sm:$0xff]
        %v5952 = vld [vmem:[#allocation2 + $0x79] sm:$0xff]
        %v5953 = vld [vmem:[#allocation2 + $0x81] sm:$0xff]
        %v5954 = vld [vmem:[#allocation2 + $0x89] sm:$0xff]
        %v5955 = vld [vmem:[#allocation2 + $0x91] sm:$0xff]
        %v5956 = vld [vmem:[#allocation2 + $0x99] sm:$0xff]
        %v5957 = vld [vmem:[#allocation2 + $0xa1] sm:$0xff]
        %v5958 = vld [vmem:[#allocation2 + $0xa9] sm:$0xff]
        %v5959 = vld [vmem:[#allocation2 + $0xb1] sm:$0xff]
        %v5960 = vld [vmem:[#allocation2 + $0xb9] sm:$0xff]
        %v5961 = vld [vmem:[#allocation2 + $0xc1] sm:$0xff]
        %v5962 = vld [vmem:[#allocation2 + $0xc9] sm:$0xff]
        %v5963 = vld [vmem:[#allocation2 + $0xd1] sm:$0xff]
        %v5964 = vld [vmem:[#allocation2 + $0xd9] sm:$0xff]
        %v5965 = vld [vmem:[#allocation2 + $0xe1] sm:$0xff]
        %v5966 = vld [vmem:[#allocation2 + $0xe9] sm:$0xff]
        %v5967 = vld [vmem:[#allocation2 + $0xf1] sm:$0xff]
        %v5968 = vld [vmem:[#allocation2 + $0xf9] sm:$0xff]
        %v5969 = vld [vmem:[#allocation2 + $0x101] sm:$0xff]
        %v5970 = vld [vmem:[#allocation2 + $0x109] sm:$0xff]
        %v5971 = vld [vmem:[#allocation2 + $0x111] sm:$0xff]
        %v5972 = vld [vmem:[#allocation2 + $0x119] sm:$0xff]
        %v5973 = vld [vmem:[#allocation2 + $0x121] sm:$0xff]
        %v5974 = vld [vmem:[#allocation2 + $0x129] sm:$0xff]
        %v5975 = vld [vmem:[#allocation2 + $0x131] sm:$0xff]
        %v5976 = vld [vmem:[#allocation2 + $0x139] sm:$0xff]
        %v5977 = vld [vmem:[#allocation2 + $0x141] sm:$0xff]
        %s5978 = scalar_lea.vmem [#allocation8], 768
        %v5979 = vld [vmem:[%s5978] sm:$0xff]
        %v5980 = vld [vmem:[%s5978 + $0x8] sm:$0xff]
        %v5981 = vld [vmem:[%s5978 + $0x10] sm:$0xff]
        %v5982 = vld [vmem:[%s5978 + $0x18] sm:$0xff]
        %v5983 = vld [vmem:[%s5978 + $0x20] sm:$0xff]
        %v5984 = vld [vmem:[%s5978 + $0x28] sm:$0xff]
        %v5985 = vld [vmem:[%s5978 + $0x30] sm:$0xff]
        %v5986 = vld [vmem:[%s5978 + $0x38] sm:$0xff]
        %v5987 = vld [vmem:[%s5978 + $0x40] sm:$0xff]
        %v5988 = vld [vmem:[%s5978 + $0x48] sm:$0xff]
        %v5989 = vld [vmem:[%s5978 + $0x50] sm:$0xff]
        %v5990 = vld [vmem:[%s5978 + $0x58] sm:$0xff]
        %v5991 = vld [vmem:[%s5978 + $0x60] sm:$0xff]
        %v5992 = vld [vmem:[%s5978 + $0x68] sm:$0xff]
        %v5993 = vld [vmem:[%s5978 + $0x70] sm:$0xff]
        %v5994 = vld [vmem:[%s5978 + $0x78] sm:$0xff]
        %5995 = vmatprep.subr.mxu0 0.0
        %5996 = vmatpush1.msra.mxu0 %v5979
        %5997 = vmatprep.subr.mxu0 0.0
        %5998 = vmatpush1.msra.mxu0 %v5980
        %5999 = vmatprep.subr.mxu0 0.0
        %6000 = vmatpush1.msra.mxu0 %v5981
        %6001 = vmatprep.subr.mxu0 0.0
        %6002 = vmatpush1.msra.mxu0 %v5982
        %6003 = vmatprep.subr.mxu0 0.0
        %6004 = vmatpush1.msra.mxu0 %v5983
        %6005 = vmatprep.subr.mxu0 0.0
        %6006 = vmatpush1.msra.mxu0 %v5984
        %6007 = vmatprep.subr.mxu0 0.0
        %6008 = vmatpush1.msra.mxu0 %v5985
        %6009 = vmatprep.subr.mxu0 0.0
        %6010 = vmatpush1.msra.mxu0 %v5986
        %6011 = vmatprep.subr.mxu0 0.0
        %6012 = vmatpush1.msra.mxu0 %v5987
        %6013 = vmatprep.subr.mxu0 0.0
        %6014 = vmatpush1.msra.mxu0 %v5988
        %6015 = vmatprep.subr.mxu0 0.0
        %6016 = vmatpush1.msra.mxu0 %v5989
        %6017 = vmatprep.subr.mxu0 0.0
        %6018 = vmatpush1.msra.mxu0 %v5990
        %6019 = vmatprep.subr.mxu0 0.0
        %6020 = vmatpush1.msra.mxu0 %v5991
        %6021 = vmatprep.subr.mxu0 0.0
        %6022 = vmatpush1.msra.mxu0 %v5992
        %6023 = vmatprep.subr.mxu0 0.0
        %6024 = vmatpush1.msra.mxu0 %v5993
        %6025 = vmatprep.subr.mxu0 0.0
        %6026 = vmatpush1.msra.mxu0 %v5994
        %6027 = vmatprep.subr.mxu0 0.0
        %6028 = vmatpush1.msra.mxu0 0.0
        %6029 = vmatprep.subr.mxu0 0.0
        %6030 = vmatpush1.msra.mxu0 0.0
        %6031 = vmatprep.subr.mxu0 0.0
        %6032 = vmatpush1.msra.mxu0 0.0
        %6033 = vmatprep.subr.mxu0 0.0
        %6034 = vmatpush1.msra.mxu0 0.0
        %6035 = vmatprep.subr.mxu0 0.0
        %6036 = vmatpush1.msra.mxu0 0.0
        %6037 = vmatprep.subr.mxu0 0.0
        %6038 = vmatpush1.msra.mxu0 0.0
        %6039 = vmatprep.subr.mxu0 0.0
        %6040 = vmatpush1.msra.mxu0 0.0
        %6041 = vmatprep.subr.mxu0 0.0
        %6042 = vmatpush1.msra.mxu0 0.0
        %6043 = vmatprep.subr.mxu0 0.0
        %6044 = vmatpush1.msra.mxu0 0.0
        %6045 = vmatprep.subr.mxu0 0.0
        %6046 = vmatpush1.msra.mxu0 0.0
        %6047 = vmatprep.subr.mxu0 0.0
        %6048 = vmatpush1.msra.mxu0 0.0
        %6049 = vmatprep.subr.mxu0 0.0
        %6050 = vmatpush1.msra.mxu0 0.0
        %6051 = vmatprep.subr.mxu0 0.0
        %6052 = vmatpush1.msra.mxu0 0.0
        %6053 = vmatprep.subr.mxu0 0.0
        %6054 = vmatpush1.msra.mxu0 0.0
        %6055 = vmatprep.subr.mxu0 0.0
        %6056 = vmatpush1.msra.mxu0 0.0
        %6057 = vmatprep.subr.mxu0 0.0
        %6058 = vmatpush1.msra.mxu0 0.0
        %6059 = vmatprep.mubr.f32.mxu0 0.0
        %6060 = vmatmul.mubr.f32.gmra.mrb[0].mxu0 %v5942
        %v6061 = vpop.f32.mrb[0].mxu0
        %v6062 = vadd.f32 0.0, %v6061
        %v6063 = vpop.f32.mrb[0].mxu0
        %6064 = vmatprep.mubr.f32.mxu0 0.0
        %6065 = vmatmul.mubr.f32.gmra.mrb[0].mxu0 %v5943
        %v6066 = vpop.f32.mrb[0].mxu0
        %v6067 = vadd.f32 0.0, %v6066
        %v6068 = vpop.f32.mrb[0].mxu0
        %6069 = vmatprep.mubr.f32.mxu0 0.0
        %6070 = vmatmul.mubr.f32.gmra.mrb[0].mxu0 %v5944
        %v6071 = vpop.f32.mrb[0].mxu0
        %v6072 = vadd.f32 0.0, %v6071
        %v6073 = vpop.f32.mrb[0].mxu0
        %6074 = vmatprep.mubr.f32.mxu0 0.0
        %6075 = vmatmul.mubr.f32.gmra.mrb[0].mxu0 %v5945
        %v6076 = vpop.f32.mrb[0].mxu0
        %v6077 = vadd.f32 0.0, %v6076
        %v6078 = vpop.f32.mrb[0].mxu0
        %6079 = vmatprep.mubr.f32.mxu0 0.0
        %6080 = vmatmul.mubr.f32.gmra.mrb[0].mxu0 %v5946
        %v6081 = vpop.f32.mrb[0].mxu0
        %v6082 = vadd.f32 0.0, %v6081
        %v6083 = vpop.f32.mrb[0].mxu0
        %6084 = vmatprep.mubr.f32.mxu0 0.0
        %6085 = vmatmul.mubr.f32.gmra.mrb[0].mxu0 %v5947
        %v6086 = vpop.f32.mrb[0].mxu0
        %v6087 = vadd.f32 0.0, %v6086
        %v6088 = vpop.f32.mrb[0].mxu0
        %6089 = vmatprep.mubr.f32.mxu0 0.0
        %6090 = vmatmul.mubr.f32.gmra.mrb[0].mxu0 %v5948
        %v6091 = vpop.f32.mrb[0].mxu0
        %v6092 = vadd.f32 0.0, %v6091
        %v6093 = vpop.f32.mrb[0].mxu0
        %6094 = vmatprep.mubr.f32.mxu0 0.0
        %6095 = vmatmul.mubr.f32.gmra.mrb[0].mxu0 %v5949
        %v6096 = vpop.f32.mrb[0].mxu0
        %v6097 = vadd.f32 0.0, %v6096
        %v6098 = vpop.f32.mrb[0].mxu0
        %6099 = vmatprep.mubr.f32.mxu0 0.0
        %6100 = vmatmul.mubr.f32.gmra.mrb[0].mxu0 %v5950
        %v6101 = vpop.f32.mrb[0].mxu0
        %v6102 = vadd.f32 0.0, %v6101
        %v6103 = vpop.f32.mrb[0].mxu0
        %6104 = vmatprep.mubr.f32.mxu0 0.0
        %6105 = vmatmul.mubr.f32.gmra.mrb[0].mxu0 %v5951
        %v6106 = vpop.f32.mrb[0].mxu0
        %v6107 = vadd.f32 0.0, %v6106
        %v6108 = vpop.f32.mrb[0].mxu0
        %6109 = vmatprep.mubr.f32.mxu0 0.0
        %6110 = vmatmul.mubr.f32.gmra.mrb[0].mxu0 %v5952
        %v6111 = vpop.f32.mrb[0].mxu0
        %v6112 = vadd.f32 0.0, %v6111
        %v6113 = vpop.f32.mrb[0].mxu0
        %6114 = vmatprep.mubr.f32.mxu0 0.0
        %6115 = vmatmul.mubr.f32.gmra.mrb[0].mxu0 %v5953
        %v6116 = vpop.f32.mrb[0].mxu0
        %v6117 = vadd.f32 0.0, %v6116
        %v6118 = vpop.f32.mrb[0].mxu0
        %6119 = vmatprep.mubr.f32.mxu0 0.0
        %6120 = vmatmul.mubr.f32.gmra.mrb[0].mxu0 %v5954
        %v6121 = vpop.f32.mrb[0].mxu0
        %v6122 = vadd.f32 0.0, %v6121
        %v6123 = vpop.f32.mrb[0].mxu0
        %6124 = vmatprep.mubr.f32.mxu0 0.0
        %6125 = vmatmul.mubr.f32.gmra.mrb[0].mxu0 %v5955
        %v6126 = vpop.f32.mrb[0].mxu0
        %v6127 = vadd.f32 0.0, %v6126
        %v6128 = vpop.f32.mrb[0].mxu0
        %6129 = vmatprep.mubr.f32.mxu0 0.0
        %6130 = vmatmul.mubr.f32.gmra.mrb[0].mxu0 %v5956
        %v6131 = vpop.f32.mrb[0].mxu0
        %v6132 = vadd.f32 0.0, %v6131
        %v6133 = vpop.f32.mrb[0].mxu0
        %6134 = vmatprep.mubr.f32.mxu0 0.0
        %6135 = vmatmul.mubr.f32.gmra.mrb[0].mxu0 %v5957
        %v6136 = vpop.f32.mrb[0].mxu0
        %v6137 = vadd.f32 0.0, %v6136
        %v6138 = vpop.f32.mrb[0].mxu0
        %6139 = vmatprep.mubr.f32.mxu0 0.0
        %6140 = vmatmul.mubr.f32.gmra.mrb[0].mxu0 %v5958
        %v6141 = vpop.f32.mrb[0].mxu0
        %v6142 = vadd.f32 0.0, %v6141
        %v6143 = vpop.f32.mrb[0].mxu0
        %6144 = vmatprep.mubr.f32.mxu0 0.0
        %6145 = vmatmul.mubr.f32.gmra.mrb[0].mxu0 %v5959
        %v6146 = vpop.f32.mrb[0].mxu0
        %v6147 = vadd.f32 0.0, %v6146
        %v6148 = vpop.f32.mrb[0].mxu0
        %6149 = vmatprep.mubr.f32.mxu0 0.0
        %6150 = vmatmul.mubr.f32.gmra.mrb[0].mxu0 %v5960
        %v6151 = vpop.f32.mrb[0].mxu0
        %v6152 = vadd.f32 0.0, %v6151
        %v6153 = vpop.f32.mrb[0].mxu0
        %6154 = vmatprep.mubr.f32.mxu0 0.0
        %6155 = vmatmul.mubr.f32.gmra.mrb[0].mxu0 %v5961
        %v6156 = vpop.f32.mrb[0].mxu0
        %v6157 = vadd.f32 0.0, %v6156
        %v6158 = vpop.f32.mrb[0].mxu0
        %6159 = vmatprep.mubr.f32.mxu0 0.0
        %6160 = vmatmul.mubr.f32.gmra.mrb[0].mxu0 %v5962
        %v6161 = vpop.f32.mrb[0].mxu0
        %v6162 = vadd.f32 0.0, %v6161
        %v6163 = vpop.f32.mrb[0].mxu0
        %6164 = vmatprep.mubr.f32.mxu0 0.0
        %6165 = vmatmul.mubr.f32.gmra.mrb[0].mxu0 %v5963
        %v6166 = vpop.f32.mrb[0].mxu0
        %v6167 = vadd.f32 0.0, %v6166
        %v6168 = vpop.f32.mrb[0].mxu0
        %6169 = vmatprep.mubr.f32.mxu0 0.0
        %6170 = vmatmul.mubr.f32.gmra.mrb[0].mxu0 %v5964
        %v6171 = vpop.f32.mrb[0].mxu0
        %v6172 = vadd.f32 0.0, %v6171
        %v6173 = vpop.f32.mrb[0].mxu0
        %6174 = vmatprep.mubr.f32.mxu0 0.0
        %6175 = vmatmul.mubr.f32.gmra.mrb[0].mxu0 %v5965
        %v6176 = vpop.f32.mrb[0].mxu0
        %v6177 = vadd.f32 0.0, %v6176
        %v6178 = vpop.f32.mrb[0].mxu0
        %6179 = vmatprep.mubr.f32.mxu0 0.0
        %6180 = vmatmul.mubr.f32.gmra.mrb[0].mxu0 %v5966
        %v6181 = vpop.f32.mrb[0].mxu0
        %v6182 = vadd.f32 0.0, %v6181
        %v6183 = vpop.f32.mrb[0].mxu0
        %6184 = vmatprep.mubr.f32.mxu0 0.0
        %6185 = vmatmul.mubr.f32.gmra.mrb[0].mxu0 %v5967
        %v6186 = vpop.f32.mrb[0].mxu0
        %v6187 = vadd.f32 0.0, %v6186
        %v6188 = vpop.f32.mrb[0].mxu0
        %6189 = vmatprep.mubr.f32.mxu0 0.0
        %6190 = vmatmul.mubr.f32.gmra.mrb[0].mxu0 %v5968
        %v6191 = vpop.f32.mrb[0].mxu0
        %v6192 = vadd.f32 0.0, %v6191
        %v6193 = vpop.f32.mrb[0].mxu0
        %6194 = vmatprep.mubr.f32.mxu0 0.0
        %6195 = vmatmul.mubr.f32.gmra.mrb[0].mxu0 %v5969
        %v6196 = vpop.f32.mrb[0].mxu0
        %v6197 = vadd.f32 0.0, %v6196
        %v6198 = vpop.f32.mrb[0].mxu0
        %6199 = vmatprep.mubr.f32.mxu0 0.0
        %6200 = vmatmul.mubr.f32.gmra.mrb[0].mxu0 %v5970
        %v6201 = vpop.f32.mrb[0].mxu0
        %v6202 = vadd.f32 0.0, %v6201
        %v6203 = vpop.f32.mrb[0].mxu0
        %6204 = vmatprep.mubr.f32.mxu0 0.0
        %6205 = vmatmul.mubr.f32.gmra.mrb[0].mxu0 %v5971
        %v6206 = vpop.f32.mrb[0].mxu0
        %v6207 = vadd.f32 0.0, %v6206
        %v6208 = vpop.f32.mrb[0].mxu0
        %6209 = vmatprep.mubr.f32.mxu0 0.0
        %6210 = vmatmul.mubr.f32.gmra.mrb[0].mxu0 %v5972
        %v6211 = vpop.f32.mrb[0].mxu0
        %v6212 = vadd.f32 0.0, %v6211
        %v6213 = vpop.f32.mrb[0].mxu0
        %6214 = vmatprep.mubr.f32.mxu0 0.0
        %6215 = vmatmul.mubr.f32.gmra.mrb[0].mxu0 %v5973
        %v6216 = vpop.f32.mrb[0].mxu0
        %v6217 = vadd.f32 0.0, %v6216
        %v6218 = vpop.f32.mrb[0].mxu0
        %6219 = vmatprep.mubr.f32.mxu0 0.0
        %6220 = vmatmul.mubr.f32.gmra.mrb[0].mxu0 %v5974
        %v6221 = vpop.f32.mrb[0].mxu0
        %v6222 = vadd.f32 0.0, %v6221
        %v6223 = vpop.f32.mrb[0].mxu0
        %6224 = vmatprep.mubr.f32.mxu0 0.0
        %6225 = vmatmul.mubr.f32.gmra.mrb[0].mxu0 %v5975
        %v6226 = vpop.f32.mrb[0].mxu0
        %v6227 = vadd.f32 0.0, %v6226
        %v6228 = vpop.f32.mrb[0].mxu0
        %6229 = vmatprep.mubr.f32.mxu0 0.0
        %6230 = vmatmul.mubr.f32.gmra.mrb[0].mxu0 %v5976
        %v6231 = vpop.f32.mrb[0].mxu0
        %v6232 = vadd.f32 0.0, %v6231
        %v6233 = vpop.f32.mrb[0].mxu0
        %6234 = vmatprep.mubr.f32.mxu0 0.0
        %6235 = vmatmul.mubr.f32.gmra.mrb[0].mxu0 %v5977
        %v6236 = vpop.f32.mrb[0].mxu0
        %v6237 = vadd.f32 0.0, %v6236
        %v6238 = vpop.f32.mrb[0].mxu0
        %6239 = vdwg.mxu0
        %v6240 = vadd.f32 %v5906, %v6062
        %v6241 = vadd.f32 %v5907, %v6067
        %v6242 = vadd.f32 %v5908, %v6072
        %v6243 = vadd.f32 %v5909, %v6077
        %v6244 = vadd.f32 %v5910, %v6082
        %v6245 = vadd.f32 %v5911, %v6087
        %v6246 = vadd.f32 %v5912, %v6092
        %v6247 = vadd.f32 %v5913, %v6097
        %v6248 = vadd.f32 %v5914, %v6102
        %v6249 = vadd.f32 %v5915, %v6107
        %v6250 = vadd.f32 %v5916, %v6112
        %v6251 = vadd.f32 %v5917, %v6117
        %v6252 = vadd.f32 %v5918, %v6122
        %v6253 = vadd.f32 %v5919, %v6127
        %v6254 = vadd.f32 %v5920, %v6132
        %v6255 = vadd.f32 %v5921, %v6137
        %v6256 = vadd.f32 %v5922, %v6142
        %v6257 = vadd.f32 %v5923, %v6147
        %v6258 = vadd.f32 %v5924, %v6152
        %v6259 = vadd.f32 %v5925, %v6157
        %v6260 = vadd.f32 %v5926, %v6162
        %v6261 = vadd.f32 %v5927, %v6167
        %v6262 = vadd.f32 %v5928, %v6172
        %v6263 = vadd.f32 %v5929, %v6177
        %v6264 = vadd.f32 %v5930, %v6182
        %v6265 = vadd.f32 %v5931, %v6187
        %v6266 = vadd.f32 %v5932, %v6192
        %v6267 = vadd.f32 %v5933, %v6197
        %v6268 = vadd.f32 %v5934, %v6202
        %v6269 = vadd.f32 %v5935, %v6207
        %v6270 = vadd.f32 %v5936, %v6212
        %v6271 = vadd.f32 %v5937, %v6217
        %v6272 = vadd.f32 %v5938, %v6222
        %v6273 = vadd.f32 %v5939, %v6227
        %v6274 = vadd.f32 %v5940, %v6232
        %v6275 = vadd.f32 %v5941, %v6237
        %v6276 = vld [vmem:[#allocation2 + $0x2a] sm:$0xff]
        %v6277 = vld [vmem:[#allocation2 + $0x32] sm:$0xff]
        %v6278 = vld [vmem:[#allocation2 + $0x3a] sm:$0xff]
        %v6279 = vld [vmem:[#allocation2 + $0x42] sm:$0xff]
        %v6280 = vld [vmem:[#allocation2 + $0x4a] sm:$0xff]
        %v6281 = vld [vmem:[#allocation2 + $0x52] sm:$0xff]
        %v6282 = vld [vmem:[#allocation2 + $0x5a] sm:$0xff]
        %v6283 = vld [vmem:[#allocation2 + $0x62] sm:$0xff]
        %v6284 = vld [vmem:[#allocation2 + $0x6a] sm:$0xff]
        %v6285 = vld [vmem:[#allocation2 + $0x72] sm:$0xff]
        %v6286 = vld [vmem:[#allocation2 + $0x7a] sm:$0xff]
        %v6287 = vld [vmem:[#allocation2 + $0x82] sm:$0xff]
        %v6288 = vld [vmem:[#allocation2 + $0x8a] sm:$0xff]
        %v6289 = vld [vmem:[#allocation2 + $0x92] sm:$0xff]
        %v6290 = vld [vmem:[#allocation2 + $0x9a] sm:$0xff]
        %v6291 = vld [vmem:[#allocation2 + $0xa2] sm:$0xff]
        %v6292 = vld [vmem:[#allocation2 + $0xaa] sm:$0xff]
        %v6293 = vld [vmem:[#allocation2 + $0xb2] sm:$0xff]
        %v6294 = vld [vmem:[#allocation2 + $0xba] sm:$0xff]
        %v6295 = vld [vmem:[#allocation2 + $0xc2] sm:$0xff]
        %v6296 = vld [vmem:[#allocation2 + $0xca] sm:$0xff]
        %v6297 = vld [vmem:[#allocation2 + $0xd2] sm:$0xff]
        %v6298 = vld [vmem:[#allocation2 + $0xda] sm:$0xff]
        %v6299 = vld [vmem:[#allocation2 + $0xe2] sm:$0xff]
        %v6300 = vld [vmem:[#allocation2 + $0xea] sm:$0xff]
        %v6301 = vld [vmem:[#allocation2 + $0xf2] sm:$0xff]
        %v6302 = vld [vmem:[#allocation2 + $0xfa] sm:$0xff]
        %v6303 = vld [vmem:[#allocation2 + $0x102] sm:$0xff]
        %v6304 = vld [vmem:[#allocation2 + $0x10a] sm:$0xff]
        %v6305 = vld [vmem:[#allocation2 + $0x112] sm:$0xff]
        %v6306 = vld [vmem:[#allocation2 + $0x11a] sm:$0xff]
        %v6307 = vld [vmem:[#allocation2 + $0x122] sm:$0xff]
        %v6308 = vld [vmem:[#allocation2 + $0x12a] sm:$0xff]
        %v6309 = vld [vmem:[#allocation2 + $0x132] sm:$0xff]
        %v6310 = vld [vmem:[#allocation2 + $0x13a] sm:$0xff]
        %v6311 = vld [vmem:[#allocation2 + $0x142] sm:$0xff]
        %s6312 = scalar_lea.vmem [#allocation8], 896
        %v6313 = vld [vmem:[%s6312] sm:$0xff]
        %v6314 = vld [vmem:[%s6312 + $0x8] sm:$0xff]
        %v6315 = vld [vmem:[%s6312 + $0x10] sm:$0xff]
        %v6316 = vld [vmem:[%s6312 + $0x18] sm:$0xff]
        %v6317 = vld [vmem:[%s6312 + $0x20] sm:$0xff]
        %v6318 = vld [vmem:[%s6312 + $0x28] sm:$0xff]
        %v6319 = vld [vmem:[%s6312 + $0x30] sm:$0xff]
        %v6320 = vld [vmem:[%s6312 + $0x38] sm:$0xff]
        %v6321 = vld [vmem:[%s6312 + $0x40] sm:$0xff]
        %v6322 = vld [vmem:[%s6312 + $0x48] sm:$0xff]
        %v6323 = vld [vmem:[%s6312 + $0x50] sm:$0xff]
        %v6324 = vld [vmem:[%s6312 + $0x58] sm:$0xff]
        %v6325 = vld [vmem:[%s6312 + $0x60] sm:$0xff]
        %v6326 = vld [vmem:[%s6312 + $0x68] sm:$0xff]
        %v6327 = vld [vmem:[%s6312 + $0x70] sm:$0xff]
        %v6328 = vld [vmem:[%s6312 + $0x78] sm:$0xff]
        %6329 = vmatprep.subr.mxu0 0.0
        %6330 = vmatpush1.msra.mxu0 %v6313
        %6331 = vmatprep.subr.mxu0 0.0
        %6332 = vmatpush1.msra.mxu0 %v6314
        %6333 = vmatprep.subr.mxu0 0.0
        %6334 = vmatpush1.msra.mxu0 %v6315
        %6335 = vmatprep.subr.mxu0 0.0
        %6336 = vmatpush1.msra.mxu0 %v6316
        %6337 = vmatprep.subr.mxu0 0.0
        %6338 = vmatpush1.msra.mxu0 %v6317
        %6339 = vmatprep.subr.mxu0 0.0
        %6340 = vmatpush1.msra.mxu0 %v6318
        %6341 = vmatprep.subr.mxu0 0.0
        %6342 = vmatpush1.msra.mxu0 %v6319
        %6343 = vmatprep.subr.mxu0 0.0
        %6344 = vmatpush1.msra.mxu0 %v6320
        %6345 = vmatprep.subr.mxu0 0.0
        %6346 = vmatpush1.msra.mxu0 %v6321
        %6347 = vmatprep.subr.mxu0 0.0
        %6348 = vmatpush1.msra.mxu0 %v6322
        %6349 = vmatprep.subr.mxu0 0.0
        %6350 = vmatpush1.msra.mxu0 %v6323
        %6351 = vmatprep.subr.mxu0 0.0
        %6352 = vmatpush1.msra.mxu0 %v6324
        %6353 = vmatprep.subr.mxu0 0.0
        %6354 = vmatpush1.msra.mxu0 %v6325
        %6355 = vmatprep.subr.mxu0 0.0
        %6356 = vmatpush1.msra.mxu0 %v6326
        %6357 = vmatprep.subr.mxu0 0.0
        %6358 = vmatpush1.msra.mxu0 %v6327
        %6359 = vmatprep.subr.mxu0 0.0
        %6360 = vmatpush1.msra.mxu0 %v6328
        %6361 = vmatprep.subr.mxu0 0.0
        %6362 = vmatpush1.msra.mxu0 0.0
        %6363 = vmatprep.subr.mxu0 0.0
        %6364 = vmatpush1.msra.mxu0 0.0
        %6365 = vmatprep.subr.mxu0 0.0
        %6366 = vmatpush1.msra.mxu0 0.0
        %6367 = vmatprep.subr.mxu0 0.0
        %6368 = vmatpush1.msra.mxu0 0.0
        %6369 = vmatprep.subr.mxu0 0.0
        %6370 = vmatpush1.msra.mxu0 0.0
        %6371 = vmatprep.subr.mxu0 0.0
        %6372 = vmatpush1.msra.mxu0 0.0
        %6373 = vmatprep.subr.mxu0 0.0
        %6374 = vmatpush1.msra.mxu0 0.0
        %6375 = vmatprep.subr.mxu0 0.0
        %6376 = vmatpush1.msra.mxu0 0.0
        %6377 = vmatprep.subr.mxu0 0.0
        %6378 = vmatpush1.msra.mxu0 0.0
        %6379 = vmatprep.subr.mxu0 0.0
        %6380 = vmatpush1.msra.mxu0 0.0
        %6381 = vmatprep.subr.mxu0 0.0
        %6382 = vmatpush1.msra.mxu0 0.0
        %6383 = vmatprep.subr.mxu0 0.0
        %6384 = vmatpush1.msra.mxu0 0.0
        %6385 = vmatprep.subr.mxu0 0.0
        %6386 = vmatpush1.msra.mxu0 0.0
        %6387 = vmatprep.subr.mxu0 0.0
        %6388 = vmatpush1.msra.mxu0 0.0
        %6389 = vmatprep.subr.mxu0 0.0
        %6390 = vmatpush1.msra.mxu0 0.0
        %6391 = vmatprep.subr.mxu0 0.0
        %6392 = vmatpush1.msra.mxu0 0.0
        %6393 = vmatprep.mubr.f32.mxu0 0.0
        %6394 = vmatmul.mubr.f32.gmra.mrb[0].mxu0 %v6276
        %v6395 = vpop.f32.mrb[0].mxu0
        %v6396 = vadd.f32 0.0, %v6395
        %v6397 = vpop.f32.mrb[0].mxu0
        %6398 = vmatprep.mubr.f32.mxu0 0.0
        %6399 = vmatmul.mubr.f32.gmra.mrb[0].mxu0 %v6277
        %v6400 = vpop.f32.mrb[0].mxu0
        %v6401 = vadd.f32 0.0, %v6400
        %v6402 = vpop.f32.mrb[0].mxu0
        %6403 = vmatprep.mubr.f32.mxu0 0.0
        %6404 = vmatmul.mubr.f32.gmra.mrb[0].mxu0 %v6278
        %v6405 = vpop.f32.mrb[0].mxu0
        %v6406 = vadd.f32 0.0, %v6405
        %v6407 = vpop.f32.mrb[0].mxu0
        %6408 = vmatprep.mubr.f32.mxu0 0.0
        %6409 = vmatmul.mubr.f32.gmra.mrb[0].mxu0 %v6279
        %v6410 = vpop.f32.mrb[0].mxu0
        %v6411 = vadd.f32 0.0, %v6410
        %v6412 = vpop.f32.mrb[0].mxu0
        %6413 = vmatprep.mubr.f32.mxu0 0.0
        %6414 = vmatmul.mubr.f32.gmra.mrb[0].mxu0 %v6280
        %v6415 = vpop.f32.mrb[0].mxu0
        %v6416 = vadd.f32 0.0, %v6415
        %v6417 = vpop.f32.mrb[0].mxu0
        %6418 = vmatprep.mubr.f32.mxu0 0.0
        %6419 = vmatmul.mubr.f32.gmra.mrb[0].mxu0 %v6281
        %v6420 = vpop.f32.mrb[0].mxu0
        %v6421 = vadd.f32 0.0, %v6420
        %v6422 = vpop.f32.mrb[0].mxu0
        %6423 = vmatprep.mubr.f32.mxu0 0.0
        %6424 = vmatmul.mubr.f32.gmra.mrb[0].mxu0 %v6282
        %v6425 = vpop.f32.mrb[0].mxu0
        %v6426 = vadd.f32 0.0, %v6425
        %v6427 = vpop.f32.mrb[0].mxu0
        %6428 = vmatprep.mubr.f32.mxu0 0.0
        %6429 = vmatmul.mubr.f32.gmra.mrb[0].mxu0 %v6283
        %v6430 = vpop.f32.mrb[0].mxu0
        %v6431 = vadd.f32 0.0, %v6430
        %v6432 = vpop.f32.mrb[0].mxu0
        %6433 = vmatprep.mubr.f32.mxu0 0.0
        %6434 = vmatmul.mubr.f32.gmra.mrb[0].mxu0 %v6284
        %v6435 = vpop.f32.mrb[0].mxu0
        %v6436 = vadd.f32 0.0, %v6435
        %v6437 = vpop.f32.mrb[0].mxu0
        %6438 = vmatprep.mubr.f32.mxu0 0.0
        %6439 = vmatmul.mubr.f32.gmra.mrb[0].mxu0 %v6285
        %v6440 = vpop.f32.mrb[0].mxu0
        %v6441 = vadd.f32 0.0, %v6440
        %v6442 = vpop.f32.mrb[0].mxu0
        %6443 = vmatprep.mubr.f32.mxu0 0.0
        %6444 = vmatmul.mubr.f32.gmra.mrb[0].mxu0 %v6286
        %v6445 = vpop.f32.mrb[0].mxu0
        %v6446 = vadd.f32 0.0, %v6445
        %v6447 = vpop.f32.mrb[0].mxu0
        %6448 = vmatprep.mubr.f32.mxu0 0.0
        %6449 = vmatmul.mubr.f32.gmra.mrb[0].mxu0 %v6287
        %v6450 = vpop.f32.mrb[0].mxu0
        %v6451 = vadd.f32 0.0, %v6450
        %v6452 = vpop.f32.mrb[0].mxu0
        %6453 = vmatprep.mubr.f32.mxu0 0.0
        %6454 = vmatmul.mubr.f32.gmra.mrb[0].mxu0 %v6288
        %v6455 = vpop.f32.mrb[0].mxu0
        %v6456 = vadd.f32 0.0, %v6455
        %v6457 = vpop.f32.mrb[0].mxu0
        %6458 = vmatprep.mubr.f32.mxu0 0.0
        %6459 = vmatmul.mubr.f32.gmra.mrb[0].mxu0 %v6289
        %v6460 = vpop.f32.mrb[0].mxu0
        %v6461 = vadd.f32 0.0, %v6460
        %v6462 = vpop.f32.mrb[0].mxu0
        %6463 = vmatprep.mubr.f32.mxu0 0.0
        %6464 = vmatmul.mubr.f32.gmra.mrb[0].mxu0 %v6290
        %v6465 = vpop.f32.mrb[0].mxu0
        %v6466 = vadd.f32 0.0, %v6465
        %v6467 = vpop.f32.mrb[0].mxu0
        %6468 = vmatprep.mubr.f32.mxu0 0.0
        %6469 = vmatmul.mubr.f32.gmra.mrb[0].mxu0 %v6291
        %v6470 = vpop.f32.mrb[0].mxu0
        %v6471 = vadd.f32 0.0, %v6470
        %v6472 = vpop.f32.mrb[0].mxu0
        %6473 = vmatprep.mubr.f32.mxu0 0.0
        %6474 = vmatmul.mubr.f32.gmra.mrb[0].mxu0 %v6292
        %v6475 = vpop.f32.mrb[0].mxu0
        %v6476 = vadd.f32 0.0, %v6475
        %v6477 = vpop.f32.mrb[0].mxu0
        %6478 = vmatprep.mubr.f32.mxu0 0.0
        %6479 = vmatmul.mubr.f32.gmra.mrb[0].mxu0 %v6293
        %v6480 = vpop.f32.mrb[0].mxu0
        %v6481 = vadd.f32 0.0, %v6480
        %v6482 = vpop.f32.mrb[0].mxu0
        %6483 = vmatprep.mubr.f32.mxu0 0.0
        %6484 = vmatmul.mubr.f32.gmra.mrb[0].mxu0 %v6294
        %v6485 = vpop.f32.mrb[0].mxu0
        %v6486 = vadd.f32 0.0, %v6485
        %v6487 = vpop.f32.mrb[0].mxu0
        %6488 = vmatprep.mubr.f32.mxu0 0.0
        %6489 = vmatmul.mubr.f32.gmra.mrb[0].mxu0 %v6295
        %v6490 = vpop.f32.mrb[0].mxu0
        %v6491 = vadd.f32 0.0, %v6490
        %v6492 = vpop.f32.mrb[0].mxu0
        %6493 = vmatprep.mubr.f32.mxu0 0.0
        %6494 = vmatmul.mubr.f32.gmra.mrb[0].mxu0 %v6296
        %v6495 = vpop.f32.mrb[0].mxu0
        %v6496 = vadd.f32 0.0, %v6495
        %v6497 = vpop.f32.mrb[0].mxu0
        %6498 = vmatprep.mubr.f32.mxu0 0.0
        %6499 = vmatmul.mubr.f32.gmra.mrb[0].mxu0 %v6297
        %v6500 = vpop.f32.mrb[0].mxu0
        %v6501 = vadd.f32 0.0, %v6500
        %v6502 = vpop.f32.mrb[0].mxu0
        %6503 = vmatprep.mubr.f32.mxu0 0.0
        %6504 = vmatmul.mubr.f32.gmra.mrb[0].mxu0 %v6298
        %v6505 = vpop.f32.mrb[0].mxu0
        %v6506 = vadd.f32 0.0, %v6505
        %v6507 = vpop.f32.mrb[0].mxu0
        %6508 = vmatprep.mubr.f32.mxu0 0.0
        %6509 = vmatmul.mubr.f32.gmra.mrb[0].mxu0 %v6299
        %v6510 = vpop.f32.mrb[0].mxu0
        %v6511 = vadd.f32 0.0, %v6510
        %v6512 = vpop.f32.mrb[0].mxu0
        %6513 = vmatprep.mubr.f32.mxu0 0.0
        %6514 = vmatmul.mubr.f32.gmra.mrb[0].mxu0 %v6300
        %v6515 = vpop.f32.mrb[0].mxu0
        %v6516 = vadd.f32 0.0, %v6515
        %v6517 = vpop.f32.mrb[0].mxu0
        %6518 = vmatprep.mubr.f32.mxu0 0.0
        %6519 = vmatmul.mubr.f32.gmra.mrb[0].mxu0 %v6301
        %v6520 = vpop.f32.mrb[0].mxu0
        %v6521 = vadd.f32 0.0, %v6520
        %v6522 = vpop.f32.mrb[0].mxu0
        %6523 = vmatprep.mubr.f32.mxu0 0.0
        %6524 = vmatmul.mubr.f32.gmra.mrb[0].mxu0 %v6302
        %v6525 = vpop.f32.mrb[0].mxu0
        %v6526 = vadd.f32 0.0, %v6525
        %v6527 = vpop.f32.mrb[0].mxu0
        %6528 = vmatprep.mubr.f32.mxu0 0.0
        %6529 = vmatmul.mubr.f32.gmra.mrb[0].mxu0 %v6303
        %v6530 = vpop.f32.mrb[0].mxu0
        %v6531 = vadd.f32 0.0, %v6530
        %v6532 = vpop.f32.mrb[0].mxu0
        %6533 = vmatprep.mubr.f32.mxu0 0.0
        %6534 = vmatmul.mubr.f32.gmra.mrb[0].mxu0 %v6304
        %v6535 = vpop.f32.mrb[0].mxu0
        %v6536 = vadd.f32 0.0, %v6535
        %v6537 = vpop.f32.mrb[0].mxu0
        %6538 = vmatprep.mubr.f32.mxu0 0.0
        %6539 = vmatmul.mubr.f32.gmra.mrb[0].mxu0 %v6305
        %v6540 = vpop.f32.mrb[0].mxu0
        %v6541 = vadd.f32 0.0, %v6540
        %v6542 = vpop.f32.mrb[0].mxu0
        %6543 = vmatprep.mubr.f32.mxu0 0.0
        %6544 = vmatmul.mubr.f32.gmra.mrb[0].mxu0 %v6306
        %v6545 = vpop.f32.mrb[0].mxu0
        %v6546 = vadd.f32 0.0, %v6545
        %v6547 = vpop.f32.mrb[0].mxu0
        %6548 = vmatprep.mubr.f32.mxu0 0.0
        %6549 = vmatmul.mubr.f32.gmra.mrb[0].mxu0 %v6307
        %v6550 = vpop.f32.mrb[0].mxu0
        %v6551 = vadd.f32 0.0, %v6550
        %v6552 = vpop.f32.mrb[0].mxu0
        %6553 = vmatprep.mubr.f32.mxu0 0.0
        %6554 = vmatmul.mubr.f32.gmra.mrb[0].mxu0 %v6308
        %v6555 = vpop.f32.mrb[0].mxu0
        %v6556 = vadd.f32 0.0, %v6555
        %v6557 = vpop.f32.mrb[0].mxu0
        %6558 = vmatprep.mubr.f32.mxu0 0.0
        %6559 = vmatmul.mubr.f32.gmra.mrb[0].mxu0 %v6309
        %v6560 = vpop.f32.mrb[0].mxu0
        %v6561 = vadd.f32 0.0, %v6560
        %v6562 = vpop.f32.mrb[0].mxu0
        %6563 = vmatprep.mubr.f32.mxu0 0.0
        %6564 = vmatmul.mubr.f32.gmra.mrb[0].mxu0 %v6310
        %v6565 = vpop.f32.mrb[0].mxu0
        %v6566 = vadd.f32 0.0, %v6565
        %v6567 = vpop.f32.mrb[0].mxu0
        %6568 = vmatprep.mubr.f32.mxu0 0.0
        %6569 = vmatmul.mubr.f32.gmra.mrb[0].mxu0 %v6311
        %v6570 = vpop.f32.mrb[0].mxu0
        %v6571 = vadd.f32 0.0, %v6570
        %v6572 = vpop.f32.mrb[0].mxu0
        %6573 = vdwg.mxu0
        %v6574 = vadd.f32 %v6240, %v6396
        %v6575 = vadd.f32 %v6241, %v6401
        %v6576 = vadd.f32 %v6242, %v6406
        %v6577 = vadd.f32 %v6243, %v6411
        %v6578 = vadd.f32 %v6244, %v6416
        %v6579 = vadd.f32 %v6245, %v6421
        %v6580 = vadd.f32 %v6246, %v6426
        %v6581 = vadd.f32 %v6247, %v6431
        %v6582 = vadd.f32 %v6248, %v6436
        %v6583 = vadd.f32 %v6249, %v6441
        %v6584 = vadd.f32 %v6250, %v6446
        %v6585 = vadd.f32 %v6251, %v6451
        %v6586 = vadd.f32 %v6252, %v6456
        %v6587 = vadd.f32 %v6253, %v6461
        %v6588 = vadd.f32 %v6254, %v6466
        %v6589 = vadd.f32 %v6255, %v6471
        %v6590 = vadd.f32 %v6256, %v6476
        %v6591 = vadd.f32 %v6257, %v6481
        %v6592 = vadd.f32 %v6258, %v6486
        %v6593 = vadd.f32 %v6259, %v6491
        %v6594 = vadd.f32 %v6260, %v6496
        %v6595 = vadd.f32 %v6261, %v6501
        %v6596 = vadd.f32 %v6262, %v6506
        %v6597 = vadd.f32 %v6263, %v6511
        %v6598 = vadd.f32 %v6264, %v6516
        %v6599 = vadd.f32 %v6265, %v6521
        %v6600 = vadd.f32 %v6266, %v6526
        %v6601 = vadd.f32 %v6267, %v6531
        %v6602 = vadd.f32 %v6268, %v6536
        %v6603 = vadd.f32 %v6269, %v6541
        %v6604 = vadd.f32 %v6270, %v6546
        %v6605 = vadd.f32 %v6271, %v6551
        %v6606 = vadd.f32 %v6272, %v6556
        %v6607 = vadd.f32 %v6273, %v6561
        %v6608 = vadd.f32 %v6274, %v6566
        %v6609 = vadd.f32 %v6275, %v6571
        %v6610 = vld [vmem:[#allocation2 + $0x2b] sm:$0xff]
        %v6611 = vld [vmem:[#allocation2 + $0x33] sm:$0xff]
        %v6612 = vld [vmem:[#allocation2 + $0x3b] sm:$0xff]
        %v6613 = vld [vmem:[#allocation2 + $0x43] sm:$0xff]
        %v6614 = vld [vmem:[#allocation2 + $0x4b] sm:$0xff]
        %v6615 = vld [vmem:[#allocation2 + $0x53] sm:$0xff]
        %v6616 = vld [vmem:[#allocation2 + $0x5b] sm:$0xff]
        %v6617 = vld [vmem:[#allocation2 + $0x63] sm:$0xff]
        %v6618 = vld [vmem:[#allocation2 + $0x6b] sm:$0xff]
        %v6619 = vld [vmem:[#allocation2 + $0x73] sm:$0xff]
        %v6620 = vld [vmem:[#allocation2 + $0x7b] sm:$0xff]
        %v6621 = vld [vmem:[#allocation2 + $0x83] sm:$0xff]
        %v6622 = vld [vmem:[#allocation2 + $0x8b] sm:$0xff]
        %v6623 = vld [vmem:[#allocation2 + $0x93] sm:$0xff]
        %v6624 = vld [vmem:[#allocation2 + $0x9b] sm:$0xff]
        %v6625 = vld [vmem:[#allocation2 + $0xa3] sm:$0xff]
        %v6626 = vld [vmem:[#allocation2 + $0xab] sm:$0xff]
        %v6627 = vld [vmem:[#allocation2 + $0xb3] sm:$0xff]
        %v6628 = vld [vmem:[#allocation2 + $0xbb] sm:$0xff]
        %v6629 = vld [vmem:[#allocation2 + $0xc3] sm:$0xff]
        %v6630 = vld [vmem:[#allocation2 + $0xcb] sm:$0xff]
        %v6631 = vld [vmem:[#allocation2 + $0xd3] sm:$0xff]
        %v6632 = vld [vmem:[#allocation2 + $0xdb] sm:$0xff]
        %v6633 = vld [vmem:[#allocation2 + $0xe3] sm:$0xff]
        %v6634 = vld [vmem:[#allocation2 + $0xeb] sm:$0xff]
        %v6635 = vld [vmem:[#allocation2 + $0xf3] sm:$0xff]
        %v6636 = vld [vmem:[#allocation2 + $0xfb] sm:$0xff]
        %v6637 = vld [vmem:[#allocation2 + $0x103] sm:$0xff]
        %v6638 = vld [vmem:[#allocation2 + $0x10b] sm:$0xff]
        %v6639 = vld [vmem:[#allocation2 + $0x113] sm:$0xff]
        %v6640 = vld [vmem:[#allocation2 + $0x11b] sm:$0xff]
        %v6641 = vld [vmem:[#allocation2 + $0x123] sm:$0xff]
        %v6642 = vld [vmem:[#allocation2 + $0x12b] sm:$0xff]
        %v6643 = vld [vmem:[#allocation2 + $0x133] sm:$0xff]
        %v6644 = vld [vmem:[#allocation2 + $0x13b] sm:$0xff]
        %v6645 = vld [vmem:[#allocation2 + $0x143] sm:$0xff]
        %s6646 = scalar_lea.vmem [#allocation8], 1024
        %v6647 = vld [vmem:[%s6646] sm:$0xff]
        %v6648 = vld [vmem:[%s6646 + $0x8] sm:$0xff]
        %v6649 = vld [vmem:[%s6646 + $0x10] sm:$0xff]
        %v6650 = vld [vmem:[%s6646 + $0x18] sm:$0xff]
        %v6651 = vld [vmem:[%s6646 + $0x20] sm:$0xff]
        %v6652 = vld [vmem:[%s6646 + $0x28] sm:$0xff]
        %v6653 = vld [vmem:[%s6646 + $0x30] sm:$0xff]
        %v6654 = vld [vmem:[%s6646 + $0x38] sm:$0xff]
        %v6655 = vld [vmem:[%s6646 + $0x40] sm:$0xff]
        %v6656 = vld [vmem:[%s6646 + $0x48] sm:$0xff]
        %v6657 = vld [vmem:[%s6646 + $0x50] sm:$0xff]
        %v6658 = vld [vmem:[%s6646 + $0x58] sm:$0xff]
        %v6659 = vld [vmem:[%s6646 + $0x60] sm:$0xff]
        %v6660 = vld [vmem:[%s6646 + $0x68] sm:$0xff]
        %v6661 = vld [vmem:[%s6646 + $0x70] sm:$0xff]
        %v6662 = vld [vmem:[%s6646 + $0x78] sm:$0xff]
        %6663 = vmatprep.subr.mxu0 0.0
        %6664 = vmatpush1.msra.mxu0 %v6647
        %6665 = vmatprep.subr.mxu0 0.0
        %6666 = vmatpush1.msra.mxu0 %v6648
        %6667 = vmatprep.subr.mxu0 0.0
        %6668 = vmatpush1.msra.mxu0 %v6649
        %6669 = vmatprep.subr.mxu0 0.0
        %6670 = vmatpush1.msra.mxu0 %v6650
        %6671 = vmatprep.subr.mxu0 0.0
        %6672 = vmatpush1.msra.mxu0 %v6651
        %6673 = vmatprep.subr.mxu0 0.0
        %6674 = vmatpush1.msra.mxu0 %v6652
        %6675 = vmatprep.subr.mxu0 0.0
        %6676 = vmatpush1.msra.mxu0 %v6653
        %6677 = vmatprep.subr.mxu0 0.0
        %6678 = vmatpush1.msra.mxu0 %v6654
        %6679 = vmatprep.subr.mxu0 0.0
        %6680 = vmatpush1.msra.mxu0 %v6655
        %6681 = vmatprep.subr.mxu0 0.0
        %6682 = vmatpush1.msra.mxu0 %v6656
        %6683 = vmatprep.subr.mxu0 0.0
        %6684 = vmatpush1.msra.mxu0 %v6657
        %6685 = vmatprep.subr.mxu0 0.0
        %6686 = vmatpush1.msra.mxu0 %v6658
        %6687 = vmatprep.subr.mxu0 0.0
        %6688 = vmatpush1.msra.mxu0 %v6659
        %6689 = vmatprep.subr.mxu0 0.0
        %6690 = vmatpush1.msra.mxu0 %v6660
        %6691 = vmatprep.subr.mxu0 0.0
        %6692 = vmatpush1.msra.mxu0 %v6661
        %6693 = vmatprep.subr.mxu0 0.0
        %6694 = vmatpush1.msra.mxu0 %v6662
        %6695 = vmatprep.subr.mxu0 0.0
        %6696 = vmatpush1.msra.mxu0 0.0
        %6697 = vmatprep.subr.mxu0 0.0
        %6698 = vmatpush1.msra.mxu0 0.0
        %6699 = vmatprep.subr.mxu0 0.0
        %6700 = vmatpush1.msra.mxu0 0.0
        %6701 = vmatprep.subr.mxu0 0.0
        %6702 = vmatpush1.msra.mxu0 0.0
        %6703 = vmatprep.subr.mxu0 0.0
        %6704 = vmatpush1.msra.mxu0 0.0
        %6705 = vmatprep.subr.mxu0 0.0
        %6706 = vmatpush1.msra.mxu0 0.0
        %6707 = vmatprep.subr.mxu0 0.0
        %6708 = vmatpush1.msra.mxu0 0.0
        %6709 = vmatprep.subr.mxu0 0.0
        %6710 = vmatpush1.msra.mxu0 0.0
        %6711 = vmatprep.subr.mxu0 0.0
        %6712 = vmatpush1.msra.mxu0 0.0
        %6713 = vmatprep.subr.mxu0 0.0
        %6714 = vmatpush1.msra.mxu0 0.0
        %6715 = vmatprep.subr.mxu0 0.0
        %6716 = vmatpush1.msra.mxu0 0.0
        %6717 = vmatprep.subr.mxu0 0.0
        %6718 = vmatpush1.msra.mxu0 0.0
        %6719 = vmatprep.subr.mxu0 0.0
        %6720 = vmatpush1.msra.mxu0 0.0
        %6721 = vmatprep.subr.mxu0 0.0
        %6722 = vmatpush1.msra.mxu0 0.0
        %6723 = vmatprep.subr.mxu0 0.0
        %6724 = vmatpush1.msra.mxu0 0.0
        %6725 = vmatprep.subr.mxu0 0.0
        %6726 = vmatpush1.msra.mxu0 0.0
        %6727 = vmatprep.mubr.f32.mxu0 0.0
        %6728 = vmatmul.mubr.f32.gmra.mrb[0].mxu0 %v6610
        %v6729 = vpop.f32.mrb[0].mxu0
        %v6730 = vadd.f32 0.0, %v6729
        %v6731 = vpop.f32.mrb[0].mxu0
        %6732 = vmatprep.mubr.f32.mxu0 0.0
        %6733 = vmatmul.mubr.f32.gmra.mrb[0].mxu0 %v6611
        %v6734 = vpop.f32.mrb[0].mxu0
        %v6735 = vadd.f32 0.0, %v6734
        %v6736 = vpop.f32.mrb[0].mxu0
        %6737 = vmatprep.mubr.f32.mxu0 0.0
        %6738 = vmatmul.mubr.f32.gmra.mrb[0].mxu0 %v6612
        %v6739 = vpop.f32.mrb[0].mxu0
        %v6740 = vadd.f32 0.0, %v6739
        %v6741 = vpop.f32.mrb[0].mxu0
        %6742 = vmatprep.mubr.f32.mxu0 0.0
        %6743 = vmatmul.mubr.f32.gmra.mrb[0].mxu0 %v6613
        %v6744 = vpop.f32.mrb[0].mxu0
        %v6745 = vadd.f32 0.0, %v6744
        %v6746 = vpop.f32.mrb[0].mxu0
        %6747 = vmatprep.mubr.f32.mxu0 0.0
        %6748 = vmatmul.mubr.f32.gmra.mrb[0].mxu0 %v6614
        %v6749 = vpop.f32.mrb[0].mxu0
        %v6750 = vadd.f32 0.0, %v6749
        %v6751 = vpop.f32.mrb[0].mxu0
        %6752 = vmatprep.mubr.f32.mxu0 0.0
        %6753 = vmatmul.mubr.f32.gmra.mrb[0].mxu0 %v6615
        %v6754 = vpop.f32.mrb[0].mxu0
        %v6755 = vadd.f32 0.0, %v6754
        %v6756 = vpop.f32.mrb[0].mxu0
        %6757 = vmatprep.mubr.f32.mxu0 0.0
        %6758 = vmatmul.mubr.f32.gmra.mrb[0].mxu0 %v6616
        %v6759 = vpop.f32.mrb[0].mxu0
        %v6760 = vadd.f32 0.0, %v6759
        %v6761 = vpop.f32.mrb[0].mxu0
        %6762 = vmatprep.mubr.f32.mxu0 0.0
        %6763 = vmatmul.mubr.f32.gmra.mrb[0].mxu0 %v6617
        %v6764 = vpop.f32.mrb[0].mxu0
        %v6765 = vadd.f32 0.0, %v6764
        %v6766 = vpop.f32.mrb[0].mxu0
        %6767 = vmatprep.mubr.f32.mxu0 0.0
        %6768 = vmatmul.mubr.f32.gmra.mrb[0].mxu0 %v6618
        %v6769 = vpop.f32.mrb[0].mxu0
        %v6770 = vadd.f32 0.0, %v6769
        %v6771 = vpop.f32.mrb[0].mxu0
        %6772 = vmatprep.mubr.f32.mxu0 0.0
        %6773 = vmatmul.mubr.f32.gmra.mrb[0].mxu0 %v6619
        %v6774 = vpop.f32.mrb[0].mxu0
        %v6775 = vadd.f32 0.0, %v6774
        %v6776 = vpop.f32.mrb[0].mxu0
        %6777 = vmatprep.mubr.f32.mxu0 0.0
        %6778 = vmatmul.mubr.f32.gmra.mrb[0].mxu0 %v6620
        %v6779 = vpop.f32.mrb[0].mxu0
        %v6780 = vadd.f32 0.0, %v6779
        %v6781 = vpop.f32.mrb[0].mxu0
        %6782 = vmatprep.mubr.f32.mxu0 0.0
        %6783 = vmatmul.mubr.f32.gmra.mrb[0].mxu0 %v6621
        %v6784 = vpop.f32.mrb[0].mxu0
        %v6785 = vadd.f32 0.0, %v6784
        %v6786 = vpop.f32.mrb[0].mxu0
        %6787 = vmatprep.mubr.f32.mxu0 0.0
        %6788 = vmatmul.mubr.f32.gmra.mrb[0].mxu0 %v6622
        %v6789 = vpop.f32.mrb[0].mxu0
        %v6790 = vadd.f32 0.0, %v6789
        %v6791 = vpop.f32.mrb[0].mxu0
        %6792 = vmatprep.mubr.f32.mxu0 0.0
        %6793 = vmatmul.mubr.f32.gmra.mrb[0].mxu0 %v6623
        %v6794 = vpop.f32.mrb[0].mxu0
        %v6795 = vadd.f32 0.0, %v6794
        %v6796 = vpop.f32.mrb[0].mxu0
        %6797 = vmatprep.mubr.f32.mxu0 0.0
        %6798 = vmatmul.mubr.f32.gmra.mrb[0].mxu0 %v6624
        %v6799 = vpop.f32.mrb[0].mxu0
        %v6800 = vadd.f32 0.0, %v6799
        %v6801 = vpop.f32.mrb[0].mxu0
        %6802 = vmatprep.mubr.f32.mxu0 0.0
        %6803 = vmatmul.mubr.f32.gmra.mrb[0].mxu0 %v6625
        %v6804 = vpop.f32.mrb[0].mxu0
        %v6805 = vadd.f32 0.0, %v6804
        %v6806 = vpop.f32.mrb[0].mxu0
        %6807 = vmatprep.mubr.f32.mxu0 0.0
        %6808 = vmatmul.mubr.f32.gmra.mrb[0].mxu0 %v6626
        %v6809 = vpop.f32.mrb[0].mxu0
        %v6810 = vadd.f32 0.0, %v6809
        %v6811 = vpop.f32.mrb[0].mxu0
        %6812 = vmatprep.mubr.f32.mxu0 0.0
        %6813 = vmatmul.mubr.f32.gmra.mrb[0].mxu0 %v6627
        %v6814 = vpop.f32.mrb[0].mxu0
        %v6815 = vadd.f32 0.0, %v6814
        %v6816 = vpop.f32.mrb[0].mxu0
        %6817 = vmatprep.mubr.f32.mxu0 0.0
        %6818 = vmatmul.mubr.f32.gmra.mrb[0].mxu0 %v6628
        %v6819 = vpop.f32.mrb[0].mxu0
        %v6820 = vadd.f32 0.0, %v6819
        %v6821 = vpop.f32.mrb[0].mxu0
        %6822 = vmatprep.mubr.f32.mxu0 0.0
        %6823 = vmatmul.mubr.f32.gmra.mrb[0].mxu0 %v6629
        %v6824 = vpop.f32.mrb[0].mxu0
        %v6825 = vadd.f32 0.0, %v6824
        %v6826 = vpop.f32.mrb[0].mxu0
        %6827 = vmatprep.mubr.f32.mxu0 0.0
        %6828 = vmatmul.mubr.f32.gmra.mrb[0].mxu0 %v6630
        %v6829 = vpop.f32.mrb[0].mxu0
        %v6830 = vadd.f32 0.0, %v6829
        %v6831 = vpop.f32.mrb[0].mxu0
        %6832 = vmatprep.mubr.f32.mxu0 0.0
        %6833 = vmatmul.mubr.f32.gmra.mrb[0].mxu0 %v6631
        %v6834 = vpop.f32.mrb[0].mxu0
        %v6835 = vadd.f32 0.0, %v6834
        %v6836 = vpop.f32.mrb[0].mxu0
        %6837 = vmatprep.mubr.f32.mxu0 0.0
        %6838 = vmatmul.mubr.f32.gmra.mrb[0].mxu0 %v6632
        %v6839 = vpop.f32.mrb[0].mxu0
        %v6840 = vadd.f32 0.0, %v6839
        %v6841 = vpop.f32.mrb[0].mxu0
        %6842 = vmatprep.mubr.f32.mxu0 0.0
        %6843 = vmatmul.mubr.f32.gmra.mrb[0].mxu0 %v6633
        %v6844 = vpop.f32.mrb[0].mxu0
        %v6845 = vadd.f32 0.0, %v6844
        %v6846 = vpop.f32.mrb[0].mxu0
        %6847 = vmatprep.mubr.f32.mxu0 0.0
        %6848 = vmatmul.mubr.f32.gmra.mrb[0].mxu0 %v6634
        %v6849 = vpop.f32.mrb[0].mxu0
        %v6850 = vadd.f32 0.0, %v6849
        %v6851 = vpop.f32.mrb[0].mxu0
        %6852 = vmatprep.mubr.f32.mxu0 0.0
        %6853 = vmatmul.mubr.f32.gmra.mrb[0].mxu0 %v6635
        %v6854 = vpop.f32.mrb[0].mxu0
        %v6855 = vadd.f32 0.0, %v6854
        %v6856 = vpop.f32.mrb[0].mxu0
        %6857 = vmatprep.mubr.f32.mxu0 0.0
        %6858 = vmatmul.mubr.f32.gmra.mrb[0].mxu0 %v6636
        %v6859 = vpop.f32.mrb[0].mxu0
        %v6860 = vadd.f32 0.0, %v6859
        %v6861 = vpop.f32.mrb[0].mxu0
        %6862 = vmatprep.mubr.f32.mxu0 0.0
        %6863 = vmatmul.mubr.f32.gmra.mrb[0].mxu0 %v6637
        %v6864 = vpop.f32.mrb[0].mxu0
        %v6865 = vadd.f32 0.0, %v6864
        %v6866 = vpop.f32.mrb[0].mxu0
        %6867 = vmatprep.mubr.f32.mxu0 0.0
        %6868 = vmatmul.mubr.f32.gmra.mrb[0].mxu0 %v6638
        %v6869 = vpop.f32.mrb[0].mxu0
        %v6870 = vadd.f32 0.0, %v6869
        %v6871 = vpop.f32.mrb[0].mxu0
        %6872 = vmatprep.mubr.f32.mxu0 0.0
        %6873 = vmatmul.mubr.f32.gmra.mrb[0].mxu0 %v6639
        %v6874 = vpop.f32.mrb[0].mxu0
        %v6875 = vadd.f32 0.0, %v6874
        %v6876 = vpop.f32.mrb[0].mxu0
        %6877 = vmatprep.mubr.f32.mxu0 0.0
        %6878 = vmatmul.mubr.f32.gmra.mrb[0].mxu0 %v6640
        %v6879 = vpop.f32.mrb[0].mxu0
        %v6880 = vadd.f32 0.0, %v6879
        %v6881 = vpop.f32.mrb[0].mxu0
        %6882 = vmatprep.mubr.f32.mxu0 0.0
        %6883 = vmatmul.mubr.f32.gmra.mrb[0].mxu0 %v6641
        %v6884 = vpop.f32.mrb[0].mxu0
        %v6885 = vadd.f32 0.0, %v6884
        %v6886 = vpop.f32.mrb[0].mxu0
        %6887 = vmatprep.mubr.f32.mxu0 0.0
        %6888 = vmatmul.mubr.f32.gmra.mrb[0].mxu0 %v6642
        %v6889 = vpop.f32.mrb[0].mxu0
        %v6890 = vadd.f32 0.0, %v6889
        %v6891 = vpop.f32.mrb[0].mxu0
        %6892 = vmatprep.mubr.f32.mxu0 0.0
        %6893 = vmatmul.mubr.f32.gmra.mrb[0].mxu0 %v6643
        %v6894 = vpop.f32.mrb[0].mxu0
        %v6895 = vadd.f32 0.0, %v6894
        %v6896 = vpop.f32.mrb[0].mxu0
        %6897 = vmatprep.mubr.f32.mxu0 0.0
        %6898 = vmatmul.mubr.f32.gmra.mrb[0].mxu0 %v6644
        %v6899 = vpop.f32.mrb[0].mxu0
        %v6900 = vadd.f32 0.0, %v6899
        %v6901 = vpop.f32.mrb[0].mxu0
        %6902 = vmatprep.mubr.f32.mxu0 0.0
        %6903 = vmatmul.mubr.f32.gmra.mrb[0].mxu0 %v6645
        %v6904 = vpop.f32.mrb[0].mxu0
        %v6905 = vadd.f32 0.0, %v6904
        %v6906 = vpop.f32.mrb[0].mxu0
        %6907 = vdwg.mxu0
        %v6908 = vadd.f32 %v6574, %v6730
        %v6909 = vadd.f32 %v6575, %v6735
        %v6910 = vadd.f32 %v6576, %v6740
        %v6911 = vadd.f32 %v6577, %v6745
        %v6912 = vadd.f32 %v6578, %v6750
        %v6913 = vadd.f32 %v6579, %v6755
        %v6914 = vadd.f32 %v6580, %v6760
        %v6915 = vadd.f32 %v6581, %v6765
        %v6916 = vadd.f32 %v6582, %v6770
        %v6917 = vadd.f32 %v6583, %v6775
        %v6918 = vadd.f32 %v6584, %v6780
        %v6919 = vadd.f32 %v6585, %v6785
        %v6920 = vadd.f32 %v6586, %v6790
        %v6921 = vadd.f32 %v6587, %v6795
        %v6922 = vadd.f32 %v6588, %v6800
        %v6923 = vadd.f32 %v6589, %v6805
        %v6924 = vadd.f32 %v6590, %v6810
        %v6925 = vadd.f32 %v6591, %v6815
        %v6926 = vadd.f32 %v6592, %v6820
        %v6927 = vadd.f32 %v6593, %v6825
        %v6928 = vadd.f32 %v6594, %v6830
        %v6929 = vadd.f32 %v6595, %v6835
        %v6930 = vadd.f32 %v6596, %v6840
        %v6931 = vadd.f32 %v6597, %v6845
        %v6932 = vadd.f32 %v6598, %v6850
        %v6933 = vadd.f32 %v6599, %v6855
        %v6934 = vadd.f32 %v6600, %v6860
        %v6935 = vadd.f32 %v6601, %v6865
        %v6936 = vadd.f32 %v6602, %v6870
        %v6937 = vadd.f32 %v6603, %v6875
        %v6938 = vadd.f32 %v6604, %v6880
        %v6939 = vadd.f32 %v6605, %v6885
        %v6940 = vadd.f32 %v6606, %v6890
        %v6941 = vadd.f32 %v6607, %v6895
        %v6942 = vadd.f32 %v6608, %v6900
        %v6943 = vadd.f32 %v6609, %v6905
        %v6944 = vld [vmem:[%s4] sm:$0x1]
        %v6946 = vlaneseq
        %v6947 = vshrl.u32 %v6946, 7
        %v6948 = vsub.s32 0, %v6947
        %v6949 = vrot.slane %v6944, %v6948
        %v6951 = vadd.f32 %v6908, %v6949
        %v6952 = vadd.f32 %v6909, %v6949
        %v6953 = vadd.f32 %v6910, %v6949
        %v6954 = vadd.f32 %v6911, %v6949
        %v6955 = vadd.f32 %v6912, %v6949
        %v6956 = vadd.f32 %v6913, %v6949
        %v6957 = vadd.f32 %v6914, %v6949
        %v6958 = vadd.f32 %v6915, %v6949
        %v6959 = vadd.f32 %v6916, %v6949
        %v6960 = vadd.f32 %v6917, %v6949
        %v6961 = vadd.f32 %v6918, %v6949
        %v6962 = vadd.f32 %v6919, %v6949
        %v6963 = vadd.f32 %v6920, %v6949
        %v6964 = vadd.f32 %v6921, %v6949
        %v6965 = vadd.f32 %v6922, %v6949
        %v6966 = vadd.f32 %v6923, %v6949
        %v6967 = vadd.f32 %v6924, %v6949
        %v6968 = vadd.f32 %v6925, %v6949
        %v6969 = vadd.f32 %v6926, %v6949
        %v6970 = vadd.f32 %v6927, %v6949
        %v6971 = vadd.f32 %v6928, %v6949
        %v6972 = vadd.f32 %v6929, %v6949
        %v6973 = vadd.f32 %v6930, %v6949
        %v6974 = vadd.f32 %v6931, %v6949
        %v6975 = vadd.f32 %v6932, %v6949
        %v6976 = vadd.f32 %v6933, %v6949
        %v6977 = vadd.f32 %v6934, %v6949
        %v6978 = vadd.f32 %v6935, %v6949
        %v6979 = vadd.f32 %v6936, %v6949
        %v6980 = vadd.f32 %v6937, %v6949
        %v6981 = vadd.f32 %v6938, %v6949
        %v6982 = vadd.f32 %v6939, %v6949
        %v6983 = vadd.f32 %v6940, %v6949
        %v6984 = vadd.f32 %v6941, %v6949
        %v6985 = vadd.f32 %v6942, %v6949
        %v6986 = vadd.f32 %v6943, %v6949
        %v6987 = vmax.f32 %v6951, 0.0
        %v6988 = vmax.f32 %v6952, 0.0
        %v6989 = vmax.f32 %v6953, 0.0
        %v6990 = vmax.f32 %v6954, 0.0
        %v6991 = vmax.f32 %v6955, 0.0
        %v6992 = vmax.f32 %v6956, 0.0
        %v6993 = vmax.f32 %v6957, 0.0
        %v6994 = vmax.f32 %v6958, 0.0
        %v6995 = vmax.f32 %v6959, 0.0
        %v6996 = vmax.f32 %v6960, 0.0
        %v6997 = vmax.f32 %v6961, 0.0
        %v6998 = vmax.f32 %v6962, 0.0
        %v6999 = vmax.f32 %v6963, 0.0
        %v7000 = vmax.f32 %v6964, 0.0
        %v7001 = vmax.f32 %v6965, 0.0
        %v7002 = vmax.f32 %v6966, 0.0
        %v7003 = vmax.f32 %v6967, 0.0
        %v7004 = vmax.f32 %v6968, 0.0
        %v7005 = vmax.f32 %v6969, 0.0
        %v7006 = vmax.f32 %v6970, 0.0
        %v7007 = vmax.f32 %v6971, 0.0
        %v7008 = vmax.f32 %v6972, 0.0
        %v7009 = vmax.f32 %v6973, 0.0
        %v7010 = vmax.f32 %v6974, 0.0
        %v7011 = vmax.f32 %v6975, 0.0
        %v7012 = vmax.f32 %v6976, 0.0
        %v7013 = vmax.f32 %v6977, 0.0
        %v7014 = vmax.f32 %v6978, 0.0
        %v7015 = vmax.f32 %v6979, 0.0
        %v7016 = vmax.f32 %v6980, 0.0
        %v7017 = vmax.f32 %v6981, 0.0
        %v7018 = vmax.f32 %v6982, 0.0
        %v7019 = vmax.f32 %v6983, 0.0
        %v7020 = vmax.f32 %v6984, 0.0
        %v7021 = vmax.f32 %v6985, 0.0
        %v7022 = vmax.f32 %v6986, 0.0
        %7023 = vst [vmem:[%s271] sm:$0xff] %v6987
        %7024 = vst [vmem:[%s271 + $0x8] sm:$0xff] %v6988
        %7025 = vst [vmem:[%s271 + $0x10] sm:$0xff] %v6989
        %7026 = vst [vmem:[%s271 + $0x18] sm:$0xff] %v6990
        %7027 = vst [vmem:[%s271 + $0x20] sm:$0xff] %v6991
        %7028 = vst [vmem:[%s271 + $0x28] sm:$0xff] %v6992
        %7029 = vst [vmem:[%s271 + $0x30] sm:$0xff] %v6993
        %7030 = vst [vmem:[%s271 + $0x38] sm:$0xff] %v6994
        %7031 = vst [vmem:[%s271 + $0x40] sm:$0xff] %v6995
        %7032 = vst [vmem:[%s271 + $0x48] sm:$0xff] %v6996
        %7033 = vst [vmem:[%s271 + $0x50] sm:$0xff] %v6997
        %7034 = vst [vmem:[%s271 + $0x58] sm:$0xff] %v6998
        %7035 = vst [vmem:[%s271 + $0x60] sm:$0xff] %v6999
        %7036 = vst [vmem:[%s271 + $0x68] sm:$0xff] %v7000
        %7037 = vst [vmem:[%s271 + $0x70] sm:$0xff] %v7001
        %7038 = vst [vmem:[%s271 + $0x78] sm:$0xff] %v7002
        %7039 = vst [vmem:[%s271 + $0x80] sm:$0xff] %v7003
        %7040 = vst [vmem:[%s271 + $0x88] sm:$0xff] %v7004
        %7041 = vst [vmem:[%s271 + $0x90] sm:$0xff] %v7005
        %7042 = vst [vmem:[%s271 + $0x98] sm:$0xff] %v7006
        %7043 = vst [vmem:[%s271 + $0xa0] sm:$0xff] %v7007
        %7044 = vst [vmem:[%s271 + $0xa8] sm:$0xff] %v7008
        %7045 = vst [vmem:[%s271 + $0xb0] sm:$0xff] %v7009
        %7046 = vst [vmem:[%s271 + $0xb8] sm:$0xff] %v7010
        %7047 = vst [vmem:[%s271 + $0xc0] sm:$0xff] %v7011
        %7048 = vst [vmem:[%s271 + $0xc8] sm:$0xff] %v7012
        %7049 = vst [vmem:[%s271 + $0xd0] sm:$0xff] %v7013
        %7050 = vst [vmem:[%s271 + $0xd8] sm:$0xff] %v7014
        %7051 = vst [vmem:[%s271 + $0xe0] sm:$0xff] %v7015
        %7052 = vst [vmem:[%s271 + $0xe8] sm:$0xff] %v7016
        %7053 = vst [vmem:[%s271 + $0xf0] sm:$0xff] %v7017
        %7054 = vst [vmem:[%s271 + $0xf8] sm:$0xff] %v7018
        %7055 = vst [vmem:[%s271 + $0x100] sm:$0xff] %v7019
        %7056 = vst [vmem:[%s271 + $0x108] sm:$0xff] %v7020
        %7057 = vst [vmem:[%s271 + $0x110] sm:$0xff] %v7021
        %7058 = vst [vmem:[%s271 + $0x118] sm:$0xff] %v7022
        %s7059 = sand.u32 %s141, 1
        %s7060 = scalar_lea.sflag [#allocation5], %s7059
        %s7061 = sand.u32 %s141, 1
        %s7062 = smul.addr %s7061, 288
        %s7063 = scalar_lea.vmem [#allocation9], %s7062
        // Predicated region
        $region53: #{tpu_custom_call.1} parent=39 // pred_check
          %p7064 = pneg %p151
        $region54: #{tpu_custom_call.1} parent=39 // pred_check_branch
          %7066 = sbr.rel (%p7064) target = $region56
        $region55: #{tpu_custom_call.1} parent=39 // pred_region
          %s7068 = ssub.s32 4608, 4608
          %7069 = vsyncadd %s7060, %s7068
          %s7070 = smul.addr %s23, 36
          %s7071 = smul.addr %s7070, 128
          %s7072 = scalar_lea.hbm %s5, %s7071
          %s7073 = sshll.u32 %s7063, 4
          %s7074 = int_to_ptr.vmem [resolvable:$true] %s7073
          %7079 = dma.vmem_to_hbm [thread:$0]  %s7074, 4608, %s7072, %s7060, 128, 128, 8
        $region56: #{tpu_custom_call.1} parent=39 // pred_fallthru
          _
      $region40: #{tpu_custom_call.1} parent=5 // pred_fallthru
        _
      %p7080 = scmp.le.s32.totalorder 2, %s18
      // Predicated region
      $region57: #{tpu_custom_call.1} parent=5 // pred_check
        %p7081 = pneg %p7080
      $region58: #{tpu_custom_call.1} parent=5 // pred_check_branch
        %7083 = sbr.rel (%p7081) target = $region60
      $region59: #{tpu_custom_call.1} parent=5 // pred_region
        %s7084 = ssub.s32 %s18, 2
        // Predicated region
        $region61: #{tpu_custom_call.1} parent=59 // pred_check
          %p7085 = pneg %p157
        $region62: #{tpu_custom_call.1} parent=59 // pred_check_branch
          %7087 = sbr.rel (%p7085) target = $region64
        $region63: #{tpu_custom_call.1} parent=59 // pred_region
          %s7088 = sand.u32 %s142, 1
          %s7089 = scalar_lea.sflag [#allocation5], %s7088
          %s7090 = sand.u32 %s142, 1
          %s7091 = smul.addr %s7090, 288
          %s7092 = scalar_lea.vmem [#allocation9], %s7091
          %7093 = dma.done %s7089, 4608
        $region64: #{tpu_custom_call.1} parent=59 // pred_fallthru
          _
      $region60: #{tpu_custom_call.1} parent=5 // pred_fallthru
        _
    $region6: #{tpu_custom_call.1} parent=1 // loop_footer
      %s22 = sadd.s32 1, %s18
    $region7: #{tpu_custom_call.1} parent=1 // loop_footer_branch
      %17 = sbr.rel target = $region3
    $region8: #{tpu_custom_call.1} parent=1 // loop_exit
      _
    %7094 = vsyncpa [#allocation4], 1
    %s7095 = scalar_lea.sflag [#allocation4], 1
    %7096 = vsyncpa %s7095, 1
    %7097 = vsyncpa [#allocation7], 1
    %7098 = vsyncpa [#allocation5], 1
    %s7099 = scalar_lea.sflag [#allocation5], 1
    %7100 = vsyncpa %s7099, 1

</llo_original>
